<compile_context>
chip_gen: v7x
topology: tpu7x:2x2x1
jax: 0.10.0
libtpu: 0.0.40
codegen_flags: <defaults>
</compile_context>

<pallas_src>
import functools
import math

import jax
import jax.numpy as jnp
import numpy as np
from jax import lax
from jax.experimental import pallas as pl
from jax.experimental.pallas import tpu as pltpu

NUM_HEADS = 2  # Self_Attention default


def attention_kernel(e_ref, wfc_ref, bfc_ref, wqkv_ref, ws_ref, bscore_ref,
                     z_ref, beta_ref, *, num_mp, num_heads, matmul_dtype):
    PN, D = e_ref.shape
    P = num_mp
    N = PN // P
    H = num_heads
    hd = D // H
    scale = hd ** (-0.5)
    inv_n = 1.0 / N
    hi = lax.Precision.HIGHEST
    mx = lambda x: x.astype(matmul_dtype)

    e = e_ref[...]                      # (P*N, D), loaded once, reused for z
    b_sc = bscore_ref[...]              # (1, 1)

    # fc + tanh and q/k/v projections batched over ALL metapaths (one matmul
    # each; bias broadcast emitted once).
    sp = jnp.tanh(jnp.dot(mx(e), mx(wfc_ref[...]), precision=hi,
                          preferred_element_type=jnp.float32) + bfc_ref[...])
    q = jnp.dot(mx(sp), mx(wqkv_ref[0]), precision=hi,
                preferred_element_type=jnp.float32)          # (P*N, D)
    k = jnp.dot(mx(sp), mx(wqkv_ref[1]), precision=hi,
                preferred_element_type=jnp.float32)
    v = jnp.dot(mx(sp), mx(wqkv_ref[2]), precision=hi,
                preferred_element_type=jnp.float32)

    # (P*N, D) -> (H*P, N, hd); batch index b = h*P + p (head-major stacking,
    # leading-dim reshape is layout-free).
    def to_heads(x):
        parts = [x[:, h * hd:(h + 1) * hd] for h in range(H)]
        return jnp.concatenate(parts, axis=0).reshape(H * P, N, hd)

    qb, kb, vb = to_heads(q), to_heads(k), to_heads(v)

    # ONE batched QK^T over all (metapath, head) pairs + ONE fused softmax.
    a = jnp.einsum('bnd,bmd->bnm', mx(qb), mx(kb), precision=hi,
                   preferred_element_type=jnp.float32) * scale   # (HP, N, N)
    a = a - jnp.max(a, axis=-1, keepdims=True)
    a = jnp.exp(a)
    a = a * pl.reciprocal(jnp.sum(a, axis=-1, keepdims=True), approx=True)

    # Algebraic elimination of attn @ v:
    #   sum_{n,d} (a @ V)[n,d] * ws[d] = colsum(a) @ V @ ws
    colsum = jnp.sum(a, axis=1, keepdims=True)                   # (HP, 1, N)
    t = jnp.einsum('bqm,bmd->bqd', colsum, vb, precision=hi,
                   preferred_element_type=jnp.float32)           # (HP, 1, hd)
    piece = jnp.sum(t * ws_ref[...], axis=2, keepdims=True)      # (HP, 1, 1)

    # Fold heads -> per-metapath score pieces (leading-dim slices, tile aligned).
    s = piece[0:P]
    for h in range(1, H):
        s = s + piece[h * P:(h + 1) * P]                         # (P, 1, 1)

    # Exact softmax over the P metapath scores (P tiny & static; exact division
    # so beta sums to 1 -- review correctness item).
    sc = [s[p] * inv_n + b_sc for p in range(P)]                 # each (1, 1)
    m = sc[0]
    for x in sc[1:]:
        m = jnp.maximum(m, x)
    ex = [jnp.exp(x - m) for x in sc]
    den = ex[0]
    for x in ex[1:]:
        den = den + x
    betas = [x / den for x in ex]                                # (1, 1) each

    # z_mp = sum_p beta_p * embeds[p]  (reuses the already-loaded e).
    z = e[0:N, :] * betas[0]
    for p in range(1, P):
        z = z + e[p * N:(p + 1) * N, :] * betas[p]
    z_ref[...] = z
    for p in range(P):                                           # no concat
        beta_ref[p:p + 1, :] = betas[p]


def attention_forward(embeds, params, *, num_heads=NUM_HEADS,
                      matmul_dtype=jnp.float32):
    """embeds: (P, N, D) float32.  Returns (z_mp (N, D), beta (P,))."""
    P, N, D = embeds.shape
    H = num_heads
    assert D % H == 0, "hidden_dim must be divisible by num_heads"
    hd = D // H
    assert N % 8 == 0, "node count must be a multiple of the f32 sublane (8)"

    # Fold output projection + metapath attention vector (free wrapper algebra):
    #   score_p = att . mean_n(o_p @ w_proj + b_proj)
    #           = mean_n(o_p) . (att @ w_proj^T) + att . b_proj
    w_score = jnp.dot(params["att"], params["w_proj"].T,
                      precision=lax.Precision.HIGHEST)                # (1, D)
    b_score = jnp.sum(params["att"] * params["b_proj"]).reshape(1, 1)
    # per-(head, metapath) copy of the head's score vector, batch b = h*P + p
    ws_stacked = jnp.repeat(w_score.reshape(H, 1, hd), P, axis=0)     # (HP,1,hd)
    # (D, 3D) -> (3, D, D): q/k/v weights become leading-dim slices in-kernel
    w_qkv3 = params["w_qkv"].reshape(D, 3, D).transpose(1, 0, 2)
    e_flat = embeds.reshape(P * N, D)

    flops = (2 * P * N * D * D            # fc
             + 3 * 2 * P * N * D * D      # q, k, v
             + 2 * H * P * N * N * hd     # QK^T
             + 2 * H * P * N * hd         # colsum @ V
             + 8 * P * N * D)             # elementwise slack
    transcendentals = P * N * D + H * P * N * N + P
    bytes_accessed = 4 * (P * N * D + 4 * D * D + D + H * P * hd + 1
                          + N * D + P)

    kernel = functools.partial(attention_kernel, num_mp=P, num_heads=H,
                               matmul_dtype=matmul_dtype)
    vmem = pl.BlockSpec(memory_space=pltpu.MemorySpace.VMEM)
    # TODO(synk): at real sizes keep D a multiple of 128 (lane-dense z store)
    #             and tile the node axis with a grid; grid-less is right here.
    z, beta = pl.pallas_call(
        kernel,
        out_shape=(jax.ShapeDtypeStruct((N, D), jnp.float32),
                   jax.ShapeDtypeStruct((P, 1), jnp.float32)),
        in_specs=[vmem] * 6,
        out_specs=(vmem, vmem),
        cost_estimate=pl.CostEstimate(flops=flops,
                                      transcendentals=transcendentals,
                                      bytes_accessed=bytes_accessed),
    )(e_flat, params["w_fc"], params["b_fc"], w_qkv3, ws_stacked, b_score)
    return z, beta[:, 0]


def reference_forward(embeds, params, *, num_heads=NUM_HEADS):
    """Pure-JAX reference mirroring the PyTorch forward (eval mode)."""
    P, N, D = embeds.shape
    H = num_heads
    hd = D // H
    scale = hd ** (-0.5)
    betas = []
    for p in range(P):
        x = embeds[p]
        sp = jnp.tanh(x @ params["w_fc"] + params["b_fc"])
        qkv = sp @ params["w_qkv"]                            # (N, 3D)
        qkv = qkv.reshape(N, 3, H, hd).transpose(1, 2, 0, 3)  # (3, H, N, hd)
        q, k, v = qkv[0], qkv[1], qkv[2]
        a = jnp.einsum("hnd,hmd->hnm", q, k) * scale
        a = jax.nn.softmax(a, axis=-1)
        o = jnp.einsum("hnm,hmd->hnd", a, v)                  # (H, N, hd)
        o = o.transpose(1, 0, 2).reshape(N, D)
        o = o @ params["w_proj"] + params["b_proj"]
        s = o.mean(axis=0)
        betas.append(jnp.sum(params["att"][0] * s))
    beta = jax.nn.softmax(jnp.stack(betas))
    z = jnp.einsum("p,pnd->nd", beta, embeds)
    return z, beta


if __name__ == "__main__":
    P, N, D = 3, 8, 32  # metapaths, nodes, hidden_dim

    key = jax.random.PRNGKey(0)
    ks = jax.random.split(key, 8)

    embeds = jax.random.normal(ks[0], (P, N, D), dtype=jnp.float32)

    gain = 1.414
    std_fc = gain * math.sqrt(2.0 / (D + D))        # xavier_normal for fc.weight
    std_att = gain * math.sqrt(2.0 / (1 + D))       # xavier_normal for att
    bound_lin = 1.0 / math.sqrt(D)                  # default PyTorch Linear bound

    params = {
        # stored as (in, out) == PyTorch weight.T
        "w_fc":   (jax.random.normal(ks[1], (D, D)) * std_fc).astype(jnp.float32),
        "b_fc":   jax.random.uniform(ks[2], (1, D), minval=-bound_lin,
                                     maxval=bound_lin, dtype=jnp.float32),
        "w_qkv":  jax.random.uniform(ks[3], (D, 3 * D), minval=-bound_lin,
                                     maxval=bound_lin, dtype=jnp.float32),
        "w_proj": jax.random.uniform(ks[4], (D, D), minval=-bound_lin,
                                     maxval=bound_lin, dtype=jnp.float32),
        "b_proj": jax.random.uniform(ks[5], (1, D), minval=-bound_lin,
                                     maxval=bound_lin, dtype=jnp.float32),
        "att":    (jax.random.normal(ks[6], (1, D)) * std_att).astype(jnp.float32),
    }

    z, beta = attention_forward(embeds, params)
    jax.block_until_ready((z, beta))

    # Full-precision reference so the only approximation left is the EUP
    # approximate reciprocal inside the per-row attention softmax; the beta
    # softmax now uses exact division, so the tolerance is tightened 2x vs the
    # previous version (observed error is ~1e-4).
    with jax.default_matmul_precision("float32"):
        z_ref, beta_ref = reference_forward(embeds, params)

    np.testing.assert_allclose(np.asarray(z), np.asarray(z_ref),
                               rtol=5e-3, atol=5e-3)
    np.testing.assert_allclose(np.asarray(beta), np.asarray(beta_ref),
                               rtol=5e-3, atol=5e-3)

    print("KERNEL_OK")
</pallas_src>

<mosaic_0001>
module attributes {stable_mosaic.version = 11 : i64} {
  func.func @attention_kernel(%arg0: memref<24x32xf32, #tpu.memory_space<vmem>>, %arg1: memref<32x32xf32, #tpu.memory_space<vmem>>, %arg2: memref<1x32xf32, #tpu.memory_space<vmem>>, %arg3: memref<3x32x32xf32, #tpu.memory_space<vmem>>, %arg4: memref<6x1x16xf32, #tpu.memory_space<vmem>>, %arg5: memref<1x1xf32, #tpu.memory_space<vmem>>, %arg6: memref<8x32xf32, #tpu.memory_space<vmem>>, %arg7: memref<3x1xf32, #tpu.memory_space<vmem>>) attributes {dimension_semantics = [], scalar_prefetch = 0 : i64, scratch_operands = 0 : i64, tpu.core_type = #tpu.core_type<tc>} {
    %c0 = arith.constant 0 : index
    %c0_0 = arith.constant 0 : index
    %0 = vector.load %arg0[%c0, %c0_0] : memref<24x32xf32, #tpu.memory_space<vmem>>, vector<24x32xf32>
    %c0_1 = arith.constant 0 : index
    %c0_2 = arith.constant 0 : index
    %1 = vector.load %arg5[%c0_1, %c0_2] : memref<1x1xf32, #tpu.memory_space<vmem>>, vector<1x1xf32>
    %c0_3 = arith.constant 0 : index
    %c0_4 = arith.constant 0 : index
    %2 = vector.load %arg1[%c0_3, %c0_4] : memref<32x32xf32, #tpu.memory_space<vmem>>, vector<32x32xf32>
    %cst = arith.constant dense<0.000000e+00> : vector<24x32xf32>
    %3 = tpu.matmul %0, %2, %cst {dimension_numbers = #tpu.dot_dimension_numbers<[1], [0], [0], [1], [0, 0, 1, 1], [], []>, precision = #tpu.contract_precision<fp32>} : vector<24x32xf32>, vector<32x32xf32>, vector<24x32xf32> -> vector<24x32xf32>
    %c0_5 = arith.constant 0 : index
    %c0_6 = arith.constant 0 : index
    %4 = vector.load %arg2[%c0_5, %c0_6] : memref<1x32xf32, #tpu.memory_space<vmem>>, vector<1x32xf32>
    %5 = vector.broadcast %4 : vector<1x32xf32> to vector<24x32xf32>
    %6 = arith.addf %3, %5 : vector<24x32xf32>
    %7 = math.tanh %6 : vector<24x32xf32>
    %c0_7 = arith.constant 0 : index
    %c0_8 = arith.constant 0 : index
    %c0_9 = arith.constant 0 : index
    %8 = vector.load %arg3[%c0_7, %c0_8, %c0_9] : memref<3x32x32xf32, #tpu.memory_space<vmem>>, vector<1x32x32xf32>
    %9 = vector.shape_cast %8 : vector<1x32x32xf32> to vector<32x32xf32>
    %cst_10 = arith.constant dense<0.000000e+00> : vector<24x32xf32>
    %10 = tpu.matmul %7, %9, %cst_10 {dimension_numbers = #tpu.dot_dimension_numbers<[1], [0], [0], [1], [0, 0, 1, 1], [], []>, precision = #tpu.contract_precision<fp32>} : vector<24x32xf32>, vector<32x32xf32>, vector<24x32xf32> -> vector<24x32xf32>
    %c1 = arith.constant 1 : index
    %c0_11 = arith.constant 0 : index
    %c0_12 = arith.constant 0 : index
    %11 = vector.load %arg3[%c1, %c0_11, %c0_12] : memref<3x32x32xf32, #tpu.memory_space<vmem>>, vector<1x32x32xf32>
    %12 = vector.shape_cast %11 : vector<1x32x32xf32> to vector<32x32xf32>
    %cst_13 = arith.constant dense<0.000000e+00> : vector<24x32xf32>
    %13 = tpu.matmul %7, %12, %cst_13 {dimension_numbers = #tpu.dot_dimension_numbers<[1], [0], [0], [1], [0, 0, 1, 1], [], []>, precision = #tpu.contract_precision<fp32>} : vector<24x32xf32>, vector<32x32xf32>, vector<24x32xf32> -> vector<24x32xf32>
    %c2 = arith.constant 2 : index
    %c0_14 = arith.constant 0 : index
    %c0_15 = arith.constant 0 : index
    %14 = vector.load %arg3[%c2, %c0_14, %c0_15] : memref<3x32x32xf32, #tpu.memory_space<vmem>>, vector<1x32x32xf32>
    %15 = vector.shape_cast %14 : vector<1x32x32xf32> to vector<32x32xf32>
    %cst_16 = arith.constant dense<0.000000e+00> : vector<24x32xf32>
    %16 = tpu.matmul %7, %15, %cst_16 {dimension_numbers = #tpu.dot_dimension_numbers<[1], [0], [0], [1], [0, 0, 1, 1], [], []>, precision = #tpu.contract_precision<fp32>} : vector<24x32xf32>, vector<32x32xf32>, vector<24x32xf32> -> vector<24x32xf32>
    %17 = vector.extract_strided_slice %10 {offsets = [0, 0], sizes = [24, 16], strides = [1, 1]} : vector<24x32xf32> to vector<24x16xf32>
    %18 = vector.extract_strided_slice %10 {offsets = [0, 16], sizes = [24, 16], strides = [1, 1]} : vector<24x32xf32> to vector<24x16xf32>
    %19 = tpu.concatenate %17, %18 in 0 : vector<24x16xf32>, vector<24x16xf32> -> vector<48x16xf32>
    %20 = vector.shape_cast %19 : vector<48x16xf32> to vector<6x8x16xf32>
    %21 = vector.extract_strided_slice %13 {offsets = [0, 0], sizes = [24, 16], strides = [1, 1]} : vector<24x32xf32> to vector<24x16xf32>
    %22 = vector.extract_strided_slice %13 {offsets = [0, 16], sizes = [24, 16], strides = [1, 1]} : vector<24x32xf32> to vector<24x16xf32>
    %23 = tpu.concatenate %21, %22 in 0 : vector<24x16xf32>, vector<24x16xf32> -> vector<48x16xf32>
    %24 = vector.shape_cast %23 : vector<48x16xf32> to vector<6x8x16xf32>
    %25 = vector.extract_strided_slice %16 {offsets = [0, 0], sizes = [24, 16], strides = [1, 1]} : vector<24x32xf32> to vector<24x16xf32>
    %26 = vector.extract_strided_slice %16 {offsets = [0, 16], sizes = [24, 16], strides = [1, 1]} : vector<24x32xf32> to vector<24x16xf32>
    %27 = tpu.concatenate %25, %26 in 0 : vector<24x16xf32>, vector<24x16xf32> -> vector<48x16xf32>
    %28 = vector.shape_cast %27 : vector<48x16xf32> to vector<6x8x16xf32>
    "tpu.trace_start"() <{level = 10 : i32, message = "bnd,bmd->bnm"}> : () -> ()
    %cst_17 = arith.constant dense<0.000000e+00> : vector<6x8x8xf32>
    %29 = tpu.matmul %20, %24, %cst_17 {dimension_numbers = #tpu.dot_dimension_numbers<[2], [2], [1], [1], [0, 0, 0, 1, 1, 1], [0], [0]>, precision = #tpu.contract_precision<fp32>} : vector<6x8x16xf32>, vector<6x8x16xf32>, vector<6x8x8xf32> -> vector<6x8x8xf32>
    "tpu.trace_stop"() : () -> ()
    %cst_18 = arith.constant 2.500000e-01 : f32
    %30 = vector.broadcast %cst_18 : f32 to vector<6x8x8xf32>
    %31 = arith.mulf %29, %30 : vector<6x8x8xf32>
    %cst_19 = arith.constant dense<0xFF800000> : vector<6x8xf32>
    %32 = vector.multi_reduction <maximumf>, %31, %cst_19 [2] : vector<6x8x8xf32> to vector<6x8xf32>
    %33 = vector.shape_cast %32 : vector<6x8xf32> to vector<6x8x1xf32>
    %34 = vector.broadcast %33 : vector<6x8x1xf32> to vector<6x8x8xf32>
    %35 = arith.subf %31, %34 : vector<6x8x8xf32>
    %36 = math.exp %35 : vector<6x8x8xf32>
    %cst_20 = arith.constant dense<0.000000e+00> : vector<6x8xf32>
    %37 = vector.multi_reduction <add>, %36, %cst_20 [2] : vector<6x8x8xf32> to vector<6x8xf32>
    %38 = vector.shape_cast %37 : vector<6x8xf32> to vector<6x8x1xf32>
    %39 = tpu.reciprocal %38 {approx = true} : vector<6x8x1xf32> -> vector<6x8x1xf32>
    %40 = vector.broadcast %39 : vector<6x8x1xf32> to vector<6x8x8xf32>
    %41 = arith.mulf %36, %40 : vector<6x8x8xf32>
    %cst_21 = arith.constant dense<0.000000e+00> : vector<6x8xf32>
    %42 = vector.multi_reduction <add>, %41, %cst_21 [1] : vector<6x8x8xf32> to vector<6x8xf32>
    %43 = vector.shape_cast %42 : vector<6x8xf32> to vector<6x1x8xf32>
    "tpu.trace_start"() <{level = 10 : i32, message = "bqm,bmd->bqd"}> : () -> ()
    %cst_22 = arith.constant dense<0.000000e+00> : vector<6x1x16xf32>
    %44 = tpu.matmul %43, %28, %cst_22 {dimension_numbers = #tpu.dot_dimension_numbers<[2], [1], [1], [2], [0, 0, 0, 1, 1, 2], [0], [0]>, precision = #tpu.contract_precision<fp32>} : vector<6x1x8xf32>, vector<6x8x16xf32>, vector<6x1x16xf32> -> vector<6x1x16xf32>
    "tpu.trace_stop"() : () -> ()
    %c0_23 = arith.constant 0 : index
    %c0_24 = arith.constant 0 : index
    %c0_25 = arith.constant 0 : index
    %45 = vector.load %arg4[%c0_23, %c0_24, %c0_25] : memref<6x1x16xf32, #tpu.memory_space<vmem>>, vector<6x1x16xf32>
    %46 = arith.mulf %44, %45 : vector<6x1x16xf32>
    %cst_26 = arith.constant dense<0.000000e+00> : vector<6x1xf32>
    %47 = vector.multi_reduction <add>, %46, %cst_26 [2] : vector<6x1x16xf32> to vector<6x1xf32>
    %48 = vector.shape_cast %47 : vector<6x1xf32> to vector<6x1x1xf32>
    %49 = vector.extract_strided_slice %48 {offsets = [0, 0, 0], sizes = [3, 1, 1], strides = [1, 1, 1]} : vector<6x1x1xf32> to vector<3x1x1xf32>
    %50 = vector.extract_strided_slice %48 {offsets = [3, 0, 0], sizes = [3, 1, 1], strides = [1, 1, 1]} : vector<6x1x1xf32> to vector<3x1x1xf32>
    %51 = arith.addf %49, %50 : vector<3x1x1xf32>
    %52 = vector.extract_strided_slice %51 {offsets = [0, 0, 0], sizes = [1, 1, 1], strides = [1, 1, 1]} : vector<3x1x1xf32> to vector<1x1x1xf32>
    %53 = vector.shape_cast %52 : vector<1x1x1xf32> to vector<1x1xf32>
    %cst_27 = arith.constant 1.250000e-01 : f32
    %54 = vector.broadcast %cst_27 : f32 to vector<1x1xf32>
    %55 = arith.mulf %53, %54 : vector<1x1xf32>
    %56 = arith.addf %55, %1 : vector<1x1xf32>
    %57 = vector.extract_strided_slice %51 {offsets = [1, 0, 0], sizes = [1, 1, 1], strides = [1, 1, 1]} : vector<3x1x1xf32> to vector<1x1x1xf32>
    %58 = vector.shape_cast %57 : vector<1x1x1xf32> to vector<1x1xf32>
    %cst_28 = arith.constant 1.250000e-01 : f32
    %59 = vector.broadcast %cst_28 : f32 to vector<1x1xf32>
    %60 = arith.mulf %58, %59 : vector<1x1xf32>
    %61 = arith.addf %60, %1 : vector<1x1xf32>
    %62 = vector.extract_strided_slice %51 {offsets = [2, 0, 0], sizes = [1, 1, 1], strides = [1, 1, 1]} : vector<3x1x1xf32> to vector<1x1x1xf32>
    %63 = vector.shape_cast %62 : vector<1x1x1xf32> to vector<1x1xf32>
    %cst_29 = arith.constant 1.250000e-01 : f32
    %64 = vector.broadcast %cst_29 : f32 to vector<1x1xf32>
    %65 = arith.mulf %63, %64 : vector<1x1xf32>
    %66 = arith.addf %65, %1 : vector<1x1xf32>
    %67 = arith.maximumf %56, %61 : vector<1x1xf32>
    %68 = arith.maximumf %67, %66 : vector<1x1xf32>
    %69 = arith.subf %56, %68 : vector<1x1xf32>
    %70 = math.exp %69 : vector<1x1xf32>
    %71 = arith.subf %61, %68 : vector<1x1xf32>
    %72 = math.exp %71 : vector<1x1xf32>
    %73 = arith.subf %66, %68 : vector<1x1xf32>
    %74 = math.exp %73 : vector<1x1xf32>
    %75 = arith.addf %70, %72 : vector<1x1xf32>
    %76 = arith.addf %75, %74 : vector<1x1xf32>
    %77 = arith.divf %70, %76 : vector<1x1xf32>
    %78 = arith.divf %72, %76 : vector<1x1xf32>
    %79 = arith.divf %74, %76 : vector<1x1xf32>
    %80 = vector.extract_strided_slice %0 {offsets = [0, 0], sizes = [8, 32], strides = [1, 1]} : vector<24x32xf32> to vector<8x32xf32>
    %81 = vector.broadcast %77 : vector<1x1xf32> to vector<8x32xf32>
    %82 = arith.mulf %80, %81 : vector<8x32xf32>
    %83 = vector.extract_strided_slice %0 {offsets = [8, 0], sizes = [8, 32], strides = [1, 1]} : vector<24x32xf32> to vector<8x32xf32>
    %84 = vector.broadcast %78 : vector<1x1xf32> to vector<8x32xf32>
    %85 = arith.mulf %83, %84 : vector<8x32xf32>
    %86 = arith.addf %82, %85 : vector<8x32xf32>
    %87 = vector.extract_strided_slice %0 {offsets = [16, 0], sizes = [8, 32], strides = [1, 1]} : vector<24x32xf32> to vector<8x32xf32>
    %88 = vector.broadcast %79 : vector<1x1xf32> to vector<8x32xf32>
    %89 = arith.mulf %87, %88 : vector<8x32xf32>
    %90 = arith.addf %86, %89 : vector<8x32xf32>
    %c0_30 = arith.constant 0 : index
    %c0_31 = arith.constant 0 : index
    %91 = vector.load %arg6[%c0_30, %c0_31] : memref<8x32xf32, #tpu.memory_space<vmem>>, vector<8x32xf32>
    tpu.vector_store %arg6[%c0_30, %c0_31], %90 {strides = array<i32>} : memref<8x32xf32, #tpu.memory_space<vmem>>, vector<8x32xf32>,
    %c0_32 = arith.constant 0 : index
    %c0_33 = arith.constant 0 : index
    %92 = vector.load %arg7[%c0_32, %c0_33] : memref<3x1xf32, #tpu.memory_space<vmem>>, vector<1x1xf32>
    tpu.vector_store %arg7[%c0_32, %c0_33], %77 {strides = array<i32>} : memref<3x1xf32, #tpu.memory_space<vmem>>, vector<1x1xf32>,
    %c1_34 = arith.constant 1 : index
    %c0_35 = arith.constant 0 : index
    %93 = vector.load %arg7[%c1_34, %c0_35] : memref<3x1xf32, #tpu.memory_space<vmem>>, vector<1x1xf32>
    tpu.vector_store %arg7[%c1_34, %c0_35], %78 {strides = array<i32>} : memref<3x1xf32, #tpu.memory_space<vmem>>, vector<1x1xf32>,
    %c2_36 = arith.constant 2 : index
    %c0_37 = arith.constant 0 : index
    %94 = vector.load %arg7[%c2_36, %c0_37] : memref<3x1xf32, #tpu.memory_space<vmem>>, vector<1x1xf32>
    tpu.vector_store %arg7[%c2_36, %c0_37], %79 {strides = array<i32>} : memref<3x1xf32, #tpu.memory_space<vmem>>, vector<1x1xf32>,
    return
  }
}

</mosaic_0001>

<llo_original>
// kernel: tpu_custom_call.1
$region0: #{tpu_custom_call.1}
  #allocation0 [shape = 'u32[]', space=smem, size = 0x4, offset = 0x4, fixed_abs, tag = 'smem constant byte address 0x4 - core index']
  #allocation1 [shape = 'u32[144,128]{1,0:T(1,128)}', space=vmem, size = 0x12000, scoped, tag = 'internal scratch']
  #allocation2 [shape = 'f32[1,1]{1,0:T(1,128)S(1)}', space=vmem, size = 0x200, scoped, tag = 'scoped memory for tpu_custom_call.1']
  %s0 = inlined_call_operand.hbm [shape: f32[24,32], index: 0, kind: input, shape index: {}]
  %s1 = inlined_call_operand.hbm [shape: f32[32,32], index: 1, kind: input, shape index: {}]
  %s2 = inlined_call_operand.vmem [shape: f32[1,32], index: 2, kind: input, shape index: {}]
  %s3 = inlined_call_operand.hbm [shape: f32[3,32,32], index: 3, kind: input, shape index: {}]
  %s4 = inlined_call_operand.vmem [shape: f32[6,1,16], index: 4, kind: input, shape index: {}]
  %s5 = inlined_call_operand.<no memory space> [shape: f32[1,1], index: 5, kind: input, shape index: {}]
  %s6 = inlined_call_operand.hbm [shape: f32[8,32], index: 6, kind: output, shape index: {0}]
  %s7 = inlined_call_operand.vmem [shape: f32[3,1], index: 7, kind: output, shape index: {1}]
  %8 = xla_tuple %s6, %s7
  %s9 = sld [smem:[#allocation0]]
  $region54: #{tpu_custom_call.1} parent=0
    _
  %s11 = ssub.s32 1, %s9
  %s12 = scalar_select 0, %s11, %s9
  %v13 = vstv %s5
  %14 = vst [vmem:[#allocation2] sm:$0x1] %v13
  $region1: #{tpu_custom_call.1} parent=0
    #allocation3 [shape = 'u8[12288]{0}', space=vmem, size = 0x3000, scoped, tag = 'input window, operand 0, single buffered']
    #allocation4 [shape = 's32[1]{0}', space=sflag, size = 0x4, scoped, tag = 'scoped memory for tpu_custom_call.1']
    #allocation5 [shape = 's32[1]{0}', space=sflag, size = 0x4, scoped, tag = 'scoped memory for tpu_custom_call.1']
    #allocation6 [shape = 'u8[16384]{0}', space=vmem, size = 0x4000, scoped, tag = 'input window, operand 1, single buffered']
    #allocation7 [shape = 's32[1]{0}', space=sflag, size = 0x4, scoped, tag = 'scoped memory for tpu_custom_call.1']
    #allocation8 [shape = 'u8[49152]{0}', space=vmem, size = 0xc000, scoped, tag = 'input window, operand 3, single buffered']
    #allocation9 [shape = 'u8[4096]{0}', space=vmem, size = 0x1000, scoped, tag = 'output window, operand 0, single buffered']
    %15 = vsyncpa [#allocation4], 0
    %16 = vsyncpa [#allocation7], 0
    %17 = vsyncpa [#allocation5], 0
    // Predicated region
    $region2: #{tpu_custom_call.1} parent=1 // pred_check
      _
    $region3: #{tpu_custom_call.1} parent=1 // pred_check_branch
      %19 = sbr.rel (0) target = $region5
    $region4: #{tpu_custom_call.1} parent=1 // pred_region
      %s21 = ssub.s32 384, 384
      %22 = vsyncadd [#allocation4], %s21
      %s23 = sshll.u32 [#allocation3], 4
      %s24 = int_to_ptr.vmem [resolvable:$true] %s23
      %29 = dma.hbm_to_vmem [thread:$0]  %s0, 384, %s24, [#allocation4], 128, 128, 8
    $region5: #{tpu_custom_call.1} parent=1 // pred_fallthru
      _
    // Predicated region
    $region6: #{tpu_custom_call.1} parent=1 // pred_check
      _
    $region7: #{tpu_custom_call.1} parent=1 // pred_check_branch
      %31 = sbr.rel (0) target = $region9
    $region8: #{tpu_custom_call.1} parent=1 // pred_region
      %s33 = ssub.s32 512, 512
      %34 = vsyncadd [#allocation7], %s33
      %s35 = sshll.u32 [#allocation6], 4
      %s36 = int_to_ptr.vmem [resolvable:$true] %s35
      %41 = dma.hbm_to_vmem [thread:$0]  %s1, 512, %s36, [#allocation7], 128, 128, 8
    $region9: #{tpu_custom_call.1} parent=1 // pred_fallthru
      _
    // Predicated region
    $region10: #{tpu_custom_call.1} parent=1 // pred_check
      _
    $region11: #{tpu_custom_call.1} parent=1 // pred_check_branch
      %43 = sbr.rel (0) target = $region13
    $region12: #{tpu_custom_call.1} parent=1 // pred_region
      _
    $region13: #{tpu_custom_call.1} parent=1 // pred_fallthru
      _
    // Predicated region
    $region14: #{tpu_custom_call.1} parent=1 // pred_check
      _
    $region15: #{tpu_custom_call.1} parent=1 // pred_check_branch
      %45 = sbr.rel (0) target = $region17
    $region16: #{tpu_custom_call.1} parent=1 // pred_region
      %s47 = ssub.s32 1536, 1536
      %48 = vsyncadd [#allocation7], %s47
      %s49 = sshll.u32 [#allocation8], 4
      %s50 = int_to_ptr.vmem [resolvable:$true] %s49
      %55 = dma.hbm_to_vmem [thread:$0]  %s3, 1536, %s50, [#allocation7], 128, 128, 8
    $region17: #{tpu_custom_call.1} parent=1 // pred_fallthru
      _
    // Predicated region
    $region18: #{tpu_custom_call.1} parent=1 // pred_check
      _
    $region19: #{tpu_custom_call.1} parent=1 // pred_check_branch
      %57 = sbr.rel (0) target = $region21
    $region20: #{tpu_custom_call.1} parent=1 // pred_region
      _
    $region21: #{tpu_custom_call.1} parent=1 // pred_fallthru
      _
    // Predicated region
    $region22: #{tpu_custom_call.1} parent=1 // pred_check
      _
    $region23: #{tpu_custom_call.1} parent=1 // pred_check_branch
      %59 = sbr.rel (0) target = $region25
    $region24: #{tpu_custom_call.1} parent=1 // pred_region
      _
    $region25: #{tpu_custom_call.1} parent=1 // pred_fallthru
      _
    // Predicated region
    $region26: #{tpu_custom_call.1} parent=1 // pred_check
      _
    $region27: #{tpu_custom_call.1} parent=1 // pred_check_branch
      %61 = sbr.rel (0) target = $region29
    $region28: #{tpu_custom_call.1} parent=1 // pred_region
      %62 = dma.done [#allocation4], 384
    $region29: #{tpu_custom_call.1} parent=1 // pred_fallthru
      _
    // Predicated region
    $region30: #{tpu_custom_call.1} parent=1 // pred_check
      _
    $region31: #{tpu_custom_call.1} parent=1 // pred_check_branch
      %64 = sbr.rel (0) target = $region33
    $region32: #{tpu_custom_call.1} parent=1 // pred_region
      %65 = dma.done [#allocation7], 512
    $region33: #{tpu_custom_call.1} parent=1 // pred_fallthru
      _
    // Predicated region
    $region34: #{tpu_custom_call.1} parent=1 // pred_check
      _
    $region35: #{tpu_custom_call.1} parent=1 // pred_check_branch
      %67 = sbr.rel (0) target = $region37
    $region36: #{tpu_custom_call.1} parent=1 // pred_region
      %68 = dma.done [#allocation7], 1536
    $region37: #{tpu_custom_call.1} parent=1 // pred_fallthru
      _
    %v69 = vld [vmem:[#allocation3] sm:$0xff]
    %v70 = vld [vmem:[#allocation3 + $0x8] sm:$0xff]
    %v71 = vld [vmem:[#allocation3 + $0x10] sm:$0xff]
    %v72 = vld [vmem:[#allocation2] sm:$0x1]
    %v73 = vld [vmem:[#allocation6] sm:$0xff]
    %v74 = vld [vmem:[#allocation6 + $0x8] sm:$0xff]
    %v75 = vld [vmem:[#allocation6 + $0x10] sm:$0xff]
    %v76 = vld [vmem:[#allocation6 + $0x18] sm:$0xff]
    %v77 = vld [vmem:[%s2] sm:$0x1]
    %v79 = vlaneseq
    %v80 = vshrl.u32 %v79, 7
    %v81 = vsub.s32 0, %v80
    %v82 = vrot.slane %v77, %v81
    %vm84 = vcmask 261120
    %v86 = vsel %vm84, %v69, 0
    %v89 = vsel %vm84, %v70, 0
    %v92 = vsel %vm84, %v71, 0
    %94 = vmatprep.subr.mxu0 0.0
    %v95 = vand.u32 %v73, 4294901760
    %96 = vmatpush1.msra.mxu0 %v95
    %97 = vmatprep.subr.mxu0 0.0
    %v98 = vand.u32 %v74, 4294901760
    %99 = vmatpush1.msra.mxu0 %v98
    %100 = vmatprep.subr.mxu0 0.0
    %v101 = vand.u32 %v75, 4294901760
    %102 = vmatpush1.msra.mxu0 %v101
    %103 = vmatprep.subr.mxu0 0.0
    %v104 = vand.u32 %v76, 4294901760
    %105 = vmatpush1.msra.mxu0 %v104
    %106 = vmatprep.subr.mxu0 0.0
    %107 = vmatpush1.msra.mxu0 0.0
    %108 = vmatprep.subr.mxu0 0.0
    %109 = vmatpush1.msra.mxu0 0.0
    %110 = vmatprep.subr.mxu0 0.0
    %111 = vmatpush1.msra.mxu0 0.0
    %112 = vmatprep.subr.mxu0 0.0
    %113 = vmatpush1.msra.mxu0 0.0
    %114 = vmatprep.subr.mxu0 0.0
    %115 = vmatpush1.msra.mxu0 0.0
    %116 = vmatprep.subr.mxu0 0.0
    %117 = vmatpush1.msra.mxu0 0.0
    %118 = vmatprep.subr.mxu0 0.0
    %119 = vmatpush1.msra.mxu0 0.0
    %120 = vmatprep.subr.mxu0 0.0
    %121 = vmatpush1.msra.mxu0 0.0
    %122 = vmatprep.subr.mxu0 0.0
    %123 = vmatpush1.msra.mxu0 0.0
    %124 = vmatprep.subr.mxu0 0.0
    %125 = vmatpush1.msra.mxu0 0.0
    %126 = vmatprep.subr.mxu0 0.0
    %127 = vmatpush1.msra.mxu0 0.0
    %128 = vmatprep.subr.mxu0 0.0
    %129 = vmatpush1.msra.mxu0 0.0
    %130 = vmatprep.subr.mxu0 0.0
    %131 = vmatpush1.msra.mxu0 0.0
    %132 = vmatprep.subr.mxu0 0.0
    %133 = vmatpush1.msra.mxu0 0.0
    %134 = vmatprep.subr.mxu0 0.0
    %135 = vmatpush1.msra.mxu0 0.0
    %136 = vmatprep.subr.mxu0 0.0
    %137 = vmatpush1.msra.mxu0 0.0
    %138 = vmatprep.subr.mxu0 0.0
    %139 = vmatpush1.msra.mxu0 0.0
    %140 = vmatprep.subr.mxu0 0.0
    %141 = vmatpush1.msra.mxu0 0.0
    %142 = vmatprep.subr.mxu0 0.0
    %143 = vmatpush1.msra.mxu0 0.0
    %144 = vmatprep.subr.mxu0 0.0
    %145 = vmatpush1.msra.mxu0 0.0
    %146 = vmatprep.subr.mxu0 0.0
    %147 = vmatpush1.msra.mxu0 0.0
    %148 = vmatprep.subr.mxu0 0.0
    %149 = vmatpush1.msra.mxu0 0.0
    %150 = vmatprep.subr.mxu0 0.0
    %151 = vmatpush1.msra.mxu0 0.0
    %152 = vmatprep.subr.mxu0 0.0
    %153 = vmatpush1.msra.mxu0 0.0
    %154 = vmatprep.subr.mxu0 0.0
    %155 = vmatpush1.msra.mxu0 0.0
    %156 = vmatprep.subr.mxu0 0.0
    %157 = vmatpush1.msra.mxu0 0.0
    %158 = vmatprep.subr.mxu0 0.0
    %159 = vmatpush1.msra.mxu0 0.0
    %160 = vmatprep.subr.mxu0 0.0
    %161 = vmatpush1.msra.mxu0 0.0
    %162 = vmatprep.mubr.f32.mxu0 0.0
    %v163 = vand.u32 %v86, 4294901760
    %v164 = vsub.f32 %v86, %v163
    %v165 = vand.u32 %v164, 4294901760
    %v166 = vsub.f32 %v164, %v165
    %v167 = vand.u32 %v166, 4294901760
    %168 = vmatmul.mubr.f32.gmra.mrb[0].mxu0 %v167
    %v169 = vpop.f32.mrb[0].mxu0
    %v170 = vadd.f32 %v82, %v169
    %v171 = vpop.f32.mrb[0].mxu0
    %172 = vmatprep.mubr.f32.mxu0 0.0
    %v173 = vand.u32 %v89, 4294901760
    %v174 = vsub.f32 %v89, %v173
    %v175 = vand.u32 %v174, 4294901760
    %v176 = vsub.f32 %v174, %v175
    %v177 = vand.u32 %v176, 4294901760
    %178 = vmatmul.mubr.f32.gmra.mrb[0].mxu0 %v177
    %v179 = vpop.f32.mrb[0].mxu0
    %v180 = vadd.f32 %v82, %v179
    %v181 = vpop.f32.mrb[0].mxu0
    %182 = vmatprep.mubr.f32.mxu0 0.0
    %v183 = vand.u32 %v92, 4294901760
    %v184 = vsub.f32 %v92, %v183
    %v185 = vand.u32 %v184, 4294901760
    %v186 = vsub.f32 %v184, %v185
    %v187 = vand.u32 %v186, 4294901760
    %188 = vmatmul.mubr.f32.gmra.mrb[0].mxu0 %v187
    %v189 = vpop.f32.mrb[0].mxu0
    %v190 = vadd.f32 %v82, %v189
    %v191 = vpop.f32.mrb[0].mxu0
    %192 = vdwg.mxu0
    %193 = vmatprep.subr.mxu0 0.0
    %v194 = vand.u32 %v73, 4294901760
    %v195 = vsub.f32 %v73, %v194
    %v196 = vand.u32 %v195, 4294901760
    %v197 = vsub.f32 %v195, %v196
    %v198 = vand.u32 %v197, 4294901760
    %199 = vmatpush1.msra.mxu0 %v198
    %200 = vmatprep.subr.mxu0 0.0
    %v201 = vand.u32 %v74, 4294901760
    %v202 = vsub.f32 %v74, %v201
    %v203 = vand.u32 %v202, 4294901760
    %v204 = vsub.f32 %v202, %v203
    %v205 = vand.u32 %v204, 4294901760
    %206 = vmatpush1.msra.mxu0 %v205
    %207 = vmatprep.subr.mxu0 0.0
    %v208 = vand.u32 %v75, 4294901760
    %v209 = vsub.f32 %v75, %v208
    %v210 = vand.u32 %v209, 4294901760
    %v211 = vsub.f32 %v209, %v210
    %v212 = vand.u32 %v211, 4294901760
    %213 = vmatpush1.msra.mxu0 %v212
    %214 = vmatprep.subr.mxu0 0.0
    %v215 = vand.u32 %v76, 4294901760
    %v216 = vsub.f32 %v76, %v215
    %v217 = vand.u32 %v216, 4294901760
    %v218 = vsub.f32 %v216, %v217
    %v219 = vand.u32 %v218, 4294901760
    %220 = vmatpush1.msra.mxu0 %v219
    %221 = vmatprep.subr.mxu0 0.0
    %222 = vmatpush1.msra.mxu0 0.0
    %223 = vmatprep.subr.mxu0 0.0
    %224 = vmatpush1.msra.mxu0 0.0
    %225 = vmatprep.subr.mxu0 0.0
    %226 = vmatpush1.msra.mxu0 0.0
    %227 = vmatprep.subr.mxu0 0.0
    %228 = vmatpush1.msra.mxu0 0.0
    %229 = vmatprep.subr.mxu0 0.0
    %230 = vmatpush1.msra.mxu0 0.0
    %231 = vmatprep.subr.mxu0 0.0
    %232 = vmatpush1.msra.mxu0 0.0
    %233 = vmatprep.subr.mxu0 0.0
    %234 = vmatpush1.msra.mxu0 0.0
    %235 = vmatprep.subr.mxu0 0.0
    %236 = vmatpush1.msra.mxu0 0.0
    %237 = vmatprep.subr.mxu0 0.0
    %238 = vmatpush1.msra.mxu0 0.0
    %239 = vmatprep.subr.mxu0 0.0
    %240 = vmatpush1.msra.mxu0 0.0
    %241 = vmatprep.subr.mxu0 0.0
    %242 = vmatpush1.msra.mxu0 0.0
    %243 = vmatprep.subr.mxu0 0.0
    %244 = vmatpush1.msra.mxu0 0.0
    %245 = vmatprep.subr.mxu0 0.0
    %246 = vmatpush1.msra.mxu0 0.0
    %247 = vmatprep.subr.mxu0 0.0
    %248 = vmatpush1.msra.mxu0 0.0
    %249 = vmatprep.subr.mxu0 0.0
    %250 = vmatpush1.msra.mxu0 0.0
    %251 = vmatprep.subr.mxu0 0.0
    %252 = vmatpush1.msra.mxu0 0.0
    %253 = vmatprep.subr.mxu0 0.0
    %254 = vmatpush1.msra.mxu0 0.0
    %255 = vmatprep.subr.mxu0 0.0
    %256 = vmatpush1.msra.mxu0 0.0
    %257 = vmatprep.subr.mxu0 0.0
    %258 = vmatpush1.msra.mxu0 0.0
    %259 = vmatprep.subr.mxu0 0.0
    %260 = vmatpush1.msra.mxu0 0.0
    %261 = vmatprep.subr.mxu0 0.0
    %262 = vmatpush1.msra.mxu0 0.0
    %263 = vmatprep.subr.mxu0 0.0
    %264 = vmatpush1.msra.mxu0 0.0
    %265 = vmatprep.subr.mxu0 0.0
    %266 = vmatpush1.msra.mxu0 0.0
    %267 = vmatprep.subr.mxu0 0.0
    %268 = vmatpush1.msra.mxu0 0.0
    %269 = vmatprep.subr.mxu0 0.0
    %270 = vmatpush1.msra.mxu0 0.0
    %271 = vmatprep.subr.mxu0 0.0
    %272 = vmatpush1.msra.mxu0 0.0
    %273 = vmatprep.subr.mxu0 0.0
    %274 = vmatpush1.msra.mxu0 0.0
    %275 = vmatprep.subr.mxu0 0.0
    %276 = vmatpush1.msra.mxu0 0.0
    %277 = vmatprep.mubr.f32.mxu0 0.0
    %v278 = vand.u32 %v86, 4294901760
    %279 = vmatmul.mubr.f32.gmra.mrb[0].mxu0 %v278
    %v280 = vpop.f32.mrb[0].mxu0
    %v281 = vadd.f32 %v170, %v280
    %v282 = vpop.f32.mrb[0].mxu0
    %283 = vmatprep.mubr.f32.mxu0 0.0
    %v284 = vand.u32 %v89, 4294901760
    %285 = vmatmul.mubr.f32.gmra.mrb[0].mxu0 %v284
    %v286 = vpop.f32.mrb[0].mxu0
    %v287 = vadd.f32 %v180, %v286
    %v288 = vpop.f32.mrb[0].mxu0
    %289 = vmatprep.mubr.f32.mxu0 0.0
    %v290 = vand.u32 %v92, 4294901760
    %291 = vmatmul.mubr.f32.gmra.mrb[0].mxu0 %v290
    %v292 = vpop.f32.mrb[0].mxu0
    %v293 = vadd.f32 %v190, %v292
    %v294 = vpop.f32.mrb[0].mxu0
    %295 = vdwg.mxu0
    %296 = vmatprep.subr.mxu0 0.0
    %v297 = vand.u32 %v73, 4294901760
    %v298 = vsub.f32 %v73, %v297
    %299 = vmatpush1.msra.mxu0 %v298
    %300 = vmatprep.subr.mxu0 0.0
    %v301 = vand.u32 %v74, 4294901760
    %v302 = vsub.f32 %v74, %v301
    %303 = vmatpush1.msra.mxu0 %v302
    %304 = vmatprep.subr.mxu0 0.0
    %v305 = vand.u32 %v75, 4294901760
    %v306 = vsub.f32 %v75, %v305
    %307 = vmatpush1.msra.mxu0 %v306
    %308 = vmatprep.subr.mxu0 0.0
    %v309 = vand.u32 %v76, 4294901760
    %v310 = vsub.f32 %v76, %v309
    %311 = vmatpush1.msra.mxu0 %v310
    %312 = vmatprep.subr.mxu0 0.0
    %313 = vmatpush1.msra.mxu0 0.0
    %314 = vmatprep.subr.mxu0 0.0
    %315 = vmatpush1.msra.mxu0 0.0
    %316 = vmatprep.subr.mxu0 0.0
    %317 = vmatpush1.msra.mxu0 0.0
    %318 = vmatprep.subr.mxu0 0.0
    %319 = vmatpush1.msra.mxu0 0.0
    %320 = vmatprep.subr.mxu0 0.0
    %321 = vmatpush1.msra.mxu0 0.0
    %322 = vmatprep.subr.mxu0 0.0
    %323 = vmatpush1.msra.mxu0 0.0
    %324 = vmatprep.subr.mxu0 0.0
    %325 = vmatpush1.msra.mxu0 0.0
    %326 = vmatprep.subr.mxu0 0.0
    %327 = vmatpush1.msra.mxu0 0.0
    %328 = vmatprep.subr.mxu0 0.0
    %329 = vmatpush1.msra.mxu0 0.0
    %330 = vmatprep.subr.mxu0 0.0
    %331 = vmatpush1.msra.mxu0 0.0
    %332 = vmatprep.subr.mxu0 0.0
    %333 = vmatpush1.msra.mxu0 0.0
    %334 = vmatprep.subr.mxu0 0.0
    %335 = vmatpush1.msra.mxu0 0.0
    %336 = vmatprep.subr.mxu0 0.0
    %337 = vmatpush1.msra.mxu0 0.0
    %338 = vmatprep.subr.mxu0 0.0
    %339 = vmatpush1.msra.mxu0 0.0
    %340 = vmatprep.subr.mxu0 0.0
    %341 = vmatpush1.msra.mxu0 0.0
    %342 = vmatprep.subr.mxu0 0.0
    %343 = vmatpush1.msra.mxu0 0.0
    %344 = vmatprep.subr.mxu0 0.0
    %345 = vmatpush1.msra.mxu0 0.0
    %346 = vmatprep.subr.mxu0 0.0
    %347 = vmatpush1.msra.mxu0 0.0
    %348 = vmatprep.subr.mxu0 0.0
    %349 = vmatpush1.msra.mxu0 0.0
    %350 = vmatprep.subr.mxu0 0.0
    %351 = vmatpush1.msra.mxu0 0.0
    %352 = vmatprep.subr.mxu0 0.0
    %353 = vmatpush1.msra.mxu0 0.0
    %354 = vmatprep.subr.mxu0 0.0
    %355 = vmatpush1.msra.mxu0 0.0
    %356 = vmatprep.subr.mxu0 0.0
    %357 = vmatpush1.msra.mxu0 0.0
    %358 = vmatprep.subr.mxu0 0.0
    %359 = vmatpush1.msra.mxu0 0.0
    %360 = vmatprep.subr.mxu0 0.0
    %361 = vmatpush1.msra.mxu0 0.0
    %362 = vmatprep.subr.mxu0 0.0
    %363 = vmatpush1.msra.mxu0 0.0
    %364 = vmatprep.subr.mxu0 0.0
    %365 = vmatpush1.msra.mxu0 0.0
    %366 = vmatprep.subr.mxu0 0.0
    %367 = vmatpush1.msra.mxu0 0.0
    %368 = vmatprep.mubr.f32.mxu0 0.0
    %v369 = vand.u32 %v86, 4294901760
    %v370 = vsub.f32 %v86, %v369
    %371 = vmatmul.mubr.f32.gmra.mrb[0].mxu0 %v370
    %v372 = vpop.f32.mrb[0].mxu0
    %v373 = vadd.f32 %v281, %v372
    %v374 = vpop.f32.mrb[0].mxu0
    %375 = vmatprep.mubr.f32.mxu0 0.0
    %v376 = vand.u32 %v89, 4294901760
    %v377 = vsub.f32 %v89, %v376
    %378 = vmatmul.mubr.f32.gmra.mrb[0].mxu0 %v377
    %v379 = vpop.f32.mrb[0].mxu0
    %v380 = vadd.f32 %v287, %v379
    %v381 = vpop.f32.mrb[0].mxu0
    %382 = vmatprep.mubr.f32.mxu0 0.0
    %v383 = vand.u32 %v92, 4294901760
    %v384 = vsub.f32 %v92, %v383
    %385 = vmatmul.mubr.f32.gmra.mrb[0].mxu0 %v384
    %v386 = vpop.f32.mrb[0].mxu0
    %v387 = vadd.f32 %v293, %v386
    %v388 = vpop.f32.mrb[0].mxu0
    %389 = vdwg.mxu0
    %390 = vmatprep.subr.mxu0 0.0
    %v391 = vand.u32 %v73, 4294901760
    %392 = vmatpush1.msra.mxu0 %v391
    %393 = vmatprep.subr.mxu0 0.0
    %v394 = vand.u32 %v74, 4294901760
    %395 = vmatpush1.msra.mxu0 %v394
    %396 = vmatprep.subr.mxu0 0.0
    %v397 = vand.u32 %v75, 4294901760
    %398 = vmatpush1.msra.mxu0 %v397
    %399 = vmatprep.subr.mxu0 0.0
    %v400 = vand.u32 %v76, 4294901760
    %401 = vmatpush1.msra.mxu0 %v400
    %402 = vmatprep.subr.mxu0 0.0
    %403 = vmatpush1.msra.mxu0 0.0
    %404 = vmatprep.subr.mxu0 0.0
    %405 = vmatpush1.msra.mxu0 0.0
    %406 = vmatprep.subr.mxu0 0.0
    %407 = vmatpush1.msra.mxu0 0.0
    %408 = vmatprep.subr.mxu0 0.0
    %409 = vmatpush1.msra.mxu0 0.0
    %410 = vmatprep.subr.mxu0 0.0
    %411 = vmatpush1.msra.mxu0 0.0
    %412 = vmatprep.subr.mxu0 0.0
    %413 = vmatpush1.msra.mxu0 0.0
    %414 = vmatprep.subr.mxu0 0.0
    %415 = vmatpush1.msra.mxu0 0.0
    %416 = vmatprep.subr.mxu0 0.0
    %417 = vmatpush1.msra.mxu0 0.0
    %418 = vmatprep.subr.mxu0 0.0
    %419 = vmatpush1.msra.mxu0 0.0
    %420 = vmatprep.subr.mxu0 0.0
    %421 = vmatpush1.msra.mxu0 0.0
    %422 = vmatprep.subr.mxu0 0.0
    %423 = vmatpush1.msra.mxu0 0.0
    %424 = vmatprep.subr.mxu0 0.0
    %425 = vmatpush1.msra.mxu0 0.0
    %426 = vmatprep.subr.mxu0 0.0
    %427 = vmatpush1.msra.mxu0 0.0
    %428 = vmatprep.subr.mxu0 0.0
    %429 = vmatpush1.msra.mxu0 0.0
    %430 = vmatprep.subr.mxu0 0.0
    %431 = vmatpush1.msra.mxu0 0.0
    %432 = vmatprep.subr.mxu0 0.0
    %433 = vmatpush1.msra.mxu0 0.0
    %434 = vmatprep.subr.mxu0 0.0
    %435 = vmatpush1.msra.mxu0 0.0
    %436 = vmatprep.subr.mxu0 0.0
    %437 = vmatpush1.msra.mxu0 0.0
    %438 = vmatprep.subr.mxu0 0.0
    %439 = vmatpush1.msra.mxu0 0.0
    %440 = vmatprep.subr.mxu0 0.0
    %441 = vmatpush1.msra.mxu0 0.0
    %442 = vmatprep.subr.mxu0 0.0
    %443 = vmatpush1.msra.mxu0 0.0
    %444 = vmatprep.subr.mxu0 0.0
    %445 = vmatpush1.msra.mxu0 0.0
    %446 = vmatprep.subr.mxu0 0.0
    %447 = vmatpush1.msra.mxu0 0.0
    %448 = vmatprep.subr.mxu0 0.0
    %449 = vmatpush1.msra.mxu0 0.0
    %450 = vmatprep.subr.mxu0 0.0
    %451 = vmatpush1.msra.mxu0 0.0
    %452 = vmatprep.subr.mxu0 0.0
    %453 = vmatpush1.msra.mxu0 0.0
    %454 = vmatprep.subr.mxu0 0.0
    %455 = vmatpush1.msra.mxu0 0.0
    %456 = vmatprep.subr.mxu0 0.0
    %457 = vmatpush1.msra.mxu0 0.0
    %458 = vmatprep.mubr.f32.mxu0 0.0
    %v459 = vand.u32 %v86, 4294901760
    %v460 = vsub.f32 %v86, %v459
    %v461 = vand.u32 %v460, 4294901760
    %462 = vmatmul.mubr.f32.gmra.mrb[0].mxu0 %v461
    %v463 = vpop.f32.mrb[0].mxu0
    %v464 = vadd.f32 %v373, %v463
    %v465 = vpop.f32.mrb[0].mxu0
    %466 = vmatprep.mubr.f32.mxu0 0.0
    %v467 = vand.u32 %v89, 4294901760
    %v468 = vsub.f32 %v89, %v467
    %v469 = vand.u32 %v468, 4294901760
    %470 = vmatmul.mubr.f32.gmra.mrb[0].mxu0 %v469
    %v471 = vpop.f32.mrb[0].mxu0
    %v472 = vadd.f32 %v380, %v471
    %v473 = vpop.f32.mrb[0].mxu0
    %474 = vmatprep.mubr.f32.mxu0 0.0
    %v475 = vand.u32 %v92, 4294901760
    %v476 = vsub.f32 %v92, %v475
    %v477 = vand.u32 %v476, 4294901760
    %478 = vmatmul.mubr.f32.gmra.mrb[0].mxu0 %v477
    %v479 = vpop.f32.mrb[0].mxu0
    %v480 = vadd.f32 %v387, %v479
    %v481 = vpop.f32.mrb[0].mxu0
    %482 = vdwg.mxu0
    %483 = vmatprep.subr.mxu0 0.0
    %v484 = vand.u32 %v73, 4294901760
    %v485 = vsub.f32 %v73, %v484
    %v486 = vand.u32 %v485, 4294901760
    %487 = vmatpush1.msra.mxu0 %v486
    %488 = vmatprep.subr.mxu0 0.0
    %v489 = vand.u32 %v74, 4294901760
    %v490 = vsub.f32 %v74, %v489
    %v491 = vand.u32 %v490, 4294901760
    %492 = vmatpush1.msra.mxu0 %v491
    %493 = vmatprep.subr.mxu0 0.0
    %v494 = vand.u32 %v75, 4294901760
    %v495 = vsub.f32 %v75, %v494
    %v496 = vand.u32 %v495, 4294901760
    %497 = vmatpush1.msra.mxu0 %v496
    %498 = vmatprep.subr.mxu0 0.0
    %v499 = vand.u32 %v76, 4294901760
    %v500 = vsub.f32 %v76, %v499
    %v501 = vand.u32 %v500, 4294901760
    %502 = vmatpush1.msra.mxu0 %v501
    %503 = vmatprep.subr.mxu0 0.0
    %504 = vmatpush1.msra.mxu0 0.0
    %505 = vmatprep.subr.mxu0 0.0
    %506 = vmatpush1.msra.mxu0 0.0
    %507 = vmatprep.subr.mxu0 0.0
    %508 = vmatpush1.msra.mxu0 0.0
    %509 = vmatprep.subr.mxu0 0.0
    %510 = vmatpush1.msra.mxu0 0.0
    %511 = vmatprep.subr.mxu0 0.0
    %512 = vmatpush1.msra.mxu0 0.0
    %513 = vmatprep.subr.mxu0 0.0
    %514 = vmatpush1.msra.mxu0 0.0
    %515 = vmatprep.subr.mxu0 0.0
    %516 = vmatpush1.msra.mxu0 0.0
    %517 = vmatprep.subr.mxu0 0.0
    %518 = vmatpush1.msra.mxu0 0.0
    %519 = vmatprep.subr.mxu0 0.0
    %520 = vmatpush1.msra.mxu0 0.0
    %521 = vmatprep.subr.mxu0 0.0
    %522 = vmatpush1.msra.mxu0 0.0
    %523 = vmatprep.subr.mxu0 0.0
    %524 = vmatpush1.msra.mxu0 0.0
    %525 = vmatprep.subr.mxu0 0.0
    %526 = vmatpush1.msra.mxu0 0.0
    %527 = vmatprep.subr.mxu0 0.0
    %528 = vmatpush1.msra.mxu0 0.0
    %529 = vmatprep.subr.mxu0 0.0
    %530 = vmatpush1.msra.mxu0 0.0
    %531 = vmatprep.subr.mxu0 0.0
    %532 = vmatpush1.msra.mxu0 0.0
    %533 = vmatprep.subr.mxu0 0.0
    %534 = vmatpush1.msra.mxu0 0.0
    %535 = vmatprep.subr.mxu0 0.0
    %536 = vmatpush1.msra.mxu0 0.0
    %537 = vmatprep.subr.mxu0 0.0
    %538 = vmatpush1.msra.mxu0 0.0
    %539 = vmatprep.subr.mxu0 0.0
    %540 = vmatpush1.msra.mxu0 0.0
    %541 = vmatprep.subr.mxu0 0.0
    %542 = vmatpush1.msra.mxu0 0.0
    %543 = vmatprep.subr.mxu0 0.0
    %544 = vmatpush1.msra.mxu0 0.0
    %545 = vmatprep.subr.mxu0 0.0
    %546 = vmatpush1.msra.mxu0 0.0
    %547 = vmatprep.subr.mxu0 0.0
    %548 = vmatpush1.msra.mxu0 0.0
    %549 = vmatprep.subr.mxu0 0.0
    %550 = vmatpush1.msra.mxu0 0.0
    %551 = vmatprep.subr.mxu0 0.0
    %552 = vmatpush1.msra.mxu0 0.0
    %553 = vmatprep.subr.mxu0 0.0
    %554 = vmatpush1.msra.mxu0 0.0
    %555 = vmatprep.subr.mxu0 0.0
    %556 = vmatpush1.msra.mxu0 0.0
    %557 = vmatprep.subr.mxu0 0.0
    %558 = vmatpush1.msra.mxu0 0.0
    %559 = vmatprep.mubr.f32.mxu0 0.0
    %v560 = vand.u32 %v86, 4294901760
    %561 = vmatmul.mubr.f32.gmra.mrb[0].mxu0 %v560
    %v562 = vpop.f32.mrb[0].mxu0
    %v563 = vadd.f32 %v464, %v562
    %v564 = vpop.f32.mrb[0].mxu0
    %565 = vmatprep.mubr.f32.mxu0 0.0
    %v566 = vand.u32 %v89, 4294901760
    %567 = vmatmul.mubr.f32.gmra.mrb[0].mxu0 %v566
    %v568 = vpop.f32.mrb[0].mxu0
    %v569 = vadd.f32 %v472, %v568
    %v570 = vpop.f32.mrb[0].mxu0
    %571 = vmatprep.mubr.f32.mxu0 0.0
    %v572 = vand.u32 %v92, 4294901760
    %573 = vmatmul.mubr.f32.gmra.mrb[0].mxu0 %v572
    %v574 = vpop.f32.mrb[0].mxu0
    %v575 = vadd.f32 %v480, %v574
    %v576 = vpop.f32.mrb[0].mxu0
    %577 = vdwg.mxu0
    %578 = vmatprep.subr.mxu0 0.0
    %v579 = vand.u32 %v73, 4294901760
    %580 = vmatpush1.msra.mxu0 %v579
    %581 = vmatprep.subr.mxu0 0.0
    %v582 = vand.u32 %v74, 4294901760
    %583 = vmatpush1.msra.mxu0 %v582
    %584 = vmatprep.subr.mxu0 0.0
    %v585 = vand.u32 %v75, 4294901760
    %586 = vmatpush1.msra.mxu0 %v585
    %587 = vmatprep.subr.mxu0 0.0
    %v588 = vand.u32 %v76, 4294901760
    %589 = vmatpush1.msra.mxu0 %v588
    %590 = vmatprep.subr.mxu0 0.0
    %591 = vmatpush1.msra.mxu0 0.0
    %592 = vmatprep.subr.mxu0 0.0
    %593 = vmatpush1.msra.mxu0 0.0
    %594 = vmatprep.subr.mxu0 0.0
    %595 = vmatpush1.msra.mxu0 0.0
    %596 = vmatprep.subr.mxu0 0.0
    %597 = vmatpush1.msra.mxu0 0.0
    %598 = vmatprep.subr.mxu0 0.0
    %599 = vmatpush1.msra.mxu0 0.0
    %600 = vmatprep.subr.mxu0 0.0
    %601 = vmatpush1.msra.mxu0 0.0
    %602 = vmatprep.subr.mxu0 0.0
    %603 = vmatpush1.msra.mxu0 0.0
    %604 = vmatprep.subr.mxu0 0.0
    %605 = vmatpush1.msra.mxu0 0.0
    %606 = vmatprep.subr.mxu0 0.0
    %607 = vmatpush1.msra.mxu0 0.0
    %608 = vmatprep.subr.mxu0 0.0
    %609 = vmatpush1.msra.mxu0 0.0
    %610 = vmatprep.subr.mxu0 0.0
    %611 = vmatpush1.msra.mxu0 0.0
    %612 = vmatprep.subr.mxu0 0.0
    %613 = vmatpush1.msra.mxu0 0.0
    %614 = vmatprep.subr.mxu0 0.0
    %615 = vmatpush1.msra.mxu0 0.0
    %616 = vmatprep.subr.mxu0 0.0
    %617 = vmatpush1.msra.mxu0 0.0
    %618 = vmatprep.subr.mxu0 0.0
    %619 = vmatpush1.msra.mxu0 0.0
    %620 = vmatprep.subr.mxu0 0.0
    %621 = vmatpush1.msra.mxu0 0.0
    %622 = vmatprep.subr.mxu0 0.0
    %623 = vmatpush1.msra.mxu0 0.0
    %624 = vmatprep.subr.mxu0 0.0
    %625 = vmatpush1.msra.mxu0 0.0
    %626 = vmatprep.subr.mxu0 0.0
    %627 = vmatpush1.msra.mxu0 0.0
    %628 = vmatprep.subr.mxu0 0.0
    %629 = vmatpush1.msra.mxu0 0.0
    %630 = vmatprep.subr.mxu0 0.0
    %631 = vmatpush1.msra.mxu0 0.0
    %632 = vmatprep.subr.mxu0 0.0
    %633 = vmatpush1.msra.mxu0 0.0
    %634 = vmatprep.subr.mxu0 0.0
    %635 = vmatpush1.msra.mxu0 0.0
    %636 = vmatprep.subr.mxu0 0.0
    %637 = vmatpush1.msra.mxu0 0.0
    %638 = vmatprep.subr.mxu0 0.0
    %639 = vmatpush1.msra.mxu0 0.0
    %640 = vmatprep.subr.mxu0 0.0
    %641 = vmatpush1.msra.mxu0 0.0
    %642 = vmatprep.subr.mxu0 0.0
    %643 = vmatpush1.msra.mxu0 0.0
    %644 = vmatprep.subr.mxu0 0.0
    %645 = vmatpush1.msra.mxu0 0.0
    %646 = vmatprep.mubr.f32.mxu0 0.0
    %v647 = vand.u32 %v86, 4294901760
    %648 = vmatmul.mubr.f32.gmra.mrb[0].mxu0 %v647
    %v649 = vpop.f32.mrb[0].mxu0
    %v650 = vadd.f32 %v563, %v649
    %v651 = vpop.f32.mrb[0].mxu0
    %652 = vmatprep.mubr.f32.mxu0 0.0
    %v653 = vand.u32 %v89, 4294901760
    %654 = vmatmul.mubr.f32.gmra.mrb[0].mxu0 %v653
    %v655 = vpop.f32.mrb[0].mxu0
    %v656 = vadd.f32 %v569, %v655
    %v657 = vpop.f32.mrb[0].mxu0
    %658 = vmatprep.mubr.f32.mxu0 0.0
    %v659 = vand.u32 %v92, 4294901760
    %660 = vmatmul.mubr.f32.gmra.mrb[0].mxu0 %v659
    %v661 = vpop.f32.mrb[0].mxu0
    %v662 = vadd.f32 %v575, %v661
    %v663 = vpop.f32.mrb[0].mxu0
    %664 = vdwg.mxu0
    %v665 = vtanh.pop %v650
    %v666 = vtanh.pop %v656
    %v667 = vtanh.pop %v662
    %v668 = vld [vmem:[#allocation8] sm:$0xff]
    %v669 = vld [vmem:[#allocation8 + $0x8] sm:$0xff]
    %v670 = vld [vmem:[#allocation8 + $0x10] sm:$0xff]
    %v671 = vld [vmem:[#allocation8 + $0x18] sm:$0xff]
    %v673 = vsel %vm84, %v665, 0
    %v676 = vsel %vm84, %v666, 0
    %v679 = vsel %vm84, %v667, 0
    %681 = vmatprep.subr.mxu0 0.0
    %v682 = vand.u32 %v668, 4294901760
    %683 = vmatpush1.msra.mxu0 %v682
    %684 = vmatprep.subr.mxu0 0.0
    %v685 = vand.u32 %v669, 4294901760
    %686 = vmatpush1.msra.mxu0 %v685
    %687 = vmatprep.subr.mxu0 0.0
    %v688 = vand.u32 %v670, 4294901760
    %689 = vmatpush1.msra.mxu0 %v688
    %690 = vmatprep.subr.mxu0 0.0
    %v691 = vand.u32 %v671, 4294901760
    %692 = vmatpush1.msra.mxu0 %v691
    %693 = vmatprep.subr.mxu0 0.0
    %694 = vmatpush1.msra.mxu0 0.0
    %695 = vmatprep.subr.mxu0 0.0
    %696 = vmatpush1.msra.mxu0 0.0
    %697 = vmatprep.subr.mxu0 0.0
    %698 = vmatpush1.msra.mxu0 0.0
    %699 = vmatprep.subr.mxu0 0.0
    %700 = vmatpush1.msra.mxu0 0.0
    %701 = vmatprep.subr.mxu0 0.0
    %702 = vmatpush1.msra.mxu0 0.0
    %703 = vmatprep.subr.mxu0 0.0
    %704 = vmatpush1.msra.mxu0 0.0
    %705 = vmatprep.subr.mxu0 0.0
    %706 = vmatpush1.msra.mxu0 0.0
    %707 = vmatprep.subr.mxu0 0.0
    %708 = vmatpush1.msra.mxu0 0.0
    %709 = vmatprep.subr.mxu0 0.0
    %710 = vmatpush1.msra.mxu0 0.0
    %711 = vmatprep.subr.mxu0 0.0
    %712 = vmatpush1.msra.mxu0 0.0
    %713 = vmatprep.subr.mxu0 0.0
    %714 = vmatpush1.msra.mxu0 0.0
    %715 = vmatprep.subr.mxu0 0.0
    %716 = vmatpush1.msra.mxu0 0.0
    %717 = vmatprep.subr.mxu0 0.0
    %718 = vmatpush1.msra.mxu0 0.0
    %719 = vmatprep.subr.mxu0 0.0
    %720 = vmatpush1.msra.mxu0 0.0
    %721 = vmatprep.subr.mxu0 0.0
    %722 = vmatpush1.msra.mxu0 0.0
    %723 = vmatprep.subr.mxu0 0.0
    %724 = vmatpush1.msra.mxu0 0.0
    %725 = vmatprep.subr.mxu0 0.0
    %726 = vmatpush1.msra.mxu0 0.0
    %727 = vmatprep.subr.mxu0 0.0
    %728 = vmatpush1.msra.mxu0 0.0
    %729 = vmatprep.subr.mxu0 0.0
    %730 = vmatpush1.msra.mxu0 0.0
    %731 = vmatprep.subr.mxu0 0.0
    %732 = vmatpush1.msra.mxu0 0.0
    %733 = vmatprep.subr.mxu0 0.0
    %734 = vmatpush1.msra.mxu0 0.0
    %735 = vmatprep.subr.mxu0 0.0
    %736 = vmatpush1.msra.mxu0 0.0
    %737 = vmatprep.subr.mxu0 0.0
    %738 = vmatpush1.msra.mxu0 0.0
    %739 = vmatprep.subr.mxu0 0.0
    %740 = vmatpush1.msra.mxu0 0.0
    %741 = vmatprep.subr.mxu0 0.0
    %742 = vmatpush1.msra.mxu0 0.0
    %743 = vmatprep.subr.mxu0 0.0
    %744 = vmatpush1.msra.mxu0 0.0
    %745 = vmatprep.subr.mxu0 0.0
    %746 = vmatpush1.msra.mxu0 0.0
    %747 = vmatprep.subr.mxu0 0.0
    %748 = vmatpush1.msra.mxu0 0.0
    %749 = vmatprep.mubr.f32.mxu0 0.0
    %v750 = vand.u32 %v673, 4294901760
    %v751 = vsub.f32 %v673, %v750
    %v752 = vand.u32 %v751, 4294901760
    %v753 = vsub.f32 %v751, %v752
    %v754 = vand.u32 %v753, 4294901760
    %755 = vmatmul.mubr.f32.gmra.mrb[0].mxu0 %v754
    %v756 = vpop.f32.mrb[0].mxu0
    %v757 = vadd.f32 0.0, %v756
    %v758 = vpop.f32.mrb[0].mxu0
    %759 = vmatprep.mubr.f32.mxu0 0.0
    %v760 = vand.u32 %v676, 4294901760
    %v761 = vsub.f32 %v676, %v760
    %v762 = vand.u32 %v761, 4294901760
    %v763 = vsub.f32 %v761, %v762
    %v764 = vand.u32 %v763, 4294901760
    %765 = vmatmul.mubr.f32.gmra.mrb[0].mxu0 %v764
    %v766 = vpop.f32.mrb[0].mxu0
    %v767 = vadd.f32 0.0, %v766
    %v768 = vpop.f32.mrb[0].mxu0
    %769 = vmatprep.mubr.f32.mxu0 0.0
    %v770 = vand.u32 %v679, 4294901760
    %v771 = vsub.f32 %v679, %v770
    %v772 = vand.u32 %v771, 4294901760
    %v773 = vsub.f32 %v771, %v772
    %v774 = vand.u32 %v773, 4294901760
    %775 = vmatmul.mubr.f32.gmra.mrb[0].mxu0 %v774
    %v776 = vpop.f32.mrb[0].mxu0
    %v777 = vadd.f32 0.0, %v776
    %v778 = vpop.f32.mrb[0].mxu0
    %779 = vdwg.mxu0
    %780 = vmatprep.subr.mxu0 0.0
    %v781 = vand.u32 %v668, 4294901760
    %v782 = vsub.f32 %v668, %v781
    %v783 = vand.u32 %v782, 4294901760
    %v784 = vsub.f32 %v782, %v783
    %v785 = vand.u32 %v784, 4294901760
    %786 = vmatpush1.msra.mxu0 %v785
    %787 = vmatprep.subr.mxu0 0.0
    %v788 = vand.u32 %v669, 4294901760
    %v789 = vsub.f32 %v669, %v788
    %v790 = vand.u32 %v789, 4294901760
    %v791 = vsub.f32 %v789, %v790
    %v792 = vand.u32 %v791, 4294901760
    %793 = vmatpush1.msra.mxu0 %v792
    %794 = vmatprep.subr.mxu0 0.0
    %v795 = vand.u32 %v670, 4294901760
    %v796 = vsub.f32 %v670, %v795
    %v797 = vand.u32 %v796, 4294901760
    %v798 = vsub.f32 %v796, %v797
    %v799 = vand.u32 %v798, 4294901760
    %800 = vmatpush1.msra.mxu0 %v799
    %801 = vmatprep.subr.mxu0 0.0
    %v802 = vand.u32 %v671, 4294901760
    %v803 = vsub.f32 %v671, %v802
    %v804 = vand.u32 %v803, 4294901760
    %v805 = vsub.f32 %v803, %v804
    %v806 = vand.u32 %v805, 4294901760
    %807 = vmatpush1.msra.mxu0 %v806
    %808 = vmatprep.subr.mxu0 0.0
    %809 = vmatpush1.msra.mxu0 0.0
    %810 = vmatprep.subr.mxu0 0.0
    %811 = vmatpush1.msra.mxu0 0.0
    %812 = vmatprep.subr.mxu0 0.0
    %813 = vmatpush1.msra.mxu0 0.0
    %814 = vmatprep.subr.mxu0 0.0
    %815 = vmatpush1.msra.mxu0 0.0
    %816 = vmatprep.subr.mxu0 0.0
    %817 = vmatpush1.msra.mxu0 0.0
    %818 = vmatprep.subr.mxu0 0.0
    %819 = vmatpush1.msra.mxu0 0.0
    %820 = vmatprep.subr.mxu0 0.0
    %821 = vmatpush1.msra.mxu0 0.0
    %822 = vmatprep.subr.mxu0 0.0
    %823 = vmatpush1.msra.mxu0 0.0
    %824 = vmatprep.subr.mxu0 0.0
    %825 = vmatpush1.msra.mxu0 0.0
    %826 = vmatprep.subr.mxu0 0.0
    %827 = vmatpush1.msra.mxu0 0.0
    %828 = vmatprep.subr.mxu0 0.0
    %829 = vmatpush1.msra.mxu0 0.0
    %830 = vmatprep.subr.mxu0 0.0
    %831 = vmatpush1.msra.mxu0 0.0
    %832 = vmatprep.subr.mxu0 0.0
    %833 = vmatpush1.msra.mxu0 0.0
    %834 = vmatprep.subr.mxu0 0.0
    %835 = vmatpush1.msra.mxu0 0.0
    %836 = vmatprep.subr.mxu0 0.0
    %837 = vmatpush1.msra.mxu0 0.0
    %838 = vmatprep.subr.mxu0 0.0
    %839 = vmatpush1.msra.mxu0 0.0
    %840 = vmatprep.subr.mxu0 0.0
    %841 = vmatpush1.msra.mxu0 0.0
    %842 = vmatprep.subr.mxu0 0.0
    %843 = vmatpush1.msra.mxu0 0.0
    %844 = vmatprep.subr.mxu0 0.0
    %845 = vmatpush1.msra.mxu0 0.0
    %846 = vmatprep.subr.mxu0 0.0
    %847 = vmatpush1.msra.mxu0 0.0
    %848 = vmatprep.subr.mxu0 0.0
    %849 = vmatpush1.msra.mxu0 0.0
    %850 = vmatprep.subr.mxu0 0.0
    %851 = vmatpush1.msra.mxu0 0.0
    %852 = vmatprep.subr.mxu0 0.0
    %853 = vmatpush1.msra.mxu0 0.0
    %854 = vmatprep.subr.mxu0 0.0
    %855 = vmatpush1.msra.mxu0 0.0
    %856 = vmatprep.subr.mxu0 0.0
    %857 = vmatpush1.msra.mxu0 0.0
    %858 = vmatprep.subr.mxu0 0.0
    %859 = vmatpush1.msra.mxu0 0.0
    %860 = vmatprep.subr.mxu0 0.0
    %861 = vmatpush1.msra.mxu0 0.0
    %862 = vmatprep.subr.mxu0 0.0
    %863 = vmatpush1.msra.mxu0 0.0
    %864 = vmatprep.mubr.f32.mxu0 0.0
    %v865 = vand.u32 %v673, 4294901760
    %866 = vmatmul.mubr.f32.gmra.mrb[0].mxu0 %v865
    %v867 = vpop.f32.mrb[0].mxu0
    %v868 = vadd.f32 %v757, %v867
    %v869 = vpop.f32.mrb[0].mxu0
    %870 = vmatprep.mubr.f32.mxu0 0.0
    %v871 = vand.u32 %v676, 4294901760
    %872 = vmatmul.mubr.f32.gmra.mrb[0].mxu0 %v871
    %v873 = vpop.f32.mrb[0].mxu0
    %v874 = vadd.f32 %v767, %v873
    %v875 = vpop.f32.mrb[0].mxu0
    %876 = vmatprep.mubr.f32.mxu0 0.0
    %v877 = vand.u32 %v679, 4294901760
    %878 = vmatmul.mubr.f32.gmra.mrb[0].mxu0 %v877
    %v879 = vpop.f32.mrb[0].mxu0
    %v880 = vadd.f32 %v777, %v879
    %v881 = vpop.f32.mrb[0].mxu0
    %882 = vdwg.mxu0
    %883 = vmatprep.subr.mxu0 0.0
    %v884 = vand.u32 %v668, 4294901760
    %v885 = vsub.f32 %v668, %v884
    %886 = vmatpush1.msra.mxu0 %v885
    %887 = vmatprep.subr.mxu0 0.0
    %v888 = vand.u32 %v669, 4294901760
    %v889 = vsub.f32 %v669, %v888
    %890 = vmatpush1.msra.mxu0 %v889
    %891 = vmatprep.subr.mxu0 0.0
    %v892 = vand.u32 %v670, 4294901760
    %v893 = vsub.f32 %v670, %v892
    %894 = vmatpush1.msra.mxu0 %v893
    %895 = vmatprep.subr.mxu0 0.0
    %v896 = vand.u32 %v671, 4294901760
    %v897 = vsub.f32 %v671, %v896
    %898 = vmatpush1.msra.mxu0 %v897
    %899 = vmatprep.subr.mxu0 0.0
    %900 = vmatpush1.msra.mxu0 0.0
    %901 = vmatprep.subr.mxu0 0.0
    %902 = vmatpush1.msra.mxu0 0.0
    %903 = vmatprep.subr.mxu0 0.0
    %904 = vmatpush1.msra.mxu0 0.0
    %905 = vmatprep.subr.mxu0 0.0
    %906 = vmatpush1.msra.mxu0 0.0
    %907 = vmatprep.subr.mxu0 0.0
    %908 = vmatpush1.msra.mxu0 0.0
    %909 = vmatprep.subr.mxu0 0.0
    %910 = vmatpush1.msra.mxu0 0.0
    %911 = vmatprep.subr.mxu0 0.0
    %912 = vmatpush1.msra.mxu0 0.0
    %913 = vmatprep.subr.mxu0 0.0
    %914 = vmatpush1.msra.mxu0 0.0
    %915 = vmatprep.subr.mxu0 0.0
    %916 = vmatpush1.msra.mxu0 0.0
    %917 = vmatprep.subr.mxu0 0.0
    %918 = vmatpush1.msra.mxu0 0.0
    %919 = vmatprep.subr.mxu0 0.0
    %920 = vmatpush1.msra.mxu0 0.0
    %921 = vmatprep.subr.mxu0 0.0
    %922 = vmatpush1.msra.mxu0 0.0
    %923 = vmatprep.subr.mxu0 0.0
    %924 = vmatpush1.msra.mxu0 0.0
    %925 = vmatprep.subr.mxu0 0.0
    %926 = vmatpush1.msra.mxu0 0.0
    %927 = vmatprep.subr.mxu0 0.0
    %928 = vmatpush1.msra.mxu0 0.0
    %929 = vmatprep.subr.mxu0 0.0
    %930 = vmatpush1.msra.mxu0 0.0
    %931 = vmatprep.subr.mxu0 0.0
    %932 = vmatpush1.msra.mxu0 0.0
    %933 = vmatprep.subr.mxu0 0.0
    %934 = vmatpush1.msra.mxu0 0.0
    %935 = vmatprep.subr.mxu0 0.0
    %936 = vmatpush1.msra.mxu0 0.0
    %937 = vmatprep.subr.mxu0 0.0
    %938 = vmatpush1.msra.mxu0 0.0
    %939 = vmatprep.subr.mxu0 0.0
    %940 = vmatpush1.msra.mxu0 0.0
    %941 = vmatprep.subr.mxu0 0.0
    %942 = vmatpush1.msra.mxu0 0.0
    %943 = vmatprep.subr.mxu0 0.0
    %944 = vmatpush1.msra.mxu0 0.0
    %945 = vmatprep.subr.mxu0 0.0
    %946 = vmatpush1.msra.mxu0 0.0
    %947 = vmatprep.subr.mxu0 0.0
    %948 = vmatpush1.msra.mxu0 0.0
    %949 = vmatprep.subr.mxu0 0.0
    %950 = vmatpush1.msra.mxu0 0.0
    %951 = vmatprep.subr.mxu0 0.0
    %952 = vmatpush1.msra.mxu0 0.0
    %953 = vmatprep.subr.mxu0 0.0
    %954 = vmatpush1.msra.mxu0 0.0
    %955 = vmatprep.mubr.f32.mxu0 0.0
    %v956 = vand.u32 %v673, 4294901760
    %v957 = vsub.f32 %v673, %v956
    %958 = vmatmul.mubr.f32.gmra.mrb[0].mxu0 %v957
    %v959 = vpop.f32.mrb[0].mxu0
    %v960 = vadd.f32 %v868, %v959
    %v961 = vpop.f32.mrb[0].mxu0
    %962 = vmatprep.mubr.f32.mxu0 0.0
    %v963 = vand.u32 %v676, 4294901760
    %v964 = vsub.f32 %v676, %v963
    %965 = vmatmul.mubr.f32.gmra.mrb[0].mxu0 %v964
    %v966 = vpop.f32.mrb[0].mxu0
    %v967 = vadd.f32 %v874, %v966
    %v968 = vpop.f32.mrb[0].mxu0
    %969 = vmatprep.mubr.f32.mxu0 0.0
    %v970 = vand.u32 %v679, 4294901760
    %v971 = vsub.f32 %v679, %v970
    %972 = vmatmul.mubr.f32.gmra.mrb[0].mxu0 %v971
    %v973 = vpop.f32.mrb[0].mxu0
    %v974 = vadd.f32 %v880, %v973
    %v975 = vpop.f32.mrb[0].mxu0
    %976 = vdwg.mxu0
    %977 = vmatprep.subr.mxu0 0.0
    %v978 = vand.u32 %v668, 4294901760
    %979 = vmatpush1.msra.mxu0 %v978
    %980 = vmatprep.subr.mxu0 0.0
    %v981 = vand.u32 %v669, 4294901760
    %982 = vmatpush1.msra.mxu0 %v981
    %983 = vmatprep.subr.mxu0 0.0
    %v984 = vand.u32 %v670, 4294901760
    %985 = vmatpush1.msra.mxu0 %v984
    %986 = vmatprep.subr.mxu0 0.0
    %v987 = vand.u32 %v671, 4294901760
    %988 = vmatpush1.msra.mxu0 %v987
    %989 = vmatprep.subr.mxu0 0.0
    %990 = vmatpush1.msra.mxu0 0.0
    %991 = vmatprep.subr.mxu0 0.0
    %992 = vmatpush1.msra.mxu0 0.0
    %993 = vmatprep.subr.mxu0 0.0
    %994 = vmatpush1.msra.mxu0 0.0
    %995 = vmatprep.subr.mxu0 0.0
    %996 = vmatpush1.msra.mxu0 0.0
    %997 = vmatprep.subr.mxu0 0.0
    %998 = vmatpush1.msra.mxu0 0.0
    %999 = vmatprep.subr.mxu0 0.0
    %1000 = vmatpush1.msra.mxu0 0.0
    %1001 = vmatprep.subr.mxu0 0.0
    %1002 = vmatpush1.msra.mxu0 0.0
    %1003 = vmatprep.subr.mxu0 0.0
    %1004 = vmatpush1.msra.mxu0 0.0
    %1005 = vmatprep.subr.mxu0 0.0
    %1006 = vmatpush1.msra.mxu0 0.0
    %1007 = vmatprep.subr.mxu0 0.0
    %1008 = vmatpush1.msra.mxu0 0.0
    %1009 = vmatprep.subr.mxu0 0.0
    %1010 = vmatpush1.msra.mxu0 0.0
    %1011 = vmatprep.subr.mxu0 0.0
    %1012 = vmatpush1.msra.mxu0 0.0
    %1013 = vmatprep.subr.mxu0 0.0
    %1014 = vmatpush1.msra.mxu0 0.0
    %1015 = vmatprep.subr.mxu0 0.0
    %1016 = vmatpush1.msra.mxu0 0.0
    %1017 = vmatprep.subr.mxu0 0.0
    %1018 = vmatpush1.msra.mxu0 0.0
    %1019 = vmatprep.subr.mxu0 0.0
    %1020 = vmatpush1.msra.mxu0 0.0
    %1021 = vmatprep.subr.mxu0 0.0
    %1022 = vmatpush1.msra.mxu0 0.0
    %1023 = vmatprep.subr.mxu0 0.0
    %1024 = vmatpush1.msra.mxu0 0.0
    %1025 = vmatprep.subr.mxu0 0.0
    %1026 = vmatpush1.msra.mxu0 0.0
    %1027 = vmatprep.subr.mxu0 0.0
    %1028 = vmatpush1.msra.mxu0 0.0
    %1029 = vmatprep.subr.mxu0 0.0
    %1030 = vmatpush1.msra.mxu0 0.0
    %1031 = vmatprep.subr.mxu0 0.0
    %1032 = vmatpush1.msra.mxu0 0.0
    %1033 = vmatprep.subr.mxu0 0.0
    %1034 = vmatpush1.msra.mxu0 0.0
    %1035 = vmatprep.subr.mxu0 0.0
    %1036 = vmatpush1.msra.mxu0 0.0
    %1037 = vmatprep.subr.mxu0 0.0
    %1038 = vmatpush1.msra.mxu0 0.0
    %1039 = vmatprep.subr.mxu0 0.0
    %1040 = vmatpush1.msra.mxu0 0.0
    %1041 = vmatprep.subr.mxu0 0.0
    %1042 = vmatpush1.msra.mxu0 0.0
    %1043 = vmatprep.subr.mxu0 0.0
    %1044 = vmatpush1.msra.mxu0 0.0
    %1045 = vmatprep.mubr.f32.mxu0 0.0
    %v1046 = vand.u32 %v673, 4294901760
    %v1047 = vsub.f32 %v673, %v1046
    %v1048 = vand.u32 %v1047, 4294901760
    %1049 = vmatmul.mubr.f32.gmra.mrb[0].mxu0 %v1048
    %v1050 = vpop.f32.mrb[0].mxu0
    %v1051 = vadd.f32 %v960, %v1050
    %v1052 = vpop.f32.mrb[0].mxu0
    %1053 = vmatprep.mubr.f32.mxu0 0.0
    %v1054 = vand.u32 %v676, 4294901760
    %v1055 = vsub.f32 %v676, %v1054
    %v1056 = vand.u32 %v1055, 4294901760
    %1057 = vmatmul.mubr.f32.gmra.mrb[0].mxu0 %v1056
    %v1058 = vpop.f32.mrb[0].mxu0
    %v1059 = vadd.f32 %v967, %v1058
    %v1060 = vpop.f32.mrb[0].mxu0
    %1061 = vmatprep.mubr.f32.mxu0 0.0
    %v1062 = vand.u32 %v679, 4294901760
    %v1063 = vsub.f32 %v679, %v1062
    %v1064 = vand.u32 %v1063, 4294901760
    %1065 = vmatmul.mubr.f32.gmra.mrb[0].mxu0 %v1064
    %v1066 = vpop.f32.mrb[0].mxu0
    %v1067 = vadd.f32 %v974, %v1066
    %v1068 = vpop.f32.mrb[0].mxu0
    %1069 = vdwg.mxu0
    %1070 = vmatprep.subr.mxu0 0.0
    %v1071 = vand.u32 %v668, 4294901760
    %v1072 = vsub.f32 %v668, %v1071
    %v1073 = vand.u32 %v1072, 4294901760
    %1074 = vmatpush1.msra.mxu0 %v1073
    %1075 = vmatprep.subr.mxu0 0.0
    %v1076 = vand.u32 %v669, 4294901760
    %v1077 = vsub.f32 %v669, %v1076
    %v1078 = vand.u32 %v1077, 4294901760
    %1079 = vmatpush1.msra.mxu0 %v1078
    %1080 = vmatprep.subr.mxu0 0.0
    %v1081 = vand.u32 %v670, 4294901760
    %v1082 = vsub.f32 %v670, %v1081
    %v1083 = vand.u32 %v1082, 4294901760
    %1084 = vmatpush1.msra.mxu0 %v1083
    %1085 = vmatprep.subr.mxu0 0.0
    %v1086 = vand.u32 %v671, 4294901760
    %v1087 = vsub.f32 %v671, %v1086
    %v1088 = vand.u32 %v1087, 4294901760
    %1089 = vmatpush1.msra.mxu0 %v1088
    %1090 = vmatprep.subr.mxu0 0.0
    %1091 = vmatpush1.msra.mxu0 0.0
    %1092 = vmatprep.subr.mxu0 0.0
    %1093 = vmatpush1.msra.mxu0 0.0
    %1094 = vmatprep.subr.mxu0 0.0
    %1095 = vmatpush1.msra.mxu0 0.0
    %1096 = vmatprep.subr.mxu0 0.0
    %1097 = vmatpush1.msra.mxu0 0.0
    %1098 = vmatprep.subr.mxu0 0.0
    %1099 = vmatpush1.msra.mxu0 0.0
    %1100 = vmatprep.subr.mxu0 0.0
    %1101 = vmatpush1.msra.mxu0 0.0
    %1102 = vmatprep.subr.mxu0 0.0
    %1103 = vmatpush1.msra.mxu0 0.0
    %1104 = vmatprep.subr.mxu0 0.0
    %1105 = vmatpush1.msra.mxu0 0.0
    %1106 = vmatprep.subr.mxu0 0.0
    %1107 = vmatpush1.msra.mxu0 0.0
    %1108 = vmatprep.subr.mxu0 0.0
    %1109 = vmatpush1.msra.mxu0 0.0
    %1110 = vmatprep.subr.mxu0 0.0
    %1111 = vmatpush1.msra.mxu0 0.0
    %1112 = vmatprep.subr.mxu0 0.0
    %1113 = vmatpush1.msra.mxu0 0.0
    %1114 = vmatprep.subr.mxu0 0.0
    %1115 = vmatpush1.msra.mxu0 0.0
    %1116 = vmatprep.subr.mxu0 0.0
    %1117 = vmatpush1.msra.mxu0 0.0
    %1118 = vmatprep.subr.mxu0 0.0
    %1119 = vmatpush1.msra.mxu0 0.0
    %1120 = vmatprep.subr.mxu0 0.0
    %1121 = vmatpush1.msra.mxu0 0.0
    %1122 = vmatprep.subr.mxu0 0.0
    %1123 = vmatpush1.msra.mxu0 0.0
    %1124 = vmatprep.subr.mxu0 0.0
    %1125 = vmatpush1.msra.mxu0 0.0
    %1126 = vmatprep.subr.mxu0 0.0
    %1127 = vmatpush1.msra.mxu0 0.0
    %1128 = vmatprep.subr.mxu0 0.0
    %1129 = vmatpush1.msra.mxu0 0.0
    %1130 = vmatprep.subr.mxu0 0.0
    %1131 = vmatpush1.msra.mxu0 0.0
    %1132 = vmatprep.subr.mxu0 0.0
    %1133 = vmatpush1.msra.mxu0 0.0
    %1134 = vmatprep.subr.mxu0 0.0
    %1135 = vmatpush1.msra.mxu0 0.0
    %1136 = vmatprep.subr.mxu0 0.0
    %1137 = vmatpush1.msra.mxu0 0.0
    %1138 = vmatprep.subr.mxu0 0.0
    %1139 = vmatpush1.msra.mxu0 0.0
    %1140 = vmatprep.subr.mxu0 0.0
    %1141 = vmatpush1.msra.mxu0 0.0
    %1142 = vmatprep.subr.mxu0 0.0
    %1143 = vmatpush1.msra.mxu0 0.0
    %1144 = vmatprep.subr.mxu0 0.0
    %1145 = vmatpush1.msra.mxu0 0.0
    %1146 = vmatprep.mubr.f32.mxu0 0.0
    %v1147 = vand.u32 %v673, 4294901760
    %1148 = vmatmul.mubr.f32.gmra.mrb[0].mxu0 %v1147
    %v1149 = vpop.f32.mrb[0].mxu0
    %v1150 = vadd.f32 %v1051, %v1149
    %v1151 = vpop.f32.mrb[0].mxu0
    %1152 = vmatprep.mubr.f32.mxu0 0.0
    %v1153 = vand.u32 %v676, 4294901760
    %1154 = vmatmul.mubr.f32.gmra.mrb[0].mxu0 %v1153
    %v1155 = vpop.f32.mrb[0].mxu0
    %v1156 = vadd.f32 %v1059, %v1155
    %v1157 = vpop.f32.mrb[0].mxu0
    %1158 = vmatprep.mubr.f32.mxu0 0.0
    %v1159 = vand.u32 %v679, 4294901760
    %1160 = vmatmul.mubr.f32.gmra.mrb[0].mxu0 %v1159
    %v1161 = vpop.f32.mrb[0].mxu0
    %v1162 = vadd.f32 %v1067, %v1161
    %v1163 = vpop.f32.mrb[0].mxu0
    %1164 = vdwg.mxu0
    %1165 = vmatprep.subr.mxu0 0.0
    %v1166 = vand.u32 %v668, 4294901760
    %1167 = vmatpush1.msra.mxu0 %v1166
    %1168 = vmatprep.subr.mxu0 0.0
    %v1169 = vand.u32 %v669, 4294901760
    %1170 = vmatpush1.msra.mxu0 %v1169
    %1171 = vmatprep.subr.mxu0 0.0
    %v1172 = vand.u32 %v670, 4294901760
    %1173 = vmatpush1.msra.mxu0 %v1172
    %1174 = vmatprep.subr.mxu0 0.0
    %v1175 = vand.u32 %v671, 4294901760
    %1176 = vmatpush1.msra.mxu0 %v1175
    %1177 = vmatprep.subr.mxu0 0.0
    %1178 = vmatpush1.msra.mxu0 0.0
    %1179 = vmatprep.subr.mxu0 0.0
    %1180 = vmatpush1.msra.mxu0 0.0
    %1181 = vmatprep.subr.mxu0 0.0
    %1182 = vmatpush1.msra.mxu0 0.0
    %1183 = vmatprep.subr.mxu0 0.0
    %1184 = vmatpush1.msra.mxu0 0.0
    %1185 = vmatprep.subr.mxu0 0.0
    %1186 = vmatpush1.msra.mxu0 0.0
    %1187 = vmatprep.subr.mxu0 0.0
    %1188 = vmatpush1.msra.mxu0 0.0
    %1189 = vmatprep.subr.mxu0 0.0
    %1190 = vmatpush1.msra.mxu0 0.0
    %1191 = vmatprep.subr.mxu0 0.0
    %1192 = vmatpush1.msra.mxu0 0.0
    %1193 = vmatprep.subr.mxu0 0.0
    %1194 = vmatpush1.msra.mxu0 0.0
    %1195 = vmatprep.subr.mxu0 0.0
    %1196 = vmatpush1.msra.mxu0 0.0
    %1197 = vmatprep.subr.mxu0 0.0
    %1198 = vmatpush1.msra.mxu0 0.0
    %1199 = vmatprep.subr.mxu0 0.0
    %1200 = vmatpush1.msra.mxu0 0.0
    %1201 = vmatprep.subr.mxu0 0.0
    %1202 = vmatpush1.msra.mxu0 0.0
    %1203 = vmatprep.subr.mxu0 0.0
    %1204 = vmatpush1.msra.mxu0 0.0
    %1205 = vmatprep.subr.mxu0 0.0
    %1206 = vmatpush1.msra.mxu0 0.0
    %1207 = vmatprep.subr.mxu0 0.0
    %1208 = vmatpush1.msra.mxu0 0.0
    %1209 = vmatprep.subr.mxu0 0.0
    %1210 = vmatpush1.msra.mxu0 0.0
    %1211 = vmatprep.subr.mxu0 0.0
    %1212 = vmatpush1.msra.mxu0 0.0
    %1213 = vmatprep.subr.mxu0 0.0
    %1214 = vmatpush1.msra.mxu0 0.0
    %1215 = vmatprep.subr.mxu0 0.0
    %1216 = vmatpush1.msra.mxu0 0.0
    %1217 = vmatprep.subr.mxu0 0.0
    %1218 = vmatpush1.msra.mxu0 0.0
    %1219 = vmatprep.subr.mxu0 0.0
    %1220 = vmatpush1.msra.mxu0 0.0
    %1221 = vmatprep.subr.mxu0 0.0
    %1222 = vmatpush1.msra.mxu0 0.0
    %1223 = vmatprep.subr.mxu0 0.0
    %1224 = vmatpush1.msra.mxu0 0.0
    %1225 = vmatprep.subr.mxu0 0.0
    %1226 = vmatpush1.msra.mxu0 0.0
    %1227 = vmatprep.subr.mxu0 0.0
    %1228 = vmatpush1.msra.mxu0 0.0
    %1229 = vmatprep.subr.mxu0 0.0
    %1230 = vmatpush1.msra.mxu0 0.0
    %1231 = vmatprep.subr.mxu0 0.0
    %1232 = vmatpush1.msra.mxu0 0.0
    %1233 = vmatprep.mubr.f32.mxu0 0.0
    %v1234 = vand.u32 %v673, 4294901760
    %1235 = vmatmul.mubr.f32.gmra.mrb[0].mxu0 %v1234
    %v1236 = vpop.f32.mrb[0].mxu0
    %v1237 = vadd.f32 %v1150, %v1236
    %v1238 = vpop.f32.mrb[0].mxu0
    %1239 = vmatprep.mubr.f32.mxu0 0.0
    %v1240 = vand.u32 %v676, 4294901760
    %1241 = vmatmul.mubr.f32.gmra.mrb[0].mxu0 %v1240
    %v1242 = vpop.f32.mrb[0].mxu0
    %v1243 = vadd.f32 %v1156, %v1242
    %v1244 = vpop.f32.mrb[0].mxu0
    %1245 = vmatprep.mubr.f32.mxu0 0.0
    %v1246 = vand.u32 %v679, 4294901760
    %1247 = vmatmul.mubr.f32.gmra.mrb[0].mxu0 %v1246
    %v1248 = vpop.f32.mrb[0].mxu0
    %v1249 = vadd.f32 %v1162, %v1248
    %v1250 = vpop.f32.mrb[0].mxu0
    %1251 = vdwg.mxu0
    %s1252 = scalar_lea.vmem [#allocation8], 32
    %v1253 = vld [vmem:[%s1252] sm:$0xff]
    %v1254 = vld [vmem:[%s1252 + $0x8] sm:$0xff]
    %v1255 = vld [vmem:[%s1252 + $0x10] sm:$0xff]
    %v1256 = vld [vmem:[%s1252 + $0x18] sm:$0xff]
    %1257 = vmatprep.subr.mxu0 0.0
    %v1258 = vand.u32 %v1253, 4294901760
    %1259 = vmatpush1.msra.mxu0 %v1258
    %1260 = vmatprep.subr.mxu0 0.0
    %v1261 = vand.u32 %v1254, 4294901760
    %1262 = vmatpush1.msra.mxu0 %v1261
    %1263 = vmatprep.subr.mxu0 0.0
    %v1264 = vand.u32 %v1255, 4294901760
    %1265 = vmatpush1.msra.mxu0 %v1264
    %1266 = vmatprep.subr.mxu0 0.0
    %v1267 = vand.u32 %v1256, 4294901760
    %1268 = vmatpush1.msra.mxu0 %v1267
    %1269 = vmatprep.subr.mxu0 0.0
    %1270 = vmatpush1.msra.mxu0 0.0
    %1271 = vmatprep.subr.mxu0 0.0
    %1272 = vmatpush1.msra.mxu0 0.0
    %1273 = vmatprep.subr.mxu0 0.0
    %1274 = vmatpush1.msra.mxu0 0.0
    %1275 = vmatprep.subr.mxu0 0.0
    %1276 = vmatpush1.msra.mxu0 0.0
    %1277 = vmatprep.subr.mxu0 0.0
    %1278 = vmatpush1.msra.mxu0 0.0
    %1279 = vmatprep.subr.mxu0 0.0
    %1280 = vmatpush1.msra.mxu0 0.0
    %1281 = vmatprep.subr.mxu0 0.0
    %1282 = vmatpush1.msra.mxu0 0.0
    %1283 = vmatprep.subr.mxu0 0.0
    %1284 = vmatpush1.msra.mxu0 0.0
    %1285 = vmatprep.subr.mxu0 0.0
    %1286 = vmatpush1.msra.mxu0 0.0
    %1287 = vmatprep.subr.mxu0 0.0
    %1288 = vmatpush1.msra.mxu0 0.0
    %1289 = vmatprep.subr.mxu0 0.0
    %1290 = vmatpush1.msra.mxu0 0.0
    %1291 = vmatprep.subr.mxu0 0.0
    %1292 = vmatpush1.msra.mxu0 0.0
    %1293 = vmatprep.subr.mxu0 0.0
    %1294 = vmatpush1.msra.mxu0 0.0
    %1295 = vmatprep.subr.mxu0 0.0
    %1296 = vmatpush1.msra.mxu0 0.0
    %1297 = vmatprep.subr.mxu0 0.0
    %1298 = vmatpush1.msra.mxu0 0.0
    %1299 = vmatprep.subr.mxu0 0.0
    %1300 = vmatpush1.msra.mxu0 0.0
    %1301 = vmatprep.subr.mxu0 0.0
    %1302 = vmatpush1.msra.mxu0 0.0
    %1303 = vmatprep.subr.mxu0 0.0
    %1304 = vmatpush1.msra.mxu0 0.0
    %1305 = vmatprep.subr.mxu0 0.0
    %1306 = vmatpush1.msra.mxu0 0.0
    %1307 = vmatprep.subr.mxu0 0.0
    %1308 = vmatpush1.msra.mxu0 0.0
    %1309 = vmatprep.subr.mxu0 0.0
    %1310 = vmatpush1.msra.mxu0 0.0
    %1311 = vmatprep.subr.mxu0 0.0
    %1312 = vmatpush1.msra.mxu0 0.0
    %1313 = vmatprep.subr.mxu0 0.0
    %1314 = vmatpush1.msra.mxu0 0.0
    %1315 = vmatprep.subr.mxu0 0.0
    %1316 = vmatpush1.msra.mxu0 0.0
    %1317 = vmatprep.subr.mxu0 0.0
    %1318 = vmatpush1.msra.mxu0 0.0
    %1319 = vmatprep.subr.mxu0 0.0
    %1320 = vmatpush1.msra.mxu0 0.0
    %1321 = vmatprep.subr.mxu0 0.0
    %1322 = vmatpush1.msra.mxu0 0.0
    %1323 = vmatprep.subr.mxu0 0.0
    %1324 = vmatpush1.msra.mxu0 0.0
    %1325 = vmatprep.mubr.f32.mxu0 0.0
    %v1326 = vand.u32 %v673, 4294901760
    %v1327 = vsub.f32 %v673, %v1326
    %v1328 = vand.u32 %v1327, 4294901760
    %v1329 = vsub.f32 %v1327, %v1328
    %v1330 = vand.u32 %v1329, 4294901760
    %1331 = vmatmul.mubr.f32.gmra.mrb[0].mxu0 %v1330
    %v1332 = vpop.f32.mrb[0].mxu0
    %v1333 = vadd.f32 0.0, %v1332
    %v1334 = vpop.f32.mrb[0].mxu0
    %1335 = vmatprep.mubr.f32.mxu0 0.0
    %v1336 = vand.u32 %v676, 4294901760
    %v1337 = vsub.f32 %v676, %v1336
    %v1338 = vand.u32 %v1337, 4294901760
    %v1339 = vsub.f32 %v1337, %v1338
    %v1340 = vand.u32 %v1339, 4294901760
    %1341 = vmatmul.mubr.f32.gmra.mrb[0].mxu0 %v1340
    %v1342 = vpop.f32.mrb[0].mxu0
    %v1343 = vadd.f32 0.0, %v1342
    %v1344 = vpop.f32.mrb[0].mxu0
    %1345 = vmatprep.mubr.f32.mxu0 0.0
    %v1346 = vand.u32 %v679, 4294901760
    %v1347 = vsub.f32 %v679, %v1346
    %v1348 = vand.u32 %v1347, 4294901760
    %v1349 = vsub.f32 %v1347, %v1348
    %v1350 = vand.u32 %v1349, 4294901760
    %1351 = vmatmul.mubr.f32.gmra.mrb[0].mxu0 %v1350
    %v1352 = vpop.f32.mrb[0].mxu0
    %v1353 = vadd.f32 0.0, %v1352
    %v1354 = vpop.f32.mrb[0].mxu0
    %1355 = vdwg.mxu0
    %1356 = vmatprep.subr.mxu0 0.0
    %v1357 = vand.u32 %v1253, 4294901760
    %v1358 = vsub.f32 %v1253, %v1357
    %v1359 = vand.u32 %v1358, 4294901760
    %v1360 = vsub.f32 %v1358, %v1359
    %v1361 = vand.u32 %v1360, 4294901760
    %1362 = vmatpush1.msra.mxu0 %v1361
    %1363 = vmatprep.subr.mxu0 0.0
    %v1364 = vand.u32 %v1254, 4294901760
    %v1365 = vsub.f32 %v1254, %v1364
    %v1366 = vand.u32 %v1365, 4294901760
    %v1367 = vsub.f32 %v1365, %v1366
    %v1368 = vand.u32 %v1367, 4294901760
    %1369 = vmatpush1.msra.mxu0 %v1368
    %1370 = vmatprep.subr.mxu0 0.0
    %v1371 = vand.u32 %v1255, 4294901760
    %v1372 = vsub.f32 %v1255, %v1371
    %v1373 = vand.u32 %v1372, 4294901760
    %v1374 = vsub.f32 %v1372, %v1373
    %v1375 = vand.u32 %v1374, 4294901760
    %1376 = vmatpush1.msra.mxu0 %v1375
    %1377 = vmatprep.subr.mxu0 0.0
    %v1378 = vand.u32 %v1256, 4294901760
    %v1379 = vsub.f32 %v1256, %v1378
    %v1380 = vand.u32 %v1379, 4294901760
    %v1381 = vsub.f32 %v1379, %v1380
    %v1382 = vand.u32 %v1381, 4294901760
    %1383 = vmatpush1.msra.mxu0 %v1382
    %1384 = vmatprep.subr.mxu0 0.0
    %1385 = vmatpush1.msra.mxu0 0.0
    %1386 = vmatprep.subr.mxu0 0.0
    %1387 = vmatpush1.msra.mxu0 0.0
    %1388 = vmatprep.subr.mxu0 0.0
    %1389 = vmatpush1.msra.mxu0 0.0
    %1390 = vmatprep.subr.mxu0 0.0
    %1391 = vmatpush1.msra.mxu0 0.0
    %1392 = vmatprep.subr.mxu0 0.0
    %1393 = vmatpush1.msra.mxu0 0.0
    %1394 = vmatprep.subr.mxu0 0.0
    %1395 = vmatpush1.msra.mxu0 0.0
    %1396 = vmatprep.subr.mxu0 0.0
    %1397 = vmatpush1.msra.mxu0 0.0
    %1398 = vmatprep.subr.mxu0 0.0
    %1399 = vmatpush1.msra.mxu0 0.0
    %1400 = vmatprep.subr.mxu0 0.0
    %1401 = vmatpush1.msra.mxu0 0.0
    %1402 = vmatprep.subr.mxu0 0.0
    %1403 = vmatpush1.msra.mxu0 0.0
    %1404 = vmatprep.subr.mxu0 0.0
    %1405 = vmatpush1.msra.mxu0 0.0
    %1406 = vmatprep.subr.mxu0 0.0
    %1407 = vmatpush1.msra.mxu0 0.0
    %1408 = vmatprep.subr.mxu0 0.0
    %1409 = vmatpush1.msra.mxu0 0.0
    %1410 = vmatprep.subr.mxu0 0.0
    %1411 = vmatpush1.msra.mxu0 0.0
    %1412 = vmatprep.subr.mxu0 0.0
    %1413 = vmatpush1.msra.mxu0 0.0
    %1414 = vmatprep.subr.mxu0 0.0
    %1415 = vmatpush1.msra.mxu0 0.0
    %1416 = vmatprep.subr.mxu0 0.0
    %1417 = vmatpush1.msra.mxu0 0.0
    %1418 = vmatprep.subr.mxu0 0.0
    %1419 = vmatpush1.msra.mxu0 0.0
    %1420 = vmatprep.subr.mxu0 0.0
    %1421 = vmatpush1.msra.mxu0 0.0
    %1422 = vmatprep.subr.mxu0 0.0
    %1423 = vmatpush1.msra.mxu0 0.0
    %1424 = vmatprep.subr.mxu0 0.0
    %1425 = vmatpush1.msra.mxu0 0.0
    %1426 = vmatprep.subr.mxu0 0.0
    %1427 = vmatpush1.msra.mxu0 0.0
    %1428 = vmatprep.subr.mxu0 0.0
    %1429 = vmatpush1.msra.mxu0 0.0
    %1430 = vmatprep.subr.mxu0 0.0
    %1431 = vmatpush1.msra.mxu0 0.0
    %1432 = vmatprep.subr.mxu0 0.0
    %1433 = vmatpush1.msra.mxu0 0.0
    %1434 = vmatprep.subr.mxu0 0.0
    %1435 = vmatpush1.msra.mxu0 0.0
    %1436 = vmatprep.subr.mxu0 0.0
    %1437 = vmatpush1.msra.mxu0 0.0
    %1438 = vmatprep.subr.mxu0 0.0
    %1439 = vmatpush1.msra.mxu0 0.0
    %1440 = vmatprep.mubr.f32.mxu0 0.0
    %v1441 = vand.u32 %v673, 4294901760
    %1442 = vmatmul.mubr.f32.gmra.mrb[0].mxu0 %v1441
    %v1443 = vpop.f32.mrb[0].mxu0
    %v1444 = vadd.f32 %v1333, %v1443
    %v1445 = vpop.f32.mrb[0].mxu0
    %1446 = vmatprep.mubr.f32.mxu0 0.0
    %v1447 = vand.u32 %v676, 4294901760
    %1448 = vmatmul.mubr.f32.gmra.mrb[0].mxu0 %v1447
    %v1449 = vpop.f32.mrb[0].mxu0
    %v1450 = vadd.f32 %v1343, %v1449
    %v1451 = vpop.f32.mrb[0].mxu0
    %1452 = vmatprep.mubr.f32.mxu0 0.0
    %v1453 = vand.u32 %v679, 4294901760
    %1454 = vmatmul.mubr.f32.gmra.mrb[0].mxu0 %v1453
    %v1455 = vpop.f32.mrb[0].mxu0
    %v1456 = vadd.f32 %v1353, %v1455
    %v1457 = vpop.f32.mrb[0].mxu0
    %1458 = vdwg.mxu0
    %1459 = vmatprep.subr.mxu0 0.0
    %v1460 = vand.u32 %v1253, 4294901760
    %v1461 = vsub.f32 %v1253, %v1460
    %1462 = vmatpush1.msra.mxu0 %v1461
    %1463 = vmatprep.subr.mxu0 0.0
    %v1464 = vand.u32 %v1254, 4294901760
    %v1465 = vsub.f32 %v1254, %v1464
    %1466 = vmatpush1.msra.mxu0 %v1465
    %1467 = vmatprep.subr.mxu0 0.0
    %v1468 = vand.u32 %v1255, 4294901760
    %v1469 = vsub.f32 %v1255, %v1468
    %1470 = vmatpush1.msra.mxu0 %v1469
    %1471 = vmatprep.subr.mxu0 0.0
    %v1472 = vand.u32 %v1256, 4294901760
    %v1473 = vsub.f32 %v1256, %v1472
    %1474 = vmatpush1.msra.mxu0 %v1473
    %1475 = vmatprep.subr.mxu0 0.0
    %1476 = vmatpush1.msra.mxu0 0.0
    %1477 = vmatprep.subr.mxu0 0.0
    %1478 = vmatpush1.msra.mxu0 0.0
    %1479 = vmatprep.subr.mxu0 0.0
    %1480 = vmatpush1.msra.mxu0 0.0
    %1481 = vmatprep.subr.mxu0 0.0
    %1482 = vmatpush1.msra.mxu0 0.0
    %1483 = vmatprep.subr.mxu0 0.0
    %1484 = vmatpush1.msra.mxu0 0.0
    %1485 = vmatprep.subr.mxu0 0.0
    %1486 = vmatpush1.msra.mxu0 0.0
    %1487 = vmatprep.subr.mxu0 0.0
    %1488 = vmatpush1.msra.mxu0 0.0
    %1489 = vmatprep.subr.mxu0 0.0
    %1490 = vmatpush1.msra.mxu0 0.0
    %1491 = vmatprep.subr.mxu0 0.0
    %1492 = vmatpush1.msra.mxu0 0.0
    %1493 = vmatprep.subr.mxu0 0.0
    %1494 = vmatpush1.msra.mxu0 0.0
    %1495 = vmatprep.subr.mxu0 0.0
    %1496 = vmatpush1.msra.mxu0 0.0
    %1497 = vmatprep.subr.mxu0 0.0
    %1498 = vmatpush1.msra.mxu0 0.0
    %1499 = vmatprep.subr.mxu0 0.0
    %1500 = vmatpush1.msra.mxu0 0.0
    %1501 = vmatprep.subr.mxu0 0.0
    %1502 = vmatpush1.msra.mxu0 0.0
    %1503 = vmatprep.subr.mxu0 0.0
    %1504 = vmatpush1.msra.mxu0 0.0
    %1505 = vmatprep.subr.mxu0 0.0
    %1506 = vmatpush1.msra.mxu0 0.0
    %1507 = vmatprep.subr.mxu0 0.0
    %1508 = vmatpush1.msra.mxu0 0.0
    %1509 = vmatprep.subr.mxu0 0.0
    %1510 = vmatpush1.msra.mxu0 0.0
    %1511 = vmatprep.subr.mxu0 0.0
    %1512 = vmatpush1.msra.mxu0 0.0
    %1513 = vmatprep.subr.mxu0 0.0
    %1514 = vmatpush1.msra.mxu0 0.0
    %1515 = vmatprep.subr.mxu0 0.0
    %1516 = vmatpush1.msra.mxu0 0.0
    %1517 = vmatprep.subr.mxu0 0.0
    %1518 = vmatpush1.msra.mxu0 0.0
    %1519 = vmatprep.subr.mxu0 0.0
    %1520 = vmatpush1.msra.mxu0 0.0
    %1521 = vmatprep.subr.mxu0 0.0
    %1522 = vmatpush1.msra.mxu0 0.0
    %1523 = vmatprep.subr.mxu0 0.0
    %1524 = vmatpush1.msra.mxu0 0.0
    %1525 = vmatprep.subr.mxu0 0.0
    %1526 = vmatpush1.msra.mxu0 0.0
    %1527 = vmatprep.subr.mxu0 0.0
    %1528 = vmatpush1.msra.mxu0 0.0
    %1529 = vmatprep.subr.mxu0 0.0
    %1530 = vmatpush1.msra.mxu0 0.0
    %1531 = vmatprep.mubr.f32.mxu0 0.0
    %v1532 = vand.u32 %v673, 4294901760
    %v1533 = vsub.f32 %v673, %v1532
    %1534 = vmatmul.mubr.f32.gmra.mrb[0].mxu0 %v1533
    %v1535 = vpop.f32.mrb[0].mxu0
    %v1536 = vadd.f32 %v1444, %v1535
    %v1537 = vpop.f32.mrb[0].mxu0
    %1538 = vmatprep.mubr.f32.mxu0 0.0
    %v1539 = vand.u32 %v676, 4294901760
    %v1540 = vsub.f32 %v676, %v1539
    %1541 = vmatmul.mubr.f32.gmra.mrb[0].mxu0 %v1540
    %v1542 = vpop.f32.mrb[0].mxu0
    %v1543 = vadd.f32 %v1450, %v1542
    %v1544 = vpop.f32.mrb[0].mxu0
    %1545 = vmatprep.mubr.f32.mxu0 0.0
    %v1546 = vand.u32 %v679, 4294901760
    %v1547 = vsub.f32 %v679, %v1546
    %1548 = vmatmul.mubr.f32.gmra.mrb[0].mxu0 %v1547
    %v1549 = vpop.f32.mrb[0].mxu0
    %v1550 = vadd.f32 %v1456, %v1549
    %v1551 = vpop.f32.mrb[0].mxu0
    %1552 = vdwg.mxu0
    %1553 = vmatprep.subr.mxu0 0.0
    %v1554 = vand.u32 %v1253, 4294901760
    %1555 = vmatpush1.msra.mxu0 %v1554
    %1556 = vmatprep.subr.mxu0 0.0
    %v1557 = vand.u32 %v1254, 4294901760
    %1558 = vmatpush1.msra.mxu0 %v1557
    %1559 = vmatprep.subr.mxu0 0.0
    %v1560 = vand.u32 %v1255, 4294901760
    %1561 = vmatpush1.msra.mxu0 %v1560
    %1562 = vmatprep.subr.mxu0 0.0
    %v1563 = vand.u32 %v1256, 4294901760
    %1564 = vmatpush1.msra.mxu0 %v1563
    %1565 = vmatprep.subr.mxu0 0.0
    %1566 = vmatpush1.msra.mxu0 0.0
    %1567 = vmatprep.subr.mxu0 0.0
    %1568 = vmatpush1.msra.mxu0 0.0
    %1569 = vmatprep.subr.mxu0 0.0
    %1570 = vmatpush1.msra.mxu0 0.0
    %1571 = vmatprep.subr.mxu0 0.0
    %1572 = vmatpush1.msra.mxu0 0.0
    %1573 = vmatprep.subr.mxu0 0.0
    %1574 = vmatpush1.msra.mxu0 0.0
    %1575 = vmatprep.subr.mxu0 0.0
    %1576 = vmatpush1.msra.mxu0 0.0
    %1577 = vmatprep.subr.mxu0 0.0
    %1578 = vmatpush1.msra.mxu0 0.0
    %1579 = vmatprep.subr.mxu0 0.0
    %1580 = vmatpush1.msra.mxu0 0.0
    %1581 = vmatprep.subr.mxu0 0.0
    %1582 = vmatpush1.msra.mxu0 0.0
    %1583 = vmatprep.subr.mxu0 0.0
    %1584 = vmatpush1.msra.mxu0 0.0
    %1585 = vmatprep.subr.mxu0 0.0
    %1586 = vmatpush1.msra.mxu0 0.0
    %1587 = vmatprep.subr.mxu0 0.0
    %1588 = vmatpush1.msra.mxu0 0.0
    %1589 = vmatprep.subr.mxu0 0.0
    %1590 = vmatpush1.msra.mxu0 0.0
    %1591 = vmatprep.subr.mxu0 0.0
    %1592 = vmatpush1.msra.mxu0 0.0
    %1593 = vmatprep.subr.mxu0 0.0
    %1594 = vmatpush1.msra.mxu0 0.0
    %1595 = vmatprep.subr.mxu0 0.0
    %1596 = vmatpush1.msra.mxu0 0.0
    %1597 = vmatprep.subr.mxu0 0.0
    %1598 = vmatpush1.msra.mxu0 0.0
    %1599 = vmatprep.subr.mxu0 0.0
    %1600 = vmatpush1.msra.mxu0 0.0
    %1601 = vmatprep.subr.mxu0 0.0
    %1602 = vmatpush1.msra.mxu0 0.0
    %1603 = vmatprep.subr.mxu0 0.0
    %1604 = vmatpush1.msra.mxu0 0.0
    %1605 = vmatprep.subr.mxu0 0.0
    %1606 = vmatpush1.msra.mxu0 0.0
    %1607 = vmatprep.subr.mxu0 0.0
    %1608 = vmatpush1.msra.mxu0 0.0
    %1609 = vmatprep.subr.mxu0 0.0
    %1610 = vmatpush1.msra.mxu0 0.0
    %1611 = vmatprep.subr.mxu0 0.0
    %1612 = vmatpush1.msra.mxu0 0.0
    %1613 = vmatprep.subr.mxu0 0.0
    %1614 = vmatpush1.msra.mxu0 0.0
    %1615 = vmatprep.subr.mxu0 0.0
    %1616 = vmatpush1.msra.mxu0 0.0
    %1617 = vmatprep.subr.mxu0 0.0
    %1618 = vmatpush1.msra.mxu0 0.0
    %1619 = vmatprep.subr.mxu0 0.0
    %1620 = vmatpush1.msra.mxu0 0.0
    %1621 = vmatprep.mubr.f32.mxu0 0.0
    %v1622 = vand.u32 %v673, 4294901760
    %v1623 = vsub.f32 %v673, %v1622
    %v1624 = vand.u32 %v1623, 4294901760
    %1625 = vmatmul.mubr.f32.gmra.mrb[0].mxu0 %v1624
    %v1626 = vpop.f32.mrb[0].mxu0
    %v1627 = vadd.f32 %v1536, %v1626
    %v1628 = vpop.f32.mrb[0].mxu0
    %1629 = vmatprep.mubr.f32.mxu0 0.0
    %v1630 = vand.u32 %v676, 4294901760
    %v1631 = vsub.f32 %v676, %v1630
    %v1632 = vand.u32 %v1631, 4294901760
    %1633 = vmatmul.mubr.f32.gmra.mrb[0].mxu0 %v1632
    %v1634 = vpop.f32.mrb[0].mxu0
    %v1635 = vadd.f32 %v1543, %v1634
    %v1636 = vpop.f32.mrb[0].mxu0
    %1637 = vmatprep.mubr.f32.mxu0 0.0
    %v1638 = vand.u32 %v679, 4294901760
    %v1639 = vsub.f32 %v679, %v1638
    %v1640 = vand.u32 %v1639, 4294901760
    %1641 = vmatmul.mubr.f32.gmra.mrb[0].mxu0 %v1640
    %v1642 = vpop.f32.mrb[0].mxu0
    %v1643 = vadd.f32 %v1550, %v1642
    %v1644 = vpop.f32.mrb[0].mxu0
    %1645 = vdwg.mxu0
    %1646 = vmatprep.subr.mxu0 0.0
    %v1647 = vand.u32 %v1253, 4294901760
    %v1648 = vsub.f32 %v1253, %v1647
    %v1649 = vand.u32 %v1648, 4294901760
    %1650 = vmatpush1.msra.mxu0 %v1649
    %1651 = vmatprep.subr.mxu0 0.0
    %v1652 = vand.u32 %v1254, 4294901760
    %v1653 = vsub.f32 %v1254, %v1652
    %v1654 = vand.u32 %v1653, 4294901760
    %1655 = vmatpush1.msra.mxu0 %v1654
    %1656 = vmatprep.subr.mxu0 0.0
    %v1657 = vand.u32 %v1255, 4294901760
    %v1658 = vsub.f32 %v1255, %v1657
    %v1659 = vand.u32 %v1658, 4294901760
    %1660 = vmatpush1.msra.mxu0 %v1659
    %1661 = vmatprep.subr.mxu0 0.0
    %v1662 = vand.u32 %v1256, 4294901760
    %v1663 = vsub.f32 %v1256, %v1662
    %v1664 = vand.u32 %v1663, 4294901760
    %1665 = vmatpush1.msra.mxu0 %v1664
    %1666 = vmatprep.subr.mxu0 0.0
    %1667 = vmatpush1.msra.mxu0 0.0
    %1668 = vmatprep.subr.mxu0 0.0
    %1669 = vmatpush1.msra.mxu0 0.0
    %1670 = vmatprep.subr.mxu0 0.0
    %1671 = vmatpush1.msra.mxu0 0.0
    %1672 = vmatprep.subr.mxu0 0.0
    %1673 = vmatpush1.msra.mxu0 0.0
    %1674 = vmatprep.subr.mxu0 0.0
    %1675 = vmatpush1.msra.mxu0 0.0
    %1676 = vmatprep.subr.mxu0 0.0
    %1677 = vmatpush1.msra.mxu0 0.0
    %1678 = vmatprep.subr.mxu0 0.0
    %1679 = vmatpush1.msra.mxu0 0.0
    %1680 = vmatprep.subr.mxu0 0.0
    %1681 = vmatpush1.msra.mxu0 0.0
    %1682 = vmatprep.subr.mxu0 0.0
    %1683 = vmatpush1.msra.mxu0 0.0
    %1684 = vmatprep.subr.mxu0 0.0
    %1685 = vmatpush1.msra.mxu0 0.0
    %1686 = vmatprep.subr.mxu0 0.0
    %1687 = vmatpush1.msra.mxu0 0.0
    %1688 = vmatprep.subr.mxu0 0.0
    %1689 = vmatpush1.msra.mxu0 0.0
    %1690 = vmatprep.subr.mxu0 0.0
    %1691 = vmatpush1.msra.mxu0 0.0
    %1692 = vmatprep.subr.mxu0 0.0
    %1693 = vmatpush1.msra.mxu0 0.0
    %1694 = vmatprep.subr.mxu0 0.0
    %1695 = vmatpush1.msra.mxu0 0.0
    %1696 = vmatprep.subr.mxu0 0.0
    %1697 = vmatpush1.msra.mxu0 0.0
    %1698 = vmatprep.subr.mxu0 0.0
    %1699 = vmatpush1.msra.mxu0 0.0
    %1700 = vmatprep.subr.mxu0 0.0
    %1701 = vmatpush1.msra.mxu0 0.0
    %1702 = vmatprep.subr.mxu0 0.0
    %1703 = vmatpush1.msra.mxu0 0.0
    %1704 = vmatprep.subr.mxu0 0.0
    %1705 = vmatpush1.msra.mxu0 0.0
    %1706 = vmatprep.subr.mxu0 0.0
    %1707 = vmatpush1.msra.mxu0 0.0
    %1708 = vmatprep.subr.mxu0 0.0
    %1709 = vmatpush1.msra.mxu0 0.0
    %1710 = vmatprep.subr.mxu0 0.0
    %1711 = vmatpush1.msra.mxu0 0.0
    %1712 = vmatprep.subr.mxu0 0.0
    %1713 = vmatpush1.msra.mxu0 0.0
    %1714 = vmatprep.subr.mxu0 0.0
    %1715 = vmatpush1.msra.mxu0 0.0
    %1716 = vmatprep.subr.mxu0 0.0
    %1717 = vmatpush1.msra.mxu0 0.0
    %1718 = vmatprep.subr.mxu0 0.0
    %1719 = vmatpush1.msra.mxu0 0.0
    %1720 = vmatprep.subr.mxu0 0.0
    %1721 = vmatpush1.msra.mxu0 0.0
    %1722 = vmatprep.mubr.f32.mxu0 0.0
    %v1723 = vand.u32 %v673, 4294901760
    %1724 = vmatmul.mubr.f32.gmra.mrb[0].mxu0 %v1723
    %v1725 = vpop.f32.mrb[0].mxu0
    %v1726 = vadd.f32 %v1627, %v1725
    %v1727 = vpop.f32.mrb[0].mxu0
    %1728 = vmatprep.mubr.f32.mxu0 0.0
    %v1729 = vand.u32 %v676, 4294901760
    %1730 = vmatmul.mubr.f32.gmra.mrb[0].mxu0 %v1729
    %v1731 = vpop.f32.mrb[0].mxu0
    %v1732 = vadd.f32 %v1635, %v1731
    %v1733 = vpop.f32.mrb[0].mxu0
    %1734 = vmatprep.mubr.f32.mxu0 0.0
    %v1735 = vand.u32 %v679, 4294901760
    %1736 = vmatmul.mubr.f32.gmra.mrb[0].mxu0 %v1735
    %v1737 = vpop.f32.mrb[0].mxu0
    %v1738 = vadd.f32 %v1643, %v1737
    %v1739 = vpop.f32.mrb[0].mxu0
    %1740 = vdwg.mxu0
    %1741 = vmatprep.subr.mxu0 0.0
    %v1742 = vand.u32 %v1253, 4294901760
    %1743 = vmatpush1.msra.mxu0 %v1742
    %1744 = vmatprep.subr.mxu0 0.0
    %v1745 = vand.u32 %v1254, 4294901760
    %1746 = vmatpush1.msra.mxu0 %v1745
    %1747 = vmatprep.subr.mxu0 0.0
    %v1748 = vand.u32 %v1255, 4294901760
    %1749 = vmatpush1.msra.mxu0 %v1748
    %1750 = vmatprep.subr.mxu0 0.0
    %v1751 = vand.u32 %v1256, 4294901760
    %1752 = vmatpush1.msra.mxu0 %v1751
    %1753 = vmatprep.subr.mxu0 0.0
    %1754 = vmatpush1.msra.mxu0 0.0
    %1755 = vmatprep.subr.mxu0 0.0
    %1756 = vmatpush1.msra.mxu0 0.0
    %1757 = vmatprep.subr.mxu0 0.0
    %1758 = vmatpush1.msra.mxu0 0.0
    %1759 = vmatprep.subr.mxu0 0.0
    %1760 = vmatpush1.msra.mxu0 0.0
    %1761 = vmatprep.subr.mxu0 0.0
    %1762 = vmatpush1.msra.mxu0 0.0
    %1763 = vmatprep.subr.mxu0 0.0
    %1764 = vmatpush1.msra.mxu0 0.0
    %1765 = vmatprep.subr.mxu0 0.0
    %1766 = vmatpush1.msra.mxu0 0.0
    %1767 = vmatprep.subr.mxu0 0.0
    %1768 = vmatpush1.msra.mxu0 0.0
    %1769 = vmatprep.subr.mxu0 0.0
    %1770 = vmatpush1.msra.mxu0 0.0
    %1771 = vmatprep.subr.mxu0 0.0
    %1772 = vmatpush1.msra.mxu0 0.0
    %1773 = vmatprep.subr.mxu0 0.0
    %1774 = vmatpush1.msra.mxu0 0.0
    %1775 = vmatprep.subr.mxu0 0.0
    %1776 = vmatpush1.msra.mxu0 0.0
    %1777 = vmatprep.subr.mxu0 0.0
    %1778 = vmatpush1.msra.mxu0 0.0
    %1779 = vmatprep.subr.mxu0 0.0
    %1780 = vmatpush1.msra.mxu0 0.0
    %1781 = vmatprep.subr.mxu0 0.0
    %1782 = vmatpush1.msra.mxu0 0.0
    %1783 = vmatprep.subr.mxu0 0.0
    %1784 = vmatpush1.msra.mxu0 0.0
    %1785 = vmatprep.subr.mxu0 0.0
    %1786 = vmatpush1.msra.mxu0 0.0
    %1787 = vmatprep.subr.mxu0 0.0
    %1788 = vmatpush1.msra.mxu0 0.0
    %1789 = vmatprep.subr.mxu0 0.0
    %1790 = vmatpush1.msra.mxu0 0.0
    %1791 = vmatprep.subr.mxu0 0.0
    %1792 = vmatpush1.msra.mxu0 0.0
    %1793 = vmatprep.subr.mxu0 0.0
    %1794 = vmatpush1.msra.mxu0 0.0
    %1795 = vmatprep.subr.mxu0 0.0
    %1796 = vmatpush1.msra.mxu0 0.0
    %1797 = vmatprep.subr.mxu0 0.0
    %1798 = vmatpush1.msra.mxu0 0.0
    %1799 = vmatprep.subr.mxu0 0.0
    %1800 = vmatpush1.msra.mxu0 0.0
    %1801 = vmatprep.subr.mxu0 0.0
    %1802 = vmatpush1.msra.mxu0 0.0
    %1803 = vmatprep.subr.mxu0 0.0
    %1804 = vmatpush1.msra.mxu0 0.0
    %1805 = vmatprep.subr.mxu0 0.0
    %1806 = vmatpush1.msra.mxu0 0.0
    %1807 = vmatprep.subr.mxu0 0.0
    %1808 = vmatpush1.msra.mxu0 0.0
    %1809 = vmatprep.mubr.f32.mxu0 0.0
    %v1810 = vand.u32 %v673, 4294901760
    %1811 = vmatmul.mubr.f32.gmra.mrb[0].mxu0 %v1810
    %v1812 = vpop.f32.mrb[0].mxu0
    %v1813 = vadd.f32 %v1726, %v1812
    %v1814 = vpop.f32.mrb[0].mxu0
    %1815 = vmatprep.mubr.f32.mxu0 0.0
    %v1816 = vand.u32 %v676, 4294901760
    %1817 = vmatmul.mubr.f32.gmra.mrb[0].mxu0 %v1816
    %v1818 = vpop.f32.mrb[0].mxu0
    %v1819 = vadd.f32 %v1732, %v1818
    %v1820 = vpop.f32.mrb[0].mxu0
    %1821 = vmatprep.mubr.f32.mxu0 0.0
    %v1822 = vand.u32 %v679, 4294901760
    %1823 = vmatmul.mubr.f32.gmra.mrb[0].mxu0 %v1822
    %v1824 = vpop.f32.mrb[0].mxu0
    %v1825 = vadd.f32 %v1738, %v1824
    %v1826 = vpop.f32.mrb[0].mxu0
    %1827 = vdwg.mxu0
    %s1828 = scalar_lea.vmem [#allocation8], 64
    %v1829 = vld [vmem:[%s1828] sm:$0xff]
    %v1830 = vld [vmem:[%s1828 + $0x8] sm:$0xff]
    %v1831 = vld [vmem:[%s1828 + $0x10] sm:$0xff]
    %v1832 = vld [vmem:[%s1828 + $0x18] sm:$0xff]
    %1833 = vmatprep.subr.mxu0 0.0
    %v1834 = vand.u32 %v1829, 4294901760
    %1835 = vmatpush1.msra.mxu0 %v1834
    %1836 = vmatprep.subr.mxu0 0.0
    %v1837 = vand.u32 %v1830, 4294901760
    %1838 = vmatpush1.msra.mxu0 %v1837
    %1839 = vmatprep.subr.mxu0 0.0
    %v1840 = vand.u32 %v1831, 4294901760
    %1841 = vmatpush1.msra.mxu0 %v1840
    %1842 = vmatprep.subr.mxu0 0.0
    %v1843 = vand.u32 %v1832, 4294901760
    %1844 = vmatpush1.msra.mxu0 %v1843
    %1845 = vmatprep.subr.mxu0 0.0
    %1846 = vmatpush1.msra.mxu0 0.0
    %1847 = vmatprep.subr.mxu0 0.0
    %1848 = vmatpush1.msra.mxu0 0.0
    %1849 = vmatprep.subr.mxu0 0.0
    %1850 = vmatpush1.msra.mxu0 0.0
    %1851 = vmatprep.subr.mxu0 0.0
    %1852 = vmatpush1.msra.mxu0 0.0
    %1853 = vmatprep.subr.mxu0 0.0
    %1854 = vmatpush1.msra.mxu0 0.0
    %1855 = vmatprep.subr.mxu0 0.0
    %1856 = vmatpush1.msra.mxu0 0.0
    %1857 = vmatprep.subr.mxu0 0.0
    %1858 = vmatpush1.msra.mxu0 0.0
    %1859 = vmatprep.subr.mxu0 0.0
    %1860 = vmatpush1.msra.mxu0 0.0
    %1861 = vmatprep.subr.mxu0 0.0
    %1862 = vmatpush1.msra.mxu0 0.0
    %1863 = vmatprep.subr.mxu0 0.0
    %1864 = vmatpush1.msra.mxu0 0.0
    %1865 = vmatprep.subr.mxu0 0.0
    %1866 = vmatpush1.msra.mxu0 0.0
    %1867 = vmatprep.subr.mxu0 0.0
    %1868 = vmatpush1.msra.mxu0 0.0
    %1869 = vmatprep.subr.mxu0 0.0
    %1870 = vmatpush1.msra.mxu0 0.0
    %1871 = vmatprep.subr.mxu0 0.0
    %1872 = vmatpush1.msra.mxu0 0.0
    %1873 = vmatprep.subr.mxu0 0.0
    %1874 = vmatpush1.msra.mxu0 0.0
    %1875 = vmatprep.subr.mxu0 0.0
    %1876 = vmatpush1.msra.mxu0 0.0
    %1877 = vmatprep.subr.mxu0 0.0
    %1878 = vmatpush1.msra.mxu0 0.0
    %1879 = vmatprep.subr.mxu0 0.0
    %1880 = vmatpush1.msra.mxu0 0.0
    %1881 = vmatprep.subr.mxu0 0.0
    %1882 = vmatpush1.msra.mxu0 0.0
    %1883 = vmatprep.subr.mxu0 0.0
    %1884 = vmatpush1.msra.mxu0 0.0
    %1885 = vmatprep.subr.mxu0 0.0
    %1886 = vmatpush1.msra.mxu0 0.0
    %1887 = vmatprep.subr.mxu0 0.0
    %1888 = vmatpush1.msra.mxu0 0.0
    %1889 = vmatprep.subr.mxu0 0.0
    %1890 = vmatpush1.msra.mxu0 0.0
    %1891 = vmatprep.subr.mxu0 0.0
    %1892 = vmatpush1.msra.mxu0 0.0
    %1893 = vmatprep.subr.mxu0 0.0
    %1894 = vmatpush1.msra.mxu0 0.0
    %1895 = vmatprep.subr.mxu0 0.0
    %1896 = vmatpush1.msra.mxu0 0.0
    %1897 = vmatprep.subr.mxu0 0.0
    %1898 = vmatpush1.msra.mxu0 0.0
    %1899 = vmatprep.subr.mxu0 0.0
    %1900 = vmatpush1.msra.mxu0 0.0
    %1901 = vmatprep.mubr.f32.mxu0 0.0
    %v1902 = vand.u32 %v673, 4294901760
    %v1903 = vsub.f32 %v673, %v1902
    %v1904 = vand.u32 %v1903, 4294901760
    %v1905 = vsub.f32 %v1903, %v1904
    %v1906 = vand.u32 %v1905, 4294901760
    %1907 = vmatmul.mubr.f32.gmra.mrb[0].mxu0 %v1906
    %v1908 = vpop.f32.mrb[0].mxu0
    %v1909 = vadd.f32 0.0, %v1908
    %v1910 = vpop.f32.mrb[0].mxu0
    %1911 = vmatprep.mubr.f32.mxu0 0.0
    %v1912 = vand.u32 %v676, 4294901760
    %v1913 = vsub.f32 %v676, %v1912
    %v1914 = vand.u32 %v1913, 4294901760
    %v1915 = vsub.f32 %v1913, %v1914
    %v1916 = vand.u32 %v1915, 4294901760
    %1917 = vmatmul.mubr.f32.gmra.mrb[0].mxu0 %v1916
    %v1918 = vpop.f32.mrb[0].mxu0
    %v1919 = vadd.f32 0.0, %v1918
    %v1920 = vpop.f32.mrb[0].mxu0
    %1921 = vmatprep.mubr.f32.mxu0 0.0
    %v1922 = vand.u32 %v679, 4294901760
    %v1923 = vsub.f32 %v679, %v1922
    %v1924 = vand.u32 %v1923, 4294901760
    %v1925 = vsub.f32 %v1923, %v1924
    %v1926 = vand.u32 %v1925, 4294901760
    %1927 = vmatmul.mubr.f32.gmra.mrb[0].mxu0 %v1926
    %v1928 = vpop.f32.mrb[0].mxu0
    %v1929 = vadd.f32 0.0, %v1928
    %v1930 = vpop.f32.mrb[0].mxu0
    %1931 = vdwg.mxu0
    %1932 = vmatprep.subr.mxu0 0.0
    %v1933 = vand.u32 %v1829, 4294901760
    %v1934 = vsub.f32 %v1829, %v1933
    %v1935 = vand.u32 %v1934, 4294901760
    %v1936 = vsub.f32 %v1934, %v1935
    %v1937 = vand.u32 %v1936, 4294901760
    %1938 = vmatpush1.msra.mxu0 %v1937
    %1939 = vmatprep.subr.mxu0 0.0
    %v1940 = vand.u32 %v1830, 4294901760
    %v1941 = vsub.f32 %v1830, %v1940
    %v1942 = vand.u32 %v1941, 4294901760
    %v1943 = vsub.f32 %v1941, %v1942
    %v1944 = vand.u32 %v1943, 4294901760
    %1945 = vmatpush1.msra.mxu0 %v1944
    %1946 = vmatprep.subr.mxu0 0.0
    %v1947 = vand.u32 %v1831, 4294901760
    %v1948 = vsub.f32 %v1831, %v1947
    %v1949 = vand.u32 %v1948, 4294901760
    %v1950 = vsub.f32 %v1948, %v1949
    %v1951 = vand.u32 %v1950, 4294901760
    %1952 = vmatpush1.msra.mxu0 %v1951
    %1953 = vmatprep.subr.mxu0 0.0
    %v1954 = vand.u32 %v1832, 4294901760
    %v1955 = vsub.f32 %v1832, %v1954
    %v1956 = vand.u32 %v1955, 4294901760
    %v1957 = vsub.f32 %v1955, %v1956
    %v1958 = vand.u32 %v1957, 4294901760
    %1959 = vmatpush1.msra.mxu0 %v1958
    %1960 = vmatprep.subr.mxu0 0.0
    %1961 = vmatpush1.msra.mxu0 0.0
    %1962 = vmatprep.subr.mxu0 0.0
    %1963 = vmatpush1.msra.mxu0 0.0
    %1964 = vmatprep.subr.mxu0 0.0
    %1965 = vmatpush1.msra.mxu0 0.0
    %1966 = vmatprep.subr.mxu0 0.0
    %1967 = vmatpush1.msra.mxu0 0.0
    %1968 = vmatprep.subr.mxu0 0.0
    %1969 = vmatpush1.msra.mxu0 0.0
    %1970 = vmatprep.subr.mxu0 0.0
    %1971 = vmatpush1.msra.mxu0 0.0
    %1972 = vmatprep.subr.mxu0 0.0
    %1973 = vmatpush1.msra.mxu0 0.0
    %1974 = vmatprep.subr.mxu0 0.0
    %1975 = vmatpush1.msra.mxu0 0.0
    %1976 = vmatprep.subr.mxu0 0.0
    %1977 = vmatpush1.msra.mxu0 0.0
    %1978 = vmatprep.subr.mxu0 0.0
    %1979 = vmatpush1.msra.mxu0 0.0
    %1980 = vmatprep.subr.mxu0 0.0
    %1981 = vmatpush1.msra.mxu0 0.0
    %1982 = vmatprep.subr.mxu0 0.0
    %1983 = vmatpush1.msra.mxu0 0.0
    %1984 = vmatprep.subr.mxu0 0.0
    %1985 = vmatpush1.msra.mxu0 0.0
    %1986 = vmatprep.subr.mxu0 0.0
    %1987 = vmatpush1.msra.mxu0 0.0
    %1988 = vmatprep.subr.mxu0 0.0
    %1989 = vmatpush1.msra.mxu0 0.0
    %1990 = vmatprep.subr.mxu0 0.0
    %1991 = vmatpush1.msra.mxu0 0.0
    %1992 = vmatprep.subr.mxu0 0.0
    %1993 = vmatpush1.msra.mxu0 0.0
    %1994 = vmatprep.subr.mxu0 0.0
    %1995 = vmatpush1.msra.mxu0 0.0
    %1996 = vmatprep.subr.mxu0 0.0
    %1997 = vmatpush1.msra.mxu0 0.0
    %1998 = vmatprep.subr.mxu0 0.0
    %1999 = vmatpush1.msra.mxu0 0.0
    %2000 = vmatprep.subr.mxu0 0.0
    %2001 = vmatpush1.msra.mxu0 0.0
    %2002 = vmatprep.subr.mxu0 0.0
    %2003 = vmatpush1.msra.mxu0 0.0
    %2004 = vmatprep.subr.mxu0 0.0
    %2005 = vmatpush1.msra.mxu0 0.0
    %2006 = vmatprep.subr.mxu0 0.0
    %2007 = vmatpush1.msra.mxu0 0.0
    %2008 = vmatprep.subr.mxu0 0.0
    %2009 = vmatpush1.msra.mxu0 0.0
    %2010 = vmatprep.subr.mxu0 0.0
    %2011 = vmatpush1.msra.mxu0 0.0
    %2012 = vmatprep.subr.mxu0 0.0
    %2013 = vmatpush1.msra.mxu0 0.0
    %2014 = vmatprep.subr.mxu0 0.0
    %2015 = vmatpush1.msra.mxu0 0.0
    %2016 = vmatprep.mubr.f32.mxu0 0.0
    %v2017 = vand.u32 %v673, 4294901760
    %2018 = vmatmul.mubr.f32.gmra.mrb[0].mxu0 %v2017
    %v2019 = vpop.f32.mrb[0].mxu0
    %v2020 = vadd.f32 %v1909, %v2019
    %v2021 = vpop.f32.mrb[0].mxu0
    %2022 = vmatprep.mubr.f32.mxu0 0.0
    %v2023 = vand.u32 %v676, 4294901760
    %2024 = vmatmul.mubr.f32.gmra.mrb[0].mxu0 %v2023
    %v2025 = vpop.f32.mrb[0].mxu0
    %v2026 = vadd.f32 %v1919, %v2025
    %v2027 = vpop.f32.mrb[0].mxu0
    %2028 = vmatprep.mubr.f32.mxu0 0.0
    %v2029 = vand.u32 %v679, 4294901760
    %2030 = vmatmul.mubr.f32.gmra.mrb[0].mxu0 %v2029
    %v2031 = vpop.f32.mrb[0].mxu0
    %v2032 = vadd.f32 %v1929, %v2031
    %v2033 = vpop.f32.mrb[0].mxu0
    %2034 = vdwg.mxu0
    %2035 = vmatprep.subr.mxu0 0.0
    %v2036 = vand.u32 %v1829, 4294901760
    %v2037 = vsub.f32 %v1829, %v2036
    %2038 = vmatpush1.msra.mxu0 %v2037
    %2039 = vmatprep.subr.mxu0 0.0
    %v2040 = vand.u32 %v1830, 4294901760
    %v2041 = vsub.f32 %v1830, %v2040
    %2042 = vmatpush1.msra.mxu0 %v2041
    %2043 = vmatprep.subr.mxu0 0.0
    %v2044 = vand.u32 %v1831, 4294901760
    %v2045 = vsub.f32 %v1831, %v2044
    %2046 = vmatpush1.msra.mxu0 %v2045
    %2047 = vmatprep.subr.mxu0 0.0
    %v2048 = vand.u32 %v1832, 4294901760
    %v2049 = vsub.f32 %v1832, %v2048
    %2050 = vmatpush1.msra.mxu0 %v2049
    %2051 = vmatprep.subr.mxu0 0.0
    %2052 = vmatpush1.msra.mxu0 0.0
    %2053 = vmatprep.subr.mxu0 0.0
    %2054 = vmatpush1.msra.mxu0 0.0
    %2055 = vmatprep.subr.mxu0 0.0
    %2056 = vmatpush1.msra.mxu0 0.0
    %2057 = vmatprep.subr.mxu0 0.0
    %2058 = vmatpush1.msra.mxu0 0.0
    %2059 = vmatprep.subr.mxu0 0.0
    %2060 = vmatpush1.msra.mxu0 0.0
    %2061 = vmatprep.subr.mxu0 0.0
    %2062 = vmatpush1.msra.mxu0 0.0
    %2063 = vmatprep.subr.mxu0 0.0
    %2064 = vmatpush1.msra.mxu0 0.0
    %2065 = vmatprep.subr.mxu0 0.0
    %2066 = vmatpush1.msra.mxu0 0.0
    %2067 = vmatprep.subr.mxu0 0.0
    %2068 = vmatpush1.msra.mxu0 0.0
    %2069 = vmatprep.subr.mxu0 0.0
    %2070 = vmatpush1.msra.mxu0 0.0
    %2071 = vmatprep.subr.mxu0 0.0
    %2072 = vmatpush1.msra.mxu0 0.0
    %2073 = vmatprep.subr.mxu0 0.0
    %2074 = vmatpush1.msra.mxu0 0.0
    %2075 = vmatprep.subr.mxu0 0.0
    %2076 = vmatpush1.msra.mxu0 0.0
    %2077 = vmatprep.subr.mxu0 0.0
    %2078 = vmatpush1.msra.mxu0 0.0
    %2079 = vmatprep.subr.mxu0 0.0
    %2080 = vmatpush1.msra.mxu0 0.0
    %2081 = vmatprep.subr.mxu0 0.0
    %2082 = vmatpush1.msra.mxu0 0.0
    %2083 = vmatprep.subr.mxu0 0.0
    %2084 = vmatpush1.msra.mxu0 0.0
    %2085 = vmatprep.subr.mxu0 0.0
    %2086 = vmatpush1.msra.mxu0 0.0
    %2087 = vmatprep.subr.mxu0 0.0
    %2088 = vmatpush1.msra.mxu0 0.0
    %2089 = vmatprep.subr.mxu0 0.0
    %2090 = vmatpush1.msra.mxu0 0.0
    %2091 = vmatprep.subr.mxu0 0.0
    %2092 = vmatpush1.msra.mxu0 0.0
    %2093 = vmatprep.subr.mxu0 0.0
    %2094 = vmatpush1.msra.mxu0 0.0
    %2095 = vmatprep.subr.mxu0 0.0
    %2096 = vmatpush1.msra.mxu0 0.0
    %2097 = vmatprep.subr.mxu0 0.0
    %2098 = vmatpush1.msra.mxu0 0.0
    %2099 = vmatprep.subr.mxu0 0.0
    %2100 = vmatpush1.msra.mxu0 0.0
    %2101 = vmatprep.subr.mxu0 0.0
    %2102 = vmatpush1.msra.mxu0 0.0
    %2103 = vmatprep.subr.mxu0 0.0
    %2104 = vmatpush1.msra.mxu0 0.0
    %2105 = vmatprep.subr.mxu0 0.0
    %2106 = vmatpush1.msra.mxu0 0.0
    %2107 = vmatprep.mubr.f32.mxu0 0.0
    %v2108 = vand.u32 %v673, 4294901760
    %v2109 = vsub.f32 %v673, %v2108
    %2110 = vmatmul.mubr.f32.gmra.mrb[0].mxu0 %v2109
    %v2111 = vpop.f32.mrb[0].mxu0
    %v2112 = vadd.f32 %v2020, %v2111
    %v2113 = vpop.f32.mrb[0].mxu0
    %2114 = vmatprep.mubr.f32.mxu0 0.0
    %v2115 = vand.u32 %v676, 4294901760
    %v2116 = vsub.f32 %v676, %v2115
    %2117 = vmatmul.mubr.f32.gmra.mrb[0].mxu0 %v2116
    %v2118 = vpop.f32.mrb[0].mxu0
    %v2119 = vadd.f32 %v2026, %v2118
    %v2120 = vpop.f32.mrb[0].mxu0
    %2121 = vmatprep.mubr.f32.mxu0 0.0
    %v2122 = vand.u32 %v679, 4294901760
    %v2123 = vsub.f32 %v679, %v2122
    %2124 = vmatmul.mubr.f32.gmra.mrb[0].mxu0 %v2123
    %v2125 = vpop.f32.mrb[0].mxu0
    %v2126 = vadd.f32 %v2032, %v2125
    %v2127 = vpop.f32.mrb[0].mxu0
    %2128 = vdwg.mxu0
    %2129 = vmatprep.subr.mxu0 0.0
    %v2130 = vand.u32 %v1829, 4294901760
    %2131 = vmatpush1.msra.mxu0 %v2130
    %2132 = vmatprep.subr.mxu0 0.0
    %v2133 = vand.u32 %v1830, 4294901760
    %2134 = vmatpush1.msra.mxu0 %v2133
    %2135 = vmatprep.subr.mxu0 0.0
    %v2136 = vand.u32 %v1831, 4294901760
    %2137 = vmatpush1.msra.mxu0 %v2136
    %2138 = vmatprep.subr.mxu0 0.0
    %v2139 = vand.u32 %v1832, 4294901760
    %2140 = vmatpush1.msra.mxu0 %v2139
    %2141 = vmatprep.subr.mxu0 0.0
    %2142 = vmatpush1.msra.mxu0 0.0
    %2143 = vmatprep.subr.mxu0 0.0
    %2144 = vmatpush1.msra.mxu0 0.0
    %2145 = vmatprep.subr.mxu0 0.0
    %2146 = vmatpush1.msra.mxu0 0.0
    %2147 = vmatprep.subr.mxu0 0.0
    %2148 = vmatpush1.msra.mxu0 0.0
    %2149 = vmatprep.subr.mxu0 0.0
    %2150 = vmatpush1.msra.mxu0 0.0
    %2151 = vmatprep.subr.mxu0 0.0
    %2152 = vmatpush1.msra.mxu0 0.0
    %2153 = vmatprep.subr.mxu0 0.0
    %2154 = vmatpush1.msra.mxu0 0.0
    %2155 = vmatprep.subr.mxu0 0.0
    %2156 = vmatpush1.msra.mxu0 0.0
    %2157 = vmatprep.subr.mxu0 0.0
    %2158 = vmatpush1.msra.mxu0 0.0
    %2159 = vmatprep.subr.mxu0 0.0
    %2160 = vmatpush1.msra.mxu0 0.0
    %2161 = vmatprep.subr.mxu0 0.0
    %2162 = vmatpush1.msra.mxu0 0.0
    %2163 = vmatprep.subr.mxu0 0.0
    %2164 = vmatpush1.msra.mxu0 0.0
    %2165 = vmatprep.subr.mxu0 0.0
    %2166 = vmatpush1.msra.mxu0 0.0
    %2167 = vmatprep.subr.mxu0 0.0
    %2168 = vmatpush1.msra.mxu0 0.0
    %2169 = vmatprep.subr.mxu0 0.0
    %2170 = vmatpush1.msra.mxu0 0.0
    %2171 = vmatprep.subr.mxu0 0.0
    %2172 = vmatpush1.msra.mxu0 0.0
    %2173 = vmatprep.subr.mxu0 0.0
    %2174 = vmatpush1.msra.mxu0 0.0
    %2175 = vmatprep.subr.mxu0 0.0
    %2176 = vmatpush1.msra.mxu0 0.0
    %2177 = vmatprep.subr.mxu0 0.0
    %2178 = vmatpush1.msra.mxu0 0.0
    %2179 = vmatprep.subr.mxu0 0.0
    %2180 = vmatpush1.msra.mxu0 0.0
    %2181 = vmatprep.subr.mxu0 0.0
    %2182 = vmatpush1.msra.mxu0 0.0
    %2183 = vmatprep.subr.mxu0 0.0
    %2184 = vmatpush1.msra.mxu0 0.0
    %2185 = vmatprep.subr.mxu0 0.0
    %2186 = vmatpush1.msra.mxu0 0.0
    %2187 = vmatprep.subr.mxu0 0.0
    %2188 = vmatpush1.msra.mxu0 0.0
    %2189 = vmatprep.subr.mxu0 0.0
    %2190 = vmatpush1.msra.mxu0 0.0
    %2191 = vmatprep.subr.mxu0 0.0
    %2192 = vmatpush1.msra.mxu0 0.0
    %2193 = vmatprep.subr.mxu0 0.0
    %2194 = vmatpush1.msra.mxu0 0.0
    %2195 = vmatprep.subr.mxu0 0.0
    %2196 = vmatpush1.msra.mxu0 0.0
    %2197 = vmatprep.mubr.f32.mxu0 0.0
    %v2198 = vand.u32 %v673, 4294901760
    %v2199 = vsub.f32 %v673, %v2198
    %v2200 = vand.u32 %v2199, 4294901760
    %2201 = vmatmul.mubr.f32.gmra.mrb[0].mxu0 %v2200
    %v2202 = vpop.f32.mrb[0].mxu0
    %v2203 = vadd.f32 %v2112, %v2202
    %v2204 = vpop.f32.mrb[0].mxu0
    %2205 = vmatprep.mubr.f32.mxu0 0.0
    %v2206 = vand.u32 %v676, 4294901760
    %v2207 = vsub.f32 %v676, %v2206
    %v2208 = vand.u32 %v2207, 4294901760
    %2209 = vmatmul.mubr.f32.gmra.mrb[0].mxu0 %v2208
    %v2210 = vpop.f32.mrb[0].mxu0
    %v2211 = vadd.f32 %v2119, %v2210
    %v2212 = vpop.f32.mrb[0].mxu0
    %2213 = vmatprep.mubr.f32.mxu0 0.0
    %v2214 = vand.u32 %v679, 4294901760
    %v2215 = vsub.f32 %v679, %v2214
    %v2216 = vand.u32 %v2215, 4294901760
    %2217 = vmatmul.mubr.f32.gmra.mrb[0].mxu0 %v2216
    %v2218 = vpop.f32.mrb[0].mxu0
    %v2219 = vadd.f32 %v2126, %v2218
    %v2220 = vpop.f32.mrb[0].mxu0
    %2221 = vdwg.mxu0
    %2222 = vmatprep.subr.mxu0 0.0
    %v2223 = vand.u32 %v1829, 4294901760
    %v2224 = vsub.f32 %v1829, %v2223
    %v2225 = vand.u32 %v2224, 4294901760
    %2226 = vmatpush1.msra.mxu0 %v2225
    %2227 = vmatprep.subr.mxu0 0.0
    %v2228 = vand.u32 %v1830, 4294901760
    %v2229 = vsub.f32 %v1830, %v2228
    %v2230 = vand.u32 %v2229, 4294901760
    %2231 = vmatpush1.msra.mxu0 %v2230
    %2232 = vmatprep.subr.mxu0 0.0
    %v2233 = vand.u32 %v1831, 4294901760
    %v2234 = vsub.f32 %v1831, %v2233
    %v2235 = vand.u32 %v2234, 4294901760
    %2236 = vmatpush1.msra.mxu0 %v2235
    %2237 = vmatprep.subr.mxu0 0.0
    %v2238 = vand.u32 %v1832, 4294901760
    %v2239 = vsub.f32 %v1832, %v2238
    %v2240 = vand.u32 %v2239, 4294901760
    %2241 = vmatpush1.msra.mxu0 %v2240
    %2242 = vmatprep.subr.mxu0 0.0
    %2243 = vmatpush1.msra.mxu0 0.0
    %2244 = vmatprep.subr.mxu0 0.0
    %2245 = vmatpush1.msra.mxu0 0.0
    %2246 = vmatprep.subr.mxu0 0.0
    %2247 = vmatpush1.msra.mxu0 0.0
    %2248 = vmatprep.subr.mxu0 0.0
    %2249 = vmatpush1.msra.mxu0 0.0
    %2250 = vmatprep.subr.mxu0 0.0
    %2251 = vmatpush1.msra.mxu0 0.0
    %2252 = vmatprep.subr.mxu0 0.0
    %2253 = vmatpush1.msra.mxu0 0.0
    %2254 = vmatprep.subr.mxu0 0.0
    %2255 = vmatpush1.msra.mxu0 0.0
    %2256 = vmatprep.subr.mxu0 0.0
    %2257 = vmatpush1.msra.mxu0 0.0
    %2258 = vmatprep.subr.mxu0 0.0
    %2259 = vmatpush1.msra.mxu0 0.0
    %2260 = vmatprep.subr.mxu0 0.0
    %2261 = vmatpush1.msra.mxu0 0.0
    %2262 = vmatprep.subr.mxu0 0.0
    %2263 = vmatpush1.msra.mxu0 0.0
    %2264 = vmatprep.subr.mxu0 0.0
    %2265 = vmatpush1.msra.mxu0 0.0
    %2266 = vmatprep.subr.mxu0 0.0
    %2267 = vmatpush1.msra.mxu0 0.0
    %2268 = vmatprep.subr.mxu0 0.0
    %2269 = vmatpush1.msra.mxu0 0.0
    %2270 = vmatprep.subr.mxu0 0.0
    %2271 = vmatpush1.msra.mxu0 0.0
    %2272 = vmatprep.subr.mxu0 0.0
    %2273 = vmatpush1.msra.mxu0 0.0
    %2274 = vmatprep.subr.mxu0 0.0
    %2275 = vmatpush1.msra.mxu0 0.0
    %2276 = vmatprep.subr.mxu0 0.0
    %2277 = vmatpush1.msra.mxu0 0.0
    %2278 = vmatprep.subr.mxu0 0.0
    %2279 = vmatpush1.msra.mxu0 0.0
    %2280 = vmatprep.subr.mxu0 0.0
    %2281 = vmatpush1.msra.mxu0 0.0
    %2282 = vmatprep.subr.mxu0 0.0
    %2283 = vmatpush1.msra.mxu0 0.0
    %2284 = vmatprep.subr.mxu0 0.0
    %2285 = vmatpush1.msra.mxu0 0.0
    %2286 = vmatprep.subr.mxu0 0.0
    %2287 = vmatpush1.msra.mxu0 0.0
    %2288 = vmatprep.subr.mxu0 0.0
    %2289 = vmatpush1.msra.mxu0 0.0
    %2290 = vmatprep.subr.mxu0 0.0
    %2291 = vmatpush1.msra.mxu0 0.0
    %2292 = vmatprep.subr.mxu0 0.0
    %2293 = vmatpush1.msra.mxu0 0.0
    %2294 = vmatprep.subr.mxu0 0.0
    %2295 = vmatpush1.msra.mxu0 0.0
    %2296 = vmatprep.subr.mxu0 0.0
    %2297 = vmatpush1.msra.mxu0 0.0
    %2298 = vmatprep.mubr.f32.mxu0 0.0
    %v2299 = vand.u32 %v673, 4294901760
    %2300 = vmatmul.mubr.f32.gmra.mrb[0].mxu0 %v2299
    %v2301 = vpop.f32.mrb[0].mxu0
    %v2302 = vadd.f32 %v2203, %v2301
    %v2303 = vpop.f32.mrb[0].mxu0
    %2304 = vmatprep.mubr.f32.mxu0 0.0
    %v2305 = vand.u32 %v676, 4294901760
    %2306 = vmatmul.mubr.f32.gmra.mrb[0].mxu0 %v2305
    %v2307 = vpop.f32.mrb[0].mxu0
    %v2308 = vadd.f32 %v2211, %v2307
    %v2309 = vpop.f32.mrb[0].mxu0
    %2310 = vmatprep.mubr.f32.mxu0 0.0
    %v2311 = vand.u32 %v679, 4294901760
    %2312 = vmatmul.mubr.f32.gmra.mrb[0].mxu0 %v2311
    %v2313 = vpop.f32.mrb[0].mxu0
    %v2314 = vadd.f32 %v2219, %v2313
    %v2315 = vpop.f32.mrb[0].mxu0
    %2316 = vdwg.mxu0
    %2317 = vmatprep.subr.mxu0 0.0
    %v2318 = vand.u32 %v1829, 4294901760
    %2319 = vmatpush1.msra.mxu0 %v2318
    %2320 = vmatprep.subr.mxu0 0.0
    %v2321 = vand.u32 %v1830, 4294901760
    %2322 = vmatpush1.msra.mxu0 %v2321
    %2323 = vmatprep.subr.mxu0 0.0
    %v2324 = vand.u32 %v1831, 4294901760
    %2325 = vmatpush1.msra.mxu0 %v2324
    %2326 = vmatprep.subr.mxu0 0.0
    %v2327 = vand.u32 %v1832, 4294901760
    %2328 = vmatpush1.msra.mxu0 %v2327
    %2329 = vmatprep.subr.mxu0 0.0
    %2330 = vmatpush1.msra.mxu0 0.0
    %2331 = vmatprep.subr.mxu0 0.0
    %2332 = vmatpush1.msra.mxu0 0.0
    %2333 = vmatprep.subr.mxu0 0.0
    %2334 = vmatpush1.msra.mxu0 0.0
    %2335 = vmatprep.subr.mxu0 0.0
    %2336 = vmatpush1.msra.mxu0 0.0
    %2337 = vmatprep.subr.mxu0 0.0
    %2338 = vmatpush1.msra.mxu0 0.0
    %2339 = vmatprep.subr.mxu0 0.0
    %2340 = vmatpush1.msra.mxu0 0.0
    %2341 = vmatprep.subr.mxu0 0.0
    %2342 = vmatpush1.msra.mxu0 0.0
    %2343 = vmatprep.subr.mxu0 0.0
    %2344 = vmatpush1.msra.mxu0 0.0
    %2345 = vmatprep.subr.mxu0 0.0
    %2346 = vmatpush1.msra.mxu0 0.0
    %2347 = vmatprep.subr.mxu0 0.0
    %2348 = vmatpush1.msra.mxu0 0.0
    %2349 = vmatprep.subr.mxu0 0.0
    %2350 = vmatpush1.msra.mxu0 0.0
    %2351 = vmatprep.subr.mxu0 0.0
    %2352 = vmatpush1.msra.mxu0 0.0
    %2353 = vmatprep.subr.mxu0 0.0
    %2354 = vmatpush1.msra.mxu0 0.0
    %2355 = vmatprep.subr.mxu0 0.0
    %2356 = vmatpush1.msra.mxu0 0.0
    %2357 = vmatprep.subr.mxu0 0.0
    %2358 = vmatpush1.msra.mxu0 0.0
    %2359 = vmatprep.subr.mxu0 0.0
    %2360 = vmatpush1.msra.mxu0 0.0
    %2361 = vmatprep.subr.mxu0 0.0
    %2362 = vmatpush1.msra.mxu0 0.0
    %2363 = vmatprep.subr.mxu0 0.0
    %2364 = vmatpush1.msra.mxu0 0.0
    %2365 = vmatprep.subr.mxu0 0.0
    %2366 = vmatpush1.msra.mxu0 0.0
    %2367 = vmatprep.subr.mxu0 0.0
    %2368 = vmatpush1.msra.mxu0 0.0
    %2369 = vmatprep.subr.mxu0 0.0
    %2370 = vmatpush1.msra.mxu0 0.0
    %2371 = vmatprep.subr.mxu0 0.0
    %2372 = vmatpush1.msra.mxu0 0.0
    %2373 = vmatprep.subr.mxu0 0.0
    %2374 = vmatpush1.msra.mxu0 0.0
    %2375 = vmatprep.subr.mxu0 0.0
    %2376 = vmatpush1.msra.mxu0 0.0
    %2377 = vmatprep.subr.mxu0 0.0
    %2378 = vmatpush1.msra.mxu0 0.0
    %2379 = vmatprep.subr.mxu0 0.0
    %2380 = vmatpush1.msra.mxu0 0.0
    %2381 = vmatprep.subr.mxu0 0.0
    %2382 = vmatpush1.msra.mxu0 0.0
    %2383 = vmatprep.subr.mxu0 0.0
    %2384 = vmatpush1.msra.mxu0 0.0
    %2385 = vmatprep.mubr.f32.mxu0 0.0
    %v2386 = vand.u32 %v673, 4294901760
    %2387 = vmatmul.mubr.f32.gmra.mrb[0].mxu0 %v2386
    %v2388 = vpop.f32.mrb[0].mxu0
    %v2389 = vadd.f32 %v2302, %v2388
    %v2390 = vpop.f32.mrb[0].mxu0
    %2391 = vmatprep.mubr.f32.mxu0 0.0
    %v2392 = vand.u32 %v676, 4294901760
    %2393 = vmatmul.mubr.f32.gmra.mrb[0].mxu0 %v2392
    %v2394 = vpop.f32.mrb[0].mxu0
    %v2395 = vadd.f32 %v2308, %v2394
    %v2396 = vpop.f32.mrb[0].mxu0
    %2397 = vmatprep.mubr.f32.mxu0 0.0
    %v2398 = vand.u32 %v679, 4294901760
    %2399 = vmatmul.mubr.f32.gmra.mrb[0].mxu0 %v2398
    %v2400 = vpop.f32.mrb[0].mxu0
    %v2401 = vadd.f32 %v2314, %v2400
    %v2402 = vpop.f32.mrb[0].mxu0
    %2403 = vdwg.mxu0
    %2407 = vrot.lane.b32.xlu0 %v1237, 112
    %v2408 = vpop.permute.xlu0 %2407
    %2409 = vrot.lane.b32.xlu0 %v1243, 112
    %v2410 = vpop.permute.xlu0 %2409
    %2411 = vrot.lane.b32.xlu0 %v1249, 112
    %v2412 = vpop.permute.xlu0 %2411
    %2416 = vrot.lane.b32.xlu0 %v1813, 112
    %v2417 = vpop.permute.xlu0 %2416
    %2418 = vrot.lane.b32.xlu0 %v1819, 112
    %v2419 = vpop.permute.xlu0 %2418
    %2420 = vrot.lane.b32.xlu0 %v1825, 112
    %v2421 = vpop.permute.xlu0 %2420
    %2425 = vrot.lane.b32.xlu0 %v2389, 112
    %v2426 = vpop.permute.xlu0 %2425
    %2427 = vrot.lane.b32.xlu0 %v2395, 112
    %v2428 = vpop.permute.xlu0 %2427
    %2429 = vrot.lane.b32.xlu0 %v2401, 112
    %v2430 = vpop.permute.xlu0 %2429
    %vm2434 = vcmask 130048
    %v2435 = vsel %vm2434, %v1237, 0
    %v2437 = vsel %vm2434, %v1813, 0
    %2439 = vmatprep.subr.mxu0 0.0
    %v2440 = vand.u32 %v2437, 4294901760
    %2441 = vmatpush1.xpose.msra.mxu0 %v2440
    %2442 = vmatprep.subr.mxu0 0.0
    %2443 = vmatpush1.xpose.msra.mxu0 0.0
    %2444 = vmatprep.subr.mxu0 0.0
    %2445 = vmatpush1.xpose.msra.mxu0 0.0
    %2446 = vmatprep.subr.mxu0 0.0
    %2447 = vmatpush1.xpose.msra.mxu0 0.0
    %2448 = vmatprep.subr.mxu0 0.0
    %2449 = vmatpush1.xpose.msra.mxu0 0.0
    %2450 = vmatprep.subr.mxu0 0.0
    %2451 = vmatpush1.xpose.msra.mxu0 0.0
    %2452 = vmatprep.subr.mxu0 0.0
    %2453 = vmatpush1.xpose.msra.mxu0 0.0
    %2454 = vmatprep.subr.mxu0 0.0
    %2455 = vmatpush1.xpose.msra.mxu0 0.0
    %2456 = vmatprep.subr.mxu0 0.0
    %2457 = vmatpush1.xpose.msra.mxu0 0.0
    %2458 = vmatprep.subr.mxu0 0.0
    %2459 = vmatpush1.xpose.msra.mxu0 0.0
    %2460 = vmatprep.subr.mxu0 0.0
    %2461 = vmatpush1.xpose.msra.mxu0 0.0
    %2462 = vmatprep.subr.mxu0 0.0
    %2463 = vmatpush1.xpose.msra.mxu0 0.0
    %2464 = vmatprep.subr.mxu0 0.0
    %2465 = vmatpush1.xpose.msra.mxu0 0.0
    %2466 = vmatprep.subr.mxu0 0.0
    %2467 = vmatpush1.xpose.msra.mxu0 0.0
    %2468 = vmatprep.subr.mxu0 0.0
    %2469 = vmatpush1.xpose.msra.mxu0 0.0
    %2470 = vmatprep.subr.mxu0 0.0
    %2471 = vmatpush1.xpose.msra.mxu0 0.0
    %2472 = vmatprep.subr.mxu0 0.0
    %2473 = vmatpush1.xpose.msra.mxu0 0.0
    %2474 = vmatprep.subr.mxu0 0.0
    %2475 = vmatpush1.xpose.msra.mxu0 0.0
    %2476 = vmatprep.subr.mxu0 0.0
    %2477 = vmatpush1.xpose.msra.mxu0 0.0
    %2478 = vmatprep.subr.mxu0 0.0
    %2479 = vmatpush1.xpose.msra.mxu0 0.0
    %2480 = vmatprep.subr.mxu0 0.0
    %2481 = vmatpush1.xpose.msra.mxu0 0.0
    %2482 = vmatprep.subr.mxu0 0.0
    %2483 = vmatpush1.xpose.msra.mxu0 0.0
    %2484 = vmatprep.subr.mxu0 0.0
    %2485 = vmatpush1.xpose.msra.mxu0 0.0
    %2486 = vmatprep.subr.mxu0 0.0
    %2487 = vmatpush1.xpose.msra.mxu0 0.0
    %2488 = vmatprep.subr.mxu0 0.0
    %2489 = vmatpush1.xpose.msra.mxu0 0.0
    %2490 = vmatprep.subr.mxu0 0.0
    %2491 = vmatpush1.xpose.msra.mxu0 0.0
    %2492 = vmatprep.subr.mxu0 0.0
    %2493 = vmatpush1.xpose.msra.mxu0 0.0
    %2494 = vmatprep.subr.mxu0 0.0
    %2495 = vmatpush1.xpose.msra.mxu0 0.0
    %2496 = vmatprep.subr.mxu0 0.0
    %2497 = vmatpush1.xpose.msra.mxu0 0.0
    %2498 = vmatprep.subr.mxu0 0.0
    %2499 = vmatpush1.xpose.msra.mxu0 0.0
    %2500 = vmatprep.subr.mxu0 0.0
    %2501 = vmatpush1.xpose.msra.mxu0 0.0
    %2502 = vmatprep.subr.mxu0 0.0
    %2503 = vmatpush1.xpose.msra.mxu0 0.0
    %2504 = vmatprep.mubr.f32.mxu0 0.0
    %v2505 = vand.u32 %v2435, 4294901760
    %v2506 = vsub.f32 %v2435, %v2505
    %v2507 = vand.u32 %v2506, 4294901760
    %v2508 = vsub.f32 %v2506, %v2507
    %v2509 = vand.u32 %v2508, 4294901760
    %2510 = vmatmul.mubr.f32.gmra.mrb[0].mxu0 %v2509
    %v2511 = vpop.f32.mrb[0].mxu0
    %v2512 = vadd.f32 0.0, %v2511
    %v2513 = vpop.f32.mrb[0].mxu0
    %2514 = vdwg.mxu0
    %2515 = vmatprep.subr.mxu0 0.0
    %v2516 = vand.u32 %v2437, 4294901760
    %v2517 = vsub.f32 %v2437, %v2516
    %v2518 = vand.u32 %v2517, 4294901760
    %v2519 = vsub.f32 %v2517, %v2518
    %v2520 = vand.u32 %v2519, 4294901760
    %2521 = vmatpush1.xpose.msra.mxu0 %v2520
    %2522 = vmatprep.subr.mxu0 0.0
    %2523 = vmatpush1.xpose.msra.mxu0 0.0
    %2524 = vmatprep.subr.mxu0 0.0
    %2525 = vmatpush1.xpose.msra.mxu0 0.0
    %2526 = vmatprep.subr.mxu0 0.0
    %2527 = vmatpush1.xpose.msra.mxu0 0.0
    %2528 = vmatprep.subr.mxu0 0.0
    %2529 = vmatpush1.xpose.msra.mxu0 0.0
    %2530 = vmatprep.subr.mxu0 0.0
    %2531 = vmatpush1.xpose.msra.mxu0 0.0
    %2532 = vmatprep.subr.mxu0 0.0
    %2533 = vmatpush1.xpose.msra.mxu0 0.0
    %2534 = vmatprep.subr.mxu0 0.0
    %2535 = vmatpush1.xpose.msra.mxu0 0.0
    %2536 = vmatprep.subr.mxu0 0.0
    %2537 = vmatpush1.xpose.msra.mxu0 0.0
    %2538 = vmatprep.subr.mxu0 0.0
    %2539 = vmatpush1.xpose.msra.mxu0 0.0
    %2540 = vmatprep.subr.mxu0 0.0
    %2541 = vmatpush1.xpose.msra.mxu0 0.0
    %2542 = vmatprep.subr.mxu0 0.0
    %2543 = vmatpush1.xpose.msra.mxu0 0.0
    %2544 = vmatprep.subr.mxu0 0.0
    %2545 = vmatpush1.xpose.msra.mxu0 0.0
    %2546 = vmatprep.subr.mxu0 0.0
    %2547 = vmatpush1.xpose.msra.mxu0 0.0
    %2548 = vmatprep.subr.mxu0 0.0
    %2549 = vmatpush1.xpose.msra.mxu0 0.0
    %2550 = vmatprep.subr.mxu0 0.0
    %2551 = vmatpush1.xpose.msra.mxu0 0.0
    %2552 = vmatprep.subr.mxu0 0.0
    %2553 = vmatpush1.xpose.msra.mxu0 0.0
    %2554 = vmatprep.subr.mxu0 0.0
    %2555 = vmatpush1.xpose.msra.mxu0 0.0
    %2556 = vmatprep.subr.mxu0 0.0
    %2557 = vmatpush1.xpose.msra.mxu0 0.0
    %2558 = vmatprep.subr.mxu0 0.0
    %2559 = vmatpush1.xpose.msra.mxu0 0.0
    %2560 = vmatprep.subr.mxu0 0.0
    %2561 = vmatpush1.xpose.msra.mxu0 0.0
    %2562 = vmatprep.subr.mxu0 0.0
    %2563 = vmatpush1.xpose.msra.mxu0 0.0
    %2564 = vmatprep.subr.mxu0 0.0
    %2565 = vmatpush1.xpose.msra.mxu0 0.0
    %2566 = vmatprep.subr.mxu0 0.0
    %2567 = vmatpush1.xpose.msra.mxu0 0.0
    %2568 = vmatprep.subr.mxu0 0.0
    %2569 = vmatpush1.xpose.msra.mxu0 0.0
    %2570 = vmatprep.subr.mxu0 0.0
    %2571 = vmatpush1.xpose.msra.mxu0 0.0
    %2572 = vmatprep.subr.mxu0 0.0
    %2573 = vmatpush1.xpose.msra.mxu0 0.0
    %2574 = vmatprep.subr.mxu0 0.0
    %2575 = vmatpush1.xpose.msra.mxu0 0.0
    %2576 = vmatprep.subr.mxu0 0.0
    %2577 = vmatpush1.xpose.msra.mxu0 0.0
    %2578 = vmatprep.subr.mxu0 0.0
    %2579 = vmatpush1.xpose.msra.mxu0 0.0
    %2580 = vmatprep.subr.mxu0 0.0
    %2581 = vmatpush1.xpose.msra.mxu0 0.0
    %2582 = vmatprep.subr.mxu0 0.0
    %2583 = vmatpush1.xpose.msra.mxu0 0.0
    %2584 = vmatprep.mubr.f32.mxu0 0.0
    %v2585 = vand.u32 %v2435, 4294901760
    %2586 = vmatmul.mubr.f32.gmra.mrb[0].mxu0 %v2585
    %v2587 = vpop.f32.mrb[0].mxu0
    %v2588 = vadd.f32 %v2512, %v2587
    %v2589 = vpop.f32.mrb[0].mxu0
    %2590 = vdwg.mxu0
    %2591 = vmatprep.subr.mxu0 0.0
    %v2592 = vand.u32 %v2437, 4294901760
    %v2593 = vsub.f32 %v2437, %v2592
    %2594 = vmatpush1.xpose.msra.mxu0 %v2593
    %2595 = vmatprep.subr.mxu0 0.0
    %2596 = vmatpush1.xpose.msra.mxu0 0.0
    %2597 = vmatprep.subr.mxu0 0.0
    %2598 = vmatpush1.xpose.msra.mxu0 0.0
    %2599 = vmatprep.subr.mxu0 0.0
    %2600 = vmatpush1.xpose.msra.mxu0 0.0
    %2601 = vmatprep.subr.mxu0 0.0
    %2602 = vmatpush1.xpose.msra.mxu0 0.0
    %2603 = vmatprep.subr.mxu0 0.0
    %2604 = vmatpush1.xpose.msra.mxu0 0.0
    %2605 = vmatprep.subr.mxu0 0.0
    %2606 = vmatpush1.xpose.msra.mxu0 0.0
    %2607 = vmatprep.subr.mxu0 0.0
    %2608 = vmatpush1.xpose.msra.mxu0 0.0
    %2609 = vmatprep.subr.mxu0 0.0
    %2610 = vmatpush1.xpose.msra.mxu0 0.0
    %2611 = vmatprep.subr.mxu0 0.0
    %2612 = vmatpush1.xpose.msra.mxu0 0.0
    %2613 = vmatprep.subr.mxu0 0.0
    %2614 = vmatpush1.xpose.msra.mxu0 0.0
    %2615 = vmatprep.subr.mxu0 0.0
    %2616 = vmatpush1.xpose.msra.mxu0 0.0
    %2617 = vmatprep.subr.mxu0 0.0
    %2618 = vmatpush1.xpose.msra.mxu0 0.0
    %2619 = vmatprep.subr.mxu0 0.0
    %2620 = vmatpush1.xpose.msra.mxu0 0.0
    %2621 = vmatprep.subr.mxu0 0.0
    %2622 = vmatpush1.xpose.msra.mxu0 0.0
    %2623 = vmatprep.subr.mxu0 0.0
    %2624 = vmatpush1.xpose.msra.mxu0 0.0
    %2625 = vmatprep.subr.mxu0 0.0
    %2626 = vmatpush1.xpose.msra.mxu0 0.0
    %2627 = vmatprep.subr.mxu0 0.0
    %2628 = vmatpush1.xpose.msra.mxu0 0.0
    %2629 = vmatprep.subr.mxu0 0.0
    %2630 = vmatpush1.xpose.msra.mxu0 0.0
    %2631 = vmatprep.subr.mxu0 0.0
    %2632 = vmatpush1.xpose.msra.mxu0 0.0
    %2633 = vmatprep.subr.mxu0 0.0
    %2634 = vmatpush1.xpose.msra.mxu0 0.0
    %2635 = vmatprep.subr.mxu0 0.0
    %2636 = vmatpush1.xpose.msra.mxu0 0.0
    %2637 = vmatprep.subr.mxu0 0.0
    %2638 = vmatpush1.xpose.msra.mxu0 0.0
    %2639 = vmatprep.subr.mxu0 0.0
    %2640 = vmatpush1.xpose.msra.mxu0 0.0
    %2641 = vmatprep.subr.mxu0 0.0
    %2642 = vmatpush1.xpose.msra.mxu0 0.0
    %2643 = vmatprep.subr.mxu0 0.0
    %2644 = vmatpush1.xpose.msra.mxu0 0.0
    %2645 = vmatprep.subr.mxu0 0.0
    %2646 = vmatpush1.xpose.msra.mxu0 0.0
    %2647 = vmatprep.subr.mxu0 0.0
    %2648 = vmatpush1.xpose.msra.mxu0 0.0
    %2649 = vmatprep.subr.mxu0 0.0
    %2650 = vmatpush1.xpose.msra.mxu0 0.0
    %2651 = vmatprep.subr.mxu0 0.0
    %2652 = vmatpush1.xpose.msra.mxu0 0.0
    %2653 = vmatprep.subr.mxu0 0.0
    %2654 = vmatpush1.xpose.msra.mxu0 0.0
    %2655 = vmatprep.subr.mxu0 0.0
    %2656 = vmatpush1.xpose.msra.mxu0 0.0
    %2657 = vmatprep.mubr.f32.mxu0 0.0
    %v2658 = vand.u32 %v2435, 4294901760
    %v2659 = vsub.f32 %v2435, %v2658
    %2660 = vmatmul.mubr.f32.gmra.mrb[0].mxu0 %v2659
    %v2661 = vpop.f32.mrb[0].mxu0
    %v2662 = vadd.f32 %v2588, %v2661
    %v2663 = vpop.f32.mrb[0].mxu0
    %2664 = vdwg.mxu0
    %2665 = vmatprep.subr.mxu0 0.0
    %v2666 = vand.u32 %v2437, 4294901760
    %2667 = vmatpush1.xpose.msra.mxu0 %v2666
    %2668 = vmatprep.subr.mxu0 0.0
    %2669 = vmatpush1.xpose.msra.mxu0 0.0
    %2670 = vmatprep.subr.mxu0 0.0
    %2671 = vmatpush1.xpose.msra.mxu0 0.0
    %2672 = vmatprep.subr.mxu0 0.0
    %2673 = vmatpush1.xpose.msra.mxu0 0.0
    %2674 = vmatprep.subr.mxu0 0.0
    %2675 = vmatpush1.xpose.msra.mxu0 0.0
    %2676 = vmatprep.subr.mxu0 0.0
    %2677 = vmatpush1.xpose.msra.mxu0 0.0
    %2678 = vmatprep.subr.mxu0 0.0
    %2679 = vmatpush1.xpose.msra.mxu0 0.0
    %2680 = vmatprep.subr.mxu0 0.0
    %2681 = vmatpush1.xpose.msra.mxu0 0.0
    %2682 = vmatprep.subr.mxu0 0.0
    %2683 = vmatpush1.xpose.msra.mxu0 0.0
    %2684 = vmatprep.subr.mxu0 0.0
    %2685 = vmatpush1.xpose.msra.mxu0 0.0
    %2686 = vmatprep.subr.mxu0 0.0
    %2687 = vmatpush1.xpose.msra.mxu0 0.0
    %2688 = vmatprep.subr.mxu0 0.0
    %2689 = vmatpush1.xpose.msra.mxu0 0.0
    %2690 = vmatprep.subr.mxu0 0.0
    %2691 = vmatpush1.xpose.msra.mxu0 0.0
    %2692 = vmatprep.subr.mxu0 0.0
    %2693 = vmatpush1.xpose.msra.mxu0 0.0
    %2694 = vmatprep.subr.mxu0 0.0
    %2695 = vmatpush1.xpose.msra.mxu0 0.0
    %2696 = vmatprep.subr.mxu0 0.0
    %2697 = vmatpush1.xpose.msra.mxu0 0.0
    %2698 = vmatprep.subr.mxu0 0.0
    %2699 = vmatpush1.xpose.msra.mxu0 0.0
    %2700 = vmatprep.subr.mxu0 0.0
    %2701 = vmatpush1.xpose.msra.mxu0 0.0
    %2702 = vmatprep.subr.mxu0 0.0
    %2703 = vmatpush1.xpose.msra.mxu0 0.0
    %2704 = vmatprep.subr.mxu0 0.0
    %2705 = vmatpush1.xpose.msra.mxu0 0.0
    %2706 = vmatprep.subr.mxu0 0.0
    %2707 = vmatpush1.xpose.msra.mxu0 0.0
    %2708 = vmatprep.subr.mxu0 0.0
    %2709 = vmatpush1.xpose.msra.mxu0 0.0
    %2710 = vmatprep.subr.mxu0 0.0
    %2711 = vmatpush1.xpose.msra.mxu0 0.0
    %2712 = vmatprep.subr.mxu0 0.0
    %2713 = vmatpush1.xpose.msra.mxu0 0.0
    %2714 = vmatprep.subr.mxu0 0.0
    %2715 = vmatpush1.xpose.msra.mxu0 0.0
    %2716 = vmatprep.subr.mxu0 0.0
    %2717 = vmatpush1.xpose.msra.mxu0 0.0
    %2718 = vmatprep.subr.mxu0 0.0
    %2719 = vmatpush1.xpose.msra.mxu0 0.0
    %2720 = vmatprep.subr.mxu0 0.0
    %2721 = vmatpush1.xpose.msra.mxu0 0.0
    %2722 = vmatprep.subr.mxu0 0.0
    %2723 = vmatpush1.xpose.msra.mxu0 0.0
    %2724 = vmatprep.subr.mxu0 0.0
    %2725 = vmatpush1.xpose.msra.mxu0 0.0
    %2726 = vmatprep.subr.mxu0 0.0
    %2727 = vmatpush1.xpose.msra.mxu0 0.0
    %2728 = vmatprep.subr.mxu0 0.0
    %2729 = vmatpush1.xpose.msra.mxu0 0.0
    %2730 = vmatprep.mubr.f32.mxu0 0.0
    %v2731 = vand.u32 %v2435, 4294901760
    %v2732 = vsub.f32 %v2435, %v2731
    %v2733 = vand.u32 %v2732, 4294901760
    %2734 = vmatmul.mubr.f32.gmra.mrb[0].mxu0 %v2733
    %v2735 = vpop.f32.mrb[0].mxu0
    %v2736 = vadd.f32 %v2662, %v2735
    %v2737 = vpop.f32.mrb[0].mxu0
    %2738 = vdwg.mxu0
    %2739 = vmatprep.subr.mxu0 0.0
    %v2740 = vand.u32 %v2437, 4294901760
    %v2741 = vsub.f32 %v2437, %v2740
    %v2742 = vand.u32 %v2741, 4294901760
    %2743 = vmatpush1.xpose.msra.mxu0 %v2742
    %2744 = vmatprep.subr.mxu0 0.0
    %2745 = vmatpush1.xpose.msra.mxu0 0.0
    %2746 = vmatprep.subr.mxu0 0.0
    %2747 = vmatpush1.xpose.msra.mxu0 0.0
    %2748 = vmatprep.subr.mxu0 0.0
    %2749 = vmatpush1.xpose.msra.mxu0 0.0
    %2750 = vmatprep.subr.mxu0 0.0
    %2751 = vmatpush1.xpose.msra.mxu0 0.0
    %2752 = vmatprep.subr.mxu0 0.0
    %2753 = vmatpush1.xpose.msra.mxu0 0.0
    %2754 = vmatprep.subr.mxu0 0.0
    %2755 = vmatpush1.xpose.msra.mxu0 0.0
    %2756 = vmatprep.subr.mxu0 0.0
    %2757 = vmatpush1.xpose.msra.mxu0 0.0
    %2758 = vmatprep.subr.mxu0 0.0
    %2759 = vmatpush1.xpose.msra.mxu0 0.0
    %2760 = vmatprep.subr.mxu0 0.0
    %2761 = vmatpush1.xpose.msra.mxu0 0.0
    %2762 = vmatprep.subr.mxu0 0.0
    %2763 = vmatpush1.xpose.msra.mxu0 0.0
    %2764 = vmatprep.subr.mxu0 0.0
    %2765 = vmatpush1.xpose.msra.mxu0 0.0
    %2766 = vmatprep.subr.mxu0 0.0
    %2767 = vmatpush1.xpose.msra.mxu0 0.0
    %2768 = vmatprep.subr.mxu0 0.0
    %2769 = vmatpush1.xpose.msra.mxu0 0.0
    %2770 = vmatprep.subr.mxu0 0.0
    %2771 = vmatpush1.xpose.msra.mxu0 0.0
    %2772 = vmatprep.subr.mxu0 0.0
    %2773 = vmatpush1.xpose.msra.mxu0 0.0
    %2774 = vmatprep.subr.mxu0 0.0
    %2775 = vmatpush1.xpose.msra.mxu0 0.0
    %2776 = vmatprep.subr.mxu0 0.0
    %2777 = vmatpush1.xpose.msra.mxu0 0.0
    %2778 = vmatprep.subr.mxu0 0.0
    %2779 = vmatpush1.xpose.msra.mxu0 0.0
    %2780 = vmatprep.subr.mxu0 0.0
    %2781 = vmatpush1.xpose.msra.mxu0 0.0
    %2782 = vmatprep.subr.mxu0 0.0
    %2783 = vmatpush1.xpose.msra.mxu0 0.0
    %2784 = vmatprep.subr.mxu0 0.0
    %2785 = vmatpush1.xpose.msra.mxu0 0.0
    %2786 = vmatprep.subr.mxu0 0.0
    %2787 = vmatpush1.xpose.msra.mxu0 0.0
    %2788 = vmatprep.subr.mxu0 0.0
    %2789 = vmatpush1.xpose.msra.mxu0 0.0
    %2790 = vmatprep.subr.mxu0 0.0
    %2791 = vmatpush1.xpose.msra.mxu0 0.0
    %2792 = vmatprep.subr.mxu0 0.0
    %2793 = vmatpush1.xpose.msra.mxu0 0.0
    %2794 = vmatprep.subr.mxu0 0.0
    %2795 = vmatpush1.xpose.msra.mxu0 0.0
    %2796 = vmatprep.subr.mxu0 0.0
    %2797 = vmatpush1.xpose.msra.mxu0 0.0
    %2798 = vmatprep.subr.mxu0 0.0
    %2799 = vmatpush1.xpose.msra.mxu0 0.0
    %2800 = vmatprep.subr.mxu0 0.0
    %2801 = vmatpush1.xpose.msra.mxu0 0.0
    %2802 = vmatprep.subr.mxu0 0.0
    %2803 = vmatpush1.xpose.msra.mxu0 0.0
    %2804 = vmatprep.subr.mxu0 0.0
    %2805 = vmatpush1.xpose.msra.mxu0 0.0
    %2806 = vmatprep.mubr.f32.mxu0 0.0
    %v2807 = vand.u32 %v2435, 4294901760
    %2808 = vmatmul.mubr.f32.gmra.mrb[0].mxu0 %v2807
    %v2809 = vpop.f32.mrb[0].mxu0
    %v2810 = vadd.f32 %v2736, %v2809
    %v2811 = vpop.f32.mrb[0].mxu0
    %2812 = vdwg.mxu0
    %2813 = vmatprep.subr.mxu0 0.0
    %v2814 = vand.u32 %v2437, 4294901760
    %2815 = vmatpush1.xpose.msra.mxu0 %v2814
    %2816 = vmatprep.subr.mxu0 0.0
    %2817 = vmatpush1.xpose.msra.mxu0 0.0
    %2818 = vmatprep.subr.mxu0 0.0
    %2819 = vmatpush1.xpose.msra.mxu0 0.0
    %2820 = vmatprep.subr.mxu0 0.0
    %2821 = vmatpush1.xpose.msra.mxu0 0.0
    %2822 = vmatprep.subr.mxu0 0.0
    %2823 = vmatpush1.xpose.msra.mxu0 0.0
    %2824 = vmatprep.subr.mxu0 0.0
    %2825 = vmatpush1.xpose.msra.mxu0 0.0
    %2826 = vmatprep.subr.mxu0 0.0
    %2827 = vmatpush1.xpose.msra.mxu0 0.0
    %2828 = vmatprep.subr.mxu0 0.0
    %2829 = vmatpush1.xpose.msra.mxu0 0.0
    %2830 = vmatprep.subr.mxu0 0.0
    %2831 = vmatpush1.xpose.msra.mxu0 0.0
    %2832 = vmatprep.subr.mxu0 0.0
    %2833 = vmatpush1.xpose.msra.mxu0 0.0
    %2834 = vmatprep.subr.mxu0 0.0
    %2835 = vmatpush1.xpose.msra.mxu0 0.0
    %2836 = vmatprep.subr.mxu0 0.0
    %2837 = vmatpush1.xpose.msra.mxu0 0.0
    %2838 = vmatprep.subr.mxu0 0.0
    %2839 = vmatpush1.xpose.msra.mxu0 0.0
    %2840 = vmatprep.subr.mxu0 0.0
    %2841 = vmatpush1.xpose.msra.mxu0 0.0
    %2842 = vmatprep.subr.mxu0 0.0
    %2843 = vmatpush1.xpose.msra.mxu0 0.0
    %2844 = vmatprep.subr.mxu0 0.0
    %2845 = vmatpush1.xpose.msra.mxu0 0.0
    %2846 = vmatprep.subr.mxu0 0.0
    %2847 = vmatpush1.xpose.msra.mxu0 0.0
    %2848 = vmatprep.subr.mxu0 0.0
    %2849 = vmatpush1.xpose.msra.mxu0 0.0
    %2850 = vmatprep.subr.mxu0 0.0
    %2851 = vmatpush1.xpose.msra.mxu0 0.0
    %2852 = vmatprep.subr.mxu0 0.0
    %2853 = vmatpush1.xpose.msra.mxu0 0.0
    %2854 = vmatprep.subr.mxu0 0.0
    %2855 = vmatpush1.xpose.msra.mxu0 0.0
    %2856 = vmatprep.subr.mxu0 0.0
    %2857 = vmatpush1.xpose.msra.mxu0 0.0
    %2858 = vmatprep.subr.mxu0 0.0
    %2859 = vmatpush1.xpose.msra.mxu0 0.0
    %2860 = vmatprep.subr.mxu0 0.0
    %2861 = vmatpush1.xpose.msra.mxu0 0.0
    %2862 = vmatprep.subr.mxu0 0.0
    %2863 = vmatpush1.xpose.msra.mxu0 0.0
    %2864 = vmatprep.subr.mxu0 0.0
    %2865 = vmatpush1.xpose.msra.mxu0 0.0
    %2866 = vmatprep.subr.mxu0 0.0
    %2867 = vmatpush1.xpose.msra.mxu0 0.0
    %2868 = vmatprep.subr.mxu0 0.0
    %2869 = vmatpush1.xpose.msra.mxu0 0.0
    %2870 = vmatprep.subr.mxu0 0.0
    %2871 = vmatpush1.xpose.msra.mxu0 0.0
    %2872 = vmatprep.subr.mxu0 0.0
    %2873 = vmatpush1.xpose.msra.mxu0 0.0
    %2874 = vmatprep.subr.mxu0 0.0
    %2875 = vmatpush1.xpose.msra.mxu0 0.0
    %2876 = vmatprep.subr.mxu0 0.0
    %2877 = vmatpush1.xpose.msra.mxu0 0.0
    %2878 = vmatprep.mubr.f32.mxu0 0.0
    %v2879 = vand.u32 %v2435, 4294901760
    %2880 = vmatmul.mubr.f32.gmra.mrb[0].mxu0 %v2879
    %v2881 = vpop.f32.mrb[0].mxu0
    %v2882 = vadd.f32 %v2810, %v2881
    %v2883 = vpop.f32.mrb[0].mxu0
    %2884 = vdwg.mxu0
    %v2885 = vsel %vm2434, %v1243, 0
    %v2887 = vsel %vm2434, %v1819, 0
    %2889 = vmatprep.subr.mxu0 0.0
    %v2890 = vand.u32 %v2887, 4294901760
    %2891 = vmatpush1.xpose.msra.mxu0 %v2890
    %2892 = vmatprep.subr.mxu0 0.0
    %2893 = vmatpush1.xpose.msra.mxu0 0.0
    %2894 = vmatprep.subr.mxu0 0.0
    %2895 = vmatpush1.xpose.msra.mxu0 0.0
    %2896 = vmatprep.subr.mxu0 0.0
    %2897 = vmatpush1.xpose.msra.mxu0 0.0
    %2898 = vmatprep.subr.mxu0 0.0
    %2899 = vmatpush1.xpose.msra.mxu0 0.0
    %2900 = vmatprep.subr.mxu0 0.0
    %2901 = vmatpush1.xpose.msra.mxu0 0.0
    %2902 = vmatprep.subr.mxu0 0.0
    %2903 = vmatpush1.xpose.msra.mxu0 0.0
    %2904 = vmatprep.subr.mxu0 0.0
    %2905 = vmatpush1.xpose.msra.mxu0 0.0
    %2906 = vmatprep.subr.mxu0 0.0
    %2907 = vmatpush1.xpose.msra.mxu0 0.0
    %2908 = vmatprep.subr.mxu0 0.0
    %2909 = vmatpush1.xpose.msra.mxu0 0.0
    %2910 = vmatprep.subr.mxu0 0.0
    %2911 = vmatpush1.xpose.msra.mxu0 0.0
    %2912 = vmatprep.subr.mxu0 0.0
    %2913 = vmatpush1.xpose.msra.mxu0 0.0
    %2914 = vmatprep.subr.mxu0 0.0
    %2915 = vmatpush1.xpose.msra.mxu0 0.0
    %2916 = vmatprep.subr.mxu0 0.0
    %2917 = vmatpush1.xpose.msra.mxu0 0.0
    %2918 = vmatprep.subr.mxu0 0.0
    %2919 = vmatpush1.xpose.msra.mxu0 0.0
    %2920 = vmatprep.subr.mxu0 0.0
    %2921 = vmatpush1.xpose.msra.mxu0 0.0
    %2922 = vmatprep.subr.mxu0 0.0
    %2923 = vmatpush1.xpose.msra.mxu0 0.0
    %2924 = vmatprep.subr.mxu0 0.0
    %2925 = vmatpush1.xpose.msra.mxu0 0.0
    %2926 = vmatprep.subr.mxu0 0.0
    %2927 = vmatpush1.xpose.msra.mxu0 0.0
    %2928 = vmatprep.subr.mxu0 0.0
    %2929 = vmatpush1.xpose.msra.mxu0 0.0
    %2930 = vmatprep.subr.mxu0 0.0
    %2931 = vmatpush1.xpose.msra.mxu0 0.0
    %2932 = vmatprep.subr.mxu0 0.0
    %2933 = vmatpush1.xpose.msra.mxu0 0.0
    %2934 = vmatprep.subr.mxu0 0.0
    %2935 = vmatpush1.xpose.msra.mxu0 0.0
    %2936 = vmatprep.subr.mxu0 0.0
    %2937 = vmatpush1.xpose.msra.mxu0 0.0
    %2938 = vmatprep.subr.mxu0 0.0
    %2939 = vmatpush1.xpose.msra.mxu0 0.0
    %2940 = vmatprep.subr.mxu0 0.0
    %2941 = vmatpush1.xpose.msra.mxu0 0.0
    %2942 = vmatprep.subr.mxu0 0.0
    %2943 = vmatpush1.xpose.msra.mxu0 0.0
    %2944 = vmatprep.subr.mxu0 0.0
    %2945 = vmatpush1.xpose.msra.mxu0 0.0
    %2946 = vmatprep.subr.mxu0 0.0
    %2947 = vmatpush1.xpose.msra.mxu0 0.0
    %2948 = vmatprep.subr.mxu0 0.0
    %2949 = vmatpush1.xpose.msra.mxu0 0.0
    %2950 = vmatprep.subr.mxu0 0.0
    %2951 = vmatpush1.xpose.msra.mxu0 0.0
    %2952 = vmatprep.subr.mxu0 0.0
    %2953 = vmatpush1.xpose.msra.mxu0 0.0
    %2954 = vmatprep.mubr.f32.mxu0 0.0
    %v2955 = vand.u32 %v2885, 4294901760
    %v2956 = vsub.f32 %v2885, %v2955
    %v2957 = vand.u32 %v2956, 4294901760
    %v2958 = vsub.f32 %v2956, %v2957
    %v2959 = vand.u32 %v2958, 4294901760
    %2960 = vmatmul.mubr.f32.gmra.mrb[0].mxu0 %v2959
    %v2961 = vpop.f32.mrb[0].mxu0
    %v2962 = vadd.f32 0.0, %v2961
    %v2963 = vpop.f32.mrb[0].mxu0
    %2964 = vdwg.mxu0
    %2965 = vmatprep.subr.mxu0 0.0
    %v2966 = vand.u32 %v2887, 4294901760
    %v2967 = vsub.f32 %v2887, %v2966
    %v2968 = vand.u32 %v2967, 4294901760
    %v2969 = vsub.f32 %v2967, %v2968
    %v2970 = vand.u32 %v2969, 4294901760
    %2971 = vmatpush1.xpose.msra.mxu0 %v2970
    %2972 = vmatprep.subr.mxu0 0.0
    %2973 = vmatpush1.xpose.msra.mxu0 0.0
    %2974 = vmatprep.subr.mxu0 0.0
    %2975 = vmatpush1.xpose.msra.mxu0 0.0
    %2976 = vmatprep.subr.mxu0 0.0
    %2977 = vmatpush1.xpose.msra.mxu0 0.0
    %2978 = vmatprep.subr.mxu0 0.0
    %2979 = vmatpush1.xpose.msra.mxu0 0.0
    %2980 = vmatprep.subr.mxu0 0.0
    %2981 = vmatpush1.xpose.msra.mxu0 0.0
    %2982 = vmatprep.subr.mxu0 0.0
    %2983 = vmatpush1.xpose.msra.mxu0 0.0
    %2984 = vmatprep.subr.mxu0 0.0
    %2985 = vmatpush1.xpose.msra.mxu0 0.0
    %2986 = vmatprep.subr.mxu0 0.0
    %2987 = vmatpush1.xpose.msra.mxu0 0.0
    %2988 = vmatprep.subr.mxu0 0.0
    %2989 = vmatpush1.xpose.msra.mxu0 0.0
    %2990 = vmatprep.subr.mxu0 0.0
    %2991 = vmatpush1.xpose.msra.mxu0 0.0
    %2992 = vmatprep.subr.mxu0 0.0
    %2993 = vmatpush1.xpose.msra.mxu0 0.0
    %2994 = vmatprep.subr.mxu0 0.0
    %2995 = vmatpush1.xpose.msra.mxu0 0.0
    %2996 = vmatprep.subr.mxu0 0.0
    %2997 = vmatpush1.xpose.msra.mxu0 0.0
    %2998 = vmatprep.subr.mxu0 0.0
    %2999 = vmatpush1.xpose.msra.mxu0 0.0
    %3000 = vmatprep.subr.mxu0 0.0
    %3001 = vmatpush1.xpose.msra.mxu0 0.0
    %3002 = vmatprep.subr.mxu0 0.0
    %3003 = vmatpush1.xpose.msra.mxu0 0.0
    %3004 = vmatprep.subr.mxu0 0.0
    %3005 = vmatpush1.xpose.msra.mxu0 0.0
    %3006 = vmatprep.subr.mxu0 0.0
    %3007 = vmatpush1.xpose.msra.mxu0 0.0
    %3008 = vmatprep.subr.mxu0 0.0
    %3009 = vmatpush1.xpose.msra.mxu0 0.0
    %3010 = vmatprep.subr.mxu0 0.0
    %3011 = vmatpush1.xpose.msra.mxu0 0.0
    %3012 = vmatprep.subr.mxu0 0.0
    %3013 = vmatpush1.xpose.msra.mxu0 0.0
    %3014 = vmatprep.subr.mxu0 0.0
    %3015 = vmatpush1.xpose.msra.mxu0 0.0
    %3016 = vmatprep.subr.mxu0 0.0
    %3017 = vmatpush1.xpose.msra.mxu0 0.0
    %3018 = vmatprep.subr.mxu0 0.0
    %3019 = vmatpush1.xpose.msra.mxu0 0.0
    %3020 = vmatprep.subr.mxu0 0.0
    %3021 = vmatpush1.xpose.msra.mxu0 0.0
    %3022 = vmatprep.subr.mxu0 0.0
    %3023 = vmatpush1.xpose.msra.mxu0 0.0
    %3024 = vmatprep.subr.mxu0 0.0
    %3025 = vmatpush1.xpose.msra.mxu0 0.0
    %3026 = vmatprep.subr.mxu0 0.0
    %3027 = vmatpush1.xpose.msra.mxu0 0.0
    %3028 = vmatprep.subr.mxu0 0.0
    %3029 = vmatpush1.xpose.msra.mxu0 0.0
    %3030 = vmatprep.subr.mxu0 0.0
    %3031 = vmatpush1.xpose.msra.mxu0 0.0
    %3032 = vmatprep.subr.mxu0 0.0
    %3033 = vmatpush1.xpose.msra.mxu0 0.0
    %3034 = vmatprep.mubr.f32.mxu0 0.0
    %v3035 = vand.u32 %v2885, 4294901760
    %3036 = vmatmul.mubr.f32.gmra.mrb[0].mxu0 %v3035
    %v3037 = vpop.f32.mrb[0].mxu0
    %v3038 = vadd.f32 %v2962, %v3037
    %v3039 = vpop.f32.mrb[0].mxu0
    %3040 = vdwg.mxu0
    %3041 = vmatprep.subr.mxu0 0.0
    %v3042 = vand.u32 %v2887, 4294901760
    %v3043 = vsub.f32 %v2887, %v3042
    %3044 = vmatpush1.xpose.msra.mxu0 %v3043
    %3045 = vmatprep.subr.mxu0 0.0
    %3046 = vmatpush1.xpose.msra.mxu0 0.0
    %3047 = vmatprep.subr.mxu0 0.0
    %3048 = vmatpush1.xpose.msra.mxu0 0.0
    %3049 = vmatprep.subr.mxu0 0.0
    %3050 = vmatpush1.xpose.msra.mxu0 0.0
    %3051 = vmatprep.subr.mxu0 0.0
    %3052 = vmatpush1.xpose.msra.mxu0 0.0
    %3053 = vmatprep.subr.mxu0 0.0
    %3054 = vmatpush1.xpose.msra.mxu0 0.0
    %3055 = vmatprep.subr.mxu0 0.0
    %3056 = vmatpush1.xpose.msra.mxu0 0.0
    %3057 = vmatprep.subr.mxu0 0.0
    %3058 = vmatpush1.xpose.msra.mxu0 0.0
    %3059 = vmatprep.subr.mxu0 0.0
    %3060 = vmatpush1.xpose.msra.mxu0 0.0
    %3061 = vmatprep.subr.mxu0 0.0
    %3062 = vmatpush1.xpose.msra.mxu0 0.0
    %3063 = vmatprep.subr.mxu0 0.0
    %3064 = vmatpush1.xpose.msra.mxu0 0.0
    %3065 = vmatprep.subr.mxu0 0.0
    %3066 = vmatpush1.xpose.msra.mxu0 0.0
    %3067 = vmatprep.subr.mxu0 0.0
    %3068 = vmatpush1.xpose.msra.mxu0 0.0
    %3069 = vmatprep.subr.mxu0 0.0
    %3070 = vmatpush1.xpose.msra.mxu0 0.0
    %3071 = vmatprep.subr.mxu0 0.0
    %3072 = vmatpush1.xpose.msra.mxu0 0.0
    %3073 = vmatprep.subr.mxu0 0.0
    %3074 = vmatpush1.xpose.msra.mxu0 0.0
    %3075 = vmatprep.subr.mxu0 0.0
    %3076 = vmatpush1.xpose.msra.mxu0 0.0
    %3077 = vmatprep.subr.mxu0 0.0
    %3078 = vmatpush1.xpose.msra.mxu0 0.0
    %3079 = vmatprep.subr.mxu0 0.0
    %3080 = vmatpush1.xpose.msra.mxu0 0.0
    %3081 = vmatprep.subr.mxu0 0.0
    %3082 = vmatpush1.xpose.msra.mxu0 0.0
    %3083 = vmatprep.subr.mxu0 0.0
    %3084 = vmatpush1.xpose.msra.mxu0 0.0
    %3085 = vmatprep.subr.mxu0 0.0
    %3086 = vmatpush1.xpose.msra.mxu0 0.0
    %3087 = vmatprep.subr.mxu0 0.0
    %3088 = vmatpush1.xpose.msra.mxu0 0.0
    %3089 = vmatprep.subr.mxu0 0.0
    %3090 = vmatpush1.xpose.msra.mxu0 0.0
    %3091 = vmatprep.subr.mxu0 0.0
    %3092 = vmatpush1.xpose.msra.mxu0 0.0
    %3093 = vmatprep.subr.mxu0 0.0
    %3094 = vmatpush1.xpose.msra.mxu0 0.0
    %3095 = vmatprep.subr.mxu0 0.0
    %3096 = vmatpush1.xpose.msra.mxu0 0.0
    %3097 = vmatprep.subr.mxu0 0.0
    %3098 = vmatpush1.xpose.msra.mxu0 0.0
    %3099 = vmatprep.subr.mxu0 0.0
    %3100 = vmatpush1.xpose.msra.mxu0 0.0
    %3101 = vmatprep.subr.mxu0 0.0
    %3102 = vmatpush1.xpose.msra.mxu0 0.0
    %3103 = vmatprep.subr.mxu0 0.0
    %3104 = vmatpush1.xpose.msra.mxu0 0.0
    %3105 = vmatprep.subr.mxu0 0.0
    %3106 = vmatpush1.xpose.msra.mxu0 0.0
    %3107 = vmatprep.mubr.f32.mxu0 0.0
    %v3108 = vand.u32 %v2885, 4294901760
    %v3109 = vsub.f32 %v2885, %v3108
    %3110 = vmatmul.mubr.f32.gmra.mrb[0].mxu0 %v3109
    %v3111 = vpop.f32.mrb[0].mxu0
    %v3112 = vadd.f32 %v3038, %v3111
    %v3113 = vpop.f32.mrb[0].mxu0
    %3114 = vdwg.mxu0
    %3115 = vmatprep.subr.mxu0 0.0
    %v3116 = vand.u32 %v2887, 4294901760
    %3117 = vmatpush1.xpose.msra.mxu0 %v3116
    %3118 = vmatprep.subr.mxu0 0.0
    %3119 = vmatpush1.xpose.msra.mxu0 0.0
    %3120 = vmatprep.subr.mxu0 0.0
    %3121 = vmatpush1.xpose.msra.mxu0 0.0
    %3122 = vmatprep.subr.mxu0 0.0
    %3123 = vmatpush1.xpose.msra.mxu0 0.0
    %3124 = vmatprep.subr.mxu0 0.0
    %3125 = vmatpush1.xpose.msra.mxu0 0.0
    %3126 = vmatprep.subr.mxu0 0.0
    %3127 = vmatpush1.xpose.msra.mxu0 0.0
    %3128 = vmatprep.subr.mxu0 0.0
    %3129 = vmatpush1.xpose.msra.mxu0 0.0
    %3130 = vmatprep.subr.mxu0 0.0
    %3131 = vmatpush1.xpose.msra.mxu0 0.0
    %3132 = vmatprep.subr.mxu0 0.0
    %3133 = vmatpush1.xpose.msra.mxu0 0.0
    %3134 = vmatprep.subr.mxu0 0.0
    %3135 = vmatpush1.xpose.msra.mxu0 0.0
    %3136 = vmatprep.subr.mxu0 0.0
    %3137 = vmatpush1.xpose.msra.mxu0 0.0
    %3138 = vmatprep.subr.mxu0 0.0
    %3139 = vmatpush1.xpose.msra.mxu0 0.0
    %3140 = vmatprep.subr.mxu0 0.0
    %3141 = vmatpush1.xpose.msra.mxu0 0.0
    %3142 = vmatprep.subr.mxu0 0.0
    %3143 = vmatpush1.xpose.msra.mxu0 0.0
    %3144 = vmatprep.subr.mxu0 0.0
    %3145 = vmatpush1.xpose.msra.mxu0 0.0
    %3146 = vmatprep.subr.mxu0 0.0
    %3147 = vmatpush1.xpose.msra.mxu0 0.0
    %3148 = vmatprep.subr.mxu0 0.0
    %3149 = vmatpush1.xpose.msra.mxu0 0.0
    %3150 = vmatprep.subr.mxu0 0.0
    %3151 = vmatpush1.xpose.msra.mxu0 0.0
    %3152 = vmatprep.subr.mxu0 0.0
    %3153 = vmatpush1.xpose.msra.mxu0 0.0
    %3154 = vmatprep.subr.mxu0 0.0
    %3155 = vmatpush1.xpose.msra.mxu0 0.0
    %3156 = vmatprep.subr.mxu0 0.0
    %3157 = vmatpush1.xpose.msra.mxu0 0.0
    %3158 = vmatprep.subr.mxu0 0.0
    %3159 = vmatpush1.xpose.msra.mxu0 0.0
    %3160 = vmatprep.subr.mxu0 0.0
    %3161 = vmatpush1.xpose.msra.mxu0 0.0
    %3162 = vmatprep.subr.mxu0 0.0
    %3163 = vmatpush1.xpose.msra.mxu0 0.0
    %3164 = vmatprep.subr.mxu0 0.0
    %3165 = vmatpush1.xpose.msra.mxu0 0.0
    %3166 = vmatprep.subr.mxu0 0.0
    %3167 = vmatpush1.xpose.msra.mxu0 0.0
    %3168 = vmatprep.subr.mxu0 0.0
    %3169 = vmatpush1.xpose.msra.mxu0 0.0
    %3170 = vmatprep.subr.mxu0 0.0
    %3171 = vmatpush1.xpose.msra.mxu0 0.0
    %3172 = vmatprep.subr.mxu0 0.0
    %3173 = vmatpush1.xpose.msra.mxu0 0.0
    %3174 = vmatprep.subr.mxu0 0.0
    %3175 = vmatpush1.xpose.msra.mxu0 0.0
    %3176 = vmatprep.subr.mxu0 0.0
    %3177 = vmatpush1.xpose.msra.mxu0 0.0
    %3178 = vmatprep.subr.mxu0 0.0
    %3179 = vmatpush1.xpose.msra.mxu0 0.0
    %3180 = vmatprep.mubr.f32.mxu0 0.0
    %v3181 = vand.u32 %v2885, 4294901760
    %v3182 = vsub.f32 %v2885, %v3181
    %v3183 = vand.u32 %v3182, 4294901760
    %3184 = vmatmul.mubr.f32.gmra.mrb[0].mxu0 %v3183
    %v3185 = vpop.f32.mrb[0].mxu0
    %v3186 = vadd.f32 %v3112, %v3185
    %v3187 = vpop.f32.mrb[0].mxu0
    %3188 = vdwg.mxu0
    %3189 = vmatprep.subr.mxu0 0.0
    %v3190 = vand.u32 %v2887, 4294901760
    %v3191 = vsub.f32 %v2887, %v3190
    %v3192 = vand.u32 %v3191, 4294901760
    %3193 = vmatpush1.xpose.msra.mxu0 %v3192
    %3194 = vmatprep.subr.mxu0 0.0
    %3195 = vmatpush1.xpose.msra.mxu0 0.0
    %3196 = vmatprep.subr.mxu0 0.0
    %3197 = vmatpush1.xpose.msra.mxu0 0.0
    %3198 = vmatprep.subr.mxu0 0.0
    %3199 = vmatpush1.xpose.msra.mxu0 0.0
    %3200 = vmatprep.subr.mxu0 0.0
    %3201 = vmatpush1.xpose.msra.mxu0 0.0
    %3202 = vmatprep.subr.mxu0 0.0
    %3203 = vmatpush1.xpose.msra.mxu0 0.0
    %3204 = vmatprep.subr.mxu0 0.0
    %3205 = vmatpush1.xpose.msra.mxu0 0.0
    %3206 = vmatprep.subr.mxu0 0.0
    %3207 = vmatpush1.xpose.msra.mxu0 0.0
    %3208 = vmatprep.subr.mxu0 0.0
    %3209 = vmatpush1.xpose.msra.mxu0 0.0
    %3210 = vmatprep.subr.mxu0 0.0
    %3211 = vmatpush1.xpose.msra.mxu0 0.0
    %3212 = vmatprep.subr.mxu0 0.0
    %3213 = vmatpush1.xpose.msra.mxu0 0.0
    %3214 = vmatprep.subr.mxu0 0.0
    %3215 = vmatpush1.xpose.msra.mxu0 0.0
    %3216 = vmatprep.subr.mxu0 0.0
    %3217 = vmatpush1.xpose.msra.mxu0 0.0
    %3218 = vmatprep.subr.mxu0 0.0
    %3219 = vmatpush1.xpose.msra.mxu0 0.0
    %3220 = vmatprep.subr.mxu0 0.0
    %3221 = vmatpush1.xpose.msra.mxu0 0.0
    %3222 = vmatprep.subr.mxu0 0.0
    %3223 = vmatpush1.xpose.msra.mxu0 0.0
    %3224 = vmatprep.subr.mxu0 0.0
    %3225 = vmatpush1.xpose.msra.mxu0 0.0
    %3226 = vmatprep.subr.mxu0 0.0
    %3227 = vmatpush1.xpose.msra.mxu0 0.0
    %3228 = vmatprep.subr.mxu0 0.0
    %3229 = vmatpush1.xpose.msra.mxu0 0.0
    %3230 = vmatprep.subr.mxu0 0.0
    %3231 = vmatpush1.xpose.msra.mxu0 0.0
    %3232 = vmatprep.subr.mxu0 0.0
    %3233 = vmatpush1.xpose.msra.mxu0 0.0
    %3234 = vmatprep.subr.mxu0 0.0
    %3235 = vmatpush1.xpose.msra.mxu0 0.0
    %3236 = vmatprep.subr.mxu0 0.0
    %3237 = vmatpush1.xpose.msra.mxu0 0.0
    %3238 = vmatprep.subr.mxu0 0.0
    %3239 = vmatpush1.xpose.msra.mxu0 0.0
    %3240 = vmatprep.subr.mxu0 0.0
    %3241 = vmatpush1.xpose.msra.mxu0 0.0
    %3242 = vmatprep.subr.mxu0 0.0
    %3243 = vmatpush1.xpose.msra.mxu0 0.0
    %3244 = vmatprep.subr.mxu0 0.0
    %3245 = vmatpush1.xpose.msra.mxu0 0.0
    %3246 = vmatprep.subr.mxu0 0.0
    %3247 = vmatpush1.xpose.msra.mxu0 0.0
    %3248 = vmatprep.subr.mxu0 0.0
    %3249 = vmatpush1.xpose.msra.mxu0 0.0
    %3250 = vmatprep.subr.mxu0 0.0
    %3251 = vmatpush1.xpose.msra.mxu0 0.0
    %3252 = vmatprep.subr.mxu0 0.0
    %3253 = vmatpush1.xpose.msra.mxu0 0.0
    %3254 = vmatprep.subr.mxu0 0.0
    %3255 = vmatpush1.xpose.msra.mxu0 0.0
    %3256 = vmatprep.mubr.f32.mxu0 0.0
    %v3257 = vand.u32 %v2885, 4294901760
    %3258 = vmatmul.mubr.f32.gmra.mrb[0].mxu0 %v3257
    %v3259 = vpop.f32.mrb[0].mxu0
    %v3260 = vadd.f32 %v3186, %v3259
    %v3261 = vpop.f32.mrb[0].mxu0
    %3262 = vdwg.mxu0
    %3263 = vmatprep.subr.mxu0 0.0
    %v3264 = vand.u32 %v2887, 4294901760
    %3265 = vmatpush1.xpose.msra.mxu0 %v3264
    %3266 = vmatprep.subr.mxu0 0.0
    %3267 = vmatpush1.xpose.msra.mxu0 0.0
    %3268 = vmatprep.subr.mxu0 0.0
    %3269 = vmatpush1.xpose.msra.mxu0 0.0
    %3270 = vmatprep.subr.mxu0 0.0
    %3271 = vmatpush1.xpose.msra.mxu0 0.0
    %3272 = vmatprep.subr.mxu0 0.0
    %3273 = vmatpush1.xpose.msra.mxu0 0.0
    %3274 = vmatprep.subr.mxu0 0.0
    %3275 = vmatpush1.xpose.msra.mxu0 0.0
    %3276 = vmatprep.subr.mxu0 0.0
    %3277 = vmatpush1.xpose.msra.mxu0 0.0
    %3278 = vmatprep.subr.mxu0 0.0
    %3279 = vmatpush1.xpose.msra.mxu0 0.0
    %3280 = vmatprep.subr.mxu0 0.0
    %3281 = vmatpush1.xpose.msra.mxu0 0.0
    %3282 = vmatprep.subr.mxu0 0.0
    %3283 = vmatpush1.xpose.msra.mxu0 0.0
    %3284 = vmatprep.subr.mxu0 0.0
    %3285 = vmatpush1.xpose.msra.mxu0 0.0
    %3286 = vmatprep.subr.mxu0 0.0
    %3287 = vmatpush1.xpose.msra.mxu0 0.0
    %3288 = vmatprep.subr.mxu0 0.0
    %3289 = vmatpush1.xpose.msra.mxu0 0.0
    %3290 = vmatprep.subr.mxu0 0.0
    %3291 = vmatpush1.xpose.msra.mxu0 0.0
    %3292 = vmatprep.subr.mxu0 0.0
    %3293 = vmatpush1.xpose.msra.mxu0 0.0
    %3294 = vmatprep.subr.mxu0 0.0
    %3295 = vmatpush1.xpose.msra.mxu0 0.0
    %3296 = vmatprep.subr.mxu0 0.0
    %3297 = vmatpush1.xpose.msra.mxu0 0.0
    %3298 = vmatprep.subr.mxu0 0.0
    %3299 = vmatpush1.xpose.msra.mxu0 0.0
    %3300 = vmatprep.subr.mxu0 0.0
    %3301 = vmatpush1.xpose.msra.mxu0 0.0
    %3302 = vmatprep.subr.mxu0 0.0
    %3303 = vmatpush1.xpose.msra.mxu0 0.0
    %3304 = vmatprep.subr.mxu0 0.0
    %3305 = vmatpush1.xpose.msra.mxu0 0.0
    %3306 = vmatprep.subr.mxu0 0.0
    %3307 = vmatpush1.xpose.msra.mxu0 0.0
    %3308 = vmatprep.subr.mxu0 0.0
    %3309 = vmatpush1.xpose.msra.mxu0 0.0
    %3310 = vmatprep.subr.mxu0 0.0
    %3311 = vmatpush1.xpose.msra.mxu0 0.0
    %3312 = vmatprep.subr.mxu0 0.0
    %3313 = vmatpush1.xpose.msra.mxu0 0.0
    %3314 = vmatprep.subr.mxu0 0.0
    %3315 = vmatpush1.xpose.msra.mxu0 0.0
    %3316 = vmatprep.subr.mxu0 0.0
    %3317 = vmatpush1.xpose.msra.mxu0 0.0
    %3318 = vmatprep.subr.mxu0 0.0
    %3319 = vmatpush1.xpose.msra.mxu0 0.0
    %3320 = vmatprep.subr.mxu0 0.0
    %3321 = vmatpush1.xpose.msra.mxu0 0.0
    %3322 = vmatprep.subr.mxu0 0.0
    %3323 = vmatpush1.xpose.msra.mxu0 0.0
    %3324 = vmatprep.subr.mxu0 0.0
    %3325 = vmatpush1.xpose.msra.mxu0 0.0
    %3326 = vmatprep.subr.mxu0 0.0
    %3327 = vmatpush1.xpose.msra.mxu0 0.0
    %3328 = vmatprep.mubr.f32.mxu0 0.0
    %v3329 = vand.u32 %v2885, 4294901760
    %3330 = vmatmul.mubr.f32.gmra.mrb[0].mxu0 %v3329
    %v3331 = vpop.f32.mrb[0].mxu0
    %v3332 = vadd.f32 %v3260, %v3331
    %v3333 = vpop.f32.mrb[0].mxu0
    %3334 = vdwg.mxu0
    %v3335 = vsel %vm2434, %v1249, 0
    %v3337 = vsel %vm2434, %v1825, 0
    %3339 = vmatprep.subr.mxu0 0.0
    %v3340 = vand.u32 %v3337, 4294901760
    %3341 = vmatpush1.xpose.msra.mxu0 %v3340
    %3342 = vmatprep.subr.mxu0 0.0
    %3343 = vmatpush1.xpose.msra.mxu0 0.0
    %3344 = vmatprep.subr.mxu0 0.0
    %3345 = vmatpush1.xpose.msra.mxu0 0.0
    %3346 = vmatprep.subr.mxu0 0.0
    %3347 = vmatpush1.xpose.msra.mxu0 0.0
    %3348 = vmatprep.subr.mxu0 0.0
    %3349 = vmatpush1.xpose.msra.mxu0 0.0
    %3350 = vmatprep.subr.mxu0 0.0
    %3351 = vmatpush1.xpose.msra.mxu0 0.0
    %3352 = vmatprep.subr.mxu0 0.0
    %3353 = vmatpush1.xpose.msra.mxu0 0.0
    %3354 = vmatprep.subr.mxu0 0.0
    %3355 = vmatpush1.xpose.msra.mxu0 0.0
    %3356 = vmatprep.subr.mxu0 0.0
    %3357 = vmatpush1.xpose.msra.mxu0 0.0
    %3358 = vmatprep.subr.mxu0 0.0
    %3359 = vmatpush1.xpose.msra.mxu0 0.0
    %3360 = vmatprep.subr.mxu0 0.0
    %3361 = vmatpush1.xpose.msra.mxu0 0.0
    %3362 = vmatprep.subr.mxu0 0.0
    %3363 = vmatpush1.xpose.msra.mxu0 0.0
    %3364 = vmatprep.subr.mxu0 0.0
    %3365 = vmatpush1.xpose.msra.mxu0 0.0
    %3366 = vmatprep.subr.mxu0 0.0
    %3367 = vmatpush1.xpose.msra.mxu0 0.0
    %3368 = vmatprep.subr.mxu0 0.0
    %3369 = vmatpush1.xpose.msra.mxu0 0.0
    %3370 = vmatprep.subr.mxu0 0.0
    %3371 = vmatpush1.xpose.msra.mxu0 0.0
    %3372 = vmatprep.subr.mxu0 0.0
    %3373 = vmatpush1.xpose.msra.mxu0 0.0
    %3374 = vmatprep.subr.mxu0 0.0
    %3375 = vmatpush1.xpose.msra.mxu0 0.0
    %3376 = vmatprep.subr.mxu0 0.0
    %3377 = vmatpush1.xpose.msra.mxu0 0.0
    %3378 = vmatprep.subr.mxu0 0.0
    %3379 = vmatpush1.xpose.msra.mxu0 0.0
    %3380 = vmatprep.subr.mxu0 0.0
    %3381 = vmatpush1.xpose.msra.mxu0 0.0
    %3382 = vmatprep.subr.mxu0 0.0
    %3383 = vmatpush1.xpose.msra.mxu0 0.0
    %3384 = vmatprep.subr.mxu0 0.0
    %3385 = vmatpush1.xpose.msra.mxu0 0.0
    %3386 = vmatprep.subr.mxu0 0.0
    %3387 = vmatpush1.xpose.msra.mxu0 0.0
    %3388 = vmatprep.subr.mxu0 0.0
    %3389 = vmatpush1.xpose.msra.mxu0 0.0
    %3390 = vmatprep.subr.mxu0 0.0
    %3391 = vmatpush1.xpose.msra.mxu0 0.0
    %3392 = vmatprep.subr.mxu0 0.0
    %3393 = vmatpush1.xpose.msra.mxu0 0.0
    %3394 = vmatprep.subr.mxu0 0.0
    %3395 = vmatpush1.xpose.msra.mxu0 0.0
    %3396 = vmatprep.subr.mxu0 0.0
    %3397 = vmatpush1.xpose.msra.mxu0 0.0
    %3398 = vmatprep.subr.mxu0 0.0
    %3399 = vmatpush1.xpose.msra.mxu0 0.0
    %3400 = vmatprep.subr.mxu0 0.0
    %3401 = vmatpush1.xpose.msra.mxu0 0.0
    %3402 = vmatprep.subr.mxu0 0.0
    %3403 = vmatpush1.xpose.msra.mxu0 0.0
    %3404 = vmatprep.mubr.f32.mxu0 0.0
    %v3405 = vand.u32 %v3335, 4294901760
    %v3406 = vsub.f32 %v3335, %v3405
    %v3407 = vand.u32 %v3406, 4294901760
    %v3408 = vsub.f32 %v3406, %v3407
    %v3409 = vand.u32 %v3408, 4294901760
    %3410 = vmatmul.mubr.f32.gmra.mrb[0].mxu0 %v3409
    %v3411 = vpop.f32.mrb[0].mxu0
    %v3412 = vadd.f32 0.0, %v3411
    %v3413 = vpop.f32.mrb[0].mxu0
    %3414 = vdwg.mxu0
    %3415 = vmatprep.subr.mxu0 0.0
    %v3416 = vand.u32 %v3337, 4294901760
    %v3417 = vsub.f32 %v3337, %v3416
    %v3418 = vand.u32 %v3417, 4294901760
    %v3419 = vsub.f32 %v3417, %v3418
    %v3420 = vand.u32 %v3419, 4294901760
    %3421 = vmatpush1.xpose.msra.mxu0 %v3420
    %3422 = vmatprep.subr.mxu0 0.0
    %3423 = vmatpush1.xpose.msra.mxu0 0.0
    %3424 = vmatprep.subr.mxu0 0.0
    %3425 = vmatpush1.xpose.msra.mxu0 0.0
    %3426 = vmatprep.subr.mxu0 0.0
    %3427 = vmatpush1.xpose.msra.mxu0 0.0
    %3428 = vmatprep.subr.mxu0 0.0
    %3429 = vmatpush1.xpose.msra.mxu0 0.0
    %3430 = vmatprep.subr.mxu0 0.0
    %3431 = vmatpush1.xpose.msra.mxu0 0.0
    %3432 = vmatprep.subr.mxu0 0.0
    %3433 = vmatpush1.xpose.msra.mxu0 0.0
    %3434 = vmatprep.subr.mxu0 0.0
    %3435 = vmatpush1.xpose.msra.mxu0 0.0
    %3436 = vmatprep.subr.mxu0 0.0
    %3437 = vmatpush1.xpose.msra.mxu0 0.0
    %3438 = vmatprep.subr.mxu0 0.0
    %3439 = vmatpush1.xpose.msra.mxu0 0.0
    %3440 = vmatprep.subr.mxu0 0.0
    %3441 = vmatpush1.xpose.msra.mxu0 0.0
    %3442 = vmatprep.subr.mxu0 0.0
    %3443 = vmatpush1.xpose.msra.mxu0 0.0
    %3444 = vmatprep.subr.mxu0 0.0
    %3445 = vmatpush1.xpose.msra.mxu0 0.0
    %3446 = vmatprep.subr.mxu0 0.0
    %3447 = vmatpush1.xpose.msra.mxu0 0.0
    %3448 = vmatprep.subr.mxu0 0.0
    %3449 = vmatpush1.xpose.msra.mxu0 0.0
    %3450 = vmatprep.subr.mxu0 0.0
    %3451 = vmatpush1.xpose.msra.mxu0 0.0
    %3452 = vmatprep.subr.mxu0 0.0
    %3453 = vmatpush1.xpose.msra.mxu0 0.0
    %3454 = vmatprep.subr.mxu0 0.0
    %3455 = vmatpush1.xpose.msra.mxu0 0.0
    %3456 = vmatprep.subr.mxu0 0.0
    %3457 = vmatpush1.xpose.msra.mxu0 0.0
    %3458 = vmatprep.subr.mxu0 0.0
    %3459 = vmatpush1.xpose.msra.mxu0 0.0
    %3460 = vmatprep.subr.mxu0 0.0
    %3461 = vmatpush1.xpose.msra.mxu0 0.0
    %3462 = vmatprep.subr.mxu0 0.0
    %3463 = vmatpush1.xpose.msra.mxu0 0.0
    %3464 = vmatprep.subr.mxu0 0.0
    %3465 = vmatpush1.xpose.msra.mxu0 0.0
    %3466 = vmatprep.subr.mxu0 0.0
    %3467 = vmatpush1.xpose.msra.mxu0 0.0
    %3468 = vmatprep.subr.mxu0 0.0
    %3469 = vmatpush1.xpose.msra.mxu0 0.0
    %3470 = vmatprep.subr.mxu0 0.0
    %3471 = vmatpush1.xpose.msra.mxu0 0.0
    %3472 = vmatprep.subr.mxu0 0.0
    %3473 = vmatpush1.xpose.msra.mxu0 0.0
    %3474 = vmatprep.subr.mxu0 0.0
    %3475 = vmatpush1.xpose.msra.mxu0 0.0
    %3476 = vmatprep.subr.mxu0 0.0
    %3477 = vmatpush1.xpose.msra.mxu0 0.0
    %3478 = vmatprep.subr.mxu0 0.0
    %3479 = vmatpush1.xpose.msra.mxu0 0.0
    %3480 = vmatprep.subr.mxu0 0.0
    %3481 = vmatpush1.xpose.msra.mxu0 0.0
    %3482 = vmatprep.subr.mxu0 0.0
    %3483 = vmatpush1.xpose.msra.mxu0 0.0
    %3484 = vmatprep.mubr.f32.mxu0 0.0
    %v3485 = vand.u32 %v3335, 4294901760
    %3486 = vmatmul.mubr.f32.gmra.mrb[0].mxu0 %v3485
    %v3487 = vpop.f32.mrb[0].mxu0
    %v3488 = vadd.f32 %v3412, %v3487
    %v3489 = vpop.f32.mrb[0].mxu0
    %3490 = vdwg.mxu0
    %3491 = vmatprep.subr.mxu0 0.0
    %v3492 = vand.u32 %v3337, 4294901760
    %v3493 = vsub.f32 %v3337, %v3492
    %3494 = vmatpush1.xpose.msra.mxu0 %v3493
    %3495 = vmatprep.subr.mxu0 0.0
    %3496 = vmatpush1.xpose.msra.mxu0 0.0
    %3497 = vmatprep.subr.mxu0 0.0
    %3498 = vmatpush1.xpose.msra.mxu0 0.0
    %3499 = vmatprep.subr.mxu0 0.0
    %3500 = vmatpush1.xpose.msra.mxu0 0.0
    %3501 = vmatprep.subr.mxu0 0.0
    %3502 = vmatpush1.xpose.msra.mxu0 0.0
    %3503 = vmatprep.subr.mxu0 0.0
    %3504 = vmatpush1.xpose.msra.mxu0 0.0
    %3505 = vmatprep.subr.mxu0 0.0
    %3506 = vmatpush1.xpose.msra.mxu0 0.0
    %3507 = vmatprep.subr.mxu0 0.0
    %3508 = vmatpush1.xpose.msra.mxu0 0.0
    %3509 = vmatprep.subr.mxu0 0.0
    %3510 = vmatpush1.xpose.msra.mxu0 0.0
    %3511 = vmatprep.subr.mxu0 0.0
    %3512 = vmatpush1.xpose.msra.mxu0 0.0
    %3513 = vmatprep.subr.mxu0 0.0
    %3514 = vmatpush1.xpose.msra.mxu0 0.0
    %3515 = vmatprep.subr.mxu0 0.0
    %3516 = vmatpush1.xpose.msra.mxu0 0.0
    %3517 = vmatprep.subr.mxu0 0.0
    %3518 = vmatpush1.xpose.msra.mxu0 0.0
    %3519 = vmatprep.subr.mxu0 0.0
    %3520 = vmatpush1.xpose.msra.mxu0 0.0
    %3521 = vmatprep.subr.mxu0 0.0
    %3522 = vmatpush1.xpose.msra.mxu0 0.0
    %3523 = vmatprep.subr.mxu0 0.0
    %3524 = vmatpush1.xpose.msra.mxu0 0.0
    %3525 = vmatprep.subr.mxu0 0.0
    %3526 = vmatpush1.xpose.msra.mxu0 0.0
    %3527 = vmatprep.subr.mxu0 0.0
    %3528 = vmatpush1.xpose.msra.mxu0 0.0
    %3529 = vmatprep.subr.mxu0 0.0
    %3530 = vmatpush1.xpose.msra.mxu0 0.0
    %3531 = vmatprep.subr.mxu0 0.0
    %3532 = vmatpush1.xpose.msra.mxu0 0.0
    %3533 = vmatprep.subr.mxu0 0.0
    %3534 = vmatpush1.xpose.msra.mxu0 0.0
    %3535 = vmatprep.subr.mxu0 0.0
    %3536 = vmatpush1.xpose.msra.mxu0 0.0
    %3537 = vmatprep.subr.mxu0 0.0
    %3538 = vmatpush1.xpose.msra.mxu0 0.0
    %3539 = vmatprep.subr.mxu0 0.0
    %3540 = vmatpush1.xpose.msra.mxu0 0.0
    %3541 = vmatprep.subr.mxu0 0.0
    %3542 = vmatpush1.xpose.msra.mxu0 0.0
    %3543 = vmatprep.subr.mxu0 0.0
    %3544 = vmatpush1.xpose.msra.mxu0 0.0
    %3545 = vmatprep.subr.mxu0 0.0
    %3546 = vmatpush1.xpose.msra.mxu0 0.0
    %3547 = vmatprep.subr.mxu0 0.0
    %3548 = vmatpush1.xpose.msra.mxu0 0.0
    %3549 = vmatprep.subr.mxu0 0.0
    %3550 = vmatpush1.xpose.msra.mxu0 0.0
    %3551 = vmatprep.subr.mxu0 0.0
    %3552 = vmatpush1.xpose.msra.mxu0 0.0
    %3553 = vmatprep.subr.mxu0 0.0
    %3554 = vmatpush1.xpose.msra.mxu0 0.0
    %3555 = vmatprep.subr.mxu0 0.0
    %3556 = vmatpush1.xpose.msra.mxu0 0.0
    %3557 = vmatprep.mubr.f32.mxu0 0.0
    %v3558 = vand.u32 %v3335, 4294901760
    %v3559 = vsub.f32 %v3335, %v3558
    %3560 = vmatmul.mubr.f32.gmra.mrb[0].mxu0 %v3559
    %v3561 = vpop.f32.mrb[0].mxu0
    %v3562 = vadd.f32 %v3488, %v3561
    %v3563 = vpop.f32.mrb[0].mxu0
    %3564 = vdwg.mxu0
    %3565 = vmatprep.subr.mxu0 0.0
    %v3566 = vand.u32 %v3337, 4294901760
    %3567 = vmatpush1.xpose.msra.mxu0 %v3566
    %3568 = vmatprep.subr.mxu0 0.0
    %3569 = vmatpush1.xpose.msra.mxu0 0.0
    %3570 = vmatprep.subr.mxu0 0.0
    %3571 = vmatpush1.xpose.msra.mxu0 0.0
    %3572 = vmatprep.subr.mxu0 0.0
    %3573 = vmatpush1.xpose.msra.mxu0 0.0
    %3574 = vmatprep.subr.mxu0 0.0
    %3575 = vmatpush1.xpose.msra.mxu0 0.0
    %3576 = vmatprep.subr.mxu0 0.0
    %3577 = vmatpush1.xpose.msra.mxu0 0.0
    %3578 = vmatprep.subr.mxu0 0.0
    %3579 = vmatpush1.xpose.msra.mxu0 0.0
    %3580 = vmatprep.subr.mxu0 0.0
    %3581 = vmatpush1.xpose.msra.mxu0 0.0
    %3582 = vmatprep.subr.mxu0 0.0
    %3583 = vmatpush1.xpose.msra.mxu0 0.0
    %3584 = vmatprep.subr.mxu0 0.0
    %3585 = vmatpush1.xpose.msra.mxu0 0.0
    %3586 = vmatprep.subr.mxu0 0.0
    %3587 = vmatpush1.xpose.msra.mxu0 0.0
    %3588 = vmatprep.subr.mxu0 0.0
    %3589 = vmatpush1.xpose.msra.mxu0 0.0
    %3590 = vmatprep.subr.mxu0 0.0
    %3591 = vmatpush1.xpose.msra.mxu0 0.0
    %3592 = vmatprep.subr.mxu0 0.0
    %3593 = vmatpush1.xpose.msra.mxu0 0.0
    %3594 = vmatprep.subr.mxu0 0.0
    %3595 = vmatpush1.xpose.msra.mxu0 0.0
    %3596 = vmatprep.subr.mxu0 0.0
    %3597 = vmatpush1.xpose.msra.mxu0 0.0
    %3598 = vmatprep.subr.mxu0 0.0
    %3599 = vmatpush1.xpose.msra.mxu0 0.0
    %3600 = vmatprep.subr.mxu0 0.0
    %3601 = vmatpush1.xpose.msra.mxu0 0.0
    %3602 = vmatprep.subr.mxu0 0.0
    %3603 = vmatpush1.xpose.msra.mxu0 0.0
    %3604 = vmatprep.subr.mxu0 0.0
    %3605 = vmatpush1.xpose.msra.mxu0 0.0
    %3606 = vmatprep.subr.mxu0 0.0
    %3607 = vmatpush1.xpose.msra.mxu0 0.0
    %3608 = vmatprep.subr.mxu0 0.0
    %3609 = vmatpush1.xpose.msra.mxu0 0.0
    %3610 = vmatprep.subr.mxu0 0.0
    %3611 = vmatpush1.xpose.msra.mxu0 0.0
    %3612 = vmatprep.subr.mxu0 0.0
    %3613 = vmatpush1.xpose.msra.mxu0 0.0
    %3614 = vmatprep.subr.mxu0 0.0
    %3615 = vmatpush1.xpose.msra.mxu0 0.0
    %3616 = vmatprep.subr.mxu0 0.0
    %3617 = vmatpush1.xpose.msra.mxu0 0.0
    %3618 = vmatprep.subr.mxu0 0.0
    %3619 = vmatpush1.xpose.msra.mxu0 0.0
    %3620 = vmatprep.subr.mxu0 0.0
    %3621 = vmatpush1.xpose.msra.mxu0 0.0
    %3622 = vmatprep.subr.mxu0 0.0
    %3623 = vmatpush1.xpose.msra.mxu0 0.0
    %3624 = vmatprep.subr.mxu0 0.0
    %3625 = vmatpush1.xpose.msra.mxu0 0.0
    %3626 = vmatprep.subr.mxu0 0.0
    %3627 = vmatpush1.xpose.msra.mxu0 0.0
    %3628 = vmatprep.subr.mxu0 0.0
    %3629 = vmatpush1.xpose.msra.mxu0 0.0
    %3630 = vmatprep.mubr.f32.mxu0 0.0
    %v3631 = vand.u32 %v3335, 4294901760
    %v3632 = vsub.f32 %v3335, %v3631
    %v3633 = vand.u32 %v3632, 4294901760
    %3634 = vmatmul.mubr.f32.gmra.mrb[0].mxu0 %v3633
    %v3635 = vpop.f32.mrb[0].mxu0
    %v3636 = vadd.f32 %v3562, %v3635
    %v3637 = vpop.f32.mrb[0].mxu0
    %3638 = vdwg.mxu0
    %3639 = vmatprep.subr.mxu0 0.0
    %v3640 = vand.u32 %v3337, 4294901760
    %v3641 = vsub.f32 %v3337, %v3640
    %v3642 = vand.u32 %v3641, 4294901760
    %3643 = vmatpush1.xpose.msra.mxu0 %v3642
    %3644 = vmatprep.subr.mxu0 0.0
    %3645 = vmatpush1.xpose.msra.mxu0 0.0
    %3646 = vmatprep.subr.mxu0 0.0
    %3647 = vmatpush1.xpose.msra.mxu0 0.0
    %3648 = vmatprep.subr.mxu0 0.0
    %3649 = vmatpush1.xpose.msra.mxu0 0.0
    %3650 = vmatprep.subr.mxu0 0.0
    %3651 = vmatpush1.xpose.msra.mxu0 0.0
    %3652 = vmatprep.subr.mxu0 0.0
    %3653 = vmatpush1.xpose.msra.mxu0 0.0
    %3654 = vmatprep.subr.mxu0 0.0
    %3655 = vmatpush1.xpose.msra.mxu0 0.0
    %3656 = vmatprep.subr.mxu0 0.0
    %3657 = vmatpush1.xpose.msra.mxu0 0.0
    %3658 = vmatprep.subr.mxu0 0.0
    %3659 = vmatpush1.xpose.msra.mxu0 0.0
    %3660 = vmatprep.subr.mxu0 0.0
    %3661 = vmatpush1.xpose.msra.mxu0 0.0
    %3662 = vmatprep.subr.mxu0 0.0
    %3663 = vmatpush1.xpose.msra.mxu0 0.0
    %3664 = vmatprep.subr.mxu0 0.0
    %3665 = vmatpush1.xpose.msra.mxu0 0.0
    %3666 = vmatprep.subr.mxu0 0.0
    %3667 = vmatpush1.xpose.msra.mxu0 0.0
    %3668 = vmatprep.subr.mxu0 0.0
    %3669 = vmatpush1.xpose.msra.mxu0 0.0
    %3670 = vmatprep.subr.mxu0 0.0
    %3671 = vmatpush1.xpose.msra.mxu0 0.0
    %3672 = vmatprep.subr.mxu0 0.0
    %3673 = vmatpush1.xpose.msra.mxu0 0.0
    %3674 = vmatprep.subr.mxu0 0.0
    %3675 = vmatpush1.xpose.msra.mxu0 0.0
    %3676 = vmatprep.subr.mxu0 0.0
    %3677 = vmatpush1.xpose.msra.mxu0 0.0
    %3678 = vmatprep.subr.mxu0 0.0
    %3679 = vmatpush1.xpose.msra.mxu0 0.0
    %3680 = vmatprep.subr.mxu0 0.0
    %3681 = vmatpush1.xpose.msra.mxu0 0.0
    %3682 = vmatprep.subr.mxu0 0.0
    %3683 = vmatpush1.xpose.msra.mxu0 0.0
    %3684 = vmatprep.subr.mxu0 0.0
    %3685 = vmatpush1.xpose.msra.mxu0 0.0
    %3686 = vmatprep.subr.mxu0 0.0
    %3687 = vmatpush1.xpose.msra.mxu0 0.0
    %3688 = vmatprep.subr.mxu0 0.0
    %3689 = vmatpush1.xpose.msra.mxu0 0.0
    %3690 = vmatprep.subr.mxu0 0.0
    %3691 = vmatpush1.xpose.msra.mxu0 0.0
    %3692 = vmatprep.subr.mxu0 0.0
    %3693 = vmatpush1.xpose.msra.mxu0 0.0
    %3694 = vmatprep.subr.mxu0 0.0
    %3695 = vmatpush1.xpose.msra.mxu0 0.0
    %3696 = vmatprep.subr.mxu0 0.0
    %3697 = vmatpush1.xpose.msra.mxu0 0.0
    %3698 = vmatprep.subr.mxu0 0.0
    %3699 = vmatpush1.xpose.msra.mxu0 0.0
    %3700 = vmatprep.subr.mxu0 0.0
    %3701 = vmatpush1.xpose.msra.mxu0 0.0
    %3702 = vmatprep.subr.mxu0 0.0
    %3703 = vmatpush1.xpose.msra.mxu0 0.0
    %3704 = vmatprep.subr.mxu0 0.0
    %3705 = vmatpush1.xpose.msra.mxu0 0.0
    %3706 = vmatprep.mubr.f32.mxu0 0.0
    %v3707 = vand.u32 %v3335, 4294901760
    %3708 = vmatmul.mubr.f32.gmra.mrb[0].mxu0 %v3707
    %v3709 = vpop.f32.mrb[0].mxu0
    %v3710 = vadd.f32 %v3636, %v3709
    %v3711 = vpop.f32.mrb[0].mxu0
    %3712 = vdwg.mxu0
    %3713 = vmatprep.subr.mxu0 0.0
    %v3714 = vand.u32 %v3337, 4294901760
    %3715 = vmatpush1.xpose.msra.mxu0 %v3714
    %3716 = vmatprep.subr.mxu0 0.0
    %3717 = vmatpush1.xpose.msra.mxu0 0.0
    %3718 = vmatprep.subr.mxu0 0.0
    %3719 = vmatpush1.xpose.msra.mxu0 0.0
    %3720 = vmatprep.subr.mxu0 0.0
    %3721 = vmatpush1.xpose.msra.mxu0 0.0
    %3722 = vmatprep.subr.mxu0 0.0
    %3723 = vmatpush1.xpose.msra.mxu0 0.0
    %3724 = vmatprep.subr.mxu0 0.0
    %3725 = vmatpush1.xpose.msra.mxu0 0.0
    %3726 = vmatprep.subr.mxu0 0.0
    %3727 = vmatpush1.xpose.msra.mxu0 0.0
    %3728 = vmatprep.subr.mxu0 0.0
    %3729 = vmatpush1.xpose.msra.mxu0 0.0
    %3730 = vmatprep.subr.mxu0 0.0
    %3731 = vmatpush1.xpose.msra.mxu0 0.0
    %3732 = vmatprep.subr.mxu0 0.0
    %3733 = vmatpush1.xpose.msra.mxu0 0.0
    %3734 = vmatprep.subr.mxu0 0.0
    %3735 = vmatpush1.xpose.msra.mxu0 0.0
    %3736 = vmatprep.subr.mxu0 0.0
    %3737 = vmatpush1.xpose.msra.mxu0 0.0
    %3738 = vmatprep.subr.mxu0 0.0
    %3739 = vmatpush1.xpose.msra.mxu0 0.0
    %3740 = vmatprep.subr.mxu0 0.0
    %3741 = vmatpush1.xpose.msra.mxu0 0.0
    %3742 = vmatprep.subr.mxu0 0.0
    %3743 = vmatpush1.xpose.msra.mxu0 0.0
    %3744 = vmatprep.subr.mxu0 0.0
    %3745 = vmatpush1.xpose.msra.mxu0 0.0
    %3746 = vmatprep.subr.mxu0 0.0
    %3747 = vmatpush1.xpose.msra.mxu0 0.0
    %3748 = vmatprep.subr.mxu0 0.0
    %3749 = vmatpush1.xpose.msra.mxu0 0.0
    %3750 = vmatprep.subr.mxu0 0.0
    %3751 = vmatpush1.xpose.msra.mxu0 0.0
    %3752 = vmatprep.subr.mxu0 0.0
    %3753 = vmatpush1.xpose.msra.mxu0 0.0
    %3754 = vmatprep.subr.mxu0 0.0
    %3755 = vmatpush1.xpose.msra.mxu0 0.0
    %3756 = vmatprep.subr.mxu0 0.0
    %3757 = vmatpush1.xpose.msra.mxu0 0.0
    %3758 = vmatprep.subr.mxu0 0.0
    %3759 = vmatpush1.xpose.msra.mxu0 0.0
    %3760 = vmatprep.subr.mxu0 0.0
    %3761 = vmatpush1.xpose.msra.mxu0 0.0
    %3762 = vmatprep.subr.mxu0 0.0
    %3763 = vmatpush1.xpose.msra.mxu0 0.0
    %3764 = vmatprep.subr.mxu0 0.0
    %3765 = vmatpush1.xpose.msra.mxu0 0.0
    %3766 = vmatprep.subr.mxu0 0.0
    %3767 = vmatpush1.xpose.msra.mxu0 0.0
    %3768 = vmatprep.subr.mxu0 0.0
    %3769 = vmatpush1.xpose.msra.mxu0 0.0
    %3770 = vmatprep.subr.mxu0 0.0
    %3771 = vmatpush1.xpose.msra.mxu0 0.0
    %3772 = vmatprep.subr.mxu0 0.0
    %3773 = vmatpush1.xpose.msra.mxu0 0.0
    %3774 = vmatprep.subr.mxu0 0.0
    %3775 = vmatpush1.xpose.msra.mxu0 0.0
    %3776 = vmatprep.subr.mxu0 0.0
    %3777 = vmatpush1.xpose.msra.mxu0 0.0
    %3778 = vmatprep.mubr.f32.mxu0 0.0
    %v3779 = vand.u32 %v3335, 4294901760
    %3780 = vmatmul.mubr.f32.gmra.mrb[0].mxu0 %v3779
    %v3781 = vpop.f32.mrb[0].mxu0
    %v3782 = vadd.f32 %v3710, %v3781
    %v3783 = vpop.f32.mrb[0].mxu0
    %3784 = vdwg.mxu0
    %v3785 = vsel %vm2434, %v2408, 0
    %v3787 = vsel %vm2434, %v2417, 0
    %3789 = vmatprep.subr.mxu0 0.0
    %v3790 = vand.u32 %v3787, 4294901760
    %3791 = vmatpush1.xpose.msra.mxu0 %v3790
    %3792 = vmatprep.subr.mxu0 0.0
    %3793 = vmatpush1.xpose.msra.mxu0 0.0
    %3794 = vmatprep.subr.mxu0 0.0
    %3795 = vmatpush1.xpose.msra.mxu0 0.0
    %3796 = vmatprep.subr.mxu0 0.0
    %3797 = vmatpush1.xpose.msra.mxu0 0.0
    %3798 = vmatprep.subr.mxu0 0.0
    %3799 = vmatpush1.xpose.msra.mxu0 0.0
    %3800 = vmatprep.subr.mxu0 0.0
    %3801 = vmatpush1.xpose.msra.mxu0 0.0
    %3802 = vmatprep.subr.mxu0 0.0
    %3803 = vmatpush1.xpose.msra.mxu0 0.0
    %3804 = vmatprep.subr.mxu0 0.0
    %3805 = vmatpush1.xpose.msra.mxu0 0.0
    %3806 = vmatprep.subr.mxu0 0.0
    %3807 = vmatpush1.xpose.msra.mxu0 0.0
    %3808 = vmatprep.subr.mxu0 0.0
    %3809 = vmatpush1.xpose.msra.mxu0 0.0
    %3810 = vmatprep.subr.mxu0 0.0
    %3811 = vmatpush1.xpose.msra.mxu0 0.0
    %3812 = vmatprep.subr.mxu0 0.0
    %3813 = vmatpush1.xpose.msra.mxu0 0.0
    %3814 = vmatprep.subr.mxu0 0.0
    %3815 = vmatpush1.xpose.msra.mxu0 0.0
    %3816 = vmatprep.subr.mxu0 0.0
    %3817 = vmatpush1.xpose.msra.mxu0 0.0
    %3818 = vmatprep.subr.mxu0 0.0
    %3819 = vmatpush1.xpose.msra.mxu0 0.0
    %3820 = vmatprep.subr.mxu0 0.0
    %3821 = vmatpush1.xpose.msra.mxu0 0.0
    %3822 = vmatprep.subr.mxu0 0.0
    %3823 = vmatpush1.xpose.msra.mxu0 0.0
    %3824 = vmatprep.subr.mxu0 0.0
    %3825 = vmatpush1.xpose.msra.mxu0 0.0
    %3826 = vmatprep.subr.mxu0 0.0
    %3827 = vmatpush1.xpose.msra.mxu0 0.0
    %3828 = vmatprep.subr.mxu0 0.0
    %3829 = vmatpush1.xpose.msra.mxu0 0.0
    %3830 = vmatprep.subr.mxu0 0.0
    %3831 = vmatpush1.xpose.msra.mxu0 0.0
    %3832 = vmatprep.subr.mxu0 0.0
    %3833 = vmatpush1.xpose.msra.mxu0 0.0
    %3834 = vmatprep.subr.mxu0 0.0
    %3835 = vmatpush1.xpose.msra.mxu0 0.0
    %3836 = vmatprep.subr.mxu0 0.0
    %3837 = vmatpush1.xpose.msra.mxu0 0.0
    %3838 = vmatprep.subr.mxu0 0.0
    %3839 = vmatpush1.xpose.msra.mxu0 0.0
    %3840 = vmatprep.subr.mxu0 0.0
    %3841 = vmatpush1.xpose.msra.mxu0 0.0
    %3842 = vmatprep.subr.mxu0 0.0
    %3843 = vmatpush1.xpose.msra.mxu0 0.0
    %3844 = vmatprep.subr.mxu0 0.0
    %3845 = vmatpush1.xpose.msra.mxu0 0.0
    %3846 = vmatprep.subr.mxu0 0.0
    %3847 = vmatpush1.xpose.msra.mxu0 0.0
    %3848 = vmatprep.subr.mxu0 0.0
    %3849 = vmatpush1.xpose.msra.mxu0 0.0
    %3850 = vmatprep.subr.mxu0 0.0
    %3851 = vmatpush1.xpose.msra.mxu0 0.0
    %3852 = vmatprep.subr.mxu0 0.0
    %3853 = vmatpush1.xpose.msra.mxu0 0.0
    %3854 = vmatprep.mubr.f32.mxu0 0.0
    %v3855 = vand.u32 %v3785, 4294901760
    %v3856 = vsub.f32 %v3785, %v3855
    %v3857 = vand.u32 %v3856, 4294901760
    %v3858 = vsub.f32 %v3856, %v3857
    %v3859 = vand.u32 %v3858, 4294901760
    %3860 = vmatmul.mubr.f32.gmra.mrb[0].mxu0 %v3859
    %v3861 = vpop.f32.mrb[0].mxu0
    %v3862 = vadd.f32 0.0, %v3861
    %v3863 = vpop.f32.mrb[0].mxu0
    %3864 = vdwg.mxu0
    %3865 = vmatprep.subr.mxu0 0.0
    %v3866 = vand.u32 %v3787, 4294901760
    %v3867 = vsub.f32 %v3787, %v3866
    %v3868 = vand.u32 %v3867, 4294901760
    %v3869 = vsub.f32 %v3867, %v3868
    %v3870 = vand.u32 %v3869, 4294901760
    %3871 = vmatpush1.xpose.msra.mxu0 %v3870
    %3872 = vmatprep.subr.mxu0 0.0
    %3873 = vmatpush1.xpose.msra.mxu0 0.0
    %3874 = vmatprep.subr.mxu0 0.0
    %3875 = vmatpush1.xpose.msra.mxu0 0.0
    %3876 = vmatprep.subr.mxu0 0.0
    %3877 = vmatpush1.xpose.msra.mxu0 0.0
    %3878 = vmatprep.subr.mxu0 0.0
    %3879 = vmatpush1.xpose.msra.mxu0 0.0
    %3880 = vmatprep.subr.mxu0 0.0
    %3881 = vmatpush1.xpose.msra.mxu0 0.0
    %3882 = vmatprep.subr.mxu0 0.0
    %3883 = vmatpush1.xpose.msra.mxu0 0.0
    %3884 = vmatprep.subr.mxu0 0.0
    %3885 = vmatpush1.xpose.msra.mxu0 0.0
    %3886 = vmatprep.subr.mxu0 0.0
    %3887 = vmatpush1.xpose.msra.mxu0 0.0
    %3888 = vmatprep.subr.mxu0 0.0
    %3889 = vmatpush1.xpose.msra.mxu0 0.0
    %3890 = vmatprep.subr.mxu0 0.0
    %3891 = vmatpush1.xpose.msra.mxu0 0.0
    %3892 = vmatprep.subr.mxu0 0.0
    %3893 = vmatpush1.xpose.msra.mxu0 0.0
    %3894 = vmatprep.subr.mxu0 0.0
    %3895 = vmatpush1.xpose.msra.mxu0 0.0
    %3896 = vmatprep.subr.mxu0 0.0
    %3897 = vmatpush1.xpose.msra.mxu0 0.0
    %3898 = vmatprep.subr.mxu0 0.0
    %3899 = vmatpush1.xpose.msra.mxu0 0.0
    %3900 = vmatprep.subr.mxu0 0.0
    %3901 = vmatpush1.xpose.msra.mxu0 0.0
    %3902 = vmatprep.subr.mxu0 0.0
    %3903 = vmatpush1.xpose.msra.mxu0 0.0
    %3904 = vmatprep.subr.mxu0 0.0
    %3905 = vmatpush1.xpose.msra.mxu0 0.0
    %3906 = vmatprep.subr.mxu0 0.0
    %3907 = vmatpush1.xpose.msra.mxu0 0.0
    %3908 = vmatprep.subr.mxu0 0.0
    %3909 = vmatpush1.xpose.msra.mxu0 0.0
    %3910 = vmatprep.subr.mxu0 0.0
    %3911 = vmatpush1.xpose.msra.mxu0 0.0
    %3912 = vmatprep.subr.mxu0 0.0
    %3913 = vmatpush1.xpose.msra.mxu0 0.0
    %3914 = vmatprep.subr.mxu0 0.0
    %3915 = vmatpush1.xpose.msra.mxu0 0.0
    %3916 = vmatprep.subr.mxu0 0.0
    %3917 = vmatpush1.xpose.msra.mxu0 0.0
    %3918 = vmatprep.subr.mxu0 0.0
    %3919 = vmatpush1.xpose.msra.mxu0 0.0
    %3920 = vmatprep.subr.mxu0 0.0
    %3921 = vmatpush1.xpose.msra.mxu0 0.0
    %3922 = vmatprep.subr.mxu0 0.0
    %3923 = vmatpush1.xpose.msra.mxu0 0.0
    %3924 = vmatprep.subr.mxu0 0.0
    %3925 = vmatpush1.xpose.msra.mxu0 0.0
    %3926 = vmatprep.subr.mxu0 0.0
    %3927 = vmatpush1.xpose.msra.mxu0 0.0
    %3928 = vmatprep.subr.mxu0 0.0
    %3929 = vmatpush1.xpose.msra.mxu0 0.0
    %3930 = vmatprep.subr.mxu0 0.0
    %3931 = vmatpush1.xpose.msra.mxu0 0.0
    %3932 = vmatprep.subr.mxu0 0.0
    %3933 = vmatpush1.xpose.msra.mxu0 0.0
    %3934 = vmatprep.mubr.f32.mxu0 0.0
    %v3935 = vand.u32 %v3785, 4294901760
    %3936 = vmatmul.mubr.f32.gmra.mrb[0].mxu0 %v3935
    %v3937 = vpop.f32.mrb[0].mxu0
    %v3938 = vadd.f32 %v3862, %v3937
    %v3939 = vpop.f32.mrb[0].mxu0
    %3940 = vdwg.mxu0
    %3941 = vmatprep.subr.mxu0 0.0
    %v3942 = vand.u32 %v3787, 4294901760
    %v3943 = vsub.f32 %v3787, %v3942
    %3944 = vmatpush1.xpose.msra.mxu0 %v3943
    %3945 = vmatprep.subr.mxu0 0.0
    %3946 = vmatpush1.xpose.msra.mxu0 0.0
    %3947 = vmatprep.subr.mxu0 0.0
    %3948 = vmatpush1.xpose.msra.mxu0 0.0
    %3949 = vmatprep.subr.mxu0 0.0
    %3950 = vmatpush1.xpose.msra.mxu0 0.0
    %3951 = vmatprep.subr.mxu0 0.0
    %3952 = vmatpush1.xpose.msra.mxu0 0.0
    %3953 = vmatprep.subr.mxu0 0.0
    %3954 = vmatpush1.xpose.msra.mxu0 0.0
    %3955 = vmatprep.subr.mxu0 0.0
    %3956 = vmatpush1.xpose.msra.mxu0 0.0
    %3957 = vmatprep.subr.mxu0 0.0
    %3958 = vmatpush1.xpose.msra.mxu0 0.0
    %3959 = vmatprep.subr.mxu0 0.0
    %3960 = vmatpush1.xpose.msra.mxu0 0.0
    %3961 = vmatprep.subr.mxu0 0.0
    %3962 = vmatpush1.xpose.msra.mxu0 0.0
    %3963 = vmatprep.subr.mxu0 0.0
    %3964 = vmatpush1.xpose.msra.mxu0 0.0
    %3965 = vmatprep.subr.mxu0 0.0
    %3966 = vmatpush1.xpose.msra.mxu0 0.0
    %3967 = vmatprep.subr.mxu0 0.0
    %3968 = vmatpush1.xpose.msra.mxu0 0.0
    %3969 = vmatprep.subr.mxu0 0.0
    %3970 = vmatpush1.xpose.msra.mxu0 0.0
    %3971 = vmatprep.subr.mxu0 0.0
    %3972 = vmatpush1.xpose.msra.mxu0 0.0
    %3973 = vmatprep.subr.mxu0 0.0
    %3974 = vmatpush1.xpose.msra.mxu0 0.0
    %3975 = vmatprep.subr.mxu0 0.0
    %3976 = vmatpush1.xpose.msra.mxu0 0.0
    %3977 = vmatprep.subr.mxu0 0.0
    %3978 = vmatpush1.xpose.msra.mxu0 0.0
    %3979 = vmatprep.subr.mxu0 0.0
    %3980 = vmatpush1.xpose.msra.mxu0 0.0
    %3981 = vmatprep.subr.mxu0 0.0
    %3982 = vmatpush1.xpose.msra.mxu0 0.0
    %3983 = vmatprep.subr.mxu0 0.0
    %3984 = vmatpush1.xpose.msra.mxu0 0.0
    %3985 = vmatprep.subr.mxu0 0.0
    %3986 = vmatpush1.xpose.msra.mxu0 0.0
    %3987 = vmatprep.subr.mxu0 0.0
    %3988 = vmatpush1.xpose.msra.mxu0 0.0
    %3989 = vmatprep.subr.mxu0 0.0
    %3990 = vmatpush1.xpose.msra.mxu0 0.0
    %3991 = vmatprep.subr.mxu0 0.0
    %3992 = vmatpush1.xpose.msra.mxu0 0.0
    %3993 = vmatprep.subr.mxu0 0.0
    %3994 = vmatpush1.xpose.msra.mxu0 0.0
    %3995 = vmatprep.subr.mxu0 0.0
    %3996 = vmatpush1.xpose.msra.mxu0 0.0
    %3997 = vmatprep.subr.mxu0 0.0
    %3998 = vmatpush1.xpose.msra.mxu0 0.0
    %3999 = vmatprep.subr.mxu0 0.0
    %4000 = vmatpush1.xpose.msra.mxu0 0.0
    %4001 = vmatprep.subr.mxu0 0.0
    %4002 = vmatpush1.xpose.msra.mxu0 0.0
    %4003 = vmatprep.subr.mxu0 0.0
    %4004 = vmatpush1.xpose.msra.mxu0 0.0
    %4005 = vmatprep.subr.mxu0 0.0
    %4006 = vmatpush1.xpose.msra.mxu0 0.0
    %4007 = vmatprep.mubr.f32.mxu0 0.0
    %v4008 = vand.u32 %v3785, 4294901760
    %v4009 = vsub.f32 %v3785, %v4008
    %4010 = vmatmul.mubr.f32.gmra.mrb[0].mxu0 %v4009
    %v4011 = vpop.f32.mrb[0].mxu0
    %v4012 = vadd.f32 %v3938, %v4011
    %v4013 = vpop.f32.mrb[0].mxu0
    %4014 = vdwg.mxu0
    %4015 = vmatprep.subr.mxu0 0.0
    %v4016 = vand.u32 %v3787, 4294901760
    %4017 = vmatpush1.xpose.msra.mxu0 %v4016
    %4018 = vmatprep.subr.mxu0 0.0
    %4019 = vmatpush1.xpose.msra.mxu0 0.0
    %4020 = vmatprep.subr.mxu0 0.0
    %4021 = vmatpush1.xpose.msra.mxu0 0.0
    %4022 = vmatprep.subr.mxu0 0.0
    %4023 = vmatpush1.xpose.msra.mxu0 0.0
    %4024 = vmatprep.subr.mxu0 0.0
    %4025 = vmatpush1.xpose.msra.mxu0 0.0
    %4026 = vmatprep.subr.mxu0 0.0
    %4027 = vmatpush1.xpose.msra.mxu0 0.0
    %4028 = vmatprep.subr.mxu0 0.0
    %4029 = vmatpush1.xpose.msra.mxu0 0.0
    %4030 = vmatprep.subr.mxu0 0.0
    %4031 = vmatpush1.xpose.msra.mxu0 0.0
    %4032 = vmatprep.subr.mxu0 0.0
    %4033 = vmatpush1.xpose.msra.mxu0 0.0
    %4034 = vmatprep.subr.mxu0 0.0
    %4035 = vmatpush1.xpose.msra.mxu0 0.0
    %4036 = vmatprep.subr.mxu0 0.0
    %4037 = vmatpush1.xpose.msra.mxu0 0.0
    %4038 = vmatprep.subr.mxu0 0.0
    %4039 = vmatpush1.xpose.msra.mxu0 0.0
    %4040 = vmatprep.subr.mxu0 0.0
    %4041 = vmatpush1.xpose.msra.mxu0 0.0
    %4042 = vmatprep.subr.mxu0 0.0
    %4043 = vmatpush1.xpose.msra.mxu0 0.0
    %4044 = vmatprep.subr.mxu0 0.0
    %4045 = vmatpush1.xpose.msra.mxu0 0.0
    %4046 = vmatprep.subr.mxu0 0.0
    %4047 = vmatpush1.xpose.msra.mxu0 0.0
    %4048 = vmatprep.subr.mxu0 0.0
    %4049 = vmatpush1.xpose.msra.mxu0 0.0
    %4050 = vmatprep.subr.mxu0 0.0
    %4051 = vmatpush1.xpose.msra.mxu0 0.0
    %4052 = vmatprep.subr.mxu0 0.0
    %4053 = vmatpush1.xpose.msra.mxu0 0.0
    %4054 = vmatprep.subr.mxu0 0.0
    %4055 = vmatpush1.xpose.msra.mxu0 0.0
    %4056 = vmatprep.subr.mxu0 0.0
    %4057 = vmatpush1.xpose.msra.mxu0 0.0
    %4058 = vmatprep.subr.mxu0 0.0
    %4059 = vmatpush1.xpose.msra.mxu0 0.0
    %4060 = vmatprep.subr.mxu0 0.0
    %4061 = vmatpush1.xpose.msra.mxu0 0.0
    %4062 = vmatprep.subr.mxu0 0.0
    %4063 = vmatpush1.xpose.msra.mxu0 0.0
    %4064 = vmatprep.subr.mxu0 0.0
    %4065 = vmatpush1.xpose.msra.mxu0 0.0
    %4066 = vmatprep.subr.mxu0 0.0
    %4067 = vmatpush1.xpose.msra.mxu0 0.0
    %4068 = vmatprep.subr.mxu0 0.0
    %4069 = vmatpush1.xpose.msra.mxu0 0.0
    %4070 = vmatprep.subr.mxu0 0.0
    %4071 = vmatpush1.xpose.msra.mxu0 0.0
    %4072 = vmatprep.subr.mxu0 0.0
    %4073 = vmatpush1.xpose.msra.mxu0 0.0
    %4074 = vmatprep.subr.mxu0 0.0
    %4075 = vmatpush1.xpose.msra.mxu0 0.0
    %4076 = vmatprep.subr.mxu0 0.0
    %4077 = vmatpush1.xpose.msra.mxu0 0.0
    %4078 = vmatprep.subr.mxu0 0.0
    %4079 = vmatpush1.xpose.msra.mxu0 0.0
    %4080 = vmatprep.mubr.f32.mxu0 0.0
    %v4081 = vand.u32 %v3785, 4294901760
    %v4082 = vsub.f32 %v3785, %v4081
    %v4083 = vand.u32 %v4082, 4294901760
    %4084 = vmatmul.mubr.f32.gmra.mrb[0].mxu0 %v4083
    %v4085 = vpop.f32.mrb[0].mxu0
    %v4086 = vadd.f32 %v4012, %v4085
    %v4087 = vpop.f32.mrb[0].mxu0
    %4088 = vdwg.mxu0
    %4089 = vmatprep.subr.mxu0 0.0
    %v4090 = vand.u32 %v3787, 4294901760
    %v4091 = vsub.f32 %v3787, %v4090
    %v4092 = vand.u32 %v4091, 4294901760
    %4093 = vmatpush1.xpose.msra.mxu0 %v4092
    %4094 = vmatprep.subr.mxu0 0.0
    %4095 = vmatpush1.xpose.msra.mxu0 0.0
    %4096 = vmatprep.subr.mxu0 0.0
    %4097 = vmatpush1.xpose.msra.mxu0 0.0
    %4098 = vmatprep.subr.mxu0 0.0
    %4099 = vmatpush1.xpose.msra.mxu0 0.0
    %4100 = vmatprep.subr.mxu0 0.0
    %4101 = vmatpush1.xpose.msra.mxu0 0.0
    %4102 = vmatprep.subr.mxu0 0.0
    %4103 = vmatpush1.xpose.msra.mxu0 0.0
    %4104 = vmatprep.subr.mxu0 0.0
    %4105 = vmatpush1.xpose.msra.mxu0 0.0
    %4106 = vmatprep.subr.mxu0 0.0
    %4107 = vmatpush1.xpose.msra.mxu0 0.0
    %4108 = vmatprep.subr.mxu0 0.0
    %4109 = vmatpush1.xpose.msra.mxu0 0.0
    %4110 = vmatprep.subr.mxu0 0.0
    %4111 = vmatpush1.xpose.msra.mxu0 0.0
    %4112 = vmatprep.subr.mxu0 0.0
    %4113 = vmatpush1.xpose.msra.mxu0 0.0
    %4114 = vmatprep.subr.mxu0 0.0
    %4115 = vmatpush1.xpose.msra.mxu0 0.0
    %4116 = vmatprep.subr.mxu0 0.0
    %4117 = vmatpush1.xpose.msra.mxu0 0.0
    %4118 = vmatprep.subr.mxu0 0.0
    %4119 = vmatpush1.xpose.msra.mxu0 0.0
    %4120 = vmatprep.subr.mxu0 0.0
    %4121 = vmatpush1.xpose.msra.mxu0 0.0
    %4122 = vmatprep.subr.mxu0 0.0
    %4123 = vmatpush1.xpose.msra.mxu0 0.0
    %4124 = vmatprep.subr.mxu0 0.0
    %4125 = vmatpush1.xpose.msra.mxu0 0.0
    %4126 = vmatprep.subr.mxu0 0.0
    %4127 = vmatpush1.xpose.msra.mxu0 0.0
    %4128 = vmatprep.subr.mxu0 0.0
    %4129 = vmatpush1.xpose.msra.mxu0 0.0
    %4130 = vmatprep.subr.mxu0 0.0
    %4131 = vmatpush1.xpose.msra.mxu0 0.0
    %4132 = vmatprep.subr.mxu0 0.0
    %4133 = vmatpush1.xpose.msra.mxu0 0.0
    %4134 = vmatprep.subr.mxu0 0.0
    %4135 = vmatpush1.xpose.msra.mxu0 0.0
    %4136 = vmatprep.subr.mxu0 0.0
    %4137 = vmatpush1.xpose.msra.mxu0 0.0
    %4138 = vmatprep.subr.mxu0 0.0
    %4139 = vmatpush1.xpose.msra.mxu0 0.0
    %4140 = vmatprep.subr.mxu0 0.0
    %4141 = vmatpush1.xpose.msra.mxu0 0.0
    %4142 = vmatprep.subr.mxu0 0.0
    %4143 = vmatpush1.xpose.msra.mxu0 0.0
    %4144 = vmatprep.subr.mxu0 0.0
    %4145 = vmatpush1.xpose.msra.mxu0 0.0
    %4146 = vmatprep.subr.mxu0 0.0
    %4147 = vmatpush1.xpose.msra.mxu0 0.0
    %4148 = vmatprep.subr.mxu0 0.0
    %4149 = vmatpush1.xpose.msra.mxu0 0.0
    %4150 = vmatprep.subr.mxu0 0.0
    %4151 = vmatpush1.xpose.msra.mxu0 0.0
    %4152 = vmatprep.subr.mxu0 0.0
    %4153 = vmatpush1.xpose.msra.mxu0 0.0
    %4154 = vmatprep.subr.mxu0 0.0
    %4155 = vmatpush1.xpose.msra.mxu0 0.0
    %4156 = vmatprep.mubr.f32.mxu0 0.0
    %v4157 = vand.u32 %v3785, 4294901760
    %4158 = vmatmul.mubr.f32.gmra.mrb[0].mxu0 %v4157
    %v4159 = vpop.f32.mrb[0].mxu0
    %v4160 = vadd.f32 %v4086, %v4159
    %v4161 = vpop.f32.mrb[0].mxu0
    %4162 = vdwg.mxu0
    %4163 = vmatprep.subr.mxu0 0.0
    %v4164 = vand.u32 %v3787, 4294901760
    %4165 = vmatpush1.xpose.msra.mxu0 %v4164
    %4166 = vmatprep.subr.mxu0 0.0
    %4167 = vmatpush1.xpose.msra.mxu0 0.0
    %4168 = vmatprep.subr.mxu0 0.0
    %4169 = vmatpush1.xpose.msra.mxu0 0.0
    %4170 = vmatprep.subr.mxu0 0.0
    %4171 = vmatpush1.xpose.msra.mxu0 0.0
    %4172 = vmatprep.subr.mxu0 0.0
    %4173 = vmatpush1.xpose.msra.mxu0 0.0
    %4174 = vmatprep.subr.mxu0 0.0
    %4175 = vmatpush1.xpose.msra.mxu0 0.0
    %4176 = vmatprep.subr.mxu0 0.0
    %4177 = vmatpush1.xpose.msra.mxu0 0.0
    %4178 = vmatprep.subr.mxu0 0.0
    %4179 = vmatpush1.xpose.msra.mxu0 0.0
    %4180 = vmatprep.subr.mxu0 0.0
    %4181 = vmatpush1.xpose.msra.mxu0 0.0
    %4182 = vmatprep.subr.mxu0 0.0
    %4183 = vmatpush1.xpose.msra.mxu0 0.0
    %4184 = vmatprep.subr.mxu0 0.0
    %4185 = vmatpush1.xpose.msra.mxu0 0.0
    %4186 = vmatprep.subr.mxu0 0.0
    %4187 = vmatpush1.xpose.msra.mxu0 0.0
    %4188 = vmatprep.subr.mxu0 0.0
    %4189 = vmatpush1.xpose.msra.mxu0 0.0
    %4190 = vmatprep.subr.mxu0 0.0
    %4191 = vmatpush1.xpose.msra.mxu0 0.0
    %4192 = vmatprep.subr.mxu0 0.0
    %4193 = vmatpush1.xpose.msra.mxu0 0.0
    %4194 = vmatprep.subr.mxu0 0.0
    %4195 = vmatpush1.xpose.msra.mxu0 0.0
    %4196 = vmatprep.subr.mxu0 0.0
    %4197 = vmatpush1.xpose.msra.mxu0 0.0
    %4198 = vmatprep.subr.mxu0 0.0
    %4199 = vmatpush1.xpose.msra.mxu0 0.0
    %4200 = vmatprep.subr.mxu0 0.0
    %4201 = vmatpush1.xpose.msra.mxu0 0.0
    %4202 = vmatprep.subr.mxu0 0.0
    %4203 = vmatpush1.xpose.msra.mxu0 0.0
    %4204 = vmatprep.subr.mxu0 0.0
    %4205 = vmatpush1.xpose.msra.mxu0 0.0
    %4206 = vmatprep.subr.mxu0 0.0
    %4207 = vmatpush1.xpose.msra.mxu0 0.0
    %4208 = vmatprep.subr.mxu0 0.0
    %4209 = vmatpush1.xpose.msra.mxu0 0.0
    %4210 = vmatprep.subr.mxu0 0.0
    %4211 = vmatpush1.xpose.msra.mxu0 0.0
    %4212 = vmatprep.subr.mxu0 0.0
    %4213 = vmatpush1.xpose.msra.mxu0 0.0
    %4214 = vmatprep.subr.mxu0 0.0
    %4215 = vmatpush1.xpose.msra.mxu0 0.0
    %4216 = vmatprep.subr.mxu0 0.0
    %4217 = vmatpush1.xpose.msra.mxu0 0.0
    %4218 = vmatprep.subr.mxu0 0.0
    %4219 = vmatpush1.xpose.msra.mxu0 0.0
    %4220 = vmatprep.subr.mxu0 0.0
    %4221 = vmatpush1.xpose.msra.mxu0 0.0
    %4222 = vmatprep.subr.mxu0 0.0
    %4223 = vmatpush1.xpose.msra.mxu0 0.0
    %4224 = vmatprep.subr.mxu0 0.0
    %4225 = vmatpush1.xpose.msra.mxu0 0.0
    %4226 = vmatprep.subr.mxu0 0.0
    %4227 = vmatpush1.xpose.msra.mxu0 0.0
    %4228 = vmatprep.mubr.f32.mxu0 0.0
    %v4229 = vand.u32 %v3785, 4294901760
    %4230 = vmatmul.mubr.f32.gmra.mrb[0].mxu0 %v4229
    %v4231 = vpop.f32.mrb[0].mxu0
    %v4232 = vadd.f32 %v4160, %v4231
    %v4233 = vpop.f32.mrb[0].mxu0
    %4234 = vdwg.mxu0
    %v4235 = vsel %vm2434, %v2410, 0
    %v4237 = vsel %vm2434, %v2419, 0
    %4239 = vmatprep.subr.mxu0 0.0
    %v4240 = vand.u32 %v4237, 4294901760
    %4241 = vmatpush1.xpose.msra.mxu0 %v4240
    %4242 = vmatprep.subr.mxu0 0.0
    %4243 = vmatpush1.xpose.msra.mxu0 0.0
    %4244 = vmatprep.subr.mxu0 0.0
    %4245 = vmatpush1.xpose.msra.mxu0 0.0
    %4246 = vmatprep.subr.mxu0 0.0
    %4247 = vmatpush1.xpose.msra.mxu0 0.0
    %4248 = vmatprep.subr.mxu0 0.0
    %4249 = vmatpush1.xpose.msra.mxu0 0.0
    %4250 = vmatprep.subr.mxu0 0.0
    %4251 = vmatpush1.xpose.msra.mxu0 0.0
    %4252 = vmatprep.subr.mxu0 0.0
    %4253 = vmatpush1.xpose.msra.mxu0 0.0
    %4254 = vmatprep.subr.mxu0 0.0
    %4255 = vmatpush1.xpose.msra.mxu0 0.0
    %4256 = vmatprep.subr.mxu0 0.0
    %4257 = vmatpush1.xpose.msra.mxu0 0.0
    %4258 = vmatprep.subr.mxu0 0.0
    %4259 = vmatpush1.xpose.msra.mxu0 0.0
    %4260 = vmatprep.subr.mxu0 0.0
    %4261 = vmatpush1.xpose.msra.mxu0 0.0
    %4262 = vmatprep.subr.mxu0 0.0
    %4263 = vmatpush1.xpose.msra.mxu0 0.0
    %4264 = vmatprep.subr.mxu0 0.0
    %4265 = vmatpush1.xpose.msra.mxu0 0.0
    %4266 = vmatprep.subr.mxu0 0.0
    %4267 = vmatpush1.xpose.msra.mxu0 0.0
    %4268 = vmatprep.subr.mxu0 0.0
    %4269 = vmatpush1.xpose.msra.mxu0 0.0
    %4270 = vmatprep.subr.mxu0 0.0
    %4271 = vmatpush1.xpose.msra.mxu0 0.0
    %4272 = vmatprep.subr.mxu0 0.0
    %4273 = vmatpush1.xpose.msra.mxu0 0.0
    %4274 = vmatprep.subr.mxu0 0.0
    %4275 = vmatpush1.xpose.msra.mxu0 0.0
    %4276 = vmatprep.subr.mxu0 0.0
    %4277 = vmatpush1.xpose.msra.mxu0 0.0
    %4278 = vmatprep.subr.mxu0 0.0
    %4279 = vmatpush1.xpose.msra.mxu0 0.0
    %4280 = vmatprep.subr.mxu0 0.0
    %4281 = vmatpush1.xpose.msra.mxu0 0.0
    %4282 = vmatprep.subr.mxu0 0.0
    %4283 = vmatpush1.xpose.msra.mxu0 0.0
    %4284 = vmatprep.subr.mxu0 0.0
    %4285 = vmatpush1.xpose.msra.mxu0 0.0
    %4286 = vmatprep.subr.mxu0 0.0
    %4287 = vmatpush1.xpose.msra.mxu0 0.0
    %4288 = vmatprep.subr.mxu0 0.0
    %4289 = vmatpush1.xpose.msra.mxu0 0.0
    %4290 = vmatprep.subr.mxu0 0.0
    %4291 = vmatpush1.xpose.msra.mxu0 0.0
    %4292 = vmatprep.subr.mxu0 0.0
    %4293 = vmatpush1.xpose.msra.mxu0 0.0
    %4294 = vmatprep.subr.mxu0 0.0
    %4295 = vmatpush1.xpose.msra.mxu0 0.0
    %4296 = vmatprep.subr.mxu0 0.0
    %4297 = vmatpush1.xpose.msra.mxu0 0.0
    %4298 = vmatprep.subr.mxu0 0.0
    %4299 = vmatpush1.xpose.msra.mxu0 0.0
    %4300 = vmatprep.subr.mxu0 0.0
    %4301 = vmatpush1.xpose.msra.mxu0 0.0
    %4302 = vmatprep.subr.mxu0 0.0
    %4303 = vmatpush1.xpose.msra.mxu0 0.0
    %4304 = vmatprep.mubr.f32.mxu0 0.0
    %v4305 = vand.u32 %v4235, 4294901760
    %v4306 = vsub.f32 %v4235, %v4305
    %v4307 = vand.u32 %v4306, 4294901760
    %v4308 = vsub.f32 %v4306, %v4307
    %v4309 = vand.u32 %v4308, 4294901760
    %4310 = vmatmul.mubr.f32.gmra.mrb[0].mxu0 %v4309
    %v4311 = vpop.f32.mrb[0].mxu0
    %v4312 = vadd.f32 0.0, %v4311
    %v4313 = vpop.f32.mrb[0].mxu0
    %4314 = vdwg.mxu0
    %4315 = vmatprep.subr.mxu0 0.0
    %v4316 = vand.u32 %v4237, 4294901760
    %v4317 = vsub.f32 %v4237, %v4316
    %v4318 = vand.u32 %v4317, 4294901760
    %v4319 = vsub.f32 %v4317, %v4318
    %v4320 = vand.u32 %v4319, 4294901760
    %4321 = vmatpush1.xpose.msra.mxu0 %v4320
    %4322 = vmatprep.subr.mxu0 0.0
    %4323 = vmatpush1.xpose.msra.mxu0 0.0
    %4324 = vmatprep.subr.mxu0 0.0
    %4325 = vmatpush1.xpose.msra.mxu0 0.0
    %4326 = vmatprep.subr.mxu0 0.0
    %4327 = vmatpush1.xpose.msra.mxu0 0.0
    %4328 = vmatprep.subr.mxu0 0.0
    %4329 = vmatpush1.xpose.msra.mxu0 0.0
    %4330 = vmatprep.subr.mxu0 0.0
    %4331 = vmatpush1.xpose.msra.mxu0 0.0
    %4332 = vmatprep.subr.mxu0 0.0
    %4333 = vmatpush1.xpose.msra.mxu0 0.0
    %4334 = vmatprep.subr.mxu0 0.0
    %4335 = vmatpush1.xpose.msra.mxu0 0.0
    %4336 = vmatprep.subr.mxu0 0.0
    %4337 = vmatpush1.xpose.msra.mxu0 0.0
    %4338 = vmatprep.subr.mxu0 0.0
    %4339 = vmatpush1.xpose.msra.mxu0 0.0
    %4340 = vmatprep.subr.mxu0 0.0
    %4341 = vmatpush1.xpose.msra.mxu0 0.0
    %4342 = vmatprep.subr.mxu0 0.0
    %4343 = vmatpush1.xpose.msra.mxu0 0.0
    %4344 = vmatprep.subr.mxu0 0.0
    %4345 = vmatpush1.xpose.msra.mxu0 0.0
    %4346 = vmatprep.subr.mxu0 0.0
    %4347 = vmatpush1.xpose.msra.mxu0 0.0
    %4348 = vmatprep.subr.mxu0 0.0
    %4349 = vmatpush1.xpose.msra.mxu0 0.0
    %4350 = vmatprep.subr.mxu0 0.0
    %4351 = vmatpush1.xpose.msra.mxu0 0.0
    %4352 = vmatprep.subr.mxu0 0.0
    %4353 = vmatpush1.xpose.msra.mxu0 0.0
    %4354 = vmatprep.subr.mxu0 0.0
    %4355 = vmatpush1.xpose.msra.mxu0 0.0
    %4356 = vmatprep.subr.mxu0 0.0
    %4357 = vmatpush1.xpose.msra.mxu0 0.0
    %4358 = vmatprep.subr.mxu0 0.0
    %4359 = vmatpush1.xpose.msra.mxu0 0.0
    %4360 = vmatprep.subr.mxu0 0.0
    %4361 = vmatpush1.xpose.msra.mxu0 0.0
    %4362 = vmatprep.subr.mxu0 0.0
    %4363 = vmatpush1.xpose.msra.mxu0 0.0
    %4364 = vmatprep.subr.mxu0 0.0
    %4365 = vmatpush1.xpose.msra.mxu0 0.0
    %4366 = vmatprep.subr.mxu0 0.0
    %4367 = vmatpush1.xpose.msra.mxu0 0.0
    %4368 = vmatprep.subr.mxu0 0.0
    %4369 = vmatpush1.xpose.msra.mxu0 0.0
    %4370 = vmatprep.subr.mxu0 0.0
    %4371 = vmatpush1.xpose.msra.mxu0 0.0
    %4372 = vmatprep.subr.mxu0 0.0
    %4373 = vmatpush1.xpose.msra.mxu0 0.0
    %4374 = vmatprep.subr.mxu0 0.0
    %4375 = vmatpush1.xpose.msra.mxu0 0.0
    %4376 = vmatprep.subr.mxu0 0.0
    %4377 = vmatpush1.xpose.msra.mxu0 0.0
    %4378 = vmatprep.subr.mxu0 0.0
    %4379 = vmatpush1.xpose.msra.mxu0 0.0
    %4380 = vmatprep.subr.mxu0 0.0
    %4381 = vmatpush1.xpose.msra.mxu0 0.0
    %4382 = vmatprep.subr.mxu0 0.0
    %4383 = vmatpush1.xpose.msra.mxu0 0.0
    %4384 = vmatprep.mubr.f32.mxu0 0.0
    %v4385 = vand.u32 %v4235, 4294901760
    %4386 = vmatmul.mubr.f32.gmra.mrb[0].mxu0 %v4385
    %v4387 = vpop.f32.mrb[0].mxu0
    %v4388 = vadd.f32 %v4312, %v4387
    %v4389 = vpop.f32.mrb[0].mxu0
    %4390 = vdwg.mxu0
    %4391 = vmatprep.subr.mxu0 0.0
    %v4392 = vand.u32 %v4237, 4294901760
    %v4393 = vsub.f32 %v4237, %v4392
    %4394 = vmatpush1.xpose.msra.mxu0 %v4393
    %4395 = vmatprep.subr.mxu0 0.0
    %4396 = vmatpush1.xpose.msra.mxu0 0.0
    %4397 = vmatprep.subr.mxu0 0.0
    %4398 = vmatpush1.xpose.msra.mxu0 0.0
    %4399 = vmatprep.subr.mxu0 0.0
    %4400 = vmatpush1.xpose.msra.mxu0 0.0
    %4401 = vmatprep.subr.mxu0 0.0
    %4402 = vmatpush1.xpose.msra.mxu0 0.0
    %4403 = vmatprep.subr.mxu0 0.0
    %4404 = vmatpush1.xpose.msra.mxu0 0.0
    %4405 = vmatprep.subr.mxu0 0.0
    %4406 = vmatpush1.xpose.msra.mxu0 0.0
    %4407 = vmatprep.subr.mxu0 0.0
    %4408 = vmatpush1.xpose.msra.mxu0 0.0
    %4409 = vmatprep.subr.mxu0 0.0
    %4410 = vmatpush1.xpose.msra.mxu0 0.0
    %4411 = vmatprep.subr.mxu0 0.0
    %4412 = vmatpush1.xpose.msra.mxu0 0.0
    %4413 = vmatprep.subr.mxu0 0.0
    %4414 = vmatpush1.xpose.msra.mxu0 0.0
    %4415 = vmatprep.subr.mxu0 0.0
    %4416 = vmatpush1.xpose.msra.mxu0 0.0
    %4417 = vmatprep.subr.mxu0 0.0
    %4418 = vmatpush1.xpose.msra.mxu0 0.0
    %4419 = vmatprep.subr.mxu0 0.0
    %4420 = vmatpush1.xpose.msra.mxu0 0.0
    %4421 = vmatprep.subr.mxu0 0.0
    %4422 = vmatpush1.xpose.msra.mxu0 0.0
    %4423 = vmatprep.subr.mxu0 0.0
    %4424 = vmatpush1.xpose.msra.mxu0 0.0
    %4425 = vmatprep.subr.mxu0 0.0
    %4426 = vmatpush1.xpose.msra.mxu0 0.0
    %4427 = vmatprep.subr.mxu0 0.0
    %4428 = vmatpush1.xpose.msra.mxu0 0.0
    %4429 = vmatprep.subr.mxu0 0.0
    %4430 = vmatpush1.xpose.msra.mxu0 0.0
    %4431 = vmatprep.subr.mxu0 0.0
    %4432 = vmatpush1.xpose.msra.mxu0 0.0
    %4433 = vmatprep.subr.mxu0 0.0
    %4434 = vmatpush1.xpose.msra.mxu0 0.0
    %4435 = vmatprep.subr.mxu0 0.0
    %4436 = vmatpush1.xpose.msra.mxu0 0.0
    %4437 = vmatprep.subr.mxu0 0.0
    %4438 = vmatpush1.xpose.msra.mxu0 0.0
    %4439 = vmatprep.subr.mxu0 0.0
    %4440 = vmatpush1.xpose.msra.mxu0 0.0
    %4441 = vmatprep.subr.mxu0 0.0
    %4442 = vmatpush1.xpose.msra.mxu0 0.0
    %4443 = vmatprep.subr.mxu0 0.0
    %4444 = vmatpush1.xpose.msra.mxu0 0.0
    %4445 = vmatprep.subr.mxu0 0.0
    %4446 = vmatpush1.xpose.msra.mxu0 0.0
    %4447 = vmatprep.subr.mxu0 0.0
    %4448 = vmatpush1.xpose.msra.mxu0 0.0
    %4449 = vmatprep.subr.mxu0 0.0
    %4450 = vmatpush1.xpose.msra.mxu0 0.0
    %4451 = vmatprep.subr.mxu0 0.0
    %4452 = vmatpush1.xpose.msra.mxu0 0.0
    %4453 = vmatprep.subr.mxu0 0.0
    %4454 = vmatpush1.xpose.msra.mxu0 0.0
    %4455 = vmatprep.subr.mxu0 0.0
    %4456 = vmatpush1.xpose.msra.mxu0 0.0
    %4457 = vmatprep.mubr.f32.mxu0 0.0
    %v4458 = vand.u32 %v4235, 4294901760
    %v4459 = vsub.f32 %v4235, %v4458
    %4460 = vmatmul.mubr.f32.gmra.mrb[0].mxu0 %v4459
    %v4461 = vpop.f32.mrb[0].mxu0
    %v4462 = vadd.f32 %v4388, %v4461
    %v4463 = vpop.f32.mrb[0].mxu0
    %4464 = vdwg.mxu0
    %4465 = vmatprep.subr.mxu0 0.0
    %v4466 = vand.u32 %v4237, 4294901760
    %4467 = vmatpush1.xpose.msra.mxu0 %v4466
    %4468 = vmatprep.subr.mxu0 0.0
    %4469 = vmatpush1.xpose.msra.mxu0 0.0
    %4470 = vmatprep.subr.mxu0 0.0
    %4471 = vmatpush1.xpose.msra.mxu0 0.0
    %4472 = vmatprep.subr.mxu0 0.0
    %4473 = vmatpush1.xpose.msra.mxu0 0.0
    %4474 = vmatprep.subr.mxu0 0.0
    %4475 = vmatpush1.xpose.msra.mxu0 0.0
    %4476 = vmatprep.subr.mxu0 0.0
    %4477 = vmatpush1.xpose.msra.mxu0 0.0
    %4478 = vmatprep.subr.mxu0 0.0
    %4479 = vmatpush1.xpose.msra.mxu0 0.0
    %4480 = vmatprep.subr.mxu0 0.0
    %4481 = vmatpush1.xpose.msra.mxu0 0.0
    %4482 = vmatprep.subr.mxu0 0.0
    %4483 = vmatpush1.xpose.msra.mxu0 0.0
    %4484 = vmatprep.subr.mxu0 0.0
    %4485 = vmatpush1.xpose.msra.mxu0 0.0
    %4486 = vmatprep.subr.mxu0 0.0
    %4487 = vmatpush1.xpose.msra.mxu0 0.0
    %4488 = vmatprep.subr.mxu0 0.0
    %4489 = vmatpush1.xpose.msra.mxu0 0.0
    %4490 = vmatprep.subr.mxu0 0.0
    %4491 = vmatpush1.xpose.msra.mxu0 0.0
    %4492 = vmatprep.subr.mxu0 0.0
    %4493 = vmatpush1.xpose.msra.mxu0 0.0
    %4494 = vmatprep.subr.mxu0 0.0
    %4495 = vmatpush1.xpose.msra.mxu0 0.0
    %4496 = vmatprep.subr.mxu0 0.0
    %4497 = vmatpush1.xpose.msra.mxu0 0.0
    %4498 = vmatprep.subr.mxu0 0.0
    %4499 = vmatpush1.xpose.msra.mxu0 0.0
    %4500 = vmatprep.subr.mxu0 0.0
    %4501 = vmatpush1.xpose.msra.mxu0 0.0
    %4502 = vmatprep.subr.mxu0 0.0
    %4503 = vmatpush1.xpose.msra.mxu0 0.0
    %4504 = vmatprep.subr.mxu0 0.0
    %4505 = vmatpush1.xpose.msra.mxu0 0.0
    %4506 = vmatprep.subr.mxu0 0.0
    %4507 = vmatpush1.xpose.msra.mxu0 0.0
    %4508 = vmatprep.subr.mxu0 0.0
    %4509 = vmatpush1.xpose.msra.mxu0 0.0
    %4510 = vmatprep.subr.mxu0 0.0
    %4511 = vmatpush1.xpose.msra.mxu0 0.0
    %4512 = vmatprep.subr.mxu0 0.0
    %4513 = vmatpush1.xpose.msra.mxu0 0.0
    %4514 = vmatprep.subr.mxu0 0.0
    %4515 = vmatpush1.xpose.msra.mxu0 0.0
    %4516 = vmatprep.subr.mxu0 0.0
    %4517 = vmatpush1.xpose.msra.mxu0 0.0
    %4518 = vmatprep.subr.mxu0 0.0
    %4519 = vmatpush1.xpose.msra.mxu0 0.0
    %4520 = vmatprep.subr.mxu0 0.0
    %4521 = vmatpush1.xpose.msra.mxu0 0.0
    %4522 = vmatprep.subr.mxu0 0.0
    %4523 = vmatpush1.xpose.msra.mxu0 0.0
    %4524 = vmatprep.subr.mxu0 0.0
    %4525 = vmatpush1.xpose.msra.mxu0 0.0
    %4526 = vmatprep.subr.mxu0 0.0
    %4527 = vmatpush1.xpose.msra.mxu0 0.0
    %4528 = vmatprep.subr.mxu0 0.0
    %4529 = vmatpush1.xpose.msra.mxu0 0.0
    %4530 = vmatprep.mubr.f32.mxu0 0.0
    %v4531 = vand.u32 %v4235, 4294901760
    %v4532 = vsub.f32 %v4235, %v4531
    %v4533 = vand.u32 %v4532, 4294901760
    %4534 = vmatmul.mubr.f32.gmra.mrb[0].mxu0 %v4533
    %v4535 = vpop.f32.mrb[0].mxu0
    %v4536 = vadd.f32 %v4462, %v4535
    %v4537 = vpop.f32.mrb[0].mxu0
    %4538 = vdwg.mxu0
    %4539 = vmatprep.subr.mxu0 0.0
    %v4540 = vand.u32 %v4237, 4294901760
    %v4541 = vsub.f32 %v4237, %v4540
    %v4542 = vand.u32 %v4541, 4294901760
    %4543 = vmatpush1.xpose.msra.mxu0 %v4542
    %4544 = vmatprep.subr.mxu0 0.0
    %4545 = vmatpush1.xpose.msra.mxu0 0.0
    %4546 = vmatprep.subr.mxu0 0.0
    %4547 = vmatpush1.xpose.msra.mxu0 0.0
    %4548 = vmatprep.subr.mxu0 0.0
    %4549 = vmatpush1.xpose.msra.mxu0 0.0
    %4550 = vmatprep.subr.mxu0 0.0
    %4551 = vmatpush1.xpose.msra.mxu0 0.0
    %4552 = vmatprep.subr.mxu0 0.0
    %4553 = vmatpush1.xpose.msra.mxu0 0.0
    %4554 = vmatprep.subr.mxu0 0.0
    %4555 = vmatpush1.xpose.msra.mxu0 0.0
    %4556 = vmatprep.subr.mxu0 0.0
    %4557 = vmatpush1.xpose.msra.mxu0 0.0
    %4558 = vmatprep.subr.mxu0 0.0
    %4559 = vmatpush1.xpose.msra.mxu0 0.0
    %4560 = vmatprep.subr.mxu0 0.0
    %4561 = vmatpush1.xpose.msra.mxu0 0.0
    %4562 = vmatprep.subr.mxu0 0.0
    %4563 = vmatpush1.xpose.msra.mxu0 0.0
    %4564 = vmatprep.subr.mxu0 0.0
    %4565 = vmatpush1.xpose.msra.mxu0 0.0
    %4566 = vmatprep.subr.mxu0 0.0
    %4567 = vmatpush1.xpose.msra.mxu0 0.0
    %4568 = vmatprep.subr.mxu0 0.0
    %4569 = vmatpush1.xpose.msra.mxu0 0.0
    %4570 = vmatprep.subr.mxu0 0.0
    %4571 = vmatpush1.xpose.msra.mxu0 0.0
    %4572 = vmatprep.subr.mxu0 0.0
    %4573 = vmatpush1.xpose.msra.mxu0 0.0
    %4574 = vmatprep.subr.mxu0 0.0
    %4575 = vmatpush1.xpose.msra.mxu0 0.0
    %4576 = vmatprep.subr.mxu0 0.0
    %4577 = vmatpush1.xpose.msra.mxu0 0.0
    %4578 = vmatprep.subr.mxu0 0.0
    %4579 = vmatpush1.xpose.msra.mxu0 0.0
    %4580 = vmatprep.subr.mxu0 0.0
    %4581 = vmatpush1.xpose.msra.mxu0 0.0
    %4582 = vmatprep.subr.mxu0 0.0
    %4583 = vmatpush1.xpose.msra.mxu0 0.0
    %4584 = vmatprep.subr.mxu0 0.0
    %4585 = vmatpush1.xpose.msra.mxu0 0.0
    %4586 = vmatprep.subr.mxu0 0.0
    %4587 = vmatpush1.xpose.msra.mxu0 0.0
    %4588 = vmatprep.subr.mxu0 0.0
    %4589 = vmatpush1.xpose.msra.mxu0 0.0
    %4590 = vmatprep.subr.mxu0 0.0
    %4591 = vmatpush1.xpose.msra.mxu0 0.0
    %4592 = vmatprep.subr.mxu0 0.0
    %4593 = vmatpush1.xpose.msra.mxu0 0.0
    %4594 = vmatprep.subr.mxu0 0.0
    %4595 = vmatpush1.xpose.msra.mxu0 0.0
    %4596 = vmatprep.subr.mxu0 0.0
    %4597 = vmatpush1.xpose.msra.mxu0 0.0
    %4598 = vmatprep.subr.mxu0 0.0
    %4599 = vmatpush1.xpose.msra.mxu0 0.0
    %4600 = vmatprep.subr.mxu0 0.0
    %4601 = vmatpush1.xpose.msra.mxu0 0.0
    %4602 = vmatprep.subr.mxu0 0.0
    %4603 = vmatpush1.xpose.msra.mxu0 0.0
    %4604 = vmatprep.subr.mxu0 0.0
    %4605 = vmatpush1.xpose.msra.mxu0 0.0
    %4606 = vmatprep.mubr.f32.mxu0 0.0
    %v4607 = vand.u32 %v4235, 4294901760
    %4608 = vmatmul.mubr.f32.gmra.mrb[0].mxu0 %v4607
    %v4609 = vpop.f32.mrb[0].mxu0
    %v4610 = vadd.f32 %v4536, %v4609
    %v4611 = vpop.f32.mrb[0].mxu0
    %4612 = vdwg.mxu0
    %4613 = vmatprep.subr.mxu0 0.0
    %v4614 = vand.u32 %v4237, 4294901760
    %4615 = vmatpush1.xpose.msra.mxu0 %v4614
    %4616 = vmatprep.subr.mxu0 0.0
    %4617 = vmatpush1.xpose.msra.mxu0 0.0
    %4618 = vmatprep.subr.mxu0 0.0
    %4619 = vmatpush1.xpose.msra.mxu0 0.0
    %4620 = vmatprep.subr.mxu0 0.0
    %4621 = vmatpush1.xpose.msra.mxu0 0.0
    %4622 = vmatprep.subr.mxu0 0.0
    %4623 = vmatpush1.xpose.msra.mxu0 0.0
    %4624 = vmatprep.subr.mxu0 0.0
    %4625 = vmatpush1.xpose.msra.mxu0 0.0
    %4626 = vmatprep.subr.mxu0 0.0
    %4627 = vmatpush1.xpose.msra.mxu0 0.0
    %4628 = vmatprep.subr.mxu0 0.0
    %4629 = vmatpush1.xpose.msra.mxu0 0.0
    %4630 = vmatprep.subr.mxu0 0.0
    %4631 = vmatpush1.xpose.msra.mxu0 0.0
    %4632 = vmatprep.subr.mxu0 0.0
    %4633 = vmatpush1.xpose.msra.mxu0 0.0
    %4634 = vmatprep.subr.mxu0 0.0
    %4635 = vmatpush1.xpose.msra.mxu0 0.0
    %4636 = vmatprep.subr.mxu0 0.0
    %4637 = vmatpush1.xpose.msra.mxu0 0.0
    %4638 = vmatprep.subr.mxu0 0.0
    %4639 = vmatpush1.xpose.msra.mxu0 0.0
    %4640 = vmatprep.subr.mxu0 0.0
    %4641 = vmatpush1.xpose.msra.mxu0 0.0
    %4642 = vmatprep.subr.mxu0 0.0
    %4643 = vmatpush1.xpose.msra.mxu0 0.0
    %4644 = vmatprep.subr.mxu0 0.0
    %4645 = vmatpush1.xpose.msra.mxu0 0.0
    %4646 = vmatprep.subr.mxu0 0.0
    %4647 = vmatpush1.xpose.msra.mxu0 0.0
    %4648 = vmatprep.subr.mxu0 0.0
    %4649 = vmatpush1.xpose.msra.mxu0 0.0
    %4650 = vmatprep.subr.mxu0 0.0
    %4651 = vmatpush1.xpose.msra.mxu0 0.0
    %4652 = vmatprep.subr.mxu0 0.0
    %4653 = vmatpush1.xpose.msra.mxu0 0.0
    %4654 = vmatprep.subr.mxu0 0.0
    %4655 = vmatpush1.xpose.msra.mxu0 0.0
    %4656 = vmatprep.subr.mxu0 0.0
    %4657 = vmatpush1.xpose.msra.mxu0 0.0
    %4658 = vmatprep.subr.mxu0 0.0
    %4659 = vmatpush1.xpose.msra.mxu0 0.0
    %4660 = vmatprep.subr.mxu0 0.0
    %4661 = vmatpush1.xpose.msra.mxu0 0.0
    %4662 = vmatprep.subr.mxu0 0.0
    %4663 = vmatpush1.xpose.msra.mxu0 0.0
    %4664 = vmatprep.subr.mxu0 0.0
    %4665 = vmatpush1.xpose.msra.mxu0 0.0
    %4666 = vmatprep.subr.mxu0 0.0
    %4667 = vmatpush1.xpose.msra.mxu0 0.0
    %4668 = vmatprep.subr.mxu0 0.0
    %4669 = vmatpush1.xpose.msra.mxu0 0.0
    %4670 = vmatprep.subr.mxu0 0.0
    %4671 = vmatpush1.xpose.msra.mxu0 0.0
    %4672 = vmatprep.subr.mxu0 0.0
    %4673 = vmatpush1.xpose.msra.mxu0 0.0
    %4674 = vmatprep.subr.mxu0 0.0
    %4675 = vmatpush1.xpose.msra.mxu0 0.0
    %4676 = vmatprep.subr.mxu0 0.0
    %4677 = vmatpush1.xpose.msra.mxu0 0.0
    %4678 = vmatprep.mubr.f32.mxu0 0.0
    %v4679 = vand.u32 %v4235, 4294901760
    %4680 = vmatmul.mubr.f32.gmra.mrb[0].mxu0 %v4679
    %v4681 = vpop.f32.mrb[0].mxu0
    %v4682 = vadd.f32 %v4610, %v4681
    %v4683 = vpop.f32.mrb[0].mxu0
    %4684 = vdwg.mxu0
    %v4685 = vsel %vm2434, %v2412, 0
    %v4687 = vsel %vm2434, %v2421, 0
    %4689 = vmatprep.subr.mxu0 0.0
    %v4690 = vand.u32 %v4687, 4294901760
    %4691 = vmatpush1.xpose.msra.mxu0 %v4690
    %4692 = vmatprep.subr.mxu0 0.0
    %4693 = vmatpush1.xpose.msra.mxu0 0.0
    %4694 = vmatprep.subr.mxu0 0.0
    %4695 = vmatpush1.xpose.msra.mxu0 0.0
    %4696 = vmatprep.subr.mxu0 0.0
    %4697 = vmatpush1.xpose.msra.mxu0 0.0
    %4698 = vmatprep.subr.mxu0 0.0
    %4699 = vmatpush1.xpose.msra.mxu0 0.0
    %4700 = vmatprep.subr.mxu0 0.0
    %4701 = vmatpush1.xpose.msra.mxu0 0.0
    %4702 = vmatprep.subr.mxu0 0.0
    %4703 = vmatpush1.xpose.msra.mxu0 0.0
    %4704 = vmatprep.subr.mxu0 0.0
    %4705 = vmatpush1.xpose.msra.mxu0 0.0
    %4706 = vmatprep.subr.mxu0 0.0
    %4707 = vmatpush1.xpose.msra.mxu0 0.0
    %4708 = vmatprep.subr.mxu0 0.0
    %4709 = vmatpush1.xpose.msra.mxu0 0.0
    %4710 = vmatprep.subr.mxu0 0.0
    %4711 = vmatpush1.xpose.msra.mxu0 0.0
    %4712 = vmatprep.subr.mxu0 0.0
    %4713 = vmatpush1.xpose.msra.mxu0 0.0
    %4714 = vmatprep.subr.mxu0 0.0
    %4715 = vmatpush1.xpose.msra.mxu0 0.0
    %4716 = vmatprep.subr.mxu0 0.0
    %4717 = vmatpush1.xpose.msra.mxu0 0.0
    %4718 = vmatprep.subr.mxu0 0.0
    %4719 = vmatpush1.xpose.msra.mxu0 0.0
    %4720 = vmatprep.subr.mxu0 0.0
    %4721 = vmatpush1.xpose.msra.mxu0 0.0
    %4722 = vmatprep.subr.mxu0 0.0
    %4723 = vmatpush1.xpose.msra.mxu0 0.0
    %4724 = vmatprep.subr.mxu0 0.0
    %4725 = vmatpush1.xpose.msra.mxu0 0.0
    %4726 = vmatprep.subr.mxu0 0.0
    %4727 = vmatpush1.xpose.msra.mxu0 0.0
    %4728 = vmatprep.subr.mxu0 0.0
    %4729 = vmatpush1.xpose.msra.mxu0 0.0
    %4730 = vmatprep.subr.mxu0 0.0
    %4731 = vmatpush1.xpose.msra.mxu0 0.0
    %4732 = vmatprep.subr.mxu0 0.0
    %4733 = vmatpush1.xpose.msra.mxu0 0.0
    %4734 = vmatprep.subr.mxu0 0.0
    %4735 = vmatpush1.xpose.msra.mxu0 0.0
    %4736 = vmatprep.subr.mxu0 0.0
    %4737 = vmatpush1.xpose.msra.mxu0 0.0
    %4738 = vmatprep.subr.mxu0 0.0
    %4739 = vmatpush1.xpose.msra.mxu0 0.0
    %4740 = vmatprep.subr.mxu0 0.0
    %4741 = vmatpush1.xpose.msra.mxu0 0.0
    %4742 = vmatprep.subr.mxu0 0.0
    %4743 = vmatpush1.xpose.msra.mxu0 0.0
    %4744 = vmatprep.subr.mxu0 0.0
    %4745 = vmatpush1.xpose.msra.mxu0 0.0
    %4746 = vmatprep.subr.mxu0 0.0
    %4747 = vmatpush1.xpose.msra.mxu0 0.0
    %4748 = vmatprep.subr.mxu0 0.0
    %4749 = vmatpush1.xpose.msra.mxu0 0.0
    %4750 = vmatprep.subr.mxu0 0.0
    %4751 = vmatpush1.xpose.msra.mxu0 0.0
    %4752 = vmatprep.subr.mxu0 0.0
    %4753 = vmatpush1.xpose.msra.mxu0 0.0
    %4754 = vmatprep.mubr.f32.mxu0 0.0
    %v4755 = vand.u32 %v4685, 4294901760
    %v4756 = vsub.f32 %v4685, %v4755
    %v4757 = vand.u32 %v4756, 4294901760
    %v4758 = vsub.f32 %v4756, %v4757
    %v4759 = vand.u32 %v4758, 4294901760
    %4760 = vmatmul.mubr.f32.gmra.mrb[0].mxu0 %v4759
    %v4761 = vpop.f32.mrb[0].mxu0
    %v4762 = vadd.f32 0.0, %v4761
    %v4763 = vpop.f32.mrb[0].mxu0
    %4764 = vdwg.mxu0
    %4765 = vmatprep.subr.mxu0 0.0
    %v4766 = vand.u32 %v4687, 4294901760
    %v4767 = vsub.f32 %v4687, %v4766
    %v4768 = vand.u32 %v4767, 4294901760
    %v4769 = vsub.f32 %v4767, %v4768
    %v4770 = vand.u32 %v4769, 4294901760
    %4771 = vmatpush1.xpose.msra.mxu0 %v4770
    %4772 = vmatprep.subr.mxu0 0.0
    %4773 = vmatpush1.xpose.msra.mxu0 0.0
    %4774 = vmatprep.subr.mxu0 0.0
    %4775 = vmatpush1.xpose.msra.mxu0 0.0
    %4776 = vmatprep.subr.mxu0 0.0
    %4777 = vmatpush1.xpose.msra.mxu0 0.0
    %4778 = vmatprep.subr.mxu0 0.0
    %4779 = vmatpush1.xpose.msra.mxu0 0.0
    %4780 = vmatprep.subr.mxu0 0.0
    %4781 = vmatpush1.xpose.msra.mxu0 0.0
    %4782 = vmatprep.subr.mxu0 0.0
    %4783 = vmatpush1.xpose.msra.mxu0 0.0
    %4784 = vmatprep.subr.mxu0 0.0
    %4785 = vmatpush1.xpose.msra.mxu0 0.0
    %4786 = vmatprep.subr.mxu0 0.0
    %4787 = vmatpush1.xpose.msra.mxu0 0.0
    %4788 = vmatprep.subr.mxu0 0.0
    %4789 = vmatpush1.xpose.msra.mxu0 0.0
    %4790 = vmatprep.subr.mxu0 0.0
    %4791 = vmatpush1.xpose.msra.mxu0 0.0
    %4792 = vmatprep.subr.mxu0 0.0
    %4793 = vmatpush1.xpose.msra.mxu0 0.0
    %4794 = vmatprep.subr.mxu0 0.0
    %4795 = vmatpush1.xpose.msra.mxu0 0.0
    %4796 = vmatprep.subr.mxu0 0.0
    %4797 = vmatpush1.xpose.msra.mxu0 0.0
    %4798 = vmatprep.subr.mxu0 0.0
    %4799 = vmatpush1.xpose.msra.mxu0 0.0
    %4800 = vmatprep.subr.mxu0 0.0
    %4801 = vmatpush1.xpose.msra.mxu0 0.0
    %4802 = vmatprep.subr.mxu0 0.0
    %4803 = vmatpush1.xpose.msra.mxu0 0.0
    %4804 = vmatprep.subr.mxu0 0.0
    %4805 = vmatpush1.xpose.msra.mxu0 0.0
    %4806 = vmatprep.subr.mxu0 0.0
    %4807 = vmatpush1.xpose.msra.mxu0 0.0
    %4808 = vmatprep.subr.mxu0 0.0
    %4809 = vmatpush1.xpose.msra.mxu0 0.0
    %4810 = vmatprep.subr.mxu0 0.0
    %4811 = vmatpush1.xpose.msra.mxu0 0.0
    %4812 = vmatprep.subr.mxu0 0.0
    %4813 = vmatpush1.xpose.msra.mxu0 0.0
    %4814 = vmatprep.subr.mxu0 0.0
    %4815 = vmatpush1.xpose.msra.mxu0 0.0
    %4816 = vmatprep.subr.mxu0 0.0
    %4817 = vmatpush1.xpose.msra.mxu0 0.0
    %4818 = vmatprep.subr.mxu0 0.0
    %4819 = vmatpush1.xpose.msra.mxu0 0.0
    %4820 = vmatprep.subr.mxu0 0.0
    %4821 = vmatpush1.xpose.msra.mxu0 0.0
    %4822 = vmatprep.subr.mxu0 0.0
    %4823 = vmatpush1.xpose.msra.mxu0 0.0
    %4824 = vmatprep.subr.mxu0 0.0
    %4825 = vmatpush1.xpose.msra.mxu0 0.0
    %4826 = vmatprep.subr.mxu0 0.0
    %4827 = vmatpush1.xpose.msra.mxu0 0.0
    %4828 = vmatprep.subr.mxu0 0.0
    %4829 = vmatpush1.xpose.msra.mxu0 0.0
    %4830 = vmatprep.subr.mxu0 0.0
    %4831 = vmatpush1.xpose.msra.mxu0 0.0
    %4832 = vmatprep.subr.mxu0 0.0
    %4833 = vmatpush1.xpose.msra.mxu0 0.0
    %4834 = vmatprep.mubr.f32.mxu0 0.0
    %v4835 = vand.u32 %v4685, 4294901760
    %4836 = vmatmul.mubr.f32.gmra.mrb[0].mxu0 %v4835
    %v4837 = vpop.f32.mrb[0].mxu0
    %v4838 = vadd.f32 %v4762, %v4837
    %v4839 = vpop.f32.mrb[0].mxu0
    %4840 = vdwg.mxu0
    %4841 = vmatprep.subr.mxu0 0.0
    %v4842 = vand.u32 %v4687, 4294901760
    %v4843 = vsub.f32 %v4687, %v4842
    %4844 = vmatpush1.xpose.msra.mxu0 %v4843
    %4845 = vmatprep.subr.mxu0 0.0
    %4846 = vmatpush1.xpose.msra.mxu0 0.0
    %4847 = vmatprep.subr.mxu0 0.0
    %4848 = vmatpush1.xpose.msra.mxu0 0.0
    %4849 = vmatprep.subr.mxu0 0.0
    %4850 = vmatpush1.xpose.msra.mxu0 0.0
    %4851 = vmatprep.subr.mxu0 0.0
    %4852 = vmatpush1.xpose.msra.mxu0 0.0
    %4853 = vmatprep.subr.mxu0 0.0
    %4854 = vmatpush1.xpose.msra.mxu0 0.0
    %4855 = vmatprep.subr.mxu0 0.0
    %4856 = vmatpush1.xpose.msra.mxu0 0.0
    %4857 = vmatprep.subr.mxu0 0.0
    %4858 = vmatpush1.xpose.msra.mxu0 0.0
    %4859 = vmatprep.subr.mxu0 0.0
    %4860 = vmatpush1.xpose.msra.mxu0 0.0
    %4861 = vmatprep.subr.mxu0 0.0
    %4862 = vmatpush1.xpose.msra.mxu0 0.0
    %4863 = vmatprep.subr.mxu0 0.0
    %4864 = vmatpush1.xpose.msra.mxu0 0.0
    %4865 = vmatprep.subr.mxu0 0.0
    %4866 = vmatpush1.xpose.msra.mxu0 0.0
    %4867 = vmatprep.subr.mxu0 0.0
    %4868 = vmatpush1.xpose.msra.mxu0 0.0
    %4869 = vmatprep.subr.mxu0 0.0
    %4870 = vmatpush1.xpose.msra.mxu0 0.0
    %4871 = vmatprep.subr.mxu0 0.0
    %4872 = vmatpush1.xpose.msra.mxu0 0.0
    %4873 = vmatprep.subr.mxu0 0.0
    %4874 = vmatpush1.xpose.msra.mxu0 0.0
    %4875 = vmatprep.subr.mxu0 0.0
    %4876 = vmatpush1.xpose.msra.mxu0 0.0
    %4877 = vmatprep.subr.mxu0 0.0
    %4878 = vmatpush1.xpose.msra.mxu0 0.0
    %4879 = vmatprep.subr.mxu0 0.0
    %4880 = vmatpush1.xpose.msra.mxu0 0.0
    %4881 = vmatprep.subr.mxu0 0.0
    %4882 = vmatpush1.xpose.msra.mxu0 0.0
    %4883 = vmatprep.subr.mxu0 0.0
    %4884 = vmatpush1.xpose.msra.mxu0 0.0
    %4885 = vmatprep.subr.mxu0 0.0
    %4886 = vmatpush1.xpose.msra.mxu0 0.0
    %4887 = vmatprep.subr.mxu0 0.0
    %4888 = vmatpush1.xpose.msra.mxu0 0.0
    %4889 = vmatprep.subr.mxu0 0.0
    %4890 = vmatpush1.xpose.msra.mxu0 0.0
    %4891 = vmatprep.subr.mxu0 0.0
    %4892 = vmatpush1.xpose.msra.mxu0 0.0
    %4893 = vmatprep.subr.mxu0 0.0
    %4894 = vmatpush1.xpose.msra.mxu0 0.0
    %4895 = vmatprep.subr.mxu0 0.0
    %4896 = vmatpush1.xpose.msra.mxu0 0.0
    %4897 = vmatprep.subr.mxu0 0.0
    %4898 = vmatpush1.xpose.msra.mxu0 0.0
    %4899 = vmatprep.subr.mxu0 0.0
    %4900 = vmatpush1.xpose.msra.mxu0 0.0
    %4901 = vmatprep.subr.mxu0 0.0
    %4902 = vmatpush1.xpose.msra.mxu0 0.0
    %4903 = vmatprep.subr.mxu0 0.0
    %4904 = vmatpush1.xpose.msra.mxu0 0.0
    %4905 = vmatprep.subr.mxu0 0.0
    %4906 = vmatpush1.xpose.msra.mxu0 0.0
    %4907 = vmatprep.mubr.f32.mxu0 0.0
    %v4908 = vand.u32 %v4685, 4294901760
    %v4909 = vsub.f32 %v4685, %v4908
    %4910 = vmatmul.mubr.f32.gmra.mrb[0].mxu0 %v4909
    %v4911 = vpop.f32.mrb[0].mxu0
    %v4912 = vadd.f32 %v4838, %v4911
    %v4913 = vpop.f32.mrb[0].mxu0
    %4914 = vdwg.mxu0
    %4915 = vmatprep.subr.mxu0 0.0
    %v4916 = vand.u32 %v4687, 4294901760
    %4917 = vmatpush1.xpose.msra.mxu0 %v4916
    %4918 = vmatprep.subr.mxu0 0.0
    %4919 = vmatpush1.xpose.msra.mxu0 0.0
    %4920 = vmatprep.subr.mxu0 0.0
    %4921 = vmatpush1.xpose.msra.mxu0 0.0
    %4922 = vmatprep.subr.mxu0 0.0
    %4923 = vmatpush1.xpose.msra.mxu0 0.0
    %4924 = vmatprep.subr.mxu0 0.0
    %4925 = vmatpush1.xpose.msra.mxu0 0.0
    %4926 = vmatprep.subr.mxu0 0.0
    %4927 = vmatpush1.xpose.msra.mxu0 0.0
    %4928 = vmatprep.subr.mxu0 0.0
    %4929 = vmatpush1.xpose.msra.mxu0 0.0
    %4930 = vmatprep.subr.mxu0 0.0
    %4931 = vmatpush1.xpose.msra.mxu0 0.0
    %4932 = vmatprep.subr.mxu0 0.0
    %4933 = vmatpush1.xpose.msra.mxu0 0.0
    %4934 = vmatprep.subr.mxu0 0.0
    %4935 = vmatpush1.xpose.msra.mxu0 0.0
    %4936 = vmatprep.subr.mxu0 0.0
    %4937 = vmatpush1.xpose.msra.mxu0 0.0
    %4938 = vmatprep.subr.mxu0 0.0
    %4939 = vmatpush1.xpose.msra.mxu0 0.0
    %4940 = vmatprep.subr.mxu0 0.0
    %4941 = vmatpush1.xpose.msra.mxu0 0.0
    %4942 = vmatprep.subr.mxu0 0.0
    %4943 = vmatpush1.xpose.msra.mxu0 0.0
    %4944 = vmatprep.subr.mxu0 0.0
    %4945 = vmatpush1.xpose.msra.mxu0 0.0
    %4946 = vmatprep.subr.mxu0 0.0
    %4947 = vmatpush1.xpose.msra.mxu0 0.0
    %4948 = vmatprep.subr.mxu0 0.0
    %4949 = vmatpush1.xpose.msra.mxu0 0.0
    %4950 = vmatprep.subr.mxu0 0.0
    %4951 = vmatpush1.xpose.msra.mxu0 0.0
    %4952 = vmatprep.subr.mxu0 0.0
    %4953 = vmatpush1.xpose.msra.mxu0 0.0
    %4954 = vmatprep.subr.mxu0 0.0
    %4955 = vmatpush1.xpose.msra.mxu0 0.0
    %4956 = vmatprep.subr.mxu0 0.0
    %4957 = vmatpush1.xpose.msra.mxu0 0.0
    %4958 = vmatprep.subr.mxu0 0.0
    %4959 = vmatpush1.xpose.msra.mxu0 0.0
    %4960 = vmatprep.subr.mxu0 0.0
    %4961 = vmatpush1.xpose.msra.mxu0 0.0
    %4962 = vmatprep.subr.mxu0 0.0
    %4963 = vmatpush1.xpose.msra.mxu0 0.0
    %4964 = vmatprep.subr.mxu0 0.0
    %4965 = vmatpush1.xpose.msra.mxu0 0.0
    %4966 = vmatprep.subr.mxu0 0.0
    %4967 = vmatpush1.xpose.msra.mxu0 0.0
    %4968 = vmatprep.subr.mxu0 0.0
    %4969 = vmatpush1.xpose.msra.mxu0 0.0
    %4970 = vmatprep.subr.mxu0 0.0
    %4971 = vmatpush1.xpose.msra.mxu0 0.0
    %4972 = vmatprep.subr.mxu0 0.0
    %4973 = vmatpush1.xpose.msra.mxu0 0.0
    %4974 = vmatprep.subr.mxu0 0.0
    %4975 = vmatpush1.xpose.msra.mxu0 0.0
    %4976 = vmatprep.subr.mxu0 0.0
    %4977 = vmatpush1.xpose.msra.mxu0 0.0
    %4978 = vmatprep.subr.mxu0 0.0
    %4979 = vmatpush1.xpose.msra.mxu0 0.0
    %4980 = vmatprep.mubr.f32.mxu0 0.0
    %v4981 = vand.u32 %v4685, 4294901760
    %v4982 = vsub.f32 %v4685, %v4981
    %v4983 = vand.u32 %v4982, 4294901760
    %4984 = vmatmul.mubr.f32.gmra.mrb[0].mxu0 %v4983
    %v4985 = vpop.f32.mrb[0].mxu0
    %v4986 = vadd.f32 %v4912, %v4985
    %v4987 = vpop.f32.mrb[0].mxu0
    %4988 = vdwg.mxu0
    %4989 = vmatprep.subr.mxu0 0.0
    %v4990 = vand.u32 %v4687, 4294901760
    %v4991 = vsub.f32 %v4687, %v4990
    %v4992 = vand.u32 %v4991, 4294901760
    %4993 = vmatpush1.xpose.msra.mxu0 %v4992
    %4994 = vmatprep.subr.mxu0 0.0
    %4995 = vmatpush1.xpose.msra.mxu0 0.0
    %4996 = vmatprep.subr.mxu0 0.0
    %4997 = vmatpush1.xpose.msra.mxu0 0.0
    %4998 = vmatprep.subr.mxu0 0.0
    %4999 = vmatpush1.xpose.msra.mxu0 0.0
    %5000 = vmatprep.subr.mxu0 0.0
    %5001 = vmatpush1.xpose.msra.mxu0 0.0
    %5002 = vmatprep.subr.mxu0 0.0
    %5003 = vmatpush1.xpose.msra.mxu0 0.0
    %5004 = vmatprep.subr.mxu0 0.0
    %5005 = vmatpush1.xpose.msra.mxu0 0.0
    %5006 = vmatprep.subr.mxu0 0.0
    %5007 = vmatpush1.xpose.msra.mxu0 0.0
    %5008 = vmatprep.subr.mxu0 0.0
    %5009 = vmatpush1.xpose.msra.mxu0 0.0
    %5010 = vmatprep.subr.mxu0 0.0
    %5011 = vmatpush1.xpose.msra.mxu0 0.0
    %5012 = vmatprep.subr.mxu0 0.0
    %5013 = vmatpush1.xpose.msra.mxu0 0.0
    %5014 = vmatprep.subr.mxu0 0.0
    %5015 = vmatpush1.xpose.msra.mxu0 0.0
    %5016 = vmatprep.subr.mxu0 0.0
    %5017 = vmatpush1.xpose.msra.mxu0 0.0
    %5018 = vmatprep.subr.mxu0 0.0
    %5019 = vmatpush1.xpose.msra.mxu0 0.0
    %5020 = vmatprep.subr.mxu0 0.0
    %5021 = vmatpush1.xpose.msra.mxu0 0.0
    %5022 = vmatprep.subr.mxu0 0.0
    %5023 = vmatpush1.xpose.msra.mxu0 0.0
    %5024 = vmatprep.subr.mxu0 0.0
    %5025 = vmatpush1.xpose.msra.mxu0 0.0
    %5026 = vmatprep.subr.mxu0 0.0
    %5027 = vmatpush1.xpose.msra.mxu0 0.0
    %5028 = vmatprep.subr.mxu0 0.0
    %5029 = vmatpush1.xpose.msra.mxu0 0.0
    %5030 = vmatprep.subr.mxu0 0.0
    %5031 = vmatpush1.xpose.msra.mxu0 0.0
    %5032 = vmatprep.subr.mxu0 0.0
    %5033 = vmatpush1.xpose.msra.mxu0 0.0
    %5034 = vmatprep.subr.mxu0 0.0
    %5035 = vmatpush1.xpose.msra.mxu0 0.0
    %5036 = vmatprep.subr.mxu0 0.0
    %5037 = vmatpush1.xpose.msra.mxu0 0.0
    %5038 = vmatprep.subr.mxu0 0.0
    %5039 = vmatpush1.xpose.msra.mxu0 0.0
    %5040 = vmatprep.subr.mxu0 0.0
    %5041 = vmatpush1.xpose.msra.mxu0 0.0
    %5042 = vmatprep.subr.mxu0 0.0
    %5043 = vmatpush1.xpose.msra.mxu0 0.0
    %5044 = vmatprep.subr.mxu0 0.0
    %5045 = vmatpush1.xpose.msra.mxu0 0.0
    %5046 = vmatprep.subr.mxu0 0.0
    %5047 = vmatpush1.xpose.msra.mxu0 0.0
    %5048 = vmatprep.subr.mxu0 0.0
    %5049 = vmatpush1.xpose.msra.mxu0 0.0
    %5050 = vmatprep.subr.mxu0 0.0
    %5051 = vmatpush1.xpose.msra.mxu0 0.0
    %5052 = vmatprep.subr.mxu0 0.0
    %5053 = vmatpush1.xpose.msra.mxu0 0.0
    %5054 = vmatprep.subr.mxu0 0.0
    %5055 = vmatpush1.xpose.msra.mxu0 0.0
    %5056 = vmatprep.mubr.f32.mxu0 0.0
    %v5057 = vand.u32 %v4685, 4294901760
    %5058 = vmatmul.mubr.f32.gmra.mrb[0].mxu0 %v5057
    %v5059 = vpop.f32.mrb[0].mxu0
    %v5060 = vadd.f32 %v4986, %v5059
    %v5061 = vpop.f32.mrb[0].mxu0
    %5062 = vdwg.mxu0
    %5063 = vmatprep.subr.mxu0 0.0
    %v5064 = vand.u32 %v4687, 4294901760
    %5065 = vmatpush1.xpose.msra.mxu0 %v5064
    %5066 = vmatprep.subr.mxu0 0.0
    %5067 = vmatpush1.xpose.msra.mxu0 0.0
    %5068 = vmatprep.subr.mxu0 0.0
    %5069 = vmatpush1.xpose.msra.mxu0 0.0
    %5070 = vmatprep.subr.mxu0 0.0
    %5071 = vmatpush1.xpose.msra.mxu0 0.0
    %5072 = vmatprep.subr.mxu0 0.0
    %5073 = vmatpush1.xpose.msra.mxu0 0.0
    %5074 = vmatprep.subr.mxu0 0.0
    %5075 = vmatpush1.xpose.msra.mxu0 0.0
    %5076 = vmatprep.subr.mxu0 0.0
    %5077 = vmatpush1.xpose.msra.mxu0 0.0
    %5078 = vmatprep.subr.mxu0 0.0
    %5079 = vmatpush1.xpose.msra.mxu0 0.0
    %5080 = vmatprep.subr.mxu0 0.0
    %5081 = vmatpush1.xpose.msra.mxu0 0.0
    %5082 = vmatprep.subr.mxu0 0.0
    %5083 = vmatpush1.xpose.msra.mxu0 0.0
    %5084 = vmatprep.subr.mxu0 0.0
    %5085 = vmatpush1.xpose.msra.mxu0 0.0
    %5086 = vmatprep.subr.mxu0 0.0
    %5087 = vmatpush1.xpose.msra.mxu0 0.0
    %5088 = vmatprep.subr.mxu0 0.0
    %5089 = vmatpush1.xpose.msra.mxu0 0.0
    %5090 = vmatprep.subr.mxu0 0.0
    %5091 = vmatpush1.xpose.msra.mxu0 0.0
    %5092 = vmatprep.subr.mxu0 0.0
    %5093 = vmatpush1.xpose.msra.mxu0 0.0
    %5094 = vmatprep.subr.mxu0 0.0
    %5095 = vmatpush1.xpose.msra.mxu0 0.0
    %5096 = vmatprep.subr.mxu0 0.0
    %5097 = vmatpush1.xpose.msra.mxu0 0.0
    %5098 = vmatprep.subr.mxu0 0.0
    %5099 = vmatpush1.xpose.msra.mxu0 0.0
    %5100 = vmatprep.subr.mxu0 0.0
    %5101 = vmatpush1.xpose.msra.mxu0 0.0
    %5102 = vmatprep.subr.mxu0 0.0
    %5103 = vmatpush1.xpose.msra.mxu0 0.0
    %5104 = vmatprep.subr.mxu0 0.0
    %5105 = vmatpush1.xpose.msra.mxu0 0.0
    %5106 = vmatprep.subr.mxu0 0.0
    %5107 = vmatpush1.xpose.msra.mxu0 0.0
    %5108 = vmatprep.subr.mxu0 0.0
    %5109 = vmatpush1.xpose.msra.mxu0 0.0
    %5110 = vmatprep.subr.mxu0 0.0
    %5111 = vmatpush1.xpose.msra.mxu0 0.0
    %5112 = vmatprep.subr.mxu0 0.0
    %5113 = vmatpush1.xpose.msra.mxu0 0.0
    %5114 = vmatprep.subr.mxu0 0.0
    %5115 = vmatpush1.xpose.msra.mxu0 0.0
    %5116 = vmatprep.subr.mxu0 0.0
    %5117 = vmatpush1.xpose.msra.mxu0 0.0
    %5118 = vmatprep.subr.mxu0 0.0
    %5119 = vmatpush1.xpose.msra.mxu0 0.0
    %5120 = vmatprep.subr.mxu0 0.0
    %5121 = vmatpush1.xpose.msra.mxu0 0.0
    %5122 = vmatprep.subr.mxu0 0.0
    %5123 = vmatpush1.xpose.msra.mxu0 0.0
    %5124 = vmatprep.subr.mxu0 0.0
    %5125 = vmatpush1.xpose.msra.mxu0 0.0
    %5126 = vmatprep.subr.mxu0 0.0
    %5127 = vmatpush1.xpose.msra.mxu0 0.0
    %5128 = vmatprep.mubr.f32.mxu0 0.0
    %v5129 = vand.u32 %v4685, 4294901760
    %5130 = vmatmul.mubr.f32.gmra.mrb[0].mxu0 %v5129
    %v5131 = vpop.f32.mrb[0].mxu0
    %v5132 = vadd.f32 %v5060, %v5131
    %v5133 = vpop.f32.mrb[0].mxu0
    %5134 = vdwg.mxu0
    %v5135 = vmul.f32 %v2882, 0.25
    %v5136 = vmul.f32 %v3332, 0.25
    %v5137 = vmul.f32 %v3782, 0.25
    %v5138 = vmul.f32 %v4232, 0.25
    %v5139 = vmul.f32 %v4682, 0.25
    %v5140 = vmul.f32 %v5132, 0.25
    %vm5141 = vcmask 64512
    %v5142 = vsel %vm5141, %v5135, -inf
    %5143 = vmax.xlane.f32.xlu0 %v5142
    %v5144 = vpop.xlane.xlu0 %5143
    %v5145 = vsel %vm5141, %v5136, -inf
    %5146 = vmax.xlane.f32.xlu0 %v5145
    %v5147 = vpop.xlane.xlu0 %5146
    %v5148 = vsel %vm5141, %v5137, -inf
    %5149 = vmax.xlane.f32.xlu0 %v5148
    %v5150 = vpop.xlane.xlu0 %5149
    %v5151 = vsel %vm5141, %v5138, -inf
    %5152 = vmax.xlane.f32.xlu0 %v5151
    %v5153 = vpop.xlane.xlu0 %5152
    %v5154 = vsel %vm5141, %v5139, -inf
    %5155 = vmax.xlane.f32.xlu0 %v5154
    %v5156 = vpop.xlane.xlu0 %5155
    %v5157 = vsel %vm5141, %v5140, -inf
    %5158 = vmax.xlane.f32.xlu0 %v5157
    %v5159 = vpop.xlane.xlu0 %5158
    %v5160 = vsub.f32 %v5135, %v5144
    %v5161 = vsub.f32 %v5136, %v5147
    %v5162 = vsub.f32 %v5137, %v5150
    %v5163 = vsub.f32 %v5138, %v5153
    %v5164 = vsub.f32 %v5139, %v5156
    %v5165 = vsub.f32 %v5140, %v5159
    %v5166 = vmul.f32 %v5160, 1.442695
    %v5167 = vpow.pop %v5166
    %v5168 = vmul.f32 %v5161, 1.442695
    %v5169 = vpow.pop %v5168
    %v5170 = vmul.f32 %v5162, 1.442695
    %v5171 = vpow.pop %v5170
    %v5172 = vmul.f32 %v5163, 1.442695
    %v5173 = vpow.pop %v5172
    %v5174 = vmul.f32 %v5164, 1.442695
    %v5175 = vpow.pop %v5174
    %v5176 = vmul.f32 %v5165, 1.442695
    %v5177 = vpow.pop %v5176
    %v5178 = vsel %vm5141, %v5167, 0.0
    %5179 = vadd.xlane.f32.xlu0 %v5178
    %v5180 = vpop.xlane.xlu0 %5179
    %v5181 = vsel %vm5141, %v5169, 0.0
    %5182 = vadd.xlane.f32.xlu0 %v5181
    %v5183 = vpop.xlane.xlu0 %5182
    %v5184 = vsel %vm5141, %v5171, 0.0
    %5185 = vadd.xlane.f32.xlu0 %v5184
    %v5186 = vpop.xlane.xlu0 %5185
    %v5187 = vsel %vm5141, %v5173, 0.0
    %5188 = vadd.xlane.f32.xlu0 %v5187
    %v5189 = vpop.xlane.xlu0 %5188
    %v5190 = vsel %vm5141, %v5175, 0.0
    %5191 = vadd.xlane.f32.xlu0 %v5190
    %v5192 = vpop.xlane.xlu0 %5191
    %v5193 = vsel %vm5141, %v5177, 0.0
    %5194 = vadd.xlane.f32.xlu0 %v5193
    %v5195 = vpop.xlane.xlu0 %5194
    %v5196 = vrcp.pop %v5180
    %v5197 = vrcp.pop %v5183
    %v5198 = vrcp.pop %v5186
    %v5199 = vrcp.pop %v5189
    %v5200 = vrcp.pop %v5192
    %v5201 = vrcp.pop %v5195
    %v5202 = vmul.f32 %v5167, %v5196
    %v5203 = vmul.f32 %v5169, %v5197
    %v5204 = vmul.f32 %v5171, %v5198
    %v5205 = vmul.f32 %v5173, %v5199
    %v5206 = vmul.f32 %v5175, %v5200
    %v5207 = vmul.f32 %v5177, %v5201
    %v5208 = vsel %vm5141, %v5202, 0.0
    %v5209 = vrot.slane %v5208, 4
    %v5210 = vadd.f32 %v5208, %v5209
    %v5211 = vrot.slane %v5210, 2
    %v5212 = vadd.f32 %v5210, %v5211
    %v5213 = vrot.slane %v5212, 1
    %v5214 = vadd.f32 %v5212, %v5213
    %v5215 = vsel %vm5141, %v5203, 0.0
    %v5216 = vrot.slane %v5215, 4
    %v5217 = vadd.f32 %v5215, %v5216
    %v5218 = vrot.slane %v5217, 2
    %v5219 = vadd.f32 %v5217, %v5218
    %v5220 = vrot.slane %v5219, 1
    %v5221 = vadd.f32 %v5219, %v5220
    %v5222 = vsel %vm5141, %v5204, 0.0
    %v5223 = vrot.slane %v5222, 4
    %v5224 = vadd.f32 %v5222, %v5223
    %v5225 = vrot.slane %v5224, 2
    %v5226 = vadd.f32 %v5224, %v5225
    %v5227 = vrot.slane %v5226, 1
    %v5228 = vadd.f32 %v5226, %v5227
    %v5229 = vsel %vm5141, %v5205, 0.0
    %v5230 = vrot.slane %v5229, 4
    %v5231 = vadd.f32 %v5229, %v5230
    %v5232 = vrot.slane %v5231, 2
    %v5233 = vadd.f32 %v5231, %v5232
    %v5234 = vrot.slane %v5233, 1
    %v5235 = vadd.f32 %v5233, %v5234
    %v5236 = vsel %vm5141, %v5206, 0.0
    %v5237 = vrot.slane %v5236, 4
    %v5238 = vadd.f32 %v5236, %v5237
    %v5239 = vrot.slane %v5238, 2
    %v5240 = vadd.f32 %v5238, %v5239
    %v5241 = vrot.slane %v5240, 1
    %v5242 = vadd.f32 %v5240, %v5241
    %v5243 = vsel %vm5141, %v5207, 0.0
    %v5244 = vrot.slane %v5243, 4
    %v5245 = vadd.f32 %v5243, %v5244
    %v5246 = vrot.slane %v5245, 2
    %v5247 = vadd.f32 %v5245, %v5246
    %v5248 = vrot.slane %v5247, 1
    %v5249 = vadd.f32 %v5247, %v5248
    %v5251 = vsel %vm5141, %v5214, 0
    %5253 = vmatprep.subr.mxu0 0.0
    %v5254 = vand.u32 %v2389, 4294901760
    %5255 = vmatpush1.msra.mxu0 %v5254
    %5256 = vmatprep.subr.mxu0 0.0
    %5257 = vmatpush1.msra.mxu0 0.0
    %5258 = vmatprep.subr.mxu0 0.0
    %5259 = vmatpush1.msra.mxu0 0.0
    %5260 = vmatprep.subr.mxu0 0.0
    %5261 = vmatpush1.msra.mxu0 0.0
    %5262 = vmatprep.subr.mxu0 0.0
    %5263 = vmatpush1.msra.mxu0 0.0
    %5264 = vmatprep.subr.mxu0 0.0
    %5265 = vmatpush1.msra.mxu0 0.0
    %5266 = vmatprep.subr.mxu0 0.0
    %5267 = vmatpush1.msra.mxu0 0.0
    %5268 = vmatprep.subr.mxu0 0.0
    %5269 = vmatpush1.msra.mxu0 0.0
    %5270 = vmatprep.subr.mxu0 0.0
    %5271 = vmatpush1.msra.mxu0 0.0
    %5272 = vmatprep.subr.mxu0 0.0
    %5273 = vmatpush1.msra.mxu0 0.0
    %5274 = vmatprep.subr.mxu0 0.0
    %5275 = vmatpush1.msra.mxu0 0.0
    %5276 = vmatprep.subr.mxu0 0.0
    %5277 = vmatpush1.msra.mxu0 0.0
    %5278 = vmatprep.subr.mxu0 0.0
    %5279 = vmatpush1.msra.mxu0 0.0
    %5280 = vmatprep.subr.mxu0 0.0
    %5281 = vmatpush1.msra.mxu0 0.0
    %5282 = vmatprep.subr.mxu0 0.0
    %5283 = vmatpush1.msra.mxu0 0.0
    %5284 = vmatprep.subr.mxu0 0.0
    %5285 = vmatpush1.msra.mxu0 0.0
    %5286 = vmatprep.subr.mxu0 0.0
    %5287 = vmatpush1.msra.mxu0 0.0
    %5288 = vmatprep.subr.mxu0 0.0
    %5289 = vmatpush1.msra.mxu0 0.0
    %5290 = vmatprep.subr.mxu0 0.0
    %5291 = vmatpush1.msra.mxu0 0.0
    %5292 = vmatprep.subr.mxu0 0.0
    %5293 = vmatpush1.msra.mxu0 0.0
    %5294 = vmatprep.subr.mxu0 0.0
    %5295 = vmatpush1.msra.mxu0 0.0
    %5296 = vmatprep.subr.mxu0 0.0
    %5297 = vmatpush1.msra.mxu0 0.0
    %5298 = vmatprep.subr.mxu0 0.0
    %5299 = vmatpush1.msra.mxu0 0.0
    %5300 = vmatprep.subr.mxu0 0.0
    %5301 = vmatpush1.msra.mxu0 0.0
    %5302 = vmatprep.subr.mxu0 0.0
    %5303 = vmatpush1.msra.mxu0 0.0
    %5304 = vmatprep.subr.mxu0 0.0
    %5305 = vmatpush1.msra.mxu0 0.0
    %5306 = vmatprep.subr.mxu0 0.0
    %5307 = vmatpush1.msra.mxu0 0.0
    %5308 = vmatprep.subr.mxu0 0.0
    %5309 = vmatpush1.msra.mxu0 0.0
    %5310 = vmatprep.subr.mxu0 0.0
    %5311 = vmatpush1.msra.mxu0 0.0
    %5312 = vmatprep.subr.mxu0 0.0
    %5313 = vmatpush1.msra.mxu0 0.0
    %5314 = vmatprep.subr.mxu0 0.0
    %5315 = vmatpush1.msra.mxu0 0.0
    %5316 = vmatprep.subr.mxu0 0.0
    %5317 = vmatpush1.msra.mxu0 0.0
    %5318 = vmatprep.mubr.f32.mxu0 0.0
    %v5319 = vand.u32 %v5251, 4294901760
    %v5320 = vsub.f32 %v5251, %v5319
    %v5321 = vand.u32 %v5320, 4294901760
    %v5322 = vsub.f32 %v5320, %v5321
    %v5323 = vand.u32 %v5322, 4294901760
    %5324 = vmatmul.mubr.f32.gmra.mrb[0].mxu0 %v5323
    %v5325 = vpop.f32.mrb[0].mxu0
    %v5326 = vadd.f32 0.0, %v5325
    %v5327 = vpop.f32.mrb[0].mxu0
    %5328 = vdwg.mxu0
    %5329 = vmatprep.subr.mxu0 0.0
    %v5330 = vand.u32 %v2389, 4294901760
    %v5331 = vsub.f32 %v2389, %v5330
    %v5332 = vand.u32 %v5331, 4294901760
    %v5333 = vsub.f32 %v5331, %v5332
    %v5334 = vand.u32 %v5333, 4294901760
    %5335 = vmatpush1.msra.mxu0 %v5334
    %5336 = vmatprep.subr.mxu0 0.0
    %5337 = vmatpush1.msra.mxu0 0.0
    %5338 = vmatprep.subr.mxu0 0.0
    %5339 = vmatpush1.msra.mxu0 0.0
    %5340 = vmatprep.subr.mxu0 0.0
    %5341 = vmatpush1.msra.mxu0 0.0
    %5342 = vmatprep.subr.mxu0 0.0
    %5343 = vmatpush1.msra.mxu0 0.0
    %5344 = vmatprep.subr.mxu0 0.0
    %5345 = vmatpush1.msra.mxu0 0.0
    %5346 = vmatprep.subr.mxu0 0.0
    %5347 = vmatpush1.msra.mxu0 0.0
    %5348 = vmatprep.subr.mxu0 0.0
    %5349 = vmatpush1.msra.mxu0 0.0
    %5350 = vmatprep.subr.mxu0 0.0
    %5351 = vmatpush1.msra.mxu0 0.0
    %5352 = vmatprep.subr.mxu0 0.0
    %5353 = vmatpush1.msra.mxu0 0.0
    %5354 = vmatprep.subr.mxu0 0.0
    %5355 = vmatpush1.msra.mxu0 0.0
    %5356 = vmatprep.subr.mxu0 0.0
    %5357 = vmatpush1.msra.mxu0 0.0
    %5358 = vmatprep.subr.mxu0 0.0
    %5359 = vmatpush1.msra.mxu0 0.0
    %5360 = vmatprep.subr.mxu0 0.0
    %5361 = vmatpush1.msra.mxu0 0.0
    %5362 = vmatprep.subr.mxu0 0.0
    %5363 = vmatpush1.msra.mxu0 0.0
    %5364 = vmatprep.subr.mxu0 0.0
    %5365 = vmatpush1.msra.mxu0 0.0
    %5366 = vmatprep.subr.mxu0 0.0
    %5367 = vmatpush1.msra.mxu0 0.0
    %5368 = vmatprep.subr.mxu0 0.0
    %5369 = vmatpush1.msra.mxu0 0.0
    %5370 = vmatprep.subr.mxu0 0.0
    %5371 = vmatpush1.msra.mxu0 0.0
    %5372 = vmatprep.subr.mxu0 0.0
    %5373 = vmatpush1.msra.mxu0 0.0
    %5374 = vmatprep.subr.mxu0 0.0
    %5375 = vmatpush1.msra.mxu0 0.0
    %5376 = vmatprep.subr.mxu0 0.0
    %5377 = vmatpush1.msra.mxu0 0.0
    %5378 = vmatprep.subr.mxu0 0.0
    %5379 = vmatpush1.msra.mxu0 0.0
    %5380 = vmatprep.subr.mxu0 0.0
    %5381 = vmatpush1.msra.mxu0 0.0
    %5382 = vmatprep.subr.mxu0 0.0
    %5383 = vmatpush1.msra.mxu0 0.0
    %5384 = vmatprep.subr.mxu0 0.0
    %5385 = vmatpush1.msra.mxu0 0.0
    %5386 = vmatprep.subr.mxu0 0.0
    %5387 = vmatpush1.msra.mxu0 0.0
    %5388 = vmatprep.subr.mxu0 0.0
    %5389 = vmatpush1.msra.mxu0 0.0
    %5390 = vmatprep.subr.mxu0 0.0
    %5391 = vmatpush1.msra.mxu0 0.0
    %5392 = vmatprep.subr.mxu0 0.0
    %5393 = vmatpush1.msra.mxu0 0.0
    %5394 = vmatprep.subr.mxu0 0.0
    %5395 = vmatpush1.msra.mxu0 0.0
    %5396 = vmatprep.subr.mxu0 0.0
    %5397 = vmatpush1.msra.mxu0 0.0
    %5398 = vmatprep.mubr.f32.mxu0 0.0
    %v5399 = vand.u32 %v5251, 4294901760
    %5400 = vmatmul.mubr.f32.gmra.mrb[0].mxu0 %v5399
    %v5401 = vpop.f32.mrb[0].mxu0
    %v5402 = vadd.f32 %v5326, %v5401
    %v5403 = vpop.f32.mrb[0].mxu0
    %5404 = vdwg.mxu0
    %5405 = vmatprep.subr.mxu0 0.0
    %v5406 = vand.u32 %v2389, 4294901760
    %v5407 = vsub.f32 %v2389, %v5406
    %5408 = vmatpush1.msra.mxu0 %v5407
    %5409 = vmatprep.subr.mxu0 0.0
    %5410 = vmatpush1.msra.mxu0 0.0
    %5411 = vmatprep.subr.mxu0 0.0
    %5412 = vmatpush1.msra.mxu0 0.0
    %5413 = vmatprep.subr.mxu0 0.0
    %5414 = vmatpush1.msra.mxu0 0.0
    %5415 = vmatprep.subr.mxu0 0.0
    %5416 = vmatpush1.msra.mxu0 0.0
    %5417 = vmatprep.subr.mxu0 0.0
    %5418 = vmatpush1.msra.mxu0 0.0
    %5419 = vmatprep.subr.mxu0 0.0
    %5420 = vmatpush1.msra.mxu0 0.0
    %5421 = vmatprep.subr.mxu0 0.0
    %5422 = vmatpush1.msra.mxu0 0.0
    %5423 = vmatprep.subr.mxu0 0.0
    %5424 = vmatpush1.msra.mxu0 0.0
    %5425 = vmatprep.subr.mxu0 0.0
    %5426 = vmatpush1.msra.mxu0 0.0
    %5427 = vmatprep.subr.mxu0 0.0
    %5428 = vmatpush1.msra.mxu0 0.0
    %5429 = vmatprep.subr.mxu0 0.0
    %5430 = vmatpush1.msra.mxu0 0.0
    %5431 = vmatprep.subr.mxu0 0.0
    %5432 = vmatpush1.msra.mxu0 0.0
    %5433 = vmatprep.subr.mxu0 0.0
    %5434 = vmatpush1.msra.mxu0 0.0
    %5435 = vmatprep.subr.mxu0 0.0
    %5436 = vmatpush1.msra.mxu0 0.0
    %5437 = vmatprep.subr.mxu0 0.0
    %5438 = vmatpush1.msra.mxu0 0.0
    %5439 = vmatprep.subr.mxu0 0.0
    %5440 = vmatpush1.msra.mxu0 0.0
    %5441 = vmatprep.subr.mxu0 0.0
    %5442 = vmatpush1.msra.mxu0 0.0
    %5443 = vmatprep.subr.mxu0 0.0
    %5444 = vmatpush1.msra.mxu0 0.0
    %5445 = vmatprep.subr.mxu0 0.0
    %5446 = vmatpush1.msra.mxu0 0.0
    %5447 = vmatprep.subr.mxu0 0.0
    %5448 = vmatpush1.msra.mxu0 0.0
    %5449 = vmatprep.subr.mxu0 0.0
    %5450 = vmatpush1.msra.mxu0 0.0
    %5451 = vmatprep.subr.mxu0 0.0
    %5452 = vmatpush1.msra.mxu0 0.0
    %5453 = vmatprep.subr.mxu0 0.0
    %5454 = vmatpush1.msra.mxu0 0.0
    %5455 = vmatprep.subr.mxu0 0.0
    %5456 = vmatpush1.msra.mxu0 0.0
    %5457 = vmatprep.subr.mxu0 0.0
    %5458 = vmatpush1.msra.mxu0 0.0
    %5459 = vmatprep.subr.mxu0 0.0
    %5460 = vmatpush1.msra.mxu0 0.0
    %5461 = vmatprep.subr.mxu0 0.0
    %5462 = vmatpush1.msra.mxu0 0.0
    %5463 = vmatprep.subr.mxu0 0.0
    %5464 = vmatpush1.msra.mxu0 0.0
    %5465 = vmatprep.subr.mxu0 0.0
    %5466 = vmatpush1.msra.mxu0 0.0
    %5467 = vmatprep.subr.mxu0 0.0
    %5468 = vmatpush1.msra.mxu0 0.0
    %5469 = vmatprep.subr.mxu0 0.0
    %5470 = vmatpush1.msra.mxu0 0.0
    %5471 = vmatprep.mubr.f32.mxu0 0.0
    %v5472 = vand.u32 %v5251, 4294901760
    %v5473 = vsub.f32 %v5251, %v5472
    %5474 = vmatmul.mubr.f32.gmra.mrb[0].mxu0 %v5473
    %v5475 = vpop.f32.mrb[0].mxu0
    %v5476 = vadd.f32 %v5402, %v5475
    %v5477 = vpop.f32.mrb[0].mxu0
    %5478 = vdwg.mxu0
    %5479 = vmatprep.subr.mxu0 0.0
    %v5480 = vand.u32 %v2389, 4294901760
    %5481 = vmatpush1.msra.mxu0 %v5480
    %5482 = vmatprep.subr.mxu0 0.0
    %5483 = vmatpush1.msra.mxu0 0.0
    %5484 = vmatprep.subr.mxu0 0.0
    %5485 = vmatpush1.msra.mxu0 0.0
    %5486 = vmatprep.subr.mxu0 0.0
    %5487 = vmatpush1.msra.mxu0 0.0
    %5488 = vmatprep.subr.mxu0 0.0
    %5489 = vmatpush1.msra.mxu0 0.0
    %5490 = vmatprep.subr.mxu0 0.0
    %5491 = vmatpush1.msra.mxu0 0.0
    %5492 = vmatprep.subr.mxu0 0.0
    %5493 = vmatpush1.msra.mxu0 0.0
    %5494 = vmatprep.subr.mxu0 0.0
    %5495 = vmatpush1.msra.mxu0 0.0
    %5496 = vmatprep.subr.mxu0 0.0
    %5497 = vmatpush1.msra.mxu0 0.0
    %5498 = vmatprep.subr.mxu0 0.0
    %5499 = vmatpush1.msra.mxu0 0.0
    %5500 = vmatprep.subr.mxu0 0.0
    %5501 = vmatpush1.msra.mxu0 0.0
    %5502 = vmatprep.subr.mxu0 0.0
    %5503 = vmatpush1.msra.mxu0 0.0
    %5504 = vmatprep.subr.mxu0 0.0
    %5505 = vmatpush1.msra.mxu0 0.0
    %5506 = vmatprep.subr.mxu0 0.0
    %5507 = vmatpush1.msra.mxu0 0.0
    %5508 = vmatprep.subr.mxu0 0.0
    %5509 = vmatpush1.msra.mxu0 0.0
    %5510 = vmatprep.subr.mxu0 0.0
    %5511 = vmatpush1.msra.mxu0 0.0
    %5512 = vmatprep.subr.mxu0 0.0
    %5513 = vmatpush1.msra.mxu0 0.0
    %5514 = vmatprep.subr.mxu0 0.0
    %5515 = vmatpush1.msra.mxu0 0.0
    %5516 = vmatprep.subr.mxu0 0.0
    %5517 = vmatpush1.msra.mxu0 0.0
    %5518 = vmatprep.subr.mxu0 0.0
    %5519 = vmatpush1.msra.mxu0 0.0
    %5520 = vmatprep.subr.mxu0 0.0
    %5521 = vmatpush1.msra.mxu0 0.0
    %5522 = vmatprep.subr.mxu0 0.0
    %5523 = vmatpush1.msra.mxu0 0.0
    %5524 = vmatprep.subr.mxu0 0.0
    %5525 = vmatpush1.msra.mxu0 0.0
    %5526 = vmatprep.subr.mxu0 0.0
    %5527 = vmatpush1.msra.mxu0 0.0
    %5528 = vmatprep.subr.mxu0 0.0
    %5529 = vmatpush1.msra.mxu0 0.0
    %5530 = vmatprep.subr.mxu0 0.0
    %5531 = vmatpush1.msra.mxu0 0.0
    %5532 = vmatprep.subr.mxu0 0.0
    %5533 = vmatpush1.msra.mxu0 0.0
    %5534 = vmatprep.subr.mxu0 0.0
    %5535 = vmatpush1.msra.mxu0 0.0
    %5536 = vmatprep.subr.mxu0 0.0
    %5537 = vmatpush1.msra.mxu0 0.0
    %5538 = vmatprep.subr.mxu0 0.0
    %5539 = vmatpush1.msra.mxu0 0.0
    %5540 = vmatprep.subr.mxu0 0.0
    %5541 = vmatpush1.msra.mxu0 0.0
    %5542 = vmatprep.subr.mxu0 0.0
    %5543 = vmatpush1.msra.mxu0 0.0
    %5544 = vmatprep.mubr.f32.mxu0 0.0
    %v5545 = vand.u32 %v5251, 4294901760
    %v5546 = vsub.f32 %v5251, %v5545
    %v5547 = vand.u32 %v5546, 4294901760
    %5548 = vmatmul.mubr.f32.gmra.mrb[0].mxu0 %v5547
    %v5549 = vpop.f32.mrb[0].mxu0
    %v5550 = vadd.f32 %v5476, %v5549
    %v5551 = vpop.f32.mrb[0].mxu0
    %5552 = vdwg.mxu0
    %5553 = vmatprep.subr.mxu0 0.0
    %v5554 = vand.u32 %v2389, 4294901760
    %v5555 = vsub.f32 %v2389, %v5554
    %v5556 = vand.u32 %v5555, 4294901760
    %5557 = vmatpush1.msra.mxu0 %v5556
    %5558 = vmatprep.subr.mxu0 0.0
    %5559 = vmatpush1.msra.mxu0 0.0
    %5560 = vmatprep.subr.mxu0 0.0
    %5561 = vmatpush1.msra.mxu0 0.0
    %5562 = vmatprep.subr.mxu0 0.0
    %5563 = vmatpush1.msra.mxu0 0.0
    %5564 = vmatprep.subr.mxu0 0.0
    %5565 = vmatpush1.msra.mxu0 0.0
    %5566 = vmatprep.subr.mxu0 0.0
    %5567 = vmatpush1.msra.mxu0 0.0
    %5568 = vmatprep.subr.mxu0 0.0
    %5569 = vmatpush1.msra.mxu0 0.0
    %5570 = vmatprep.subr.mxu0 0.0
    %5571 = vmatpush1.msra.mxu0 0.0
    %5572 = vmatprep.subr.mxu0 0.0
    %5573 = vmatpush1.msra.mxu0 0.0
    %5574 = vmatprep.subr.mxu0 0.0
    %5575 = vmatpush1.msra.mxu0 0.0
    %5576 = vmatprep.subr.mxu0 0.0
    %5577 = vmatpush1.msra.mxu0 0.0
    %5578 = vmatprep.subr.mxu0 0.0
    %5579 = vmatpush1.msra.mxu0 0.0
    %5580 = vmatprep.subr.mxu0 0.0
    %5581 = vmatpush1.msra.mxu0 0.0
    %5582 = vmatprep.subr.mxu0 0.0
    %5583 = vmatpush1.msra.mxu0 0.0
    %5584 = vmatprep.subr.mxu0 0.0
    %5585 = vmatpush1.msra.mxu0 0.0
    %5586 = vmatprep.subr.mxu0 0.0
    %5587 = vmatpush1.msra.mxu0 0.0
    %5588 = vmatprep.subr.mxu0 0.0
    %5589 = vmatpush1.msra.mxu0 0.0
    %5590 = vmatprep.subr.mxu0 0.0
    %5591 = vmatpush1.msra.mxu0 0.0
    %5592 = vmatprep.subr.mxu0 0.0
    %5593 = vmatpush1.msra.mxu0 0.0
    %5594 = vmatprep.subr.mxu0 0.0
    %5595 = vmatpush1.msra.mxu0 0.0
    %5596 = vmatprep.subr.mxu0 0.0
    %5597 = vmatpush1.msra.mxu0 0.0
    %5598 = vmatprep.subr.mxu0 0.0
    %5599 = vmatpush1.msra.mxu0 0.0
    %5600 = vmatprep.subr.mxu0 0.0
    %5601 = vmatpush1.msra.mxu0 0.0
    %5602 = vmatprep.subr.mxu0 0.0
    %5603 = vmatpush1.msra.mxu0 0.0
    %5604 = vmatprep.subr.mxu0 0.0
    %5605 = vmatpush1.msra.mxu0 0.0
    %5606 = vmatprep.subr.mxu0 0.0
    %5607 = vmatpush1.msra.mxu0 0.0
    %5608 = vmatprep.subr.mxu0 0.0
    %5609 = vmatpush1.msra.mxu0 0.0
    %5610 = vmatprep.subr.mxu0 0.0
    %5611 = vmatpush1.msra.mxu0 0.0
    %5612 = vmatprep.subr.mxu0 0.0
    %5613 = vmatpush1.msra.mxu0 0.0
    %5614 = vmatprep.subr.mxu0 0.0
    %5615 = vmatpush1.msra.mxu0 0.0
    %5616 = vmatprep.subr.mxu0 0.0
    %5617 = vmatpush1.msra.mxu0 0.0
    %5618 = vmatprep.subr.mxu0 0.0
    %5619 = vmatpush1.msra.mxu0 0.0
    %5620 = vmatprep.mubr.f32.mxu0 0.0
    %v5621 = vand.u32 %v5251, 4294901760
    %5622 = vmatmul.mubr.f32.gmra.mrb[0].mxu0 %v5621
    %v5623 = vpop.f32.mrb[0].mxu0
    %v5624 = vadd.f32 %v5550, %v5623
    %v5625 = vpop.f32.mrb[0].mxu0
    %5626 = vdwg.mxu0
    %5627 = vmatprep.subr.mxu0 0.0
    %v5628 = vand.u32 %v2389, 4294901760
    %5629 = vmatpush1.msra.mxu0 %v5628
    %5630 = vmatprep.subr.mxu0 0.0
    %5631 = vmatpush1.msra.mxu0 0.0
    %5632 = vmatprep.subr.mxu0 0.0
    %5633 = vmatpush1.msra.mxu0 0.0
    %5634 = vmatprep.subr.mxu0 0.0
    %5635 = vmatpush1.msra.mxu0 0.0
    %5636 = vmatprep.subr.mxu0 0.0
    %5637 = vmatpush1.msra.mxu0 0.0
    %5638 = vmatprep.subr.mxu0 0.0
    %5639 = vmatpush1.msra.mxu0 0.0
    %5640 = vmatprep.subr.mxu0 0.0
    %5641 = vmatpush1.msra.mxu0 0.0
    %5642 = vmatprep.subr.mxu0 0.0
    %5643 = vmatpush1.msra.mxu0 0.0
    %5644 = vmatprep.subr.mxu0 0.0
    %5645 = vmatpush1.msra.mxu0 0.0
    %5646 = vmatprep.subr.mxu0 0.0
    %5647 = vmatpush1.msra.mxu0 0.0
    %5648 = vmatprep.subr.mxu0 0.0
    %5649 = vmatpush1.msra.mxu0 0.0
    %5650 = vmatprep.subr.mxu0 0.0
    %5651 = vmatpush1.msra.mxu0 0.0
    %5652 = vmatprep.subr.mxu0 0.0
    %5653 = vmatpush1.msra.mxu0 0.0
    %5654 = vmatprep.subr.mxu0 0.0
    %5655 = vmatpush1.msra.mxu0 0.0
    %5656 = vmatprep.subr.mxu0 0.0
    %5657 = vmatpush1.msra.mxu0 0.0
    %5658 = vmatprep.subr.mxu0 0.0
    %5659 = vmatpush1.msra.mxu0 0.0
    %5660 = vmatprep.subr.mxu0 0.0
    %5661 = vmatpush1.msra.mxu0 0.0
    %5662 = vmatprep.subr.mxu0 0.0
    %5663 = vmatpush1.msra.mxu0 0.0
    %5664 = vmatprep.subr.mxu0 0.0
    %5665 = vmatpush1.msra.mxu0 0.0
    %5666 = vmatprep.subr.mxu0 0.0
    %5667 = vmatpush1.msra.mxu0 0.0
    %5668 = vmatprep.subr.mxu0 0.0
    %5669 = vmatpush1.msra.mxu0 0.0
    %5670 = vmatprep.subr.mxu0 0.0
    %5671 = vmatpush1.msra.mxu0 0.0
    %5672 = vmatprep.subr.mxu0 0.0
    %5673 = vmatpush1.msra.mxu0 0.0
    %5674 = vmatprep.subr.mxu0 0.0
    %5675 = vmatpush1.msra.mxu0 0.0
    %5676 = vmatprep.subr.mxu0 0.0
    %5677 = vmatpush1.msra.mxu0 0.0
    %5678 = vmatprep.subr.mxu0 0.0
    %5679 = vmatpush1.msra.mxu0 0.0
    %5680 = vmatprep.subr.mxu0 0.0
    %5681 = vmatpush1.msra.mxu0 0.0
    %5682 = vmatprep.subr.mxu0 0.0
    %5683 = vmatpush1.msra.mxu0 0.0
    %5684 = vmatprep.subr.mxu0 0.0
    %5685 = vmatpush1.msra.mxu0 0.0
    %5686 = vmatprep.subr.mxu0 0.0
    %5687 = vmatpush1.msra.mxu0 0.0
    %5688 = vmatprep.subr.mxu0 0.0
    %5689 = vmatpush1.msra.mxu0 0.0
    %5690 = vmatprep.subr.mxu0 0.0
    %5691 = vmatpush1.msra.mxu0 0.0
    %5692 = vmatprep.mubr.f32.mxu0 0.0
    %v5693 = vand.u32 %v5251, 4294901760
    %5694 = vmatmul.mubr.f32.gmra.mrb[0].mxu0 %v5693
    %v5695 = vpop.f32.mrb[0].mxu0
    %v5696 = vadd.f32 %v5624, %v5695
    %v5697 = vpop.f32.mrb[0].mxu0
    %5698 = vdwg.mxu0
    %v5700 = vsel %vm5141, %v5221, 0
    %5702 = vmatprep.subr.mxu0 0.0
    %v5703 = vand.u32 %v2395, 4294901760
    %5704 = vmatpush1.msra.mxu0 %v5703
    %5705 = vmatprep.subr.mxu0 0.0
    %5706 = vmatpush1.msra.mxu0 0.0
    %5707 = vmatprep.subr.mxu0 0.0
    %5708 = vmatpush1.msra.mxu0 0.0
    %5709 = vmatprep.subr.mxu0 0.0
    %5710 = vmatpush1.msra.mxu0 0.0
    %5711 = vmatprep.subr.mxu0 0.0
    %5712 = vmatpush1.msra.mxu0 0.0
    %5713 = vmatprep.subr.mxu0 0.0
    %5714 = vmatpush1.msra.mxu0 0.0
    %5715 = vmatprep.subr.mxu0 0.0
    %5716 = vmatpush1.msra.mxu0 0.0
    %5717 = vmatprep.subr.mxu0 0.0
    %5718 = vmatpush1.msra.mxu0 0.0
    %5719 = vmatprep.subr.mxu0 0.0
    %5720 = vmatpush1.msra.mxu0 0.0
    %5721 = vmatprep.subr.mxu0 0.0
    %5722 = vmatpush1.msra.mxu0 0.0
    %5723 = vmatprep.subr.mxu0 0.0
    %5724 = vmatpush1.msra.mxu0 0.0
    %5725 = vmatprep.subr.mxu0 0.0
    %5726 = vmatpush1.msra.mxu0 0.0
    %5727 = vmatprep.subr.mxu0 0.0
    %5728 = vmatpush1.msra.mxu0 0.0
    %5729 = vmatprep.subr.mxu0 0.0
    %5730 = vmatpush1.msra.mxu0 0.0
    %5731 = vmatprep.subr.mxu0 0.0
    %5732 = vmatpush1.msra.mxu0 0.0
    %5733 = vmatprep.subr.mxu0 0.0
    %5734 = vmatpush1.msra.mxu0 0.0
    %5735 = vmatprep.subr.mxu0 0.0
    %5736 = vmatpush1.msra.mxu0 0.0
    %5737 = vmatprep.subr.mxu0 0.0
    %5738 = vmatpush1.msra.mxu0 0.0
    %5739 = vmatprep.subr.mxu0 0.0
    %5740 = vmatpush1.msra.mxu0 0.0
    %5741 = vmatprep.subr.mxu0 0.0
    %5742 = vmatpush1.msra.mxu0 0.0
    %5743 = vmatprep.subr.mxu0 0.0
    %5744 = vmatpush1.msra.mxu0 0.0
    %5745 = vmatprep.subr.mxu0 0.0
    %5746 = vmatpush1.msra.mxu0 0.0
    %5747 = vmatprep.subr.mxu0 0.0
    %5748 = vmatpush1.msra.mxu0 0.0
    %5749 = vmatprep.subr.mxu0 0.0
    %5750 = vmatpush1.msra.mxu0 0.0
    %5751 = vmatprep.subr.mxu0 0.0
    %5752 = vmatpush1.msra.mxu0 0.0
    %5753 = vmatprep.subr.mxu0 0.0
    %5754 = vmatpush1.msra.mxu0 0.0
    %5755 = vmatprep.subr.mxu0 0.0
    %5756 = vmatpush1.msra.mxu0 0.0
    %5757 = vmatprep.subr.mxu0 0.0
    %5758 = vmatpush1.msra.mxu0 0.0
    %5759 = vmatprep.subr.mxu0 0.0
    %5760 = vmatpush1.msra.mxu0 0.0
    %5761 = vmatprep.subr.mxu0 0.0
    %5762 = vmatpush1.msra.mxu0 0.0
    %5763 = vmatprep.subr.mxu0 0.0
    %5764 = vmatpush1.msra.mxu0 0.0
    %5765 = vmatprep.subr.mxu0 0.0
    %5766 = vmatpush1.msra.mxu0 0.0
    %5767 = vmatprep.mubr.f32.mxu0 0.0
    %v5768 = vand.u32 %v5700, 4294901760
    %v5769 = vsub.f32 %v5700, %v5768
    %v5770 = vand.u32 %v5769, 4294901760
    %v5771 = vsub.f32 %v5769, %v5770
    %v5772 = vand.u32 %v5771, 4294901760
    %5773 = vmatmul.mubr.f32.gmra.mrb[0].mxu0 %v5772
    %v5774 = vpop.f32.mrb[0].mxu0
    %v5775 = vadd.f32 0.0, %v5774
    %v5776 = vpop.f32.mrb[0].mxu0
    %5777 = vdwg.mxu0
    %5778 = vmatprep.subr.mxu0 0.0
    %v5779 = vand.u32 %v2395, 4294901760
    %v5780 = vsub.f32 %v2395, %v5779
    %v5781 = vand.u32 %v5780, 4294901760
    %v5782 = vsub.f32 %v5780, %v5781
    %v5783 = vand.u32 %v5782, 4294901760
    %5784 = vmatpush1.msra.mxu0 %v5783
    %5785 = vmatprep.subr.mxu0 0.0
    %5786 = vmatpush1.msra.mxu0 0.0
    %5787 = vmatprep.subr.mxu0 0.0
    %5788 = vmatpush1.msra.mxu0 0.0
    %5789 = vmatprep.subr.mxu0 0.0
    %5790 = vmatpush1.msra.mxu0 0.0
    %5791 = vmatprep.subr.mxu0 0.0
    %5792 = vmatpush1.msra.mxu0 0.0
    %5793 = vmatprep.subr.mxu0 0.0
    %5794 = vmatpush1.msra.mxu0 0.0
    %5795 = vmatprep.subr.mxu0 0.0
    %5796 = vmatpush1.msra.mxu0 0.0
    %5797 = vmatprep.subr.mxu0 0.0
    %5798 = vmatpush1.msra.mxu0 0.0
    %5799 = vmatprep.subr.mxu0 0.0
    %5800 = vmatpush1.msra.mxu0 0.0
    %5801 = vmatprep.subr.mxu0 0.0
    %5802 = vmatpush1.msra.mxu0 0.0
    %5803 = vmatprep.subr.mxu0 0.0
    %5804 = vmatpush1.msra.mxu0 0.0
    %5805 = vmatprep.subr.mxu0 0.0
    %5806 = vmatpush1.msra.mxu0 0.0
    %5807 = vmatprep.subr.mxu0 0.0
    %5808 = vmatpush1.msra.mxu0 0.0
    %5809 = vmatprep.subr.mxu0 0.0
    %5810 = vmatpush1.msra.mxu0 0.0
    %5811 = vmatprep.subr.mxu0 0.0
    %5812 = vmatpush1.msra.mxu0 0.0
    %5813 = vmatprep.subr.mxu0 0.0
    %5814 = vmatpush1.msra.mxu0 0.0
    %5815 = vmatprep.subr.mxu0 0.0
    %5816 = vmatpush1.msra.mxu0 0.0
    %5817 = vmatprep.subr.mxu0 0.0
    %5818 = vmatpush1.msra.mxu0 0.0
    %5819 = vmatprep.subr.mxu0 0.0
    %5820 = vmatpush1.msra.mxu0 0.0
    %5821 = vmatprep.subr.mxu0 0.0
    %5822 = vmatpush1.msra.mxu0 0.0
    %5823 = vmatprep.subr.mxu0 0.0
    %5824 = vmatpush1.msra.mxu0 0.0
    %5825 = vmatprep.subr.mxu0 0.0
    %5826 = vmatpush1.msra.mxu0 0.0
    %5827 = vmatprep.subr.mxu0 0.0
    %5828 = vmatpush1.msra.mxu0 0.0
    %5829 = vmatprep.subr.mxu0 0.0
    %5830 = vmatpush1.msra.mxu0 0.0
    %5831 = vmatprep.subr.mxu0 0.0
    %5832 = vmatpush1.msra.mxu0 0.0
    %5833 = vmatprep.subr.mxu0 0.0
    %5834 = vmatpush1.msra.mxu0 0.0
    %5835 = vmatprep.subr.mxu0 0.0
    %5836 = vmatpush1.msra.mxu0 0.0
    %5837 = vmatprep.subr.mxu0 0.0
    %5838 = vmatpush1.msra.mxu0 0.0
    %5839 = vmatprep.subr.mxu0 0.0
    %5840 = vmatpush1.msra.mxu0 0.0
    %5841 = vmatprep.subr.mxu0 0.0
    %5842 = vmatpush1.msra.mxu0 0.0
    %5843 = vmatprep.subr.mxu0 0.0
    %5844 = vmatpush1.msra.mxu0 0.0
    %5845 = vmatprep.subr.mxu0 0.0
    %5846 = vmatpush1.msra.mxu0 0.0
    %5847 = vmatprep.mubr.f32.mxu0 0.0
    %v5848 = vand.u32 %v5700, 4294901760
    %5849 = vmatmul.mubr.f32.gmra.mrb[0].mxu0 %v5848
    %v5850 = vpop.f32.mrb[0].mxu0
    %v5851 = vadd.f32 %v5775, %v5850
    %v5852 = vpop.f32.mrb[0].mxu0
    %5853 = vdwg.mxu0
    %5854 = vmatprep.subr.mxu0 0.0
    %v5855 = vand.u32 %v2395, 4294901760
    %v5856 = vsub.f32 %v2395, %v5855
    %5857 = vmatpush1.msra.mxu0 %v5856
    %5858 = vmatprep.subr.mxu0 0.0
    %5859 = vmatpush1.msra.mxu0 0.0
    %5860 = vmatprep.subr.mxu0 0.0
    %5861 = vmatpush1.msra.mxu0 0.0
    %5862 = vmatprep.subr.mxu0 0.0
    %5863 = vmatpush1.msra.mxu0 0.0
    %5864 = vmatprep.subr.mxu0 0.0
    %5865 = vmatpush1.msra.mxu0 0.0
    %5866 = vmatprep.subr.mxu0 0.0
    %5867 = vmatpush1.msra.mxu0 0.0
    %5868 = vmatprep.subr.mxu0 0.0
    %5869 = vmatpush1.msra.mxu0 0.0
    %5870 = vmatprep.subr.mxu0 0.0
    %5871 = vmatpush1.msra.mxu0 0.0
    %5872 = vmatprep.subr.mxu0 0.0
    %5873 = vmatpush1.msra.mxu0 0.0
    %5874 = vmatprep.subr.mxu0 0.0
    %5875 = vmatpush1.msra.mxu0 0.0
    %5876 = vmatprep.subr.mxu0 0.0
    %5877 = vmatpush1.msra.mxu0 0.0
    %5878 = vmatprep.subr.mxu0 0.0
    %5879 = vmatpush1.msra.mxu0 0.0
    %5880 = vmatprep.subr.mxu0 0.0
    %5881 = vmatpush1.msra.mxu0 0.0
    %5882 = vmatprep.subr.mxu0 0.0
    %5883 = vmatpush1.msra.mxu0 0.0
    %5884 = vmatprep.subr.mxu0 0.0
    %5885 = vmatpush1.msra.mxu0 0.0
    %5886 = vmatprep.subr.mxu0 0.0
    %5887 = vmatpush1.msra.mxu0 0.0
    %5888 = vmatprep.subr.mxu0 0.0
    %5889 = vmatpush1.msra.mxu0 0.0
    %5890 = vmatprep.subr.mxu0 0.0
    %5891 = vmatpush1.msra.mxu0 0.0
    %5892 = vmatprep.subr.mxu0 0.0
    %5893 = vmatpush1.msra.mxu0 0.0
    %5894 = vmatprep.subr.mxu0 0.0
    %5895 = vmatpush1.msra.mxu0 0.0
    %5896 = vmatprep.subr.mxu0 0.0
    %5897 = vmatpush1.msra.mxu0 0.0
    %5898 = vmatprep.subr.mxu0 0.0
    %5899 = vmatpush1.msra.mxu0 0.0
    %5900 = vmatprep.subr.mxu0 0.0
    %5901 = vmatpush1.msra.mxu0 0.0
    %5902 = vmatprep.subr.mxu0 0.0
    %5903 = vmatpush1.msra.mxu0 0.0
    %5904 = vmatprep.subr.mxu0 0.0
    %5905 = vmatpush1.msra.mxu0 0.0
    %5906 = vmatprep.subr.mxu0 0.0
    %5907 = vmatpush1.msra.mxu0 0.0
    %5908 = vmatprep.subr.mxu0 0.0
    %5909 = vmatpush1.msra.mxu0 0.0
    %5910 = vmatprep.subr.mxu0 0.0
    %5911 = vmatpush1.msra.mxu0 0.0
    %5912 = vmatprep.subr.mxu0 0.0
    %5913 = vmatpush1.msra.mxu0 0.0
    %5914 = vmatprep.subr.mxu0 0.0
    %5915 = vmatpush1.msra.mxu0 0.0
    %5916 = vmatprep.subr.mxu0 0.0
    %5917 = vmatpush1.msra.mxu0 0.0
    %5918 = vmatprep.subr.mxu0 0.0
    %5919 = vmatpush1.msra.mxu0 0.0
    %5920 = vmatprep.mubr.f32.mxu0 0.0
    %v5921 = vand.u32 %v5700, 4294901760
    %v5922 = vsub.f32 %v5700, %v5921
    %5923 = vmatmul.mubr.f32.gmra.mrb[0].mxu0 %v5922
    %v5924 = vpop.f32.mrb[0].mxu0
    %v5925 = vadd.f32 %v5851, %v5924
    %v5926 = vpop.f32.mrb[0].mxu0
    %5927 = vdwg.mxu0
    %5928 = vmatprep.subr.mxu0 0.0
    %v5929 = vand.u32 %v2395, 4294901760
    %5930 = vmatpush1.msra.mxu0 %v5929
    %5931 = vmatprep.subr.mxu0 0.0
    %5932 = vmatpush1.msra.mxu0 0.0
    %5933 = vmatprep.subr.mxu0 0.0
    %5934 = vmatpush1.msra.mxu0 0.0
    %5935 = vmatprep.subr.mxu0 0.0
    %5936 = vmatpush1.msra.mxu0 0.0
    %5937 = vmatprep.subr.mxu0 0.0
    %5938 = vmatpush1.msra.mxu0 0.0
    %5939 = vmatprep.subr.mxu0 0.0
    %5940 = vmatpush1.msra.mxu0 0.0
    %5941 = vmatprep.subr.mxu0 0.0
    %5942 = vmatpush1.msra.mxu0 0.0
    %5943 = vmatprep.subr.mxu0 0.0
    %5944 = vmatpush1.msra.mxu0 0.0
    %5945 = vmatprep.subr.mxu0 0.0
    %5946 = vmatpush1.msra.mxu0 0.0
    %5947 = vmatprep.subr.mxu0 0.0
    %5948 = vmatpush1.msra.mxu0 0.0
    %5949 = vmatprep.subr.mxu0 0.0
    %5950 = vmatpush1.msra.mxu0 0.0
    %5951 = vmatprep.subr.mxu0 0.0
    %5952 = vmatpush1.msra.mxu0 0.0
    %5953 = vmatprep.subr.mxu0 0.0
    %5954 = vmatpush1.msra.mxu0 0.0
    %5955 = vmatprep.subr.mxu0 0.0
    %5956 = vmatpush1.msra.mxu0 0.0
    %5957 = vmatprep.subr.mxu0 0.0
    %5958 = vmatpush1.msra.mxu0 0.0
    %5959 = vmatprep.subr.mxu0 0.0
    %5960 = vmatpush1.msra.mxu0 0.0
    %5961 = vmatprep.subr.mxu0 0.0
    %5962 = vmatpush1.msra.mxu0 0.0
    %5963 = vmatprep.subr.mxu0 0.0
    %5964 = vmatpush1.msra.mxu0 0.0
    %5965 = vmatprep.subr.mxu0 0.0
    %5966 = vmatpush1.msra.mxu0 0.0
    %5967 = vmatprep.subr.mxu0 0.0
    %5968 = vmatpush1.msra.mxu0 0.0
    %5969 = vmatprep.subr.mxu0 0.0
    %5970 = vmatpush1.msra.mxu0 0.0
    %5971 = vmatprep.subr.mxu0 0.0
    %5972 = vmatpush1.msra.mxu0 0.0
    %5973 = vmatprep.subr.mxu0 0.0
    %5974 = vmatpush1.msra.mxu0 0.0
    %5975 = vmatprep.subr.mxu0 0.0
    %5976 = vmatpush1.msra.mxu0 0.0
    %5977 = vmatprep.subr.mxu0 0.0
    %5978 = vmatpush1.msra.mxu0 0.0
    %5979 = vmatprep.subr.mxu0 0.0
    %5980 = vmatpush1.msra.mxu0 0.0
    %5981 = vmatprep.subr.mxu0 0.0
    %5982 = vmatpush1.msra.mxu0 0.0
    %5983 = vmatprep.subr.mxu0 0.0
    %5984 = vmatpush1.msra.mxu0 0.0
    %5985 = vmatprep.subr.mxu0 0.0
    %5986 = vmatpush1.msra.mxu0 0.0
    %5987 = vmatprep.subr.mxu0 0.0
    %5988 = vmatpush1.msra.mxu0 0.0
    %5989 = vmatprep.subr.mxu0 0.0
    %5990 = vmatpush1.msra.mxu0 0.0
    %5991 = vmatprep.subr.mxu0 0.0
    %5992 = vmatpush1.msra.mxu0 0.0
    %5993 = vmatprep.mubr.f32.mxu0 0.0
    %v5994 = vand.u32 %v5700, 4294901760
    %v5995 = vsub.f32 %v5700, %v5994
    %v5996 = vand.u32 %v5995, 4294901760
    %5997 = vmatmul.mubr.f32.gmra.mrb[0].mxu0 %v5996
    %v5998 = vpop.f32.mrb[0].mxu0
    %v5999 = vadd.f32 %v5925, %v5998
    %v6000 = vpop.f32.mrb[0].mxu0
    %6001 = vdwg.mxu0
    %6002 = vmatprep.subr.mxu0 0.0
    %v6003 = vand.u32 %v2395, 4294901760
    %v6004 = vsub.f32 %v2395, %v6003
    %v6005 = vand.u32 %v6004, 4294901760
    %6006 = vmatpush1.msra.mxu0 %v6005
    %6007 = vmatprep.subr.mxu0 0.0
    %6008 = vmatpush1.msra.mxu0 0.0
    %6009 = vmatprep.subr.mxu0 0.0
    %6010 = vmatpush1.msra.mxu0 0.0
    %6011 = vmatprep.subr.mxu0 0.0
    %6012 = vmatpush1.msra.mxu0 0.0
    %6013 = vmatprep.subr.mxu0 0.0
    %6014 = vmatpush1.msra.mxu0 0.0
    %6015 = vmatprep.subr.mxu0 0.0
    %6016 = vmatpush1.msra.mxu0 0.0
    %6017 = vmatprep.subr.mxu0 0.0
    %6018 = vmatpush1.msra.mxu0 0.0
    %6019 = vmatprep.subr.mxu0 0.0
    %6020 = vmatpush1.msra.mxu0 0.0
    %6021 = vmatprep.subr.mxu0 0.0
    %6022 = vmatpush1.msra.mxu0 0.0
    %6023 = vmatprep.subr.mxu0 0.0
    %6024 = vmatpush1.msra.mxu0 0.0
    %6025 = vmatprep.subr.mxu0 0.0
    %6026 = vmatpush1.msra.mxu0 0.0
    %6027 = vmatprep.subr.mxu0 0.0
    %6028 = vmatpush1.msra.mxu0 0.0
    %6029 = vmatprep.subr.mxu0 0.0
    %6030 = vmatpush1.msra.mxu0 0.0
    %6031 = vmatprep.subr.mxu0 0.0
    %6032 = vmatpush1.msra.mxu0 0.0
    %6033 = vmatprep.subr.mxu0 0.0
    %6034 = vmatpush1.msra.mxu0 0.0
    %6035 = vmatprep.subr.mxu0 0.0
    %6036 = vmatpush1.msra.mxu0 0.0
    %6037 = vmatprep.subr.mxu0 0.0
    %6038 = vmatpush1.msra.mxu0 0.0
    %6039 = vmatprep.subr.mxu0 0.0
    %6040 = vmatpush1.msra.mxu0 0.0
    %6041 = vmatprep.subr.mxu0 0.0
    %6042 = vmatpush1.msra.mxu0 0.0
    %6043 = vmatprep.subr.mxu0 0.0
    %6044 = vmatpush1.msra.mxu0 0.0
    %6045 = vmatprep.subr.mxu0 0.0
    %6046 = vmatpush1.msra.mxu0 0.0
    %6047 = vmatprep.subr.mxu0 0.0
    %6048 = vmatpush1.msra.mxu0 0.0
    %6049 = vmatprep.subr.mxu0 0.0
    %6050 = vmatpush1.msra.mxu0 0.0
    %6051 = vmatprep.subr.mxu0 0.0
    %6052 = vmatpush1.msra.mxu0 0.0
    %6053 = vmatprep.subr.mxu0 0.0
    %6054 = vmatpush1.msra.mxu0 0.0
    %6055 = vmatprep.subr.mxu0 0.0
    %6056 = vmatpush1.msra.mxu0 0.0
    %6057 = vmatprep.subr.mxu0 0.0
    %6058 = vmatpush1.msra.mxu0 0.0
    %6059 = vmatprep.subr.mxu0 0.0
    %6060 = vmatpush1.msra.mxu0 0.0
    %6061 = vmatprep.subr.mxu0 0.0
    %6062 = vmatpush1.msra.mxu0 0.0
    %6063 = vmatprep.subr.mxu0 0.0
    %6064 = vmatpush1.msra.mxu0 0.0
    %6065 = vmatprep.subr.mxu0 0.0
    %6066 = vmatpush1.msra.mxu0 0.0
    %6067 = vmatprep.subr.mxu0 0.0
    %6068 = vmatpush1.msra.mxu0 0.0
    %6069 = vmatprep.mubr.f32.mxu0 0.0
    %v6070 = vand.u32 %v5700, 4294901760
    %6071 = vmatmul.mubr.f32.gmra.mrb[0].mxu0 %v6070
    %v6072 = vpop.f32.mrb[0].mxu0
    %v6073 = vadd.f32 %v5999, %v6072
    %v6074 = vpop.f32.mrb[0].mxu0
    %6075 = vdwg.mxu0
    %6076 = vmatprep.subr.mxu0 0.0
    %v6077 = vand.u32 %v2395, 4294901760
    %6078 = vmatpush1.msra.mxu0 %v6077
    %6079 = vmatprep.subr.mxu0 0.0
    %6080 = vmatpush1.msra.mxu0 0.0
    %6081 = vmatprep.subr.mxu0 0.0
    %6082 = vmatpush1.msra.mxu0 0.0
    %6083 = vmatprep.subr.mxu0 0.0
    %6084 = vmatpush1.msra.mxu0 0.0
    %6085 = vmatprep.subr.mxu0 0.0
    %6086 = vmatpush1.msra.mxu0 0.0
    %6087 = vmatprep.subr.mxu0 0.0
    %6088 = vmatpush1.msra.mxu0 0.0
    %6089 = vmatprep.subr.mxu0 0.0
    %6090 = vmatpush1.msra.mxu0 0.0
    %6091 = vmatprep.subr.mxu0 0.0
    %6092 = vmatpush1.msra.mxu0 0.0
    %6093 = vmatprep.subr.mxu0 0.0
    %6094 = vmatpush1.msra.mxu0 0.0
    %6095 = vmatprep.subr.mxu0 0.0
    %6096 = vmatpush1.msra.mxu0 0.0
    %6097 = vmatprep.subr.mxu0 0.0
    %6098 = vmatpush1.msra.mxu0 0.0
    %6099 = vmatprep.subr.mxu0 0.0
    %6100 = vmatpush1.msra.mxu0 0.0
    %6101 = vmatprep.subr.mxu0 0.0
    %6102 = vmatpush1.msra.mxu0 0.0
    %6103 = vmatprep.subr.mxu0 0.0
    %6104 = vmatpush1.msra.mxu0 0.0
    %6105 = vmatprep.subr.mxu0 0.0
    %6106 = vmatpush1.msra.mxu0 0.0
    %6107 = vmatprep.subr.mxu0 0.0
    %6108 = vmatpush1.msra.mxu0 0.0
    %6109 = vmatprep.subr.mxu0 0.0
    %6110 = vmatpush1.msra.mxu0 0.0
    %6111 = vmatprep.subr.mxu0 0.0
    %6112 = vmatpush1.msra.mxu0 0.0
    %6113 = vmatprep.subr.mxu0 0.0
    %6114 = vmatpush1.msra.mxu0 0.0
    %6115 = vmatprep.subr.mxu0 0.0
    %6116 = vmatpush1.msra.mxu0 0.0
    %6117 = vmatprep.subr.mxu0 0.0
    %6118 = vmatpush1.msra.mxu0 0.0
    %6119 = vmatprep.subr.mxu0 0.0
    %6120 = vmatpush1.msra.mxu0 0.0
    %6121 = vmatprep.subr.mxu0 0.0
    %6122 = vmatpush1.msra.mxu0 0.0
    %6123 = vmatprep.subr.mxu0 0.0
    %6124 = vmatpush1.msra.mxu0 0.0
    %6125 = vmatprep.subr.mxu0 0.0
    %6126 = vmatpush1.msra.mxu0 0.0
    %6127 = vmatprep.subr.mxu0 0.0
    %6128 = vmatpush1.msra.mxu0 0.0
    %6129 = vmatprep.subr.mxu0 0.0
    %6130 = vmatpush1.msra.mxu0 0.0
    %6131 = vmatprep.subr.mxu0 0.0
    %6132 = vmatpush1.msra.mxu0 0.0
    %6133 = vmatprep.subr.mxu0 0.0
    %6134 = vmatpush1.msra.mxu0 0.0
    %6135 = vmatprep.subr.mxu0 0.0
    %6136 = vmatpush1.msra.mxu0 0.0
    %6137 = vmatprep.subr.mxu0 0.0
    %6138 = vmatpush1.msra.mxu0 0.0
    %6139 = vmatprep.subr.mxu0 0.0
    %6140 = vmatpush1.msra.mxu0 0.0
    %6141 = vmatprep.mubr.f32.mxu0 0.0
    %v6142 = vand.u32 %v5700, 4294901760
    %6143 = vmatmul.mubr.f32.gmra.mrb[0].mxu0 %v6142
    %v6144 = vpop.f32.mrb[0].mxu0
    %v6145 = vadd.f32 %v6073, %v6144
    %v6146 = vpop.f32.mrb[0].mxu0
    %6147 = vdwg.mxu0
    %v6149 = vsel %vm5141, %v5228, 0
    %6151 = vmatprep.subr.mxu0 0.0
    %v6152 = vand.u32 %v2401, 4294901760
    %6153 = vmatpush1.msra.mxu0 %v6152
    %6154 = vmatprep.subr.mxu0 0.0
    %6155 = vmatpush1.msra.mxu0 0.0
    %6156 = vmatprep.subr.mxu0 0.0
    %6157 = vmatpush1.msra.mxu0 0.0
    %6158 = vmatprep.subr.mxu0 0.0
    %6159 = vmatpush1.msra.mxu0 0.0
    %6160 = vmatprep.subr.mxu0 0.0
    %6161 = vmatpush1.msra.mxu0 0.0
    %6162 = vmatprep.subr.mxu0 0.0
    %6163 = vmatpush1.msra.mxu0 0.0
    %6164 = vmatprep.subr.mxu0 0.0
    %6165 = vmatpush1.msra.mxu0 0.0
    %6166 = vmatprep.subr.mxu0 0.0
    %6167 = vmatpush1.msra.mxu0 0.0
    %6168 = vmatprep.subr.mxu0 0.0
    %6169 = vmatpush1.msra.mxu0 0.0
    %6170 = vmatprep.subr.mxu0 0.0
    %6171 = vmatpush1.msra.mxu0 0.0
    %6172 = vmatprep.subr.mxu0 0.0
    %6173 = vmatpush1.msra.mxu0 0.0
    %6174 = vmatprep.subr.mxu0 0.0
    %6175 = vmatpush1.msra.mxu0 0.0
    %6176 = vmatprep.subr.mxu0 0.0
    %6177 = vmatpush1.msra.mxu0 0.0
    %6178 = vmatprep.subr.mxu0 0.0
    %6179 = vmatpush1.msra.mxu0 0.0
    %6180 = vmatprep.subr.mxu0 0.0
    %6181 = vmatpush1.msra.mxu0 0.0
    %6182 = vmatprep.subr.mxu0 0.0
    %6183 = vmatpush1.msra.mxu0 0.0
    %6184 = vmatprep.subr.mxu0 0.0
    %6185 = vmatpush1.msra.mxu0 0.0
    %6186 = vmatprep.subr.mxu0 0.0
    %6187 = vmatpush1.msra.mxu0 0.0
    %6188 = vmatprep.subr.mxu0 0.0
    %6189 = vmatpush1.msra.mxu0 0.0
    %6190 = vmatprep.subr.mxu0 0.0
    %6191 = vmatpush1.msra.mxu0 0.0
    %6192 = vmatprep.subr.mxu0 0.0
    %6193 = vmatpush1.msra.mxu0 0.0
    %6194 = vmatprep.subr.mxu0 0.0
    %6195 = vmatpush1.msra.mxu0 0.0
    %6196 = vmatprep.subr.mxu0 0.0
    %6197 = vmatpush1.msra.mxu0 0.0
    %6198 = vmatprep.subr.mxu0 0.0
    %6199 = vmatpush1.msra.mxu0 0.0
    %6200 = vmatprep.subr.mxu0 0.0
    %6201 = vmatpush1.msra.mxu0 0.0
    %6202 = vmatprep.subr.mxu0 0.0
    %6203 = vmatpush1.msra.mxu0 0.0
    %6204 = vmatprep.subr.mxu0 0.0
    %6205 = vmatpush1.msra.mxu0 0.0
    %6206 = vmatprep.subr.mxu0 0.0
    %6207 = vmatpush1.msra.mxu0 0.0
    %6208 = vmatprep.subr.mxu0 0.0
    %6209 = vmatpush1.msra.mxu0 0.0
    %6210 = vmatprep.subr.mxu0 0.0
    %6211 = vmatpush1.msra.mxu0 0.0
    %6212 = vmatprep.subr.mxu0 0.0
    %6213 = vmatpush1.msra.mxu0 0.0
    %6214 = vmatprep.subr.mxu0 0.0
    %6215 = vmatpush1.msra.mxu0 0.0
    %6216 = vmatprep.mubr.f32.mxu0 0.0
    %v6217 = vand.u32 %v6149, 4294901760
    %v6218 = vsub.f32 %v6149, %v6217
    %v6219 = vand.u32 %v6218, 4294901760
    %v6220 = vsub.f32 %v6218, %v6219
    %v6221 = vand.u32 %v6220, 4294901760
    %6222 = vmatmul.mubr.f32.gmra.mrb[0].mxu0 %v6221
    %v6223 = vpop.f32.mrb[0].mxu0
    %v6224 = vadd.f32 0.0, %v6223
    %v6225 = vpop.f32.mrb[0].mxu0
    %6226 = vdwg.mxu0
    %6227 = vmatprep.subr.mxu0 0.0
    %v6228 = vand.u32 %v2401, 4294901760
    %v6229 = vsub.f32 %v2401, %v6228
    %v6230 = vand.u32 %v6229, 4294901760
    %v6231 = vsub.f32 %v6229, %v6230
    %v6232 = vand.u32 %v6231, 4294901760
    %6233 = vmatpush1.msra.mxu0 %v6232
    %6234 = vmatprep.subr.mxu0 0.0
    %6235 = vmatpush1.msra.mxu0 0.0
    %6236 = vmatprep.subr.mxu0 0.0
    %6237 = vmatpush1.msra.mxu0 0.0
    %6238 = vmatprep.subr.mxu0 0.0
    %6239 = vmatpush1.msra.mxu0 0.0
    %6240 = vmatprep.subr.mxu0 0.0
    %6241 = vmatpush1.msra.mxu0 0.0
    %6242 = vmatprep.subr.mxu0 0.0
    %6243 = vmatpush1.msra.mxu0 0.0
    %6244 = vmatprep.subr.mxu0 0.0
    %6245 = vmatpush1.msra.mxu0 0.0
    %6246 = vmatprep.subr.mxu0 0.0
    %6247 = vmatpush1.msra.mxu0 0.0
    %6248 = vmatprep.subr.mxu0 0.0
    %6249 = vmatpush1.msra.mxu0 0.0
    %6250 = vmatprep.subr.mxu0 0.0
    %6251 = vmatpush1.msra.mxu0 0.0
    %6252 = vmatprep.subr.mxu0 0.0
    %6253 = vmatpush1.msra.mxu0 0.0
    %6254 = vmatprep.subr.mxu0 0.0
    %6255 = vmatpush1.msra.mxu0 0.0
    %6256 = vmatprep.subr.mxu0 0.0
    %6257 = vmatpush1.msra.mxu0 0.0
    %6258 = vmatprep.subr.mxu0 0.0
    %6259 = vmatpush1.msra.mxu0 0.0
    %6260 = vmatprep.subr.mxu0 0.0
    %6261 = vmatpush1.msra.mxu0 0.0
    %6262 = vmatprep.subr.mxu0 0.0
    %6263 = vmatpush1.msra.mxu0 0.0
    %6264 = vmatprep.subr.mxu0 0.0
    %6265 = vmatpush1.msra.mxu0 0.0
    %6266 = vmatprep.subr.mxu0 0.0
    %6267 = vmatpush1.msra.mxu0 0.0
    %6268 = vmatprep.subr.mxu0 0.0
    %6269 = vmatpush1.msra.mxu0 0.0
    %6270 = vmatprep.subr.mxu0 0.0
    %6271 = vmatpush1.msra.mxu0 0.0
    %6272 = vmatprep.subr.mxu0 0.0
    %6273 = vmatpush1.msra.mxu0 0.0
    %6274 = vmatprep.subr.mxu0 0.0
    %6275 = vmatpush1.msra.mxu0 0.0
    %6276 = vmatprep.subr.mxu0 0.0
    %6277 = vmatpush1.msra.mxu0 0.0
    %6278 = vmatprep.subr.mxu0 0.0
    %6279 = vmatpush1.msra.mxu0 0.0
    %6280 = vmatprep.subr.mxu0 0.0
    %6281 = vmatpush1.msra.mxu0 0.0
    %6282 = vmatprep.subr.mxu0 0.0
    %6283 = vmatpush1.msra.mxu0 0.0
    %6284 = vmatprep.subr.mxu0 0.0
    %6285 = vmatpush1.msra.mxu0 0.0
    %6286 = vmatprep.subr.mxu0 0.0
    %6287 = vmatpush1.msra.mxu0 0.0
    %6288 = vmatprep.subr.mxu0 0.0
    %6289 = vmatpush1.msra.mxu0 0.0
    %6290 = vmatprep.subr.mxu0 0.0
    %6291 = vmatpush1.msra.mxu0 0.0
    %6292 = vmatprep.subr.mxu0 0.0
    %6293 = vmatpush1.msra.mxu0 0.0
    %6294 = vmatprep.subr.mxu0 0.0
    %6295 = vmatpush1.msra.mxu0 0.0
    %6296 = vmatprep.mubr.f32.mxu0 0.0
    %v6297 = vand.u32 %v6149, 4294901760
    %6298 = vmatmul.mubr.f32.gmra.mrb[0].mxu0 %v6297
    %v6299 = vpop.f32.mrb[0].mxu0
    %v6300 = vadd.f32 %v6224, %v6299
    %v6301 = vpop.f32.mrb[0].mxu0
    %6302 = vdwg.mxu0
    %6303 = vmatprep.subr.mxu0 0.0
    %v6304 = vand.u32 %v2401, 4294901760
    %v6305 = vsub.f32 %v2401, %v6304
    %6306 = vmatpush1.msra.mxu0 %v6305
    %6307 = vmatprep.subr.mxu0 0.0
    %6308 = vmatpush1.msra.mxu0 0.0
    %6309 = vmatprep.subr.mxu0 0.0
    %6310 = vmatpush1.msra.mxu0 0.0
    %6311 = vmatprep.subr.mxu0 0.0
    %6312 = vmatpush1.msra.mxu0 0.0
    %6313 = vmatprep.subr.mxu0 0.0
    %6314 = vmatpush1.msra.mxu0 0.0
    %6315 = vmatprep.subr.mxu0 0.0
    %6316 = vmatpush1.msra.mxu0 0.0
    %6317 = vmatprep.subr.mxu0 0.0
    %6318 = vmatpush1.msra.mxu0 0.0
    %6319 = vmatprep.subr.mxu0 0.0
    %6320 = vmatpush1.msra.mxu0 0.0
    %6321 = vmatprep.subr.mxu0 0.0
    %6322 = vmatpush1.msra.mxu0 0.0
    %6323 = vmatprep.subr.mxu0 0.0
    %6324 = vmatpush1.msra.mxu0 0.0
    %6325 = vmatprep.subr.mxu0 0.0
    %6326 = vmatpush1.msra.mxu0 0.0
    %6327 = vmatprep.subr.mxu0 0.0
    %6328 = vmatpush1.msra.mxu0 0.0
    %6329 = vmatprep.subr.mxu0 0.0
    %6330 = vmatpush1.msra.mxu0 0.0
    %6331 = vmatprep.subr.mxu0 0.0
    %6332 = vmatpush1.msra.mxu0 0.0
    %6333 = vmatprep.subr.mxu0 0.0
    %6334 = vmatpush1.msra.mxu0 0.0
    %6335 = vmatprep.subr.mxu0 0.0
    %6336 = vmatpush1.msra.mxu0 0.0
    %6337 = vmatprep.subr.mxu0 0.0
    %6338 = vmatpush1.msra.mxu0 0.0
    %6339 = vmatprep.subr.mxu0 0.0
    %6340 = vmatpush1.msra.mxu0 0.0
    %6341 = vmatprep.subr.mxu0 0.0
    %6342 = vmatpush1.msra.mxu0 0.0
    %6343 = vmatprep.subr.mxu0 0.0
    %6344 = vmatpush1.msra.mxu0 0.0
    %6345 = vmatprep.subr.mxu0 0.0
    %6346 = vmatpush1.msra.mxu0 0.0
    %6347 = vmatprep.subr.mxu0 0.0
    %6348 = vmatpush1.msra.mxu0 0.0
    %6349 = vmatprep.subr.mxu0 0.0
    %6350 = vmatpush1.msra.mxu0 0.0
    %6351 = vmatprep.subr.mxu0 0.0
    %6352 = vmatpush1.msra.mxu0 0.0
    %6353 = vmatprep.subr.mxu0 0.0
    %6354 = vmatpush1.msra.mxu0 0.0
    %6355 = vmatprep.subr.mxu0 0.0
    %6356 = vmatpush1.msra.mxu0 0.0
    %6357 = vmatprep.subr.mxu0 0.0
    %6358 = vmatpush1.msra.mxu0 0.0
    %6359 = vmatprep.subr.mxu0 0.0
    %6360 = vmatpush1.msra.mxu0 0.0
    %6361 = vmatprep.subr.mxu0 0.0
    %6362 = vmatpush1.msra.mxu0 0.0
    %6363 = vmatprep.subr.mxu0 0.0
    %6364 = vmatpush1.msra.mxu0 0.0
    %6365 = vmatprep.subr.mxu0 0.0
    %6366 = vmatpush1.msra.mxu0 0.0
    %6367 = vmatprep.subr.mxu0 0.0
    %6368 = vmatpush1.msra.mxu0 0.0
    %6369 = vmatprep.mubr.f32.mxu0 0.0
    %v6370 = vand.u32 %v6149, 4294901760
    %v6371 = vsub.f32 %v6149, %v6370
    %6372 = vmatmul.mubr.f32.gmra.mrb[0].mxu0 %v6371
    %v6373 = vpop.f32.mrb[0].mxu0
    %v6374 = vadd.f32 %v6300, %v6373
    %v6375 = vpop.f32.mrb[0].mxu0
    %6376 = vdwg.mxu0
    %6377 = vmatprep.subr.mxu0 0.0
    %v6378 = vand.u32 %v2401, 4294901760
    %6379 = vmatpush1.msra.mxu0 %v6378
    %6380 = vmatprep.subr.mxu0 0.0
    %6381 = vmatpush1.msra.mxu0 0.0
    %6382 = vmatprep.subr.mxu0 0.0
    %6383 = vmatpush1.msra.mxu0 0.0
    %6384 = vmatprep.subr.mxu0 0.0
    %6385 = vmatpush1.msra.mxu0 0.0
    %6386 = vmatprep.subr.mxu0 0.0
    %6387 = vmatpush1.msra.mxu0 0.0
    %6388 = vmatprep.subr.mxu0 0.0
    %6389 = vmatpush1.msra.mxu0 0.0
    %6390 = vmatprep.subr.mxu0 0.0
    %6391 = vmatpush1.msra.mxu0 0.0
    %6392 = vmatprep.subr.mxu0 0.0
    %6393 = vmatpush1.msra.mxu0 0.0
    %6394 = vmatprep.subr.mxu0 0.0
    %6395 = vmatpush1.msra.mxu0 0.0
    %6396 = vmatprep.subr.mxu0 0.0
    %6397 = vmatpush1.msra.mxu0 0.0
    %6398 = vmatprep.subr.mxu0 0.0
    %6399 = vmatpush1.msra.mxu0 0.0
    %6400 = vmatprep.subr.mxu0 0.0
    %6401 = vmatpush1.msra.mxu0 0.0
    %6402 = vmatprep.subr.mxu0 0.0
    %6403 = vmatpush1.msra.mxu0 0.0
    %6404 = vmatprep.subr.mxu0 0.0
    %6405 = vmatpush1.msra.mxu0 0.0
    %6406 = vmatprep.subr.mxu0 0.0
    %6407 = vmatpush1.msra.mxu0 0.0
    %6408 = vmatprep.subr.mxu0 0.0
    %6409 = vmatpush1.msra.mxu0 0.0
    %6410 = vmatprep.subr.mxu0 0.0
    %6411 = vmatpush1.msra.mxu0 0.0
    %6412 = vmatprep.subr.mxu0 0.0
    %6413 = vmatpush1.msra.mxu0 0.0
    %6414 = vmatprep.subr.mxu0 0.0
    %6415 = vmatpush1.msra.mxu0 0.0
    %6416 = vmatprep.subr.mxu0 0.0
    %6417 = vmatpush1.msra.mxu0 0.0
    %6418 = vmatprep.subr.mxu0 0.0
    %6419 = vmatpush1.msra.mxu0 0.0
    %6420 = vmatprep.subr.mxu0 0.0
    %6421 = vmatpush1.msra.mxu0 0.0
    %6422 = vmatprep.subr.mxu0 0.0
    %6423 = vmatpush1.msra.mxu0 0.0
    %6424 = vmatprep.subr.mxu0 0.0
    %6425 = vmatpush1.msra.mxu0 0.0
    %6426 = vmatprep.subr.mxu0 0.0
    %6427 = vmatpush1.msra.mxu0 0.0
    %6428 = vmatprep.subr.mxu0 0.0
    %6429 = vmatpush1.msra.mxu0 0.0
    %6430 = vmatprep.subr.mxu0 0.0
    %6431 = vmatpush1.msra.mxu0 0.0
    %6432 = vmatprep.subr.mxu0 0.0
    %6433 = vmatpush1.msra.mxu0 0.0
    %6434 = vmatprep.subr.mxu0 0.0
    %6435 = vmatpush1.msra.mxu0 0.0
    %6436 = vmatprep.subr.mxu0 0.0
    %6437 = vmatpush1.msra.mxu0 0.0
    %6438 = vmatprep.subr.mxu0 0.0
    %6439 = vmatpush1.msra.mxu0 0.0
    %6440 = vmatprep.subr.mxu0 0.0
    %6441 = vmatpush1.msra.mxu0 0.0
    %6442 = vmatprep.mubr.f32.mxu0 0.0
    %v6443 = vand.u32 %v6149, 4294901760
    %v6444 = vsub.f32 %v6149, %v6443
    %v6445 = vand.u32 %v6444, 4294901760
    %6446 = vmatmul.mubr.f32.gmra.mrb[0].mxu0 %v6445
    %v6447 = vpop.f32.mrb[0].mxu0
    %v6448 = vadd.f32 %v6374, %v6447
    %v6449 = vpop.f32.mrb[0].mxu0
    %6450 = vdwg.mxu0
    %6451 = vmatprep.subr.mxu0 0.0
    %v6452 = vand.u32 %v2401, 4294901760
    %v6453 = vsub.f32 %v2401, %v6452
    %v6454 = vand.u32 %v6453, 4294901760
    %6455 = vmatpush1.msra.mxu0 %v6454
    %6456 = vmatprep.subr.mxu0 0.0
    %6457 = vmatpush1.msra.mxu0 0.0
    %6458 = vmatprep.subr.mxu0 0.0
    %6459 = vmatpush1.msra.mxu0 0.0
    %6460 = vmatprep.subr.mxu0 0.0
    %6461 = vmatpush1.msra.mxu0 0.0
    %6462 = vmatprep.subr.mxu0 0.0
    %6463 = vmatpush1.msra.mxu0 0.0
    %6464 = vmatprep.subr.mxu0 0.0
    %6465 = vmatpush1.msra.mxu0 0.0
    %6466 = vmatprep.subr.mxu0 0.0
    %6467 = vmatpush1.msra.mxu0 0.0
    %6468 = vmatprep.subr.mxu0 0.0
    %6469 = vmatpush1.msra.mxu0 0.0
    %6470 = vmatprep.subr.mxu0 0.0
    %6471 = vmatpush1.msra.mxu0 0.0
    %6472 = vmatprep.subr.mxu0 0.0
    %6473 = vmatpush1.msra.mxu0 0.0
    %6474 = vmatprep.subr.mxu0 0.0
    %6475 = vmatpush1.msra.mxu0 0.0
    %6476 = vmatprep.subr.mxu0 0.0
    %6477 = vmatpush1.msra.mxu0 0.0
    %6478 = vmatprep.subr.mxu0 0.0
    %6479 = vmatpush1.msra.mxu0 0.0
    %6480 = vmatprep.subr.mxu0 0.0
    %6481 = vmatpush1.msra.mxu0 0.0
    %6482 = vmatprep.subr.mxu0 0.0
    %6483 = vmatpush1.msra.mxu0 0.0
    %6484 = vmatprep.subr.mxu0 0.0
    %6485 = vmatpush1.msra.mxu0 0.0
    %6486 = vmatprep.subr.mxu0 0.0
    %6487 = vmatpush1.msra.mxu0 0.0
    %6488 = vmatprep.subr.mxu0 0.0
    %6489 = vmatpush1.msra.mxu0 0.0
    %6490 = vmatprep.subr.mxu0 0.0
    %6491 = vmatpush1.msra.mxu0 0.0
    %6492 = vmatprep.subr.mxu0 0.0
    %6493 = vmatpush1.msra.mxu0 0.0
    %6494 = vmatprep.subr.mxu0 0.0
    %6495 = vmatpush1.msra.mxu0 0.0
    %6496 = vmatprep.subr.mxu0 0.0
    %6497 = vmatpush1.msra.mxu0 0.0
    %6498 = vmatprep.subr.mxu0 0.0
    %6499 = vmatpush1.msra.mxu0 0.0
    %6500 = vmatprep.subr.mxu0 0.0
    %6501 = vmatpush1.msra.mxu0 0.0
    %6502 = vmatprep.subr.mxu0 0.0
    %6503 = vmatpush1.msra.mxu0 0.0
    %6504 = vmatprep.subr.mxu0 0.0
    %6505 = vmatpush1.msra.mxu0 0.0
    %6506 = vmatprep.subr.mxu0 0.0
    %6507 = vmatpush1.msra.mxu0 0.0
    %6508 = vmatprep.subr.mxu0 0.0
    %6509 = vmatpush1.msra.mxu0 0.0
    %6510 = vmatprep.subr.mxu0 0.0
    %6511 = vmatpush1.msra.mxu0 0.0
    %6512 = vmatprep.subr.mxu0 0.0
    %6513 = vmatpush1.msra.mxu0 0.0
    %6514 = vmatprep.subr.mxu0 0.0
    %6515 = vmatpush1.msra.mxu0 0.0
    %6516 = vmatprep.subr.mxu0 0.0
    %6517 = vmatpush1.msra.mxu0 0.0
    %6518 = vmatprep.mubr.f32.mxu0 0.0
    %v6519 = vand.u32 %v6149, 4294901760
    %6520 = vmatmul.mubr.f32.gmra.mrb[0].mxu0 %v6519
    %v6521 = vpop.f32.mrb[0].mxu0
    %v6522 = vadd.f32 %v6448, %v6521
    %v6523 = vpop.f32.mrb[0].mxu0
    %6524 = vdwg.mxu0
    %6525 = vmatprep.subr.mxu0 0.0
    %v6526 = vand.u32 %v2401, 4294901760
    %6527 = vmatpush1.msra.mxu0 %v6526
    %6528 = vmatprep.subr.mxu0 0.0
    %6529 = vmatpush1.msra.mxu0 0.0
    %6530 = vmatprep.subr.mxu0 0.0
    %6531 = vmatpush1.msra.mxu0 0.0
    %6532 = vmatprep.subr.mxu0 0.0
    %6533 = vmatpush1.msra.mxu0 0.0
    %6534 = vmatprep.subr.mxu0 0.0
    %6535 = vmatpush1.msra.mxu0 0.0
    %6536 = vmatprep.subr.mxu0 0.0
    %6537 = vmatpush1.msra.mxu0 0.0
    %6538 = vmatprep.subr.mxu0 0.0
    %6539 = vmatpush1.msra.mxu0 0.0
    %6540 = vmatprep.subr.mxu0 0.0
    %6541 = vmatpush1.msra.mxu0 0.0
    %6542 = vmatprep.subr.mxu0 0.0
    %6543 = vmatpush1.msra.mxu0 0.0
    %6544 = vmatprep.subr.mxu0 0.0
    %6545 = vmatpush1.msra.mxu0 0.0
    %6546 = vmatprep.subr.mxu0 0.0
    %6547 = vmatpush1.msra.mxu0 0.0
    %6548 = vmatprep.subr.mxu0 0.0
    %6549 = vmatpush1.msra.mxu0 0.0
    %6550 = vmatprep.subr.mxu0 0.0
    %6551 = vmatpush1.msra.mxu0 0.0
    %6552 = vmatprep.subr.mxu0 0.0
    %6553 = vmatpush1.msra.mxu0 0.0
    %6554 = vmatprep.subr.mxu0 0.0
    %6555 = vmatpush1.msra.mxu0 0.0
    %6556 = vmatprep.subr.mxu0 0.0
    %6557 = vmatpush1.msra.mxu0 0.0
    %6558 = vmatprep.subr.mxu0 0.0
    %6559 = vmatpush1.msra.mxu0 0.0
    %6560 = vmatprep.subr.mxu0 0.0
    %6561 = vmatpush1.msra.mxu0 0.0
    %6562 = vmatprep.subr.mxu0 0.0
    %6563 = vmatpush1.msra.mxu0 0.0
    %6564 = vmatprep.subr.mxu0 0.0
    %6565 = vmatpush1.msra.mxu0 0.0
    %6566 = vmatprep.subr.mxu0 0.0
    %6567 = vmatpush1.msra.mxu0 0.0
    %6568 = vmatprep.subr.mxu0 0.0
    %6569 = vmatpush1.msra.mxu0 0.0
    %6570 = vmatprep.subr.mxu0 0.0
    %6571 = vmatpush1.msra.mxu0 0.0
    %6572 = vmatprep.subr.mxu0 0.0
    %6573 = vmatpush1.msra.mxu0 0.0
    %6574 = vmatprep.subr.mxu0 0.0
    %6575 = vmatpush1.msra.mxu0 0.0
    %6576 = vmatprep.subr.mxu0 0.0
    %6577 = vmatpush1.msra.mxu0 0.0
    %6578 = vmatprep.subr.mxu0 0.0
    %6579 = vmatpush1.msra.mxu0 0.0
    %6580 = vmatprep.subr.mxu0 0.0
    %6581 = vmatpush1.msra.mxu0 0.0
    %6582 = vmatprep.subr.mxu0 0.0
    %6583 = vmatpush1.msra.mxu0 0.0
    %6584 = vmatprep.subr.mxu0 0.0
    %6585 = vmatpush1.msra.mxu0 0.0
    %6586 = vmatprep.subr.mxu0 0.0
    %6587 = vmatpush1.msra.mxu0 0.0
    %6588 = vmatprep.subr.mxu0 0.0
    %6589 = vmatpush1.msra.mxu0 0.0
    %6590 = vmatprep.mubr.f32.mxu0 0.0
    %v6591 = vand.u32 %v6149, 4294901760
    %6592 = vmatmul.mubr.f32.gmra.mrb[0].mxu0 %v6591
    %v6593 = vpop.f32.mrb[0].mxu0
    %v6594 = vadd.f32 %v6522, %v6593
    %v6595 = vpop.f32.mrb[0].mxu0
    %6596 = vdwg.mxu0
    %v6598 = vsel %vm5141, %v5235, 0
    %6600 = vmatprep.subr.mxu0 0.0
    %v6601 = vand.u32 %v2426, 4294901760
    %6602 = vmatpush1.msra.mxu0 %v6601
    %6603 = vmatprep.subr.mxu0 0.0
    %6604 = vmatpush1.msra.mxu0 0.0
    %6605 = vmatprep.subr.mxu0 0.0
    %6606 = vmatpush1.msra.mxu0 0.0
    %6607 = vmatprep.subr.mxu0 0.0
    %6608 = vmatpush1.msra.mxu0 0.0
    %6609 = vmatprep.subr.mxu0 0.0
    %6610 = vmatpush1.msra.mxu0 0.0
    %6611 = vmatprep.subr.mxu0 0.0
    %6612 = vmatpush1.msra.mxu0 0.0
    %6613 = vmatprep.subr.mxu0 0.0
    %6614 = vmatpush1.msra.mxu0 0.0
    %6615 = vmatprep.subr.mxu0 0.0
    %6616 = vmatpush1.msra.mxu0 0.0
    %6617 = vmatprep.subr.mxu0 0.0
    %6618 = vmatpush1.msra.mxu0 0.0
    %6619 = vmatprep.subr.mxu0 0.0
    %6620 = vmatpush1.msra.mxu0 0.0
    %6621 = vmatprep.subr.mxu0 0.0
    %6622 = vmatpush1.msra.mxu0 0.0
    %6623 = vmatprep.subr.mxu0 0.0
    %6624 = vmatpush1.msra.mxu0 0.0
    %6625 = vmatprep.subr.mxu0 0.0
    %6626 = vmatpush1.msra.mxu0 0.0
    %6627 = vmatprep.subr.mxu0 0.0
    %6628 = vmatpush1.msra.mxu0 0.0
    %6629 = vmatprep.subr.mxu0 0.0
    %6630 = vmatpush1.msra.mxu0 0.0
    %6631 = vmatprep.subr.mxu0 0.0
    %6632 = vmatpush1.msra.mxu0 0.0
    %6633 = vmatprep.subr.mxu0 0.0
    %6634 = vmatpush1.msra.mxu0 0.0
    %6635 = vmatprep.subr.mxu0 0.0
    %6636 = vmatpush1.msra.mxu0 0.0
    %6637 = vmatprep.subr.mxu0 0.0
    %6638 = vmatpush1.msra.mxu0 0.0
    %6639 = vmatprep.subr.mxu0 0.0
    %6640 = vmatpush1.msra.mxu0 0.0
    %6641 = vmatprep.subr.mxu0 0.0
    %6642 = vmatpush1.msra.mxu0 0.0
    %6643 = vmatprep.subr.mxu0 0.0
    %6644 = vmatpush1.msra.mxu0 0.0
    %6645 = vmatprep.subr.mxu0 0.0
    %6646 = vmatpush1.msra.mxu0 0.0
    %6647 = vmatprep.subr.mxu0 0.0
    %6648 = vmatpush1.msra.mxu0 0.0
    %6649 = vmatprep.subr.mxu0 0.0
    %6650 = vmatpush1.msra.mxu0 0.0
    %6651 = vmatprep.subr.mxu0 0.0
    %6652 = vmatpush1.msra.mxu0 0.0
    %6653 = vmatprep.subr.mxu0 0.0
    %6654 = vmatpush1.msra.mxu0 0.0
    %6655 = vmatprep.subr.mxu0 0.0
    %6656 = vmatpush1.msra.mxu0 0.0
    %6657 = vmatprep.subr.mxu0 0.0
    %6658 = vmatpush1.msra.mxu0 0.0
    %6659 = vmatprep.subr.mxu0 0.0
    %6660 = vmatpush1.msra.mxu0 0.0
    %6661 = vmatprep.subr.mxu0 0.0
    %6662 = vmatpush1.msra.mxu0 0.0
    %6663 = vmatprep.subr.mxu0 0.0
    %6664 = vmatpush1.msra.mxu0 0.0
    %6665 = vmatprep.mubr.f32.mxu0 0.0
    %v6666 = vand.u32 %v6598, 4294901760
    %v6667 = vsub.f32 %v6598, %v6666
    %v6668 = vand.u32 %v6667, 4294901760
    %v6669 = vsub.f32 %v6667, %v6668
    %v6670 = vand.u32 %v6669, 4294901760
    %6671 = vmatmul.mubr.f32.gmra.mrb[0].mxu0 %v6670
    %v6672 = vpop.f32.mrb[0].mxu0
    %v6673 = vadd.f32 0.0, %v6672
    %v6674 = vpop.f32.mrb[0].mxu0
    %6675 = vdwg.mxu0
    %6676 = vmatprep.subr.mxu0 0.0
    %v6677 = vand.u32 %v2426, 4294901760
    %v6678 = vsub.f32 %v2426, %v6677
    %v6679 = vand.u32 %v6678, 4294901760
    %v6680 = vsub.f32 %v6678, %v6679
    %v6681 = vand.u32 %v6680, 4294901760
    %6682 = vmatpush1.msra.mxu0 %v6681
    %6683 = vmatprep.subr.mxu0 0.0
    %6684 = vmatpush1.msra.mxu0 0.0
    %6685 = vmatprep.subr.mxu0 0.0
    %6686 = vmatpush1.msra.mxu0 0.0
    %6687 = vmatprep.subr.mxu0 0.0
    %6688 = vmatpush1.msra.mxu0 0.0
    %6689 = vmatprep.subr.mxu0 0.0
    %6690 = vmatpush1.msra.mxu0 0.0
    %6691 = vmatprep.subr.mxu0 0.0
    %6692 = vmatpush1.msra.mxu0 0.0
    %6693 = vmatprep.subr.mxu0 0.0
    %6694 = vmatpush1.msra.mxu0 0.0
    %6695 = vmatprep.subr.mxu0 0.0
    %6696 = vmatpush1.msra.mxu0 0.0
    %6697 = vmatprep.subr.mxu0 0.0
    %6698 = vmatpush1.msra.mxu0 0.0
    %6699 = vmatprep.subr.mxu0 0.0
    %6700 = vmatpush1.msra.mxu0 0.0
    %6701 = vmatprep.subr.mxu0 0.0
    %6702 = vmatpush1.msra.mxu0 0.0
    %6703 = vmatprep.subr.mxu0 0.0
    %6704 = vmatpush1.msra.mxu0 0.0
    %6705 = vmatprep.subr.mxu0 0.0
    %6706 = vmatpush1.msra.mxu0 0.0
    %6707 = vmatprep.subr.mxu0 0.0
    %6708 = vmatpush1.msra.mxu0 0.0
    %6709 = vmatprep.subr.mxu0 0.0
    %6710 = vmatpush1.msra.mxu0 0.0
    %6711 = vmatprep.subr.mxu0 0.0
    %6712 = vmatpush1.msra.mxu0 0.0
    %6713 = vmatprep.subr.mxu0 0.0
    %6714 = vmatpush1.msra.mxu0 0.0
    %6715 = vmatprep.subr.mxu0 0.0
    %6716 = vmatpush1.msra.mxu0 0.0
    %6717 = vmatprep.subr.mxu0 0.0
    %6718 = vmatpush1.msra.mxu0 0.0
    %6719 = vmatprep.subr.mxu0 0.0
    %6720 = vmatpush1.msra.mxu0 0.0
    %6721 = vmatprep.subr.mxu0 0.0
    %6722 = vmatpush1.msra.mxu0 0.0
    %6723 = vmatprep.subr.mxu0 0.0
    %6724 = vmatpush1.msra.mxu0 0.0
    %6725 = vmatprep.subr.mxu0 0.0
    %6726 = vmatpush1.msra.mxu0 0.0
    %6727 = vmatprep.subr.mxu0 0.0
    %6728 = vmatpush1.msra.mxu0 0.0
    %6729 = vmatprep.subr.mxu0 0.0
    %6730 = vmatpush1.msra.mxu0 0.0
    %6731 = vmatprep.subr.mxu0 0.0
    %6732 = vmatpush1.msra.mxu0 0.0
    %6733 = vmatprep.subr.mxu0 0.0
    %6734 = vmatpush1.msra.mxu0 0.0
    %6735 = vmatprep.subr.mxu0 0.0
    %6736 = vmatpush1.msra.mxu0 0.0
    %6737 = vmatprep.subr.mxu0 0.0
    %6738 = vmatpush1.msra.mxu0 0.0
    %6739 = vmatprep.subr.mxu0 0.0
    %6740 = vmatpush1.msra.mxu0 0.0
    %6741 = vmatprep.subr.mxu0 0.0
    %6742 = vmatpush1.msra.mxu0 0.0
    %6743 = vmatprep.subr.mxu0 0.0
    %6744 = vmatpush1.msra.mxu0 0.0
    %6745 = vmatprep.mubr.f32.mxu0 0.0
    %v6746 = vand.u32 %v6598, 4294901760
    %6747 = vmatmul.mubr.f32.gmra.mrb[0].mxu0 %v6746
    %v6748 = vpop.f32.mrb[0].mxu0
    %v6749 = vadd.f32 %v6673, %v6748
    %v6750 = vpop.f32.mrb[0].mxu0
    %6751 = vdwg.mxu0
    %6752 = vmatprep.subr.mxu0 0.0
    %v6753 = vand.u32 %v2426, 4294901760
    %v6754 = vsub.f32 %v2426, %v6753
    %6755 = vmatpush1.msra.mxu0 %v6754
    %6756 = vmatprep.subr.mxu0 0.0
    %6757 = vmatpush1.msra.mxu0 0.0
    %6758 = vmatprep.subr.mxu0 0.0
    %6759 = vmatpush1.msra.mxu0 0.0
    %6760 = vmatprep.subr.mxu0 0.0
    %6761 = vmatpush1.msra.mxu0 0.0
    %6762 = vmatprep.subr.mxu0 0.0
    %6763 = vmatpush1.msra.mxu0 0.0
    %6764 = vmatprep.subr.mxu0 0.0
    %6765 = vmatpush1.msra.mxu0 0.0
    %6766 = vmatprep.subr.mxu0 0.0
    %6767 = vmatpush1.msra.mxu0 0.0
    %6768 = vmatprep.subr.mxu0 0.0
    %6769 = vmatpush1.msra.mxu0 0.0
    %6770 = vmatprep.subr.mxu0 0.0
    %6771 = vmatpush1.msra.mxu0 0.0
    %6772 = vmatprep.subr.mxu0 0.0
    %6773 = vmatpush1.msra.mxu0 0.0
    %6774 = vmatprep.subr.mxu0 0.0
    %6775 = vmatpush1.msra.mxu0 0.0
    %6776 = vmatprep.subr.mxu0 0.0
    %6777 = vmatpush1.msra.mxu0 0.0
    %6778 = vmatprep.subr.mxu0 0.0
    %6779 = vmatpush1.msra.mxu0 0.0
    %6780 = vmatprep.subr.mxu0 0.0
    %6781 = vmatpush1.msra.mxu0 0.0
    %6782 = vmatprep.subr.mxu0 0.0
    %6783 = vmatpush1.msra.mxu0 0.0
    %6784 = vmatprep.subr.mxu0 0.0
    %6785 = vmatpush1.msra.mxu0 0.0
    %6786 = vmatprep.subr.mxu0 0.0
    %6787 = vmatpush1.msra.mxu0 0.0
    %6788 = vmatprep.subr.mxu0 0.0
    %6789 = vmatpush1.msra.mxu0 0.0
    %6790 = vmatprep.subr.mxu0 0.0
    %6791 = vmatpush1.msra.mxu0 0.0
    %6792 = vmatprep.subr.mxu0 0.0
    %6793 = vmatpush1.msra.mxu0 0.0
    %6794 = vmatprep.subr.mxu0 0.0
    %6795 = vmatpush1.msra.mxu0 0.0
    %6796 = vmatprep.subr.mxu0 0.0
    %6797 = vmatpush1.msra.mxu0 0.0
    %6798 = vmatprep.subr.mxu0 0.0
    %6799 = vmatpush1.msra.mxu0 0.0
    %6800 = vmatprep.subr.mxu0 0.0
    %6801 = vmatpush1.msra.mxu0 0.0
    %6802 = vmatprep.subr.mxu0 0.0
    %6803 = vmatpush1.msra.mxu0 0.0
    %6804 = vmatprep.subr.mxu0 0.0
    %6805 = vmatpush1.msra.mxu0 0.0
    %6806 = vmatprep.subr.mxu0 0.0
    %6807 = vmatpush1.msra.mxu0 0.0
    %6808 = vmatprep.subr.mxu0 0.0
    %6809 = vmatpush1.msra.mxu0 0.0
    %6810 = vmatprep.subr.mxu0 0.0
    %6811 = vmatpush1.msra.mxu0 0.0
    %6812 = vmatprep.subr.mxu0 0.0
    %6813 = vmatpush1.msra.mxu0 0.0
    %6814 = vmatprep.subr.mxu0 0.0
    %6815 = vmatpush1.msra.mxu0 0.0
    %6816 = vmatprep.subr.mxu0 0.0
    %6817 = vmatpush1.msra.mxu0 0.0
    %6818 = vmatprep.mubr.f32.mxu0 0.0
    %v6819 = vand.u32 %v6598, 4294901760
    %v6820 = vsub.f32 %v6598, %v6819
    %6821 = vmatmul.mubr.f32.gmra.mrb[0].mxu0 %v6820
    %v6822 = vpop.f32.mrb[0].mxu0
    %v6823 = vadd.f32 %v6749, %v6822
    %v6824 = vpop.f32.mrb[0].mxu0
    %6825 = vdwg.mxu0
    %6826 = vmatprep.subr.mxu0 0.0
    %v6827 = vand.u32 %v2426, 4294901760
    %6828 = vmatpush1.msra.mxu0 %v6827
    %6829 = vmatprep.subr.mxu0 0.0
    %6830 = vmatpush1.msra.mxu0 0.0
    %6831 = vmatprep.subr.mxu0 0.0
    %6832 = vmatpush1.msra.mxu0 0.0
    %6833 = vmatprep.subr.mxu0 0.0
    %6834 = vmatpush1.msra.mxu0 0.0
    %6835 = vmatprep.subr.mxu0 0.0
    %6836 = vmatpush1.msra.mxu0 0.0
    %6837 = vmatprep.subr.mxu0 0.0
    %6838 = vmatpush1.msra.mxu0 0.0
    %6839 = vmatprep.subr.mxu0 0.0
    %6840 = vmatpush1.msra.mxu0 0.0
    %6841 = vmatprep.subr.mxu0 0.0
    %6842 = vmatpush1.msra.mxu0 0.0
    %6843 = vmatprep.subr.mxu0 0.0
    %6844 = vmatpush1.msra.mxu0 0.0
    %6845 = vmatprep.subr.mxu0 0.0
    %6846 = vmatpush1.msra.mxu0 0.0
    %6847 = vmatprep.subr.mxu0 0.0
    %6848 = vmatpush1.msra.mxu0 0.0
    %6849 = vmatprep.subr.mxu0 0.0
    %6850 = vmatpush1.msra.mxu0 0.0
    %6851 = vmatprep.subr.mxu0 0.0
    %6852 = vmatpush1.msra.mxu0 0.0
    %6853 = vmatprep.subr.mxu0 0.0
    %6854 = vmatpush1.msra.mxu0 0.0
    %6855 = vmatprep.subr.mxu0 0.0
    %6856 = vmatpush1.msra.mxu0 0.0
    %6857 = vmatprep.subr.mxu0 0.0
    %6858 = vmatpush1.msra.mxu0 0.0
    %6859 = vmatprep.subr.mxu0 0.0
    %6860 = vmatpush1.msra.mxu0 0.0
    %6861 = vmatprep.subr.mxu0 0.0
    %6862 = vmatpush1.msra.mxu0 0.0
    %6863 = vmatprep.subr.mxu0 0.0
    %6864 = vmatpush1.msra.mxu0 0.0
    %6865 = vmatprep.subr.mxu0 0.0
    %6866 = vmatpush1.msra.mxu0 0.0
    %6867 = vmatprep.subr.mxu0 0.0
    %6868 = vmatpush1.msra.mxu0 0.0
    %6869 = vmatprep.subr.mxu0 0.0
    %6870 = vmatpush1.msra.mxu0 0.0
    %6871 = vmatprep.subr.mxu0 0.0
    %6872 = vmatpush1.msra.mxu0 0.0
    %6873 = vmatprep.subr.mxu0 0.0
    %6874 = vmatpush1.msra.mxu0 0.0
    %6875 = vmatprep.subr.mxu0 0.0
    %6876 = vmatpush1.msra.mxu0 0.0
    %6877 = vmatprep.subr.mxu0 0.0
    %6878 = vmatpush1.msra.mxu0 0.0
    %6879 = vmatprep.subr.mxu0 0.0
    %6880 = vmatpush1.msra.mxu0 0.0
    %6881 = vmatprep.subr.mxu0 0.0
    %6882 = vmatpush1.msra.mxu0 0.0
    %6883 = vmatprep.subr.mxu0 0.0
    %6884 = vmatpush1.msra.mxu0 0.0
    %6885 = vmatprep.subr.mxu0 0.0
    %6886 = vmatpush1.msra.mxu0 0.0
    %6887 = vmatprep.subr.mxu0 0.0
    %6888 = vmatpush1.msra.mxu0 0.0
    %6889 = vmatprep.subr.mxu0 0.0
    %6890 = vmatpush1.msra.mxu0 0.0
    %6891 = vmatprep.mubr.f32.mxu0 0.0
    %v6892 = vand.u32 %v6598, 4294901760
    %v6893 = vsub.f32 %v6598, %v6892
    %v6894 = vand.u32 %v6893, 4294901760
    %6895 = vmatmul.mubr.f32.gmra.mrb[0].mxu0 %v6894
    %v6896 = vpop.f32.mrb[0].mxu0
    %v6897 = vadd.f32 %v6823, %v6896
    %v6898 = vpop.f32.mrb[0].mxu0
    %6899 = vdwg.mxu0
    %6900 = vmatprep.subr.mxu0 0.0
    %v6901 = vand.u32 %v2426, 4294901760
    %v6902 = vsub.f32 %v2426, %v6901
    %v6903 = vand.u32 %v6902, 4294901760
    %6904 = vmatpush1.msra.mxu0 %v6903
    %6905 = vmatprep.subr.mxu0 0.0
    %6906 = vmatpush1.msra.mxu0 0.0
    %6907 = vmatprep.subr.mxu0 0.0
    %6908 = vmatpush1.msra.mxu0 0.0
    %6909 = vmatprep.subr.mxu0 0.0
    %6910 = vmatpush1.msra.mxu0 0.0
    %6911 = vmatprep.subr.mxu0 0.0
    %6912 = vmatpush1.msra.mxu0 0.0
    %6913 = vmatprep.subr.mxu0 0.0
    %6914 = vmatpush1.msra.mxu0 0.0
    %6915 = vmatprep.subr.mxu0 0.0
    %6916 = vmatpush1.msra.mxu0 0.0
    %6917 = vmatprep.subr.mxu0 0.0
    %6918 = vmatpush1.msra.mxu0 0.0
    %6919 = vmatprep.subr.mxu0 0.0
    %6920 = vmatpush1.msra.mxu0 0.0
    %6921 = vmatprep.subr.mxu0 0.0
    %6922 = vmatpush1.msra.mxu0 0.0
    %6923 = vmatprep.subr.mxu0 0.0
    %6924 = vmatpush1.msra.mxu0 0.0
    %6925 = vmatprep.subr.mxu0 0.0
    %6926 = vmatpush1.msra.mxu0 0.0
    %6927 = vmatprep.subr.mxu0 0.0
    %6928 = vmatpush1.msra.mxu0 0.0
    %6929 = vmatprep.subr.mxu0 0.0
    %6930 = vmatpush1.msra.mxu0 0.0
    %6931 = vmatprep.subr.mxu0 0.0
    %6932 = vmatpush1.msra.mxu0 0.0
    %6933 = vmatprep.subr.mxu0 0.0
    %6934 = vmatpush1.msra.mxu0 0.0
    %6935 = vmatprep.subr.mxu0 0.0
    %6936 = vmatpush1.msra.mxu0 0.0
    %6937 = vmatprep.subr.mxu0 0.0
    %6938 = vmatpush1.msra.mxu0 0.0
    %6939 = vmatprep.subr.mxu0 0.0
    %6940 = vmatpush1.msra.mxu0 0.0
    %6941 = vmatprep.subr.mxu0 0.0
    %6942 = vmatpush1.msra.mxu0 0.0
    %6943 = vmatprep.subr.mxu0 0.0
    %6944 = vmatpush1.msra.mxu0 0.0
    %6945 = vmatprep.subr.mxu0 0.0
    %6946 = vmatpush1.msra.mxu0 0.0
    %6947 = vmatprep.subr.mxu0 0.0
    %6948 = vmatpush1.msra.mxu0 0.0
    %6949 = vmatprep.subr.mxu0 0.0
    %6950 = vmatpush1.msra.mxu0 0.0
    %6951 = vmatprep.subr.mxu0 0.0
    %6952 = vmatpush1.msra.mxu0 0.0
    %6953 = vmatprep.subr.mxu0 0.0
    %6954 = vmatpush1.msra.mxu0 0.0
    %6955 = vmatprep.subr.mxu0 0.0
    %6956 = vmatpush1.msra.mxu0 0.0
    %6957 = vmatprep.subr.mxu0 0.0
    %6958 = vmatpush1.msra.mxu0 0.0
    %6959 = vmatprep.subr.mxu0 0.0
    %6960 = vmatpush1.msra.mxu0 0.0
    %6961 = vmatprep.subr.mxu0 0.0
    %6962 = vmatpush1.msra.mxu0 0.0
    %6963 = vmatprep.subr.mxu0 0.0
    %6964 = vmatpush1.msra.mxu0 0.0
    %6965 = vmatprep.subr.mxu0 0.0
    %6966 = vmatpush1.msra.mxu0 0.0
    %6967 = vmatprep.mubr.f32.mxu0 0.0
    %v6968 = vand.u32 %v6598, 4294901760
    %6969 = vmatmul.mubr.f32.gmra.mrb[0].mxu0 %v6968
    %v6970 = vpop.f32.mrb[0].mxu0
    %v6971 = vadd.f32 %v6897, %v6970
    %v6972 = vpop.f32.mrb[0].mxu0
    %6973 = vdwg.mxu0
    %6974 = vmatprep.subr.mxu0 0.0
    %v6975 = vand.u32 %v2426, 4294901760
    %6976 = vmatpush1.msra.mxu0 %v6975
    %6977 = vmatprep.subr.mxu0 0.0
    %6978 = vmatpush1.msra.mxu0 0.0
    %6979 = vmatprep.subr.mxu0 0.0
    %6980 = vmatpush1.msra.mxu0 0.0
    %6981 = vmatprep.subr.mxu0 0.0
    %6982 = vmatpush1.msra.mxu0 0.0
    %6983 = vmatprep.subr.mxu0 0.0
    %6984 = vmatpush1.msra.mxu0 0.0
    %6985 = vmatprep.subr.mxu0 0.0
    %6986 = vmatpush1.msra.mxu0 0.0
    %6987 = vmatprep.subr.mxu0 0.0
    %6988 = vmatpush1.msra.mxu0 0.0
    %6989 = vmatprep.subr.mxu0 0.0
    %6990 = vmatpush1.msra.mxu0 0.0
    %6991 = vmatprep.subr.mxu0 0.0
    %6992 = vmatpush1.msra.mxu0 0.0
    %6993 = vmatprep.subr.mxu0 0.0
    %6994 = vmatpush1.msra.mxu0 0.0
    %6995 = vmatprep.subr.mxu0 0.0
    %6996 = vmatpush1.msra.mxu0 0.0
    %6997 = vmatprep.subr.mxu0 0.0
    %6998 = vmatpush1.msra.mxu0 0.0
    %6999 = vmatprep.subr.mxu0 0.0
    %7000 = vmatpush1.msra.mxu0 0.0
    %7001 = vmatprep.subr.mxu0 0.0
    %7002 = vmatpush1.msra.mxu0 0.0
    %7003 = vmatprep.subr.mxu0 0.0
    %7004 = vmatpush1.msra.mxu0 0.0
    %7005 = vmatprep.subr.mxu0 0.0
    %7006 = vmatpush1.msra.mxu0 0.0
    %7007 = vmatprep.subr.mxu0 0.0
    %7008 = vmatpush1.msra.mxu0 0.0
    %7009 = vmatprep.subr.mxu0 0.0
    %7010 = vmatpush1.msra.mxu0 0.0
    %7011 = vmatprep.subr.mxu0 0.0
    %7012 = vmatpush1.msra.mxu0 0.0
    %7013 = vmatprep.subr.mxu0 0.0
    %7014 = vmatpush1.msra.mxu0 0.0
    %7015 = vmatprep.subr.mxu0 0.0
    %7016 = vmatpush1.msra.mxu0 0.0
    %7017 = vmatprep.subr.mxu0 0.0
    %7018 = vmatpush1.msra.mxu0 0.0
    %7019 = vmatprep.subr.mxu0 0.0
    %7020 = vmatpush1.msra.mxu0 0.0
    %7021 = vmatprep.subr.mxu0 0.0
    %7022 = vmatpush1.msra.mxu0 0.0
    %7023 = vmatprep.subr.mxu0 0.0
    %7024 = vmatpush1.msra.mxu0 0.0
    %7025 = vmatprep.subr.mxu0 0.0
    %7026 = vmatpush1.msra.mxu0 0.0
    %7027 = vmatprep.subr.mxu0 0.0
    %7028 = vmatpush1.msra.mxu0 0.0
    %7029 = vmatprep.subr.mxu0 0.0
    %7030 = vmatpush1.msra.mxu0 0.0
    %7031 = vmatprep.subr.mxu0 0.0
    %7032 = vmatpush1.msra.mxu0 0.0
    %7033 = vmatprep.subr.mxu0 0.0
    %7034 = vmatpush1.msra.mxu0 0.0
    %7035 = vmatprep.subr.mxu0 0.0
    %7036 = vmatpush1.msra.mxu0 0.0
    %7037 = vmatprep.subr.mxu0 0.0
    %7038 = vmatpush1.msra.mxu0 0.0
    %7039 = vmatprep.mubr.f32.mxu0 0.0
    %v7040 = vand.u32 %v6598, 4294901760
    %7041 = vmatmul.mubr.f32.gmra.mrb[0].mxu0 %v7040
    %v7042 = vpop.f32.mrb[0].mxu0
    %v7043 = vadd.f32 %v6971, %v7042
    %v7044 = vpop.f32.mrb[0].mxu0
    %7045 = vdwg.mxu0
    %v7047 = vsel %vm5141, %v5242, 0
    %7049 = vmatprep.subr.mxu0 0.0
    %v7050 = vand.u32 %v2428, 4294901760
    %7051 = vmatpush1.msra.mxu0 %v7050
    %7052 = vmatprep.subr.mxu0 0.0
    %7053 = vmatpush1.msra.mxu0 0.0
    %7054 = vmatprep.subr.mxu0 0.0
    %7055 = vmatpush1.msra.mxu0 0.0
    %7056 = vmatprep.subr.mxu0 0.0
    %7057 = vmatpush1.msra.mxu0 0.0
    %7058 = vmatprep.subr.mxu0 0.0
    %7059 = vmatpush1.msra.mxu0 0.0
    %7060 = vmatprep.subr.mxu0 0.0
    %7061 = vmatpush1.msra.mxu0 0.0
    %7062 = vmatprep.subr.mxu0 0.0
    %7063 = vmatpush1.msra.mxu0 0.0
    %7064 = vmatprep.subr.mxu0 0.0
    %7065 = vmatpush1.msra.mxu0 0.0
    %7066 = vmatprep.subr.mxu0 0.0
    %7067 = vmatpush1.msra.mxu0 0.0
    %7068 = vmatprep.subr.mxu0 0.0
    %7069 = vmatpush1.msra.mxu0 0.0
    %7070 = vmatprep.subr.mxu0 0.0
    %7071 = vmatpush1.msra.mxu0 0.0
    %7072 = vmatprep.subr.mxu0 0.0
    %7073 = vmatpush1.msra.mxu0 0.0
    %7074 = vmatprep.subr.mxu0 0.0
    %7075 = vmatpush1.msra.mxu0 0.0
    %7076 = vmatprep.subr.mxu0 0.0
    %7077 = vmatpush1.msra.mxu0 0.0
    %7078 = vmatprep.subr.mxu0 0.0
    %7079 = vmatpush1.msra.mxu0 0.0
    %7080 = vmatprep.subr.mxu0 0.0
    %7081 = vmatpush1.msra.mxu0 0.0
    %7082 = vmatprep.subr.mxu0 0.0
    %7083 = vmatpush1.msra.mxu0 0.0
    %7084 = vmatprep.subr.mxu0 0.0
    %7085 = vmatpush1.msra.mxu0 0.0
    %7086 = vmatprep.subr.mxu0 0.0
    %7087 = vmatpush1.msra.mxu0 0.0
    %7088 = vmatprep.subr.mxu0 0.0
    %7089 = vmatpush1.msra.mxu0 0.0
    %7090 = vmatprep.subr.mxu0 0.0
    %7091 = vmatpush1.msra.mxu0 0.0
    %7092 = vmatprep.subr.mxu0 0.0
    %7093 = vmatpush1.msra.mxu0 0.0
    %7094 = vmatprep.subr.mxu0 0.0
    %7095 = vmatpush1.msra.mxu0 0.0
    %7096 = vmatprep.subr.mxu0 0.0
    %7097 = vmatpush1.msra.mxu0 0.0
    %7098 = vmatprep.subr.mxu0 0.0
    %7099 = vmatpush1.msra.mxu0 0.0
    %7100 = vmatprep.subr.mxu0 0.0
    %7101 = vmatpush1.msra.mxu0 0.0
    %7102 = vmatprep.subr.mxu0 0.0
    %7103 = vmatpush1.msra.mxu0 0.0
    %7104 = vmatprep.subr.mxu0 0.0
    %7105 = vmatpush1.msra.mxu0 0.0
    %7106 = vmatprep.subr.mxu0 0.0
    %7107 = vmatpush1.msra.mxu0 0.0
    %7108 = vmatprep.subr.mxu0 0.0
    %7109 = vmatpush1.msra.mxu0 0.0
    %7110 = vmatprep.subr.mxu0 0.0
    %7111 = vmatpush1.msra.mxu0 0.0
    %7112 = vmatprep.subr.mxu0 0.0
    %7113 = vmatpush1.msra.mxu0 0.0
    %7114 = vmatprep.mubr.f32.mxu0 0.0
    %v7115 = vand.u32 %v7047, 4294901760
    %v7116 = vsub.f32 %v7047, %v7115
    %v7117 = vand.u32 %v7116, 4294901760
    %v7118 = vsub.f32 %v7116, %v7117
    %v7119 = vand.u32 %v7118, 4294901760
    %7120 = vmatmul.mubr.f32.gmra.mrb[0].mxu0 %v7119
    %v7121 = vpop.f32.mrb[0].mxu0
    %v7122 = vadd.f32 0.0, %v7121
    %v7123 = vpop.f32.mrb[0].mxu0
    %7124 = vdwg.mxu0
    %7125 = vmatprep.subr.mxu0 0.0
    %v7126 = vand.u32 %v2428, 4294901760
    %v7127 = vsub.f32 %v2428, %v7126
    %v7128 = vand.u32 %v7127, 4294901760
    %v7129 = vsub.f32 %v7127, %v7128
    %v7130 = vand.u32 %v7129, 4294901760
    %7131 = vmatpush1.msra.mxu0 %v7130
    %7132 = vmatprep.subr.mxu0 0.0
    %7133 = vmatpush1.msra.mxu0 0.0
    %7134 = vmatprep.subr.mxu0 0.0
    %7135 = vmatpush1.msra.mxu0 0.0
    %7136 = vmatprep.subr.mxu0 0.0
    %7137 = vmatpush1.msra.mxu0 0.0
    %7138 = vmatprep.subr.mxu0 0.0
    %7139 = vmatpush1.msra.mxu0 0.0
    %7140 = vmatprep.subr.mxu0 0.0
    %7141 = vmatpush1.msra.mxu0 0.0
    %7142 = vmatprep.subr.mxu0 0.0
    %7143 = vmatpush1.msra.mxu0 0.0
    %7144 = vmatprep.subr.mxu0 0.0
    %7145 = vmatpush1.msra.mxu0 0.0
    %7146 = vmatprep.subr.mxu0 0.0
    %7147 = vmatpush1.msra.mxu0 0.0
    %7148 = vmatprep.subr.mxu0 0.0
    %7149 = vmatpush1.msra.mxu0 0.0
    %7150 = vmatprep.subr.mxu0 0.0
    %7151 = vmatpush1.msra.mxu0 0.0
    %7152 = vmatprep.subr.mxu0 0.0
    %7153 = vmatpush1.msra.mxu0 0.0
    %7154 = vmatprep.subr.mxu0 0.0
    %7155 = vmatpush1.msra.mxu0 0.0
    %7156 = vmatprep.subr.mxu0 0.0
    %7157 = vmatpush1.msra.mxu0 0.0
    %7158 = vmatprep.subr.mxu0 0.0
    %7159 = vmatpush1.msra.mxu0 0.0
    %7160 = vmatprep.subr.mxu0 0.0
    %7161 = vmatpush1.msra.mxu0 0.0
    %7162 = vmatprep.subr.mxu0 0.0
    %7163 = vmatpush1.msra.mxu0 0.0
    %7164 = vmatprep.subr.mxu0 0.0
    %7165 = vmatpush1.msra.mxu0 0.0
    %7166 = vmatprep.subr.mxu0 0.0
    %7167 = vmatpush1.msra.mxu0 0.0
    %7168 = vmatprep.subr.mxu0 0.0
    %7169 = vmatpush1.msra.mxu0 0.0
    %7170 = vmatprep.subr.mxu0 0.0
    %7171 = vmatpush1.msra.mxu0 0.0
    %7172 = vmatprep.subr.mxu0 0.0
    %7173 = vmatpush1.msra.mxu0 0.0
    %7174 = vmatprep.subr.mxu0 0.0
    %7175 = vmatpush1.msra.mxu0 0.0
    %7176 = vmatprep.subr.mxu0 0.0
    %7177 = vmatpush1.msra.mxu0 0.0
    %7178 = vmatprep.subr.mxu0 0.0
    %7179 = vmatpush1.msra.mxu0 0.0
    %7180 = vmatprep.subr.mxu0 0.0
    %7181 = vmatpush1.msra.mxu0 0.0
    %7182 = vmatprep.subr.mxu0 0.0
    %7183 = vmatpush1.msra.mxu0 0.0
    %7184 = vmatprep.subr.mxu0 0.0
    %7185 = vmatpush1.msra.mxu0 0.0
    %7186 = vmatprep.subr.mxu0 0.0
    %7187 = vmatpush1.msra.mxu0 0.0
    %7188 = vmatprep.subr.mxu0 0.0
    %7189 = vmatpush1.msra.mxu0 0.0
    %7190 = vmatprep.subr.mxu0 0.0
    %7191 = vmatpush1.msra.mxu0 0.0
    %7192 = vmatprep.subr.mxu0 0.0
    %7193 = vmatpush1.msra.mxu0 0.0
    %7194 = vmatprep.mubr.f32.mxu0 0.0
    %v7195 = vand.u32 %v7047, 4294901760
    %7196 = vmatmul.mubr.f32.gmra.mrb[0].mxu0 %v7195
    %v7197 = vpop.f32.mrb[0].mxu0
    %v7198 = vadd.f32 %v7122, %v7197
    %v7199 = vpop.f32.mrb[0].mxu0
    %7200 = vdwg.mxu0
    %7201 = vmatprep.subr.mxu0 0.0
    %v7202 = vand.u32 %v2428, 4294901760
    %v7203 = vsub.f32 %v2428, %v7202
    %7204 = vmatpush1.msra.mxu0 %v7203
    %7205 = vmatprep.subr.mxu0 0.0
    %7206 = vmatpush1.msra.mxu0 0.0
    %7207 = vmatprep.subr.mxu0 0.0
    %7208 = vmatpush1.msra.mxu0 0.0
    %7209 = vmatprep.subr.mxu0 0.0
    %7210 = vmatpush1.msra.mxu0 0.0
    %7211 = vmatprep.subr.mxu0 0.0
    %7212 = vmatpush1.msra.mxu0 0.0
    %7213 = vmatprep.subr.mxu0 0.0
    %7214 = vmatpush1.msra.mxu0 0.0
    %7215 = vmatprep.subr.mxu0 0.0
    %7216 = vmatpush1.msra.mxu0 0.0
    %7217 = vmatprep.subr.mxu0 0.0
    %7218 = vmatpush1.msra.mxu0 0.0
    %7219 = vmatprep.subr.mxu0 0.0
    %7220 = vmatpush1.msra.mxu0 0.0
    %7221 = vmatprep.subr.mxu0 0.0
    %7222 = vmatpush1.msra.mxu0 0.0
    %7223 = vmatprep.subr.mxu0 0.0
    %7224 = vmatpush1.msra.mxu0 0.0
    %7225 = vmatprep.subr.mxu0 0.0
    %7226 = vmatpush1.msra.mxu0 0.0
    %7227 = vmatprep.subr.mxu0 0.0
    %7228 = vmatpush1.msra.mxu0 0.0
    %7229 = vmatprep.subr.mxu0 0.0
    %7230 = vmatpush1.msra.mxu0 0.0
    %7231 = vmatprep.subr.mxu0 0.0
    %7232 = vmatpush1.msra.mxu0 0.0
    %7233 = vmatprep.subr.mxu0 0.0
    %7234 = vmatpush1.msra.mxu0 0.0
    %7235 = vmatprep.subr.mxu0 0.0
    %7236 = vmatpush1.msra.mxu0 0.0
    %7237 = vmatprep.subr.mxu0 0.0
    %7238 = vmatpush1.msra.mxu0 0.0
    %7239 = vmatprep.subr.mxu0 0.0
    %7240 = vmatpush1.msra.mxu0 0.0
    %7241 = vmatprep.subr.mxu0 0.0
    %7242 = vmatpush1.msra.mxu0 0.0
    %7243 = vmatprep.subr.mxu0 0.0
    %7244 = vmatpush1.msra.mxu0 0.0
    %7245 = vmatprep.subr.mxu0 0.0
    %7246 = vmatpush1.msra.mxu0 0.0
    %7247 = vmatprep.subr.mxu0 0.0
    %7248 = vmatpush1.msra.mxu0 0.0
    %7249 = vmatprep.subr.mxu0 0.0
    %7250 = vmatpush1.msra.mxu0 0.0
    %7251 = vmatprep.subr.mxu0 0.0
    %7252 = vmatpush1.msra.mxu0 0.0
    %7253 = vmatprep.subr.mxu0 0.0
    %7254 = vmatpush1.msra.mxu0 0.0
    %7255 = vmatprep.subr.mxu0 0.0
    %7256 = vmatpush1.msra.mxu0 0.0
    %7257 = vmatprep.subr.mxu0 0.0
    %7258 = vmatpush1.msra.mxu0 0.0
    %7259 = vmatprep.subr.mxu0 0.0
    %7260 = vmatpush1.msra.mxu0 0.0
    %7261 = vmatprep.subr.mxu0 0.0
    %7262 = vmatpush1.msra.mxu0 0.0
    %7263 = vmatprep.subr.mxu0 0.0
    %7264 = vmatpush1.msra.mxu0 0.0
    %7265 = vmatprep.subr.mxu0 0.0
    %7266 = vmatpush1.msra.mxu0 0.0
    %7267 = vmatprep.mubr.f32.mxu0 0.0
    %v7268 = vand.u32 %v7047, 4294901760
    %v7269 = vsub.f32 %v7047, %v7268
    %7270 = vmatmul.mubr.f32.gmra.mrb[0].mxu0 %v7269
    %v7271 = vpop.f32.mrb[0].mxu0
    %v7272 = vadd.f32 %v7198, %v7271
    %v7273 = vpop.f32.mrb[0].mxu0
    %7274 = vdwg.mxu0
    %7275 = vmatprep.subr.mxu0 0.0
    %v7276 = vand.u32 %v2428, 4294901760
    %7277 = vmatpush1.msra.mxu0 %v7276
    %7278 = vmatprep.subr.mxu0 0.0
    %7279 = vmatpush1.msra.mxu0 0.0
    %7280 = vmatprep.subr.mxu0 0.0
    %7281 = vmatpush1.msra.mxu0 0.0
    %7282 = vmatprep.subr.mxu0 0.0
    %7283 = vmatpush1.msra.mxu0 0.0
    %7284 = vmatprep.subr.mxu0 0.0
    %7285 = vmatpush1.msra.mxu0 0.0
    %7286 = vmatprep.subr.mxu0 0.0
    %7287 = vmatpush1.msra.mxu0 0.0
    %7288 = vmatprep.subr.mxu0 0.0
    %7289 = vmatpush1.msra.mxu0 0.0
    %7290 = vmatprep.subr.mxu0 0.0
    %7291 = vmatpush1.msra.mxu0 0.0
    %7292 = vmatprep.subr.mxu0 0.0
    %7293 = vmatpush1.msra.mxu0 0.0
    %7294 = vmatprep.subr.mxu0 0.0
    %7295 = vmatpush1.msra.mxu0 0.0
    %7296 = vmatprep.subr.mxu0 0.0
    %7297 = vmatpush1.msra.mxu0 0.0
    %7298 = vmatprep.subr.mxu0 0.0
    %7299 = vmatpush1.msra.mxu0 0.0
    %7300 = vmatprep.subr.mxu0 0.0
    %7301 = vmatpush1.msra.mxu0 0.0
    %7302 = vmatprep.subr.mxu0 0.0
    %7303 = vmatpush1.msra.mxu0 0.0
    %7304 = vmatprep.subr.mxu0 0.0
    %7305 = vmatpush1.msra.mxu0 0.0
    %7306 = vmatprep.subr.mxu0 0.0
    %7307 = vmatpush1.msra.mxu0 0.0
    %7308 = vmatprep.subr.mxu0 0.0
    %7309 = vmatpush1.msra.mxu0 0.0
    %7310 = vmatprep.subr.mxu0 0.0
    %7311 = vmatpush1.msra.mxu0 0.0
    %7312 = vmatprep.subr.mxu0 0.0
    %7313 = vmatpush1.msra.mxu0 0.0
    %7314 = vmatprep.subr.mxu0 0.0
    %7315 = vmatpush1.msra.mxu0 0.0
    %7316 = vmatprep.subr.mxu0 0.0
    %7317 = vmatpush1.msra.mxu0 0.0
    %7318 = vmatprep.subr.mxu0 0.0
    %7319 = vmatpush1.msra.mxu0 0.0
    %7320 = vmatprep.subr.mxu0 0.0
    %7321 = vmatpush1.msra.mxu0 0.0
    %7322 = vmatprep.subr.mxu0 0.0
    %7323 = vmatpush1.msra.mxu0 0.0
    %7324 = vmatprep.subr.mxu0 0.0
    %7325 = vmatpush1.msra.mxu0 0.0
    %7326 = vmatprep.subr.mxu0 0.0
    %7327 = vmatpush1.msra.mxu0 0.0
    %7328 = vmatprep.subr.mxu0 0.0
    %7329 = vmatpush1.msra.mxu0 0.0
    %7330 = vmatprep.subr.mxu0 0.0
    %7331 = vmatpush1.msra.mxu0 0.0
    %7332 = vmatprep.subr.mxu0 0.0
    %7333 = vmatpush1.msra.mxu0 0.0
    %7334 = vmatprep.subr.mxu0 0.0
    %7335 = vmatpush1.msra.mxu0 0.0
    %7336 = vmatprep.subr.mxu0 0.0
    %7337 = vmatpush1.msra.mxu0 0.0
    %7338 = vmatprep.subr.mxu0 0.0
    %7339 = vmatpush1.msra.mxu0 0.0
    %7340 = vmatprep.mubr.f32.mxu0 0.0
    %v7341 = vand.u32 %v7047, 4294901760
    %v7342 = vsub.f32 %v7047, %v7341
    %v7343 = vand.u32 %v7342, 4294901760
    %7344 = vmatmul.mubr.f32.gmra.mrb[0].mxu0 %v7343
    %v7345 = vpop.f32.mrb[0].mxu0
    %v7346 = vadd.f32 %v7272, %v7345
    %v7347 = vpop.f32.mrb[0].mxu0
    %7348 = vdwg.mxu0
    %7349 = vmatprep.subr.mxu0 0.0
    %v7350 = vand.u32 %v2428, 4294901760
    %v7351 = vsub.f32 %v2428, %v7350
    %v7352 = vand.u32 %v7351, 4294901760
    %7353 = vmatpush1.msra.mxu0 %v7352
    %7354 = vmatprep.subr.mxu0 0.0
    %7355 = vmatpush1.msra.mxu0 0.0
    %7356 = vmatprep.subr.mxu0 0.0
    %7357 = vmatpush1.msra.mxu0 0.0
    %7358 = vmatprep.subr.mxu0 0.0
    %7359 = vmatpush1.msra.mxu0 0.0
    %7360 = vmatprep.subr.mxu0 0.0
    %7361 = vmatpush1.msra.mxu0 0.0
    %7362 = vmatprep.subr.mxu0 0.0
    %7363 = vmatpush1.msra.mxu0 0.0
    %7364 = vmatprep.subr.mxu0 0.0
    %7365 = vmatpush1.msra.mxu0 0.0
    %7366 = vmatprep.subr.mxu0 0.0
    %7367 = vmatpush1.msra.mxu0 0.0
    %7368 = vmatprep.subr.mxu0 0.0
    %7369 = vmatpush1.msra.mxu0 0.0
    %7370 = vmatprep.subr.mxu0 0.0
    %7371 = vmatpush1.msra.mxu0 0.0
    %7372 = vmatprep.subr.mxu0 0.0
    %7373 = vmatpush1.msra.mxu0 0.0
    %7374 = vmatprep.subr.mxu0 0.0
    %7375 = vmatpush1.msra.mxu0 0.0
    %7376 = vmatprep.subr.mxu0 0.0
    %7377 = vmatpush1.msra.mxu0 0.0
    %7378 = vmatprep.subr.mxu0 0.0
    %7379 = vmatpush1.msra.mxu0 0.0
    %7380 = vmatprep.subr.mxu0 0.0
    %7381 = vmatpush1.msra.mxu0 0.0
    %7382 = vmatprep.subr.mxu0 0.0
    %7383 = vmatpush1.msra.mxu0 0.0
    %7384 = vmatprep.subr.mxu0 0.0
    %7385 = vmatpush1.msra.mxu0 0.0
    %7386 = vmatprep.subr.mxu0 0.0
    %7387 = vmatpush1.msra.mxu0 0.0
    %7388 = vmatprep.subr.mxu0 0.0
    %7389 = vmatpush1.msra.mxu0 0.0
    %7390 = vmatprep.subr.mxu0 0.0
    %7391 = vmatpush1.msra.mxu0 0.0
    %7392 = vmatprep.subr.mxu0 0.0
    %7393 = vmatpush1.msra.mxu0 0.0
    %7394 = vmatprep.subr.mxu0 0.0
    %7395 = vmatpush1.msra.mxu0 0.0
    %7396 = vmatprep.subr.mxu0 0.0
    %7397 = vmatpush1.msra.mxu0 0.0
    %7398 = vmatprep.subr.mxu0 0.0
    %7399 = vmatpush1.msra.mxu0 0.0
    %7400 = vmatprep.subr.mxu0 0.0
    %7401 = vmatpush1.msra.mxu0 0.0
    %7402 = vmatprep.subr.mxu0 0.0
    %7403 = vmatpush1.msra.mxu0 0.0
    %7404 = vmatprep.subr.mxu0 0.0
    %7405 = vmatpush1.msra.mxu0 0.0
    %7406 = vmatprep.subr.mxu0 0.0
    %7407 = vmatpush1.msra.mxu0 0.0
    %7408 = vmatprep.subr.mxu0 0.0
    %7409 = vmatpush1.msra.mxu0 0.0
    %7410 = vmatprep.subr.mxu0 0.0
    %7411 = vmatpush1.msra.mxu0 0.0
    %7412 = vmatprep.subr.mxu0 0.0
    %7413 = vmatpush1.msra.mxu0 0.0
    %7414 = vmatprep.subr.mxu0 0.0
    %7415 = vmatpush1.msra.mxu0 0.0
    %7416 = vmatprep.mubr.f32.mxu0 0.0
    %v7417 = vand.u32 %v7047, 4294901760
    %7418 = vmatmul.mubr.f32.gmra.mrb[0].mxu0 %v7417
    %v7419 = vpop.f32.mrb[0].mxu0
    %v7420 = vadd.f32 %v7346, %v7419
    %v7421 = vpop.f32.mrb[0].mxu0
    %7422 = vdwg.mxu0
    %7423 = vmatprep.subr.mxu0 0.0
    %v7424 = vand.u32 %v2428, 4294901760
    %7425 = vmatpush1.msra.mxu0 %v7424
    %7426 = vmatprep.subr.mxu0 0.0
    %7427 = vmatpush1.msra.mxu0 0.0
    %7428 = vmatprep.subr.mxu0 0.0
    %7429 = vmatpush1.msra.mxu0 0.0
    %7430 = vmatprep.subr.mxu0 0.0
    %7431 = vmatpush1.msra.mxu0 0.0
    %7432 = vmatprep.subr.mxu0 0.0
    %7433 = vmatpush1.msra.mxu0 0.0
    %7434 = vmatprep.subr.mxu0 0.0
    %7435 = vmatpush1.msra.mxu0 0.0
    %7436 = vmatprep.subr.mxu0 0.0
    %7437 = vmatpush1.msra.mxu0 0.0
    %7438 = vmatprep.subr.mxu0 0.0
    %7439 = vmatpush1.msra.mxu0 0.0
    %7440 = vmatprep.subr.mxu0 0.0
    %7441 = vmatpush1.msra.mxu0 0.0
    %7442 = vmatprep.subr.mxu0 0.0
    %7443 = vmatpush1.msra.mxu0 0.0
    %7444 = vmatprep.subr.mxu0 0.0
    %7445 = vmatpush1.msra.mxu0 0.0
    %7446 = vmatprep.subr.mxu0 0.0
    %7447 = vmatpush1.msra.mxu0 0.0
    %7448 = vmatprep.subr.mxu0 0.0
    %7449 = vmatpush1.msra.mxu0 0.0
    %7450 = vmatprep.subr.mxu0 0.0
    %7451 = vmatpush1.msra.mxu0 0.0
    %7452 = vmatprep.subr.mxu0 0.0
    %7453 = vmatpush1.msra.mxu0 0.0
    %7454 = vmatprep.subr.mxu0 0.0
    %7455 = vmatpush1.msra.mxu0 0.0
    %7456 = vmatprep.subr.mxu0 0.0
    %7457 = vmatpush1.msra.mxu0 0.0
    %7458 = vmatprep.subr.mxu0 0.0
    %7459 = vmatpush1.msra.mxu0 0.0
    %7460 = vmatprep.subr.mxu0 0.0
    %7461 = vmatpush1.msra.mxu0 0.0
    %7462 = vmatprep.subr.mxu0 0.0
    %7463 = vmatpush1.msra.mxu0 0.0
    %7464 = vmatprep.subr.mxu0 0.0
    %7465 = vmatpush1.msra.mxu0 0.0
    %7466 = vmatprep.subr.mxu0 0.0
    %7467 = vmatpush1.msra.mxu0 0.0
    %7468 = vmatprep.subr.mxu0 0.0
    %7469 = vmatpush1.msra.mxu0 0.0
    %7470 = vmatprep.subr.mxu0 0.0
    %7471 = vmatpush1.msra.mxu0 0.0
    %7472 = vmatprep.subr.mxu0 0.0
    %7473 = vmatpush1.msra.mxu0 0.0
    %7474 = vmatprep.subr.mxu0 0.0
    %7475 = vmatpush1.msra.mxu0 0.0
    %7476 = vmatprep.subr.mxu0 0.0
    %7477 = vmatpush1.msra.mxu0 0.0
    %7478 = vmatprep.subr.mxu0 0.0
    %7479 = vmatpush1.msra.mxu0 0.0
    %7480 = vmatprep.subr.mxu0 0.0
    %7481 = vmatpush1.msra.mxu0 0.0
    %7482 = vmatprep.subr.mxu0 0.0
    %7483 = vmatpush1.msra.mxu0 0.0
    %7484 = vmatprep.subr.mxu0 0.0
    %7485 = vmatpush1.msra.mxu0 0.0
    %7486 = vmatprep.subr.mxu0 0.0
    %7487 = vmatpush1.msra.mxu0 0.0
    %7488 = vmatprep.mubr.f32.mxu0 0.0
    %v7489 = vand.u32 %v7047, 4294901760
    %7490 = vmatmul.mubr.f32.gmra.mrb[0].mxu0 %v7489
    %v7491 = vpop.f32.mrb[0].mxu0
    %v7492 = vadd.f32 %v7420, %v7491
    %v7493 = vpop.f32.mrb[0].mxu0
    %7494 = vdwg.mxu0
    %v7496 = vsel %vm5141, %v5249, 0
    %7498 = vmatprep.subr.mxu0 0.0
    %v7499 = vand.u32 %v2430, 4294901760
    %7500 = vmatpush1.msra.mxu0 %v7499
    %7501 = vmatprep.subr.mxu0 0.0
    %7502 = vmatpush1.msra.mxu0 0.0
    %7503 = vmatprep.subr.mxu0 0.0
    %7504 = vmatpush1.msra.mxu0 0.0
    %7505 = vmatprep.subr.mxu0 0.0
    %7506 = vmatpush1.msra.mxu0 0.0
    %7507 = vmatprep.subr.mxu0 0.0
    %7508 = vmatpush1.msra.mxu0 0.0
    %7509 = vmatprep.subr.mxu0 0.0
    %7510 = vmatpush1.msra.mxu0 0.0
    %7511 = vmatprep.subr.mxu0 0.0
    %7512 = vmatpush1.msra.mxu0 0.0
    %7513 = vmatprep.subr.mxu0 0.0
    %7514 = vmatpush1.msra.mxu0 0.0
    %7515 = vmatprep.subr.mxu0 0.0
    %7516 = vmatpush1.msra.mxu0 0.0
    %7517 = vmatprep.subr.mxu0 0.0
    %7518 = vmatpush1.msra.mxu0 0.0
    %7519 = vmatprep.subr.mxu0 0.0
    %7520 = vmatpush1.msra.mxu0 0.0
    %7521 = vmatprep.subr.mxu0 0.0
    %7522 = vmatpush1.msra.mxu0 0.0
    %7523 = vmatprep.subr.mxu0 0.0
    %7524 = vmatpush1.msra.mxu0 0.0
    %7525 = vmatprep.subr.mxu0 0.0
    %7526 = vmatpush1.msra.mxu0 0.0
    %7527 = vmatprep.subr.mxu0 0.0
    %7528 = vmatpush1.msra.mxu0 0.0
    %7529 = vmatprep.subr.mxu0 0.0
    %7530 = vmatpush1.msra.mxu0 0.0
    %7531 = vmatprep.subr.mxu0 0.0
    %7532 = vmatpush1.msra.mxu0 0.0
    %7533 = vmatprep.subr.mxu0 0.0
    %7534 = vmatpush1.msra.mxu0 0.0
    %7535 = vmatprep.subr.mxu0 0.0
    %7536 = vmatpush1.msra.mxu0 0.0
    %7537 = vmatprep.subr.mxu0 0.0
    %7538 = vmatpush1.msra.mxu0 0.0
    %7539 = vmatprep.subr.mxu0 0.0
    %7540 = vmatpush1.msra.mxu0 0.0
    %7541 = vmatprep.subr.mxu0 0.0
    %7542 = vmatpush1.msra.mxu0 0.0
    %7543 = vmatprep.subr.mxu0 0.0
    %7544 = vmatpush1.msra.mxu0 0.0
    %7545 = vmatprep.subr.mxu0 0.0
    %7546 = vmatpush1.msra.mxu0 0.0
    %7547 = vmatprep.subr.mxu0 0.0
    %7548 = vmatpush1.msra.mxu0 0.0
    %7549 = vmatprep.subr.mxu0 0.0
    %7550 = vmatpush1.msra.mxu0 0.0
    %7551 = vmatprep.subr.mxu0 0.0
    %7552 = vmatpush1.msra.mxu0 0.0
    %7553 = vmatprep.subr.mxu0 0.0
    %7554 = vmatpush1.msra.mxu0 0.0
    %7555 = vmatprep.subr.mxu0 0.0
    %7556 = vmatpush1.msra.mxu0 0.0
    %7557 = vmatprep.subr.mxu0 0.0
    %7558 = vmatpush1.msra.mxu0 0.0
    %7559 = vmatprep.subr.mxu0 0.0
    %7560 = vmatpush1.msra.mxu0 0.0
    %7561 = vmatprep.subr.mxu0 0.0
    %7562 = vmatpush1.msra.mxu0 0.0
    %7563 = vmatprep.mubr.f32.mxu0 0.0
    %v7564 = vand.u32 %v7496, 4294901760
    %v7565 = vsub.f32 %v7496, %v7564
    %v7566 = vand.u32 %v7565, 4294901760
    %v7567 = vsub.f32 %v7565, %v7566
    %v7568 = vand.u32 %v7567, 4294901760
    %7569 = vmatmul.mubr.f32.gmra.mrb[0].mxu0 %v7568
    %v7570 = vpop.f32.mrb[0].mxu0
    %v7571 = vadd.f32 0.0, %v7570
    %v7572 = vpop.f32.mrb[0].mxu0
    %7573 = vdwg.mxu0
    %7574 = vmatprep.subr.mxu0 0.0
    %v7575 = vand.u32 %v2430, 4294901760
    %v7576 = vsub.f32 %v2430, %v7575
    %v7577 = vand.u32 %v7576, 4294901760
    %v7578 = vsub.f32 %v7576, %v7577
    %v7579 = vand.u32 %v7578, 4294901760
    %7580 = vmatpush1.msra.mxu0 %v7579
    %7581 = vmatprep.subr.mxu0 0.0
    %7582 = vmatpush1.msra.mxu0 0.0
    %7583 = vmatprep.subr.mxu0 0.0
    %7584 = vmatpush1.msra.mxu0 0.0
    %7585 = vmatprep.subr.mxu0 0.0
    %7586 = vmatpush1.msra.mxu0 0.0
    %7587 = vmatprep.subr.mxu0 0.0
    %7588 = vmatpush1.msra.mxu0 0.0
    %7589 = vmatprep.subr.mxu0 0.0
    %7590 = vmatpush1.msra.mxu0 0.0
    %7591 = vmatprep.subr.mxu0 0.0
    %7592 = vmatpush1.msra.mxu0 0.0
    %7593 = vmatprep.subr.mxu0 0.0
    %7594 = vmatpush1.msra.mxu0 0.0
    %7595 = vmatprep.subr.mxu0 0.0
    %7596 = vmatpush1.msra.mxu0 0.0
    %7597 = vmatprep.subr.mxu0 0.0
    %7598 = vmatpush1.msra.mxu0 0.0
    %7599 = vmatprep.subr.mxu0 0.0
    %7600 = vmatpush1.msra.mxu0 0.0
    %7601 = vmatprep.subr.mxu0 0.0
    %7602 = vmatpush1.msra.mxu0 0.0
    %7603 = vmatprep.subr.mxu0 0.0
    %7604 = vmatpush1.msra.mxu0 0.0
    %7605 = vmatprep.subr.mxu0 0.0
    %7606 = vmatpush1.msra.mxu0 0.0
    %7607 = vmatprep.subr.mxu0 0.0
    %7608 = vmatpush1.msra.mxu0 0.0
    %7609 = vmatprep.subr.mxu0 0.0
    %7610 = vmatpush1.msra.mxu0 0.0
    %7611 = vmatprep.subr.mxu0 0.0
    %7612 = vmatpush1.msra.mxu0 0.0
    %7613 = vmatprep.subr.mxu0 0.0
    %7614 = vmatpush1.msra.mxu0 0.0
    %7615 = vmatprep.subr.mxu0 0.0
    %7616 = vmatpush1.msra.mxu0 0.0
    %7617 = vmatprep.subr.mxu0 0.0
    %7618 = vmatpush1.msra.mxu0 0.0
    %7619 = vmatprep.subr.mxu0 0.0
    %7620 = vmatpush1.msra.mxu0 0.0
    %7621 = vmatprep.subr.mxu0 0.0
    %7622 = vmatpush1.msra.mxu0 0.0
    %7623 = vmatprep.subr.mxu0 0.0
    %7624 = vmatpush1.msra.mxu0 0.0
    %7625 = vmatprep.subr.mxu0 0.0
    %7626 = vmatpush1.msra.mxu0 0.0
    %7627 = vmatprep.subr.mxu0 0.0
    %7628 = vmatpush1.msra.mxu0 0.0
    %7629 = vmatprep.subr.mxu0 0.0
    %7630 = vmatpush1.msra.mxu0 0.0
    %7631 = vmatprep.subr.mxu0 0.0
    %7632 = vmatpush1.msra.mxu0 0.0
    %7633 = vmatprep.subr.mxu0 0.0
    %7634 = vmatpush1.msra.mxu0 0.0
    %7635 = vmatprep.subr.mxu0 0.0
    %7636 = vmatpush1.msra.mxu0 0.0
    %7637 = vmatprep.subr.mxu0 0.0
    %7638 = vmatpush1.msra.mxu0 0.0
    %7639 = vmatprep.subr.mxu0 0.0
    %7640 = vmatpush1.msra.mxu0 0.0
    %7641 = vmatprep.subr.mxu0 0.0
    %7642 = vmatpush1.msra.mxu0 0.0
    %7643 = vmatprep.mubr.f32.mxu0 0.0
    %v7644 = vand.u32 %v7496, 4294901760
    %7645 = vmatmul.mubr.f32.gmra.mrb[0].mxu0 %v7644
    %v7646 = vpop.f32.mrb[0].mxu0
    %v7647 = vadd.f32 %v7571, %v7646
    %v7648 = vpop.f32.mrb[0].mxu0
    %7649 = vdwg.mxu0
    %7650 = vmatprep.subr.mxu0 0.0
    %v7651 = vand.u32 %v2430, 4294901760
    %v7652 = vsub.f32 %v2430, %v7651
    %7653 = vmatpush1.msra.mxu0 %v7652
    %7654 = vmatprep.subr.mxu0 0.0
    %7655 = vmatpush1.msra.mxu0 0.0
    %7656 = vmatprep.subr.mxu0 0.0
    %7657 = vmatpush1.msra.mxu0 0.0
    %7658 = vmatprep.subr.mxu0 0.0
    %7659 = vmatpush1.msra.mxu0 0.0
    %7660 = vmatprep.subr.mxu0 0.0
    %7661 = vmatpush1.msra.mxu0 0.0
    %7662 = vmatprep.subr.mxu0 0.0
    %7663 = vmatpush1.msra.mxu0 0.0
    %7664 = vmatprep.subr.mxu0 0.0
    %7665 = vmatpush1.msra.mxu0 0.0
    %7666 = vmatprep.subr.mxu0 0.0
    %7667 = vmatpush1.msra.mxu0 0.0
    %7668 = vmatprep.subr.mxu0 0.0
    %7669 = vmatpush1.msra.mxu0 0.0
    %7670 = vmatprep.subr.mxu0 0.0
    %7671 = vmatpush1.msra.mxu0 0.0
    %7672 = vmatprep.subr.mxu0 0.0
    %7673 = vmatpush1.msra.mxu0 0.0
    %7674 = vmatprep.subr.mxu0 0.0
    %7675 = vmatpush1.msra.mxu0 0.0
    %7676 = vmatprep.subr.mxu0 0.0
    %7677 = vmatpush1.msra.mxu0 0.0
    %7678 = vmatprep.subr.mxu0 0.0
    %7679 = vmatpush1.msra.mxu0 0.0
    %7680 = vmatprep.subr.mxu0 0.0
    %7681 = vmatpush1.msra.mxu0 0.0
    %7682 = vmatprep.subr.mxu0 0.0
    %7683 = vmatpush1.msra.mxu0 0.0
    %7684 = vmatprep.subr.mxu0 0.0
    %7685 = vmatpush1.msra.mxu0 0.0
    %7686 = vmatprep.subr.mxu0 0.0
    %7687 = vmatpush1.msra.mxu0 0.0
    %7688 = vmatprep.subr.mxu0 0.0
    %7689 = vmatpush1.msra.mxu0 0.0
    %7690 = vmatprep.subr.mxu0 0.0
    %7691 = vmatpush1.msra.mxu0 0.0
    %7692 = vmatprep.subr.mxu0 0.0
    %7693 = vmatpush1.msra.mxu0 0.0
    %7694 = vmatprep.subr.mxu0 0.0
    %7695 = vmatpush1.msra.mxu0 0.0
    %7696 = vmatprep.subr.mxu0 0.0
    %7697 = vmatpush1.msra.mxu0 0.0
    %7698 = vmatprep.subr.mxu0 0.0
    %7699 = vmatpush1.msra.mxu0 0.0
    %7700 = vmatprep.subr.mxu0 0.0
    %7701 = vmatpush1.msra.mxu0 0.0
    %7702 = vmatprep.subr.mxu0 0.0
    %7703 = vmatpush1.msra.mxu0 0.0
    %7704 = vmatprep.subr.mxu0 0.0
    %7705 = vmatpush1.msra.mxu0 0.0
    %7706 = vmatprep.subr.mxu0 0.0
    %7707 = vmatpush1.msra.mxu0 0.0
    %7708 = vmatprep.subr.mxu0 0.0
    %7709 = vmatpush1.msra.mxu0 0.0
    %7710 = vmatprep.subr.mxu0 0.0
    %7711 = vmatpush1.msra.mxu0 0.0
    %7712 = vmatprep.subr.mxu0 0.0
    %7713 = vmatpush1.msra.mxu0 0.0
    %7714 = vmatprep.subr.mxu0 0.0
    %7715 = vmatpush1.msra.mxu0 0.0
    %7716 = vmatprep.mubr.f32.mxu0 0.0
    %v7717 = vand.u32 %v7496, 4294901760
    %v7718 = vsub.f32 %v7496, %v7717
    %7719 = vmatmul.mubr.f32.gmra.mrb[0].mxu0 %v7718
    %v7720 = vpop.f32.mrb[0].mxu0
    %v7721 = vadd.f32 %v7647, %v7720
    %v7722 = vpop.f32.mrb[0].mxu0
    %7723 = vdwg.mxu0
    %7724 = vmatprep.subr.mxu0 0.0
    %v7725 = vand.u32 %v2430, 4294901760
    %7726 = vmatpush1.msra.mxu0 %v7725
    %7727 = vmatprep.subr.mxu0 0.0
    %7728 = vmatpush1.msra.mxu0 0.0
    %7729 = vmatprep.subr.mxu0 0.0
    %7730 = vmatpush1.msra.mxu0 0.0
    %7731 = vmatprep.subr.mxu0 0.0
    %7732 = vmatpush1.msra.mxu0 0.0
    %7733 = vmatprep.subr.mxu0 0.0
    %7734 = vmatpush1.msra.mxu0 0.0
    %7735 = vmatprep.subr.mxu0 0.0
    %7736 = vmatpush1.msra.mxu0 0.0
    %7737 = vmatprep.subr.mxu0 0.0
    %7738 = vmatpush1.msra.mxu0 0.0
    %7739 = vmatprep.subr.mxu0 0.0
    %7740 = vmatpush1.msra.mxu0 0.0
    %7741 = vmatprep.subr.mxu0 0.0
    %7742 = vmatpush1.msra.mxu0 0.0
    %7743 = vmatprep.subr.mxu0 0.0
    %7744 = vmatpush1.msra.mxu0 0.0
    %7745 = vmatprep.subr.mxu0 0.0
    %7746 = vmatpush1.msra.mxu0 0.0
    %7747 = vmatprep.subr.mxu0 0.0
    %7748 = vmatpush1.msra.mxu0 0.0
    %7749 = vmatprep.subr.mxu0 0.0
    %7750 = vmatpush1.msra.mxu0 0.0
    %7751 = vmatprep.subr.mxu0 0.0
    %7752 = vmatpush1.msra.mxu0 0.0
    %7753 = vmatprep.subr.mxu0 0.0
    %7754 = vmatpush1.msra.mxu0 0.0
    %7755 = vmatprep.subr.mxu0 0.0
    %7756 = vmatpush1.msra.mxu0 0.0
    %7757 = vmatprep.subr.mxu0 0.0
    %7758 = vmatpush1.msra.mxu0 0.0
    %7759 = vmatprep.subr.mxu0 0.0
    %7760 = vmatpush1.msra.mxu0 0.0
    %7761 = vmatprep.subr.mxu0 0.0
    %7762 = vmatpush1.msra.mxu0 0.0
    %7763 = vmatprep.subr.mxu0 0.0
    %7764 = vmatpush1.msra.mxu0 0.0
    %7765 = vmatprep.subr.mxu0 0.0
    %7766 = vmatpush1.msra.mxu0 0.0
    %7767 = vmatprep.subr.mxu0 0.0
    %7768 = vmatpush1.msra.mxu0 0.0
    %7769 = vmatprep.subr.mxu0 0.0
    %7770 = vmatpush1.msra.mxu0 0.0
    %7771 = vmatprep.subr.mxu0 0.0
    %7772 = vmatpush1.msra.mxu0 0.0
    %7773 = vmatprep.subr.mxu0 0.0
    %7774 = vmatpush1.msra.mxu0 0.0
    %7775 = vmatprep.subr.mxu0 0.0
    %7776 = vmatpush1.msra.mxu0 0.0
    %7777 = vmatprep.subr.mxu0 0.0
    %7778 = vmatpush1.msra.mxu0 0.0
    %7779 = vmatprep.subr.mxu0 0.0
    %7780 = vmatpush1.msra.mxu0 0.0
    %7781 = vmatprep.subr.mxu0 0.0
    %7782 = vmatpush1.msra.mxu0 0.0
    %7783 = vmatprep.subr.mxu0 0.0
    %7784 = vmatpush1.msra.mxu0 0.0
    %7785 = vmatprep.subr.mxu0 0.0
    %7786 = vmatpush1.msra.mxu0 0.0
    %7787 = vmatprep.subr.mxu0 0.0
    %7788 = vmatpush1.msra.mxu0 0.0
    %7789 = vmatprep.mubr.f32.mxu0 0.0
    %v7790 = vand.u32 %v7496, 4294901760
    %v7791 = vsub.f32 %v7496, %v7790
    %v7792 = vand.u32 %v7791, 4294901760
    %7793 = vmatmul.mubr.f32.gmra.mrb[0].mxu0 %v7792
    %v7794 = vpop.f32.mrb[0].mxu0
    %v7795 = vadd.f32 %v7721, %v7794
    %v7796 = vpop.f32.mrb[0].mxu0
    %7797 = vdwg.mxu0
    %7798 = vmatprep.subr.mxu0 0.0
    %v7799 = vand.u32 %v2430, 4294901760
    %v7800 = vsub.f32 %v2430, %v7799
    %v7801 = vand.u32 %v7800, 4294901760
    %7802 = vmatpush1.msra.mxu0 %v7801
    %7803 = vmatprep.subr.mxu0 0.0
    %7804 = vmatpush1.msra.mxu0 0.0
    %7805 = vmatprep.subr.mxu0 0.0
    %7806 = vmatpush1.msra.mxu0 0.0
    %7807 = vmatprep.subr.mxu0 0.0
    %7808 = vmatpush1.msra.mxu0 0.0
    %7809 = vmatprep.subr.mxu0 0.0
    %7810 = vmatpush1.msra.mxu0 0.0
    %7811 = vmatprep.subr.mxu0 0.0
    %7812 = vmatpush1.msra.mxu0 0.0
    %7813 = vmatprep.subr.mxu0 0.0
    %7814 = vmatpush1.msra.mxu0 0.0
    %7815 = vmatprep.subr.mxu0 0.0
    %7816 = vmatpush1.msra.mxu0 0.0
    %7817 = vmatprep.subr.mxu0 0.0
    %7818 = vmatpush1.msra.mxu0 0.0
    %7819 = vmatprep.subr.mxu0 0.0
    %7820 = vmatpush1.msra.mxu0 0.0
    %7821 = vmatprep.subr.mxu0 0.0
    %7822 = vmatpush1.msra.mxu0 0.0
    %7823 = vmatprep.subr.mxu0 0.0
    %7824 = vmatpush1.msra.mxu0 0.0
    %7825 = vmatprep.subr.mxu0 0.0
    %7826 = vmatpush1.msra.mxu0 0.0
    %7827 = vmatprep.subr.mxu0 0.0
    %7828 = vmatpush1.msra.mxu0 0.0
    %7829 = vmatprep.subr.mxu0 0.0
    %7830 = vmatpush1.msra.mxu0 0.0
    %7831 = vmatprep.subr.mxu0 0.0
    %7832 = vmatpush1.msra.mxu0 0.0
    %7833 = vmatprep.subr.mxu0 0.0
    %7834 = vmatpush1.msra.mxu0 0.0
    %7835 = vmatprep.subr.mxu0 0.0
    %7836 = vmatpush1.msra.mxu0 0.0
    %7837 = vmatprep.subr.mxu0 0.0
    %7838 = vmatpush1.msra.mxu0 0.0
    %7839 = vmatprep.subr.mxu0 0.0
    %7840 = vmatpush1.msra.mxu0 0.0
    %7841 = vmatprep.subr.mxu0 0.0
    %7842 = vmatpush1.msra.mxu0 0.0
    %7843 = vmatprep.subr.mxu0 0.0
    %7844 = vmatpush1.msra.mxu0 0.0
    %7845 = vmatprep.subr.mxu0 0.0
    %7846 = vmatpush1.msra.mxu0 0.0
    %7847 = vmatprep.subr.mxu0 0.0
    %7848 = vmatpush1.msra.mxu0 0.0
    %7849 = vmatprep.subr.mxu0 0.0
    %7850 = vmatpush1.msra.mxu0 0.0
    %7851 = vmatprep.subr.mxu0 0.0
    %7852 = vmatpush1.msra.mxu0 0.0
    %7853 = vmatprep.subr.mxu0 0.0
    %7854 = vmatpush1.msra.mxu0 0.0
    %7855 = vmatprep.subr.mxu0 0.0
    %7856 = vmatpush1.msra.mxu0 0.0
    %7857 = vmatprep.subr.mxu0 0.0
    %7858 = vmatpush1.msra.mxu0 0.0
    %7859 = vmatprep.subr.mxu0 0.0
    %7860 = vmatpush1.msra.mxu0 0.0
    %7861 = vmatprep.subr.mxu0 0.0
    %7862 = vmatpush1.msra.mxu0 0.0
    %7863 = vmatprep.subr.mxu0 0.0
    %7864 = vmatpush1.msra.mxu0 0.0
    %7865 = vmatprep.mubr.f32.mxu0 0.0
    %v7866 = vand.u32 %v7496, 4294901760
    %7867 = vmatmul.mubr.f32.gmra.mrb[0].mxu0 %v7866
    %v7868 = vpop.f32.mrb[0].mxu0
    %v7869 = vadd.f32 %v7795, %v7868
    %v7870 = vpop.f32.mrb[0].mxu0
    %7871 = vdwg.mxu0
    %7872 = vmatprep.subr.mxu0 0.0
    %v7873 = vand.u32 %v2430, 4294901760
    %7874 = vmatpush1.msra.mxu0 %v7873
    %7875 = vmatprep.subr.mxu0 0.0
    %7876 = vmatpush1.msra.mxu0 0.0
    %7877 = vmatprep.subr.mxu0 0.0
    %7878 = vmatpush1.msra.mxu0 0.0
    %7879 = vmatprep.subr.mxu0 0.0
    %7880 = vmatpush1.msra.mxu0 0.0
    %7881 = vmatprep.subr.mxu0 0.0
    %7882 = vmatpush1.msra.mxu0 0.0
    %7883 = vmatprep.subr.mxu0 0.0
    %7884 = vmatpush1.msra.mxu0 0.0
    %7885 = vmatprep.subr.mxu0 0.0
    %7886 = vmatpush1.msra.mxu0 0.0
    %7887 = vmatprep.subr.mxu0 0.0
    %7888 = vmatpush1.msra.mxu0 0.0
    %7889 = vmatprep.subr.mxu0 0.0
    %7890 = vmatpush1.msra.mxu0 0.0
    %7891 = vmatprep.subr.mxu0 0.0
    %7892 = vmatpush1.msra.mxu0 0.0
    %7893 = vmatprep.subr.mxu0 0.0
    %7894 = vmatpush1.msra.mxu0 0.0
    %7895 = vmatprep.subr.mxu0 0.0
    %7896 = vmatpush1.msra.mxu0 0.0
    %7897 = vmatprep.subr.mxu0 0.0
    %7898 = vmatpush1.msra.mxu0 0.0
    %7899 = vmatprep.subr.mxu0 0.0
    %7900 = vmatpush1.msra.mxu0 0.0
    %7901 = vmatprep.subr.mxu0 0.0
    %7902 = vmatpush1.msra.mxu0 0.0
    %7903 = vmatprep.subr.mxu0 0.0
    %7904 = vmatpush1.msra.mxu0 0.0
    %7905 = vmatprep.subr.mxu0 0.0
    %7906 = vmatpush1.msra.mxu0 0.0
    %7907 = vmatprep.subr.mxu0 0.0
    %7908 = vmatpush1.msra.mxu0 0.0
    %7909 = vmatprep.subr.mxu0 0.0
    %7910 = vmatpush1.msra.mxu0 0.0
    %7911 = vmatprep.subr.mxu0 0.0
    %7912 = vmatpush1.msra.mxu0 0.0
    %7913 = vmatprep.subr.mxu0 0.0
    %7914 = vmatpush1.msra.mxu0 0.0
    %7915 = vmatprep.subr.mxu0 0.0
    %7916 = vmatpush1.msra.mxu0 0.0
    %7917 = vmatprep.subr.mxu0 0.0
    %7918 = vmatpush1.msra.mxu0 0.0
    %7919 = vmatprep.subr.mxu0 0.0
    %7920 = vmatpush1.msra.mxu0 0.0
    %7921 = vmatprep.subr.mxu0 0.0
    %7922 = vmatpush1.msra.mxu0 0.0
    %7923 = vmatprep.subr.mxu0 0.0
    %7924 = vmatpush1.msra.mxu0 0.0
    %7925 = vmatprep.subr.mxu0 0.0
    %7926 = vmatpush1.msra.mxu0 0.0
    %7927 = vmatprep.subr.mxu0 0.0
    %7928 = vmatpush1.msra.mxu0 0.0
    %7929 = vmatprep.subr.mxu0 0.0
    %7930 = vmatpush1.msra.mxu0 0.0
    %7931 = vmatprep.subr.mxu0 0.0
    %7932 = vmatpush1.msra.mxu0 0.0
    %7933 = vmatprep.subr.mxu0 0.0
    %7934 = vmatpush1.msra.mxu0 0.0
    %7935 = vmatprep.subr.mxu0 0.0
    %7936 = vmatpush1.msra.mxu0 0.0
    %7937 = vmatprep.mubr.f32.mxu0 0.0
    %v7938 = vand.u32 %v7496, 4294901760
    %7939 = vmatmul.mubr.f32.gmra.mrb[0].mxu0 %v7938
    %v7940 = vpop.f32.mrb[0].mxu0
    %v7941 = vadd.f32 %v7869, %v7940
    %v7942 = vpop.f32.mrb[0].mxu0
    %7943 = vdwg.mxu0
    %v7944 = vld [vmem:[%s4] sm:$0x1]
    %v7945 = vld [vmem:[%s4 + $0x1] sm:$0x1]
    %v7946 = vld [vmem:[%s4 + $0x2] sm:$0x1]
    %v7947 = vld [vmem:[%s4 + $0x3] sm:$0x1]
    %v7948 = vld [vmem:[%s4 + $0x4] sm:$0x1]
    %v7949 = vld [vmem:[%s4 + $0x5] sm:$0x1]
    %v7950 = vmul.f32 %v5696, %v7944
    %v7951 = vmul.f32 %v6145, %v7945
    %v7952 = vmul.f32 %v6594, %v7946
    %v7953 = vmul.f32 %v7043, %v7947
    %v7954 = vmul.f32 %v7492, %v7948
    %v7955 = vmul.f32 %v7941, %v7949
    %vm7956 = vcmask 122880
    %v7957 = vsel %vm7956, %v7950, 0.0
    %7958 = vadd.xlane.f32.xlu0 %v7957
    %v7959 = vpop.xlane.xlu0 %7958
    %v7960 = vsel %vm7956, %v7951, 0.0
    %7961 = vadd.xlane.f32.xlu0 %v7960
    %v7962 = vpop.xlane.xlu0 %7961
    %v7963 = vsel %vm7956, %v7952, 0.0
    %7964 = vadd.xlane.f32.xlu0 %v7963
    %v7965 = vpop.xlane.xlu0 %7964
    %v7966 = vsel %vm7956, %v7953, 0.0
    %7967 = vadd.xlane.f32.xlu0 %v7966
    %v7968 = vpop.xlane.xlu0 %7967
    %v7969 = vsel %vm7956, %v7954, 0.0
    %7970 = vadd.xlane.f32.xlu0 %v7969
    %v7971 = vpop.xlane.xlu0 %7970
    %v7972 = vsel %vm7956, %v7955, 0.0
    %7973 = vadd.xlane.f32.xlu0 %v7972
    %v7974 = vpop.xlane.xlu0 %7973
    %v7975 = vadd.f32 %v7959, %v7968
    %v7976 = vadd.f32 %v7962, %v7971
    %v7977 = vadd.f32 %v7965, %v7974
    %v7978 = vmul.f32 %v7975, 0.125
    %v7979 = vadd.f32 %v7978, %v72
    %v7980 = vmul.f32 %v7976, 0.125
    %v7981 = vadd.f32 %v7980, %v72
    %v7982 = vmul.f32 %v7977, 0.125
    %v7983 = vadd.f32 %v7982, %v72
    %v7984 = vmax.f32 %v7979, %v7981
    %v7985 = vmax.f32 %v7984, %v7983
    %v7986 = vsub.f32 %v7979, %v7985
    %v7987 = vmul.f32 %v7986, 1.442695
    %v7988 = vpow.pop %v7987
    %v7989 = vsub.f32 %v7981, %v7985
    %v7990 = vmul.f32 %v7989, 1.442695
    %v7991 = vpow.pop %v7990
    %v7992 = vsub.f32 %v7983, %v7985
    %v7993 = vmul.f32 %v7992, 1.442695
    %v7994 = vpow.pop %v7993
    %v7995 = vadd.f32 %v7988, %v7991
    %v7996 = vadd.f32 %v7995, %v7994
    %v7997 = vrcp.pop %v7996
    %v7998 = vmul.f32 %v7988, %v7997
    %v7999 = vmul.f32 %v7991, %v7997
    %v8000 = vmul.f32 %v7994, %v7997
    %s8002 = vtos %v7998
    %v8003 = vstv %s8002
    %v8005 = vmul.f32 %v69, %v8003
    %s8007 = vtos %v7999
    %v8008 = vstv %s8007
    %v8010 = vmul.f32 %v70, %v8008
    %v8011 = vadd.f32 %v8005, %v8010
    %s8013 = vtos %v8000
    %v8014 = vstv %s8013
    %v8016 = vmul.f32 %v71, %v8014
    %v8017 = vadd.f32 %v8011, %v8016
    %8018 = vst.msk [vmem:[#allocation9] sm:$0xff] %vm84, %v8017
    %vm8019 = vcmask 0
    %8020 = vst.msk [vmem:[%s7] sm:$0x1] %vm8019, %v7998
    %8021 = vst.msk [vmem:[%s7 + $0x1] sm:$0x1] %vm8019, %v7999
    %8022 = vst.msk [vmem:[%s7 + $0x2] sm:$0x1] %vm8019, %v8000
    // Predicated region
    $region38: #{tpu_custom_call.1} parent=1 // pred_check
      _
    $region39: #{tpu_custom_call.1} parent=1 // pred_check_branch
      %8024 = sbr.rel (0) target = $region41
    $region40: #{tpu_custom_call.1} parent=1 // pred_region
      %s8026 = ssub.s32 128, 128
      %8027 = vsyncadd [#allocation5], %s8026
      %s8029 = sshll.u32 [#allocation9], 4
      %s8030 = int_to_ptr.vmem [resolvable:$true] %s8029
      %8032 = dma.vmem_to_hbm [thread:$0]  %s8030, 128, %s6, [#allocation5]
    $region41: #{tpu_custom_call.1} parent=1 // pred_fallthru
      _
    // Predicated region
    $region42: #{tpu_custom_call.1} parent=1 // pred_check
      _
    $region43: #{tpu_custom_call.1} parent=1 // pred_check_branch
      %8034 = sbr.rel (0) target = $region45
    $region44: #{tpu_custom_call.1} parent=1 // pred_region
      _
    $region45: #{tpu_custom_call.1} parent=1 // pred_fallthru
      _
    // Predicated region
    $region46: #{tpu_custom_call.1} parent=1 // pred_check
      _
    $region47: #{tpu_custom_call.1} parent=1 // pred_check_branch
      %8036 = sbr.rel (0) target = $region49
    $region48: #{tpu_custom_call.1} parent=1 // pred_region
      %8037 = dma.done [#allocation5], 128
    $region49: #{tpu_custom_call.1} parent=1 // pred_fallthru
      _
    // Predicated region
    $region50: #{tpu_custom_call.1} parent=1 // pred_check
      _
    $region51: #{tpu_custom_call.1} parent=1 // pred_check_branch
      %8039 = sbr.rel (0) target = $region53
    $region52: #{tpu_custom_call.1} parent=1 // pred_region
      _
    $region53: #{tpu_custom_call.1} parent=1 // pred_fallthru
      _
    %8040 = vsyncpa [#allocation4], 1
    %8041 = vsyncpa [#allocation7], 1
    %8042 = vsyncpa [#allocation5], 1

</llo_original>
